<compile_context>
chip_gen: v7x
topology: tpu7x:2x2x1
jax: 0.10.0
libtpu: 0.0.40
codegen_flags: <defaults>
</compile_context>

<pallas_src>
import functools

import jax
import jax.numpy as jnp
from jax.experimental import pallas as pl
from jax.experimental.pallas import tpu as pltpu

MAX_RESIDENT_K = 2048        # full-K residency per dot up to this size, else K-tiled
K_TILE = 512
VMEM_LIMIT = 48 * 1024 * 1024


def _round_up(x, m):
    return (x + m - 1) // m * m


def _pick_tm(m):
    if m >= 2048:
        return 512
    if m >= 512:
        return 256
    return _round_up(m, 8)


def _pick_tn(co_pad):
    if co_pad <= 512:
        return co_pad
    for t in (512, 256, 128):
        if co_pad % t == 0:
            return t
    return 128


def _pick_tk(k):
    return k if k <= MAX_RESIDENT_K else K_TILE


def _padded_k(k):
    tk = _pick_tk(k)
    return _round_up(k, tk), tk


# ------------------------------------------------------------------
# Kernel 1: conv as a K-tiled matmul.  Grid = (M_tiles, N_tiles, K_tiles); K axis last
# ("arbitrary") with an f32 VMEM accumulator.  Optional epilogue fuses bias +
# skip-BatchNorm affine + residual add.  Outputs are lane-dense bf16.
# ------------------------------------------------------------------
def _conv_kernel(a_ref, w_ref, b_ref, o_ref, acc_ref, *, nk):
    t = pl.program_id(2)

    @pl.when(t == 0)
    def _():
        acc_ref[...] = jnp.zeros_like(acc_ref)

    acc_ref[...] += jnp.dot(a_ref[...], w_ref[...],
                            preferred_element_type=jnp.float32)

    @pl.when(t == nk - 1)
    def _():
        o_ref[...] = (acc_ref[...] + b_ref[...]).astype(o_ref.dtype)


def _conv_res_kernel(a_ref, w_ref, b_ref, r_ref, rs_ref, rt_ref, o_ref, acc_ref, *, nk):
    t = pl.program_id(2)

    @pl.when(t == 0)
    def _():
        acc_ref[...] = jnp.zeros_like(acc_ref)

    acc_ref[...] += jnp.dot(a_ref[...], w_ref[...],
                            preferred_element_type=jnp.float32)

    @pl.when(t == nk - 1)
    def _():
        # fused: + bias + BatchNorm-affine(residual) + residual add
        o_ref[...] = (acc_ref[...] + b_ref[...]
                      + r_ref[...].astype(jnp.float32) * rs_ref[...]
                      + rt_ref[...]).astype(o_ref.dtype)


def _pallas_conv(a, w, b, res=None, rs=None, rt=None):
    m, kdim = a.shape
    co_pad = w.shape[-1]
    if b.shape[-1] != co_pad:                       # pad bias lanes (tiny trace-time op)
        b = jnp.pad(b, ((0, 0), (0, co_pad - b.shape[-1])))

    tm = _pick_tm(m)
    tn = _pick_tn(co_pad)
    tk = _pick_tk(kdim)
    nk = kdim // tk
    grid = (pl.cdiv(m, tm), co_pad // tn, nk)

    in_specs = [
        pl.BlockSpec((tm, tk), lambda i, j, t: (i, t)),      # activation slab (bf16)
        pl.BlockSpec((tk, tn), lambda i, j, t: (t, j)),      # packed weights (bf16)
        pl.BlockSpec((1, tn), lambda i, j, t: (0, j)),       # bias (f32)
    ]
    args = [a, w, b]
    if res is not None:
        # residual block index is independent of t -> DMA'd once per (i, j)
        in_specs += [
            pl.BlockSpec((tm, tn), lambda i, j, t: (i, j)),  # residual (bf16, padded)
            pl.BlockSpec((1, tn), lambda i, j, t: (0, j)),   # BN scale (f32)
            pl.BlockSpec((1, tn), lambda i, j, t: (0, j)),   # BN shift (f32)
        ]
        args += [res, rs, rt]
        kernel = functools.partial(_conv_res_kernel, nk=nk)
    else:
        kernel = functools.partial(_conv_kernel, nk=nk)

    return pl.pallas_call(
        kernel,
        out_shape=jax.ShapeDtypeStruct((m, co_pad), jnp.bfloat16),
        grid=grid,
        in_specs=in_specs,
        out_specs=pl.BlockSpec((tm, tn), lambda i, j, t: (i, j)),
        scratch_shapes=[pltpu.VMEM((tm, tn), jnp.float32)],
        compiler_params=pltpu.CompilerParams(
            dimension_semantics=("parallel", "parallel", "arbitrary"),
            vmem_limit_bytes=VMEM_LIMIT),
    )(*args)


def _im2col(x, k, stride, padding):
    """One (M, k*k*Cin[+pad]) bf16 slab; column order = (kh, kw, cin) matches weights."""
    x = x.astype(jnp.bfloat16)                      # cast BEFORE the spatial zero-pad
    n, h, w, c = x.shape
    if padding > 0:
        x = jnp.pad(x, ((0, 0), (padding, padding), (padding, padding), (0, 0)))
    ho = (h + 2 * padding - k) // stride + 1
    wo = (w + 2 * padding - k) // stride + 1
    slabs = [
        x[:, i:i + stride * (ho - 1) + 1:stride, j:j + stride * (wo - 1) + 1:stride, :]
        for i in range(k) for j in range(k)
    ]
    a = jnp.concatenate(slabs, axis=-1) if len(slabs) > 1 else slabs[0]
    a = a.reshape(n * ho * wo, k * k * c)
    kp, _ = _padded_k(k * k * c)
    if kp > a.shape[-1]:
        a = jnp.pad(a, ((0, 0), (0, kp - a.shape[-1])))
    return a, (n, ho, wo)


def conv_fused(x, pk, k, stride, padding,
               res_p=None, res_scale=None, res_shift=None, keep_padded=False):
    """PyTorch-semantics Conv2d (+ optional fused BN-affine residual add)."""
    a, (n, ho, wo) = _im2col(x, k, stride, padding)
    out_p = _pallas_conv(a, pk["w"], pk["b"], res_p, res_scale, res_shift)
    if keep_padded:
        return out_p, (n, ho, wo)                   # (M, Cout_pad) bf16
    co = pk["b"].shape[-1]                          # real Cout (static from bias shape)
    return out_p[:, :co].reshape(n, ho, wo, co)


# ------------------------------------------------------------------
# Kernel 2: ConvTranspose2d(kernel=2, stride=2), R rows per grid step, lane-dense
# interleaved output (N*H, 2, W, 2*Co_pad) == (N, 2H, 2W, Co_pad) row-major.
# ------------------------------------------------------------------
def _upsample_kernel(x_ref, w_ref, b_ref, o_ref):
    r, wdim, ci = x_ref.shape
    x = x_ref[...].reshape(r * wdim, ci)                        # bf16
    for ki in range(2):
        y = jnp.dot(x, w_ref[ki], preferred_element_type=jnp.float32) + b_ref[...]
        o_ref[:, ki] = y.reshape(r, wdim, -1).astype(o_ref.dtype)


def conv_transpose2x2(x, pk):
    n, h, w, ci = x.shape
    co = pk["b"].shape[-1]
    co2 = pk["w"].shape[-1]                 # 2 * co_pad
    co_pad = co2 // 2
    nh = n * h
    x3 = x.reshape(nh, w, ci).astype(jnp.bfloat16)
    b2 = jnp.zeros((2, co_pad), jnp.float32).at[:, :co].set(pk["b"][0]).reshape(1, co2)
    rows = min(nh, max(1, 256 // w))        # batch rows so each matmul has M ~ 256

    out = pl.pallas_call(
        _upsample_kernel,
        out_shape=jax.ShapeDtypeStruct((nh, 2, w, co2), jnp.bfloat16),
        grid=(pl.cdiv(nh, rows),),
        in_specs=[
            pl.BlockSpec((rows, w, ci), lambda i: (i, 0, 0)),
            pl.BlockSpec((2, ci, co2), lambda i: (0, 0, 0)),
            pl.BlockSpec((1, co2), lambda i: (0, 0)),
        ],
        out_specs=pl.BlockSpec((rows, 2, w, co2), lambda i: (i, 0, 0, 0)),
        compiler_params=pltpu.CompilerParams(
            dimension_semantics=("parallel",),
            vmem_limit_bytes=VMEM_LIMIT),
    )(x3, pk["w"], b2)

    out = out.reshape(n, 2 * h, 2 * w, co_pad)      # free reshape (row-major identical)
    return out[..., :co] if co_pad != co else out


# ------------------------------------------------------------------
# BatchNorm (training-mode batch stats) as per-channel scale/shift; pre-conv BN+ReLU is
# one XLA-fused elementwise expression feeding the tap construction (zero-pad AFTER
# the ReLU, matching PyTorch semantics).
# ------------------------------------------------------------------
def _bn_affine(x2d, gamma, beta, eps=1e-5):
    x32 = x2d.astype(jnp.float32)
    mean = jnp.mean(x32, axis=0)
    var = jnp.mean(jnp.square(x32 - mean), axis=0)          # biased, training semantics
    scale = gamma * jax.lax.rsqrt(var + eps)
    shift = beta - mean * scale
    return scale, shift


def bn_relu(x, gamma, beta):
    c = x.shape[-1]
    s, t = _bn_affine(x.reshape(-1, c), gamma, beta)
    return jnp.maximum(x.astype(jnp.float32) * s + t, 0.0)


def bn_affine_padded(x_padded, co, gamma, beta):
    """BN affine for a (M, Cout_pad) padded activation; stats over real channels only."""
    s, t = _bn_affine(x_padded[:, :co], gamma, beta)
    co_pad = x_padded.shape[-1]
    sp = jnp.zeros((1, co_pad), jnp.float32).at[0, :co].set(s)
    tp = jnp.zeros((1, co_pad), jnp.float32).at[0, :co].set(t)
    return sp, tp


# ------------------------------------------------------------------
# Model blocks
# ------------------------------------------------------------------
def residual_conv(x, p, stride, padding):
    # conv_block: BN -> ReLU -> Conv3x3(stride,padding) -> BN -> ReLU -> Conv3x3(pad 1)
    z1 = bn_relu(x, *p["bn1"])
    y = conv_fused(z1, p["conv1"], k=3, stride=stride, padding=padding)
    z2 = bn_relu(y, *p["bn2"])
    # conv_skip: Conv3x3(stride, pad 1) -> BN   (affine + add fused into conv2 epilogue)
    skip_p, _ = conv_fused(x, p["skip"], k=3, stride=stride, padding=1, keep_padded=True)
    ss, st = bn_affine_padded(skip_p, p["skip"]["b"].shape[-1], *p["skip_bn"])
    return conv_fused(z2, p["conv2"], k=3, stride=1, padding=1,
                      res_p=skip_p, res_scale=ss, res_shift=st)


def resunet_forward(params, x_nchw):
    p = params
    x = jnp.transpose(x_nchw, (0, 2, 3, 1)).astype(jnp.float32)   # NCHW -> NHWC

    # input_layer + input_skip (plain residual add fused into the second conv)
    y = conv_fused(x, p["in_c1"], k=3, stride=1, padding=1)
    z = bn_relu(y, *p["in_bn"])
    skip0_p, _ = conv_fused(x, p["in_skip"], k=3, stride=1, padding=1, keep_padded=True)
    f0 = p["in_skip"]["b"].shape[-1]
    co_pad0 = skip0_p.shape[-1]
    one = jnp.zeros((1, co_pad0), jnp.float32).at[0, :f0].set(1.0)
    zero = jnp.zeros((1, co_pad0), jnp.float32)
    x1 = conv_fused(z, p["in_c2"], k=3, stride=1, padding=1,
                    res_p=skip0_p, res_scale=one, res_shift=zero)

    # encoder
    x2 = residual_conv(x1, p["res1"], stride=2, padding=1)
    x3 = residual_conv(x2, p["res2"], stride=2, padding=1)
    x4 = residual_conv(x3, p["bridge"], stride=2, padding=1)

    # decoder
    u1 = conv_transpose2x2(x4, p["up1"])
    x5 = jnp.concatenate([u1, x3], axis=-1)          # torch.cat(dim=1) == NHWC axis -1
    x6 = residual_conv(x5, p["up_res1"], stride=1, padding=1)

    u2 = conv_transpose2x2(x6, p["up2"])
    x7 = jnp.concatenate([u2, x2], axis=-1)
    x8 = residual_conv(x7, p["up_res2"], stride=1, padding=1)

    u3 = conv_transpose2x2(x8, p["up3"])
    x9 = jnp.concatenate([u3, x1], axis=-1)
    x10 = residual_conv(x9, p["up_res3"], stride=1, padding=1)

    out = conv_fused(x10, p["out"], k=1, stride=1, padding=0)     # 1x1 conv (padded N)
    return jnp.transpose(out, (0, 3, 1, 2)).astype(jnp.float32)   # NHWC -> NCHW


# ------------------------------------------------------------------
# Deterministic synthetic parameters, pre-packed for the kernels once at init:
# folded-K row layout, Cout zero-padded to lane-dense multiples, bf16 weights.
# Real Cout is recovered statically from the (unpadded) bias shape.
# ------------------------------------------------------------------
def _conv_init(key, cin, cout, k):
    k1, k2 = jax.random.split(key)
    w = 0.1 * jax.random.normal(k1, (cout, cin, k, k), jnp.float32)   # PyTorch (O,I,kh,kw)
    b = 0.1 * jax.random.normal(k2, (cout,), jnp.float32)
    kdim = k * k * cin
    kp, _ = _padded_k(kdim)
    co_pad = _round_up(cout, 128)
    w2 = jnp.transpose(w, (2, 3, 1, 0)).reshape(kdim, cout)           # (kh,kw,ci,co) rows
    w_packed = jnp.zeros((kp, co_pad), jnp.float32).at[:kdim, :cout].set(w2)
    return {"w": w_packed.astype(jnp.bfloat16), "b": b.reshape(1, cout)}


def _up_init(key, cin, cout):
    k1, k2 = jax.random.split(key)
    w = 0.1 * jax.random.normal(k1, (cin, cout, 2, 2), jnp.float32)   # PyTorch (I,O,kh,kw)
    b = 0.1 * jax.random.normal(k2, (cout,), jnp.float32)
    co_pad = _round_up(cout, 64)                    # 2*co_pad is a multiple of 128
    wt = jnp.transpose(w, (2, 0, 3, 1))             # (ki, ci, kj, co)
    w_packed = jnp.zeros((2, cin, 2, co_pad), jnp.float32).at[..., :cout].set(wt)
    w_packed = w_packed.reshape(2, cin, 2 * co_pad).astype(jnp.bfloat16)
    return {"w": w_packed, "b": b.reshape(1, cout)}


def _bn_init(key, c):
    k1, k2 = jax.random.split(key)
    g = 1.0 + 0.1 * jax.random.normal(k1, (c,), jnp.float32)
    b = 0.1 * jax.random.normal(k2, (c,), jnp.float32)
    return g, b


def _resblock_init(key, cin, cout):
    ks = jax.random.split(key, 6)
    return {
        "bn1": _bn_init(ks[0], cin),
        "conv1": _conv_init(ks[1], cin, cout, 3),
        "bn2": _bn_init(ks[2], cout),
        "conv2": _conv_init(ks[3], cout, cout, 3),
        "skip": _conv_init(ks[4], cin, cout, 3),
        "skip_bn": _bn_init(ks[5], cout),
    }


def init_resunet_params(key, in_channels, num_classes, filters):
    f = filters
    ks = jax.random.split(key, 14)
    return {
        "in_c1": _conv_init(ks[0], in_channels, f[0], 3),
        "in_bn": _bn_init(ks[1], f[0]),
        "in_c2": _conv_init(ks[2], f[0], f[0], 3),
        "in_skip": _conv_init(ks[3], in_channels, f[0], 3),
        "res1": _resblock_init(ks[4], f[0], f[1]),
        "res2": _resblock_init(ks[5], f[1], f[2]),
        "bridge": _resblock_init(ks[6], f[2], f[3]),
        "up1": _up_init(ks[7], f[3], f[3]),
        "up_res1": _resblock_init(ks[8], f[3] + f[2], f[2]),
        "up2": _up_init(ks[9], f[2], f[2]),
        "up_res2": _resblock_init(ks[10], f[1] + f[2], f[1]),
        "up3": _up_init(ks[11], f[1], f[1]),
        "up_res3": _resblock_init(ks[12], f[1] + f[0], f[0]),
        "out": _conv_init(ks[13], f[0], num_classes, 1),
    }


if __name__ == "__main__":
    key = jax.random.PRNGKey(0)
    pk, xk = jax.random.split(key)

    in_channels, num_classes = 4, 3
    filters = [8, 16, 32, 64]          # small filters for a quick synthetic run
    batch, spatial = 2, 16

    params = init_resunet_params(pk, in_channels, num_classes, filters)
    x = jax.random.normal(xk, (batch, in_channels, spatial, spatial), jnp.float32)

    out = jax.jit(resunet_forward)(params, x)
    jax.block_until_ready(out)
    assert out.shape == (batch, num_classes, spatial, spatial), out.shape
    assert jnp.all(jnp.isfinite(out))
    print("KERNEL_OK")
</pallas_src>

<mosaic_0001>
module attributes {stable_mosaic.version = 11 : i64} {
  func.func @_conv_kernel(%arg0: i32, %arg1: i32, %arg2: i32, %arg3: memref<256x36xbf16, #tpu.memory_space<vmem>>, %arg4: memref<36x128xbf16, #tpu.memory_space<vmem>>, %arg5: memref<1x128xf32, #tpu.memory_space<vmem>>, %arg6: memref<256x128xbf16, #tpu.memory_space<vmem>>, %arg7: memref<256x128xf32, #tpu.memory_space<vmem>>) attributes {dimension_semantics = [#tpu.dimension_semantics<parallel>, #tpu.dimension_semantics<parallel>, #tpu.dimension_semantics<arbitrary>], iteration_bounds = array<i64: 2, 1, 1>, scalar_prefetch = 0 : i64, scratch_operands = 1 : i64, tpu.core_type = #tpu.core_type<tc>, window_params = [{transform_indices = @transform_0, window_bounds = array<i64: 256, 36>}, {transform_indices = @transform_1, window_bounds = array<i64: 36, 128>}, {transform_indices = @transform_2, window_bounds = array<i64: 1, 128>}, {transform_indices = @transform_3, window_bounds = array<i64: 256, 128>}]} {
    %c0_i32 = arith.constant 0 : i32
    %0 = arith.cmpi eq, %arg2, %c0_i32 : i32
    %1 = arith.extui %0 : i1 to i32
    %c0_i32_0 = arith.constant 0 : i32
    %2 = arith.cmpi ne, %1, %c0_i32_0 : i32
    scf.if %2 {
      %cst_10 = arith.constant 0.000000e+00 : f32
      %12 = vector.broadcast %cst_10 : f32 to vector<256x128xf32>
      %c0_11 = arith.constant 0 : index
      %c0_12 = arith.constant 0 : index
      %13 = vector.load %arg7[%c0_11, %c0_12] : memref<256x128xf32, #tpu.memory_space<vmem>>, vector<256x128xf32>
      tpu.vector_store %arg7[%c0_11, %c0_12], %12 {strides = array<i32>} : memref<256x128xf32, #tpu.memory_space<vmem>>, vector<256x128xf32>,
    } else {
    }
    %c0 = arith.constant 0 : index
    %c0_1 = arith.constant 0 : index
    %3 = vector.load %arg7[%c0, %c0_1] : memref<256x128xf32, #tpu.memory_space<vmem>>, vector<256x128xf32>
    %c0_2 = arith.constant 0 : index
    %c0_3 = arith.constant 0 : index
    %4 = vector.load %arg3[%c0_2, %c0_3] : memref<256x36xbf16, #tpu.memory_space<vmem>>, vector<256x36xbf16>
    %c0_4 = arith.constant 0 : index
    %c0_5 = arith.constant 0 : index
    %5 = vector.load %arg4[%c0_4, %c0_5] : memref<36x128xbf16, #tpu.memory_space<vmem>>, vector<36x128xbf16>
    %cst = arith.constant dense<0.000000e+00> : vector<256x128xf32>
    %6 = tpu.matmul %4, %5, %cst {dimension_numbers = #tpu.dot_dimension_numbers<[1], [0], [0], [1], [0, 0, 1, 1], [], []>} : vector<256x36xbf16>, vector<36x128xbf16>, vector<256x128xf32> -> vector<256x128xf32>
    %7 = arith.addf %3, %6 : vector<256x128xf32>
    %c0_6 = arith.constant 0 : index
    %c0_7 = arith.constant 0 : index
    %8 = vector.load %arg7[%c0_6, %c0_7] : memref<256x128xf32, #tpu.memory_space<vmem>>, vector<256x128xf32>
    tpu.vector_store %arg7[%c0_6, %c0_7], %7 {strides = array<i32>} : memref<256x128xf32, #tpu.memory_space<vmem>>, vector<256x128xf32>,
    %c0_i32_8 = arith.constant 0 : i32
    %9 = arith.cmpi eq, %arg2, %c0_i32_8 : i32
    %10 = arith.extui %9 : i1 to i32
    %c0_i32_9 = arith.constant 0 : i32
    %11 = arith.cmpi ne, %10, %c0_i32_9 : i32
    scf.if %11 {
      %c0_10 = arith.constant 0 : index
      %c0_11 = arith.constant 0 : index
      %12 = vector.load %arg7[%c0_10, %c0_11] : memref<256x128xf32, #tpu.memory_space<vmem>>, vector<256x128xf32>
      %c0_12 = arith.constant 0 : index
      %c0_13 = arith.constant 0 : index
      %13 = vector.load %arg5[%c0_12, %c0_13] : memref<1x128xf32, #tpu.memory_space<vmem>>, vector<1x128xf32>
      %14 = vector.broadcast %13 : vector<1x128xf32> to vector<256x128xf32>
      %15 = arith.addf %12, %14 : vector<256x128xf32>
      %16 = arith.truncf %15 : vector<256x128xf32> to vector<256x128xbf16>
      %c0_14 = arith.constant 0 : index
      %c0_15 = arith.constant 0 : index
      %17 = vector.load %arg6[%c0_14, %c0_15] : memref<256x128xbf16, #tpu.memory_space<vmem>>, vector<256x128xbf16>
      tpu.vector_store %arg6[%c0_14, %c0_15], %16 {strides = array<i32>} : memref<256x128xbf16, #tpu.memory_space<vmem>>, vector<256x128xbf16>,
    } else {
    }
    return
  }
  func.func @transform_0(%arg0: i32, %arg1: i32, %arg2: i32) -> (i32, i32) {
    %c0_i32 = arith.constant 0 : i32
    return %arg0, %arg2 : i32, i32
  }
  func.func @transform_1(%arg0: i32, %arg1: i32, %arg2: i32) -> (i32, i32) {
    %c0_i32 = arith.constant 0 : i32
    return %arg2, %arg1 : i32, i32
  }
  func.func @transform_2(%arg0: i32, %arg1: i32, %arg2: i32) -> (i32, i32) {
    %c0_i32 = arith.constant 0 : i32
    %c0_i32_0 = arith.constant 0 : i32
    return %c0_i32, %arg1 : i32, i32
  }
  func.func @transform_3(%arg0: i32, %arg1: i32, %arg2: i32) -> (i32, i32) {
    %c0_i32 = arith.constant 0 : i32
    return %arg0, %arg1 : i32, i32
  }
}

module attributes {stable_mosaic.version = 11 : i64} {
  func.func @_conv_res_kernel(%arg0: i32, %arg1: i32, %arg2: i32, %arg3: memref<256x72xbf16, #tpu.memory_space<vmem>>, %arg4: memref<72x128xbf16, #tpu.memory_space<vmem>>, %arg5: memref<1x128xf32, #tpu.memory_space<vmem>>, %arg6: memref<256x128xbf16, #tpu.memory_space<vmem>>, %arg7: memref<1x128xf32, #tpu.memory_space<vmem>>, %arg8: memref<1x128xf32, #tpu.memory_space<vmem>>, %arg9: memref<256x128xbf16, #tpu.memory_space<vmem>>, %arg10: memref<256x128xf32, #tpu.memory_space<vmem>>) attributes {dimension_semantics = [#tpu.dimension_semantics<parallel>, #tpu.dimension_semantics<parallel>, #tpu.dimension_semantics<arbitrary>], iteration_bounds = array<i64: 2, 1, 1>, scalar_prefetch = 0 : i64, scratch_operands = 1 : i64, tpu.core_type = #tpu.core_type<tc>, window_params = [{transform_indices = @transform_0, window_bounds = array<i64: 256, 72>}, {transform_indices = @transform_1, window_bounds = array<i64: 72, 128>}, {transform_indices = @transform_2, window_bounds = array<i64: 1, 128>}, {transform_indices = @transform_3, window_bounds = array<i64: 256, 128>}, {transform_indices = @transform_4, window_bounds = array<i64: 1, 128>}, {transform_indices = @transform_5, window_bounds = array<i64: 1, 128>}, {transform_indices = @transform_6, window_bounds = array<i64: 256, 128>}]} {
    %c0_i32 = arith.constant 0 : i32
    %0 = arith.cmpi eq, %arg2, %c0_i32 : i32
    %1 = arith.extui %0 : i1 to i32
    %c0_i32_0 = arith.constant 0 : i32
    %2 = arith.cmpi ne, %1, %c0_i32_0 : i32
    scf.if %2 {
      %cst_10 = arith.constant 0.000000e+00 : f32
      %12 = vector.broadcast %cst_10 : f32 to vector<256x128xf32>
      %c0_11 = arith.constant 0 : index
      %c0_12 = arith.constant 0 : index
      %13 = vector.load %arg10[%c0_11, %c0_12] : memref<256x128xf32, #tpu.memory_space<vmem>>, vector<256x128xf32>
      tpu.vector_store %arg10[%c0_11, %c0_12], %12 {strides = array<i32>} : memref<256x128xf32, #tpu.memory_space<vmem>>, vector<256x128xf32>,
    } else {
    }
    %c0 = arith.constant 0 : index
    %c0_1 = arith.constant 0 : index
    %3 = vector.load %arg10[%c0, %c0_1] : memref<256x128xf32, #tpu.memory_space<vmem>>, vector<256x128xf32>
    %c0_2 = arith.constant 0 : index
    %c0_3 = arith.constant 0 : index
    %4 = vector.load %arg3[%c0_2, %c0_3] : memref<256x72xbf16, #tpu.memory_space<vmem>>, vector<256x72xbf16>
    %c0_4 = arith.constant 0 : index
    %c0_5 = arith.constant 0 : index
    %5 = vector.load %arg4[%c0_4, %c0_5] : memref<72x128xbf16, #tpu.memory_space<vmem>>, vector<72x128xbf16>
    %cst = arith.constant dense<0.000000e+00> : vector<256x128xf32>
    %6 = tpu.matmul %4, %5, %cst {dimension_numbers = #tpu.dot_dimension_numbers<[1], [0], [0], [1], [0, 0, 1, 1], [], []>} : vector<256x72xbf16>, vector<72x128xbf16>, vector<256x128xf32> -> vector<256x128xf32>
    %7 = arith.addf %3, %6 : vector<256x128xf32>
    %c0_6 = arith.constant 0 : index
    %c0_7 = arith.constant 0 : index
    %8 = vector.load %arg10[%c0_6, %c0_7] : memref<256x128xf32, #tpu.memory_space<vmem>>, vector<256x128xf32>
    tpu.vector_store %arg10[%c0_6, %c0_7], %7 {strides = array<i32>} : memref<256x128xf32, #tpu.memory_space<vmem>>, vector<256x128xf32>,
    %c0_i32_8 = arith.constant 0 : i32
    %9 = arith.cmpi eq, %arg2, %c0_i32_8 : i32
    %10 = arith.extui %9 : i1 to i32
    %c0_i32_9 = arith.constant 0 : i32
    %11 = arith.cmpi ne, %10, %c0_i32_9 : i32
    scf.if %11 {
      %c0_10 = arith.constant 0 : index
      %c0_11 = arith.constant 0 : index
      %12 = vector.load %arg10[%c0_10, %c0_11] : memref<256x128xf32, #tpu.memory_space<vmem>>, vector<256x128xf32>
      %c0_12 = arith.constant 0 : index
      %c0_13 = arith.constant 0 : index
      %13 = vector.load %arg5[%c0_12, %c0_13] : memref<1x128xf32, #tpu.memory_space<vmem>>, vector<1x128xf32>
      %14 = vector.broadcast %13 : vector<1x128xf32> to vector<256x128xf32>
      %15 = arith.addf %12, %14 : vector<256x128xf32>
      %c0_14 = arith.constant 0 : index
      %c0_15 = arith.constant 0 : index
      %16 = vector.load %arg6[%c0_14, %c0_15] : memref<256x128xbf16, #tpu.memory_space<vmem>>, vector<256x128xbf16>
      %17 = arith.extf %16 : vector<256x128xbf16> to vector<256x128xf32>
      %c0_16 = arith.constant 0 : index
      %c0_17 = arith.constant 0 : index
      %18 = vector.load %arg7[%c0_16, %c0_17] : memref<1x128xf32, #tpu.memory_space<vmem>>, vector<1x128xf32>
      %19 = vector.broadcast %18 : vector<1x128xf32> to vector<256x128xf32>
      %20 = arith.mulf %17, %19 : vector<256x128xf32>
      %21 = arith.addf %15, %20 : vector<256x128xf32>
      %c0_18 = arith.constant 0 : index
      %c0_19 = arith.constant 0 : index
      %22 = vector.load %arg8[%c0_18, %c0_19] : memref<1x128xf32, #tpu.memory_space<vmem>>, vector<1x128xf32>
      %23 = vector.broadcast %22 : vector<1x128xf32> to vector<256x128xf32>
      %24 = arith.addf %21, %23 : vector<256x128xf32>
      %25 = arith.truncf %24 : vector<256x128xf32> to vector<256x128xbf16>
      %c0_20 = arith.constant 0 : index
      %c0_21 = arith.constant 0 : index
      %26 = vector.load %arg9[%c0_20, %c0_21] : memref<256x128xbf16, #tpu.memory_space<vmem>>, vector<256x128xbf16>
      tpu.vector_store %arg9[%c0_20, %c0_21], %25 {strides = array<i32>} : memref<256x128xbf16, #tpu.memory_space<vmem>>, vector<256x128xbf16>,
    } else {
    }
    return
  }
  func.func @transform_0(%arg0: i32, %arg1: i32, %arg2: i32) -> (i32, i32) {
    %c0_i32 = arith.constant 0 : i32
    return %arg0, %arg2 : i32, i32
  }
  func.func @transform_1(%arg0: i32, %arg1: i32, %arg2: i32) -> (i32, i32) {
    %c0_i32 = arith.constant 0 : i32
    return %arg2, %arg1 : i32, i32
  }
  func.func @transform_2(%arg0: i32, %arg1: i32, %arg2: i32) -> (i32, i32) {
    %c0_i32 = arith.constant 0 : i32
    %c0_i32_0 = arith.constant 0 : i32
    return %c0_i32, %arg1 : i32, i32
  }
  func.func @transform_3(%arg0: i32, %arg1: i32, %arg2: i32) -> (i32, i32) {
    %c0_i32 = arith.constant 0 : i32
    return %arg0, %arg1 : i32, i32
  }
  func.func @transform_4(%arg0: i32, %arg1: i32, %arg2: i32) -> (i32, i32) {
    %c0_i32 = arith.constant 0 : i32
    %c0_i32_0 = arith.constant 0 : i32
    return %c0_i32, %arg1 : i32, i32
  }
  func.func @transform_5(%arg0: i32, %arg1: i32, %arg2: i32) -> (i32, i32) {
    %c0_i32 = arith.constant 0 : i32
    %c0_i32_0 = arith.constant 0 : i32
    return %c0_i32, %arg1 : i32, i32
  }
  func.func @transform_6(%arg0: i32, %arg1: i32, %arg2: i32) -> (i32, i32) {
    %c0_i32 = arith.constant 0 : i32
    return %arg0, %arg1 : i32, i32
  }
}

module attributes {stable_mosaic.version = 11 : i64} {
  func.func @_conv_kernel(%arg0: i32, %arg1: i32, %arg2: i32, %arg3: memref<128x72xbf16, #tpu.memory_space<vmem>>, %arg4: memref<72x128xbf16, #tpu.memory_space<vmem>>, %arg5: memref<1x128xf32, #tpu.memory_space<vmem>>, %arg6: memref<128x128xbf16, #tpu.memory_space<vmem>>, %arg7: memref<128x128xf32, #tpu.memory_space<vmem>>) attributes {dimension_semantics = [#tpu.dimension_semantics<parallel>, #tpu.dimension_semantics<parallel>, #tpu.dimension_semantics<arbitrary>], iteration_bounds = array<i64: 1, 1, 1>, scalar_prefetch = 0 : i64, scratch_operands = 1 : i64, tpu.core_type = #tpu.core_type<tc>, window_params = [{transform_indices = @transform_0, window_bounds = array<i64: 128, 72>}, {transform_indices = @transform_1, window_bounds = array<i64: 72, 128>}, {transform_indices = @transform_2, window_bounds = array<i64: 1, 128>}, {transform_indices = @transform_3, window_bounds = array<i64: 128, 128>}]} {
    %c0_i32 = arith.constant 0 : i32
    %0 = arith.cmpi eq, %arg2, %c0_i32 : i32
    %1 = arith.extui %0 : i1 to i32
    %c0_i32_0 = arith.constant 0 : i32
    %2 = arith.cmpi ne, %1, %c0_i32_0 : i32
    scf.if %2 {
      %cst_10 = arith.constant 0.000000e+00 : f32
      %12 = vector.broadcast %cst_10 : f32 to vector<128x128xf32>
      %c0_11 = arith.constant 0 : index
      %c0_12 = arith.constant 0 : index
      %13 = vector.load %arg7[%c0_11, %c0_12] : memref<128x128xf32, #tpu.memory_space<vmem>>, vector<128x128xf32>
      tpu.vector_store %arg7[%c0_11, %c0_12], %12 {strides = array<i32>} : memref<128x128xf32, #tpu.memory_space<vmem>>, vector<128x128xf32>,
    } else {
    }
    %c0 = arith.constant 0 : index
    %c0_1 = arith.constant 0 : index
    %3 = vector.load %arg7[%c0, %c0_1] : memref<128x128xf32, #tpu.memory_space<vmem>>, vector<128x128xf32>
    %c0_2 = arith.constant 0 : index
    %c0_3 = arith.constant 0 : index
    %4 = vector.load %arg3[%c0_2, %c0_3] : memref<128x72xbf16, #tpu.memory_space<vmem>>, vector<128x72xbf16>
    %c0_4 = arith.constant 0 : index
    %c0_5 = arith.constant 0 : index
    %5 = vector.load %arg4[%c0_4, %c0_5] : memref<72x128xbf16, #tpu.memory_space<vmem>>, vector<72x128xbf16>
    %cst = arith.constant dense<0.000000e+00> : vector<128x128xf32>
    %6 = tpu.matmul %4, %5, %cst {dimension_numbers = #tpu.dot_dimension_numbers<[1], [0], [0], [1], [0, 0, 1, 1], [], []>} : vector<128x72xbf16>, vector<72x128xbf16>, vector<128x128xf32> -> vector<128x128xf32>
    %7 = arith.addf %3, %6 : vector<128x128xf32>
    %c0_6 = arith.constant 0 : index
    %c0_7 = arith.constant 0 : index
    %8 = vector.load %arg7[%c0_6, %c0_7] : memref<128x128xf32, #tpu.memory_space<vmem>>, vector<128x128xf32>
    tpu.vector_store %arg7[%c0_6, %c0_7], %7 {strides = array<i32>} : memref<128x128xf32, #tpu.memory_space<vmem>>, vector<128x128xf32>,
    %c0_i32_8 = arith.constant 0 : i32
    %9 = arith.cmpi eq, %arg2, %c0_i32_8 : i32
    %10 = arith.extui %9 : i1 to i32
    %c0_i32_9 = arith.constant 0 : i32
    %11 = arith.cmpi ne, %10, %c0_i32_9 : i32
    scf.if %11 {
      %c0_10 = arith.constant 0 : index
      %c0_11 = arith.constant 0 : index
      %12 = vector.load %arg7[%c0_10, %c0_11] : memref<128x128xf32, #tpu.memory_space<vmem>>, vector<128x128xf32>
      %c0_12 = arith.constant 0 : index
      %c0_13 = arith.constant 0 : index
      %13 = vector.load %arg5[%c0_12, %c0_13] : memref<1x128xf32, #tpu.memory_space<vmem>>, vector<1x128xf32>
      %14 = vector.broadcast %13 : vector<1x128xf32> to vector<128x128xf32>
      %15 = arith.addf %12, %14 : vector<128x128xf32>
      %16 = arith.truncf %15 : vector<128x128xf32> to vector<128x128xbf16>
      %c0_14 = arith.constant 0 : index
      %c0_15 = arith.constant 0 : index
      %17 = vector.load %arg6[%c0_14, %c0_15] : memref<128x128xbf16, #tpu.memory_space<vmem>>, vector<128x128xbf16>
      tpu.vector_store %arg6[%c0_14, %c0_15], %16 {strides = array<i32>} : memref<128x128xbf16, #tpu.memory_space<vmem>>, vector<128x128xbf16>,
    } else {
    }
    return
  }
  func.func @transform_0(%arg0: i32, %arg1: i32, %arg2: i32) -> (i32, i32) {
    %c0_i32 = arith.constant 0 : i32
    return %arg0, %arg2 : i32, i32
  }
  func.func @transform_1(%arg0: i32, %arg1: i32, %arg2: i32) -> (i32, i32) {
    %c0_i32 = arith.constant 0 : i32
    return %arg2, %arg1 : i32, i32
  }
  func.func @transform_2(%arg0: i32, %arg1: i32, %arg2: i32) -> (i32, i32) {
    %c0_i32 = arith.constant 0 : i32
    %c0_i32_0 = arith.constant 0 : i32
    return %c0_i32, %arg1 : i32, i32
  }
  func.func @transform_3(%arg0: i32, %arg1: i32, %arg2: i32) -> (i32, i32) {
    %c0_i32 = arith.constant 0 : i32
    return %arg0, %arg1 : i32, i32
  }
}

module attributes {stable_mosaic.version = 11 : i64} {
  func.func @_conv_res_kernel(%arg0: i32, %arg1: i32, %arg2: i32, %arg3: memref<128x144xbf16, #tpu.memory_space<vmem>>, %arg4: memref<144x128xbf16, #tpu.memory_space<vmem>>, %arg5: memref<1x128xf32, #tpu.memory_space<vmem>>, %arg6: memref<128x128xbf16, #tpu.memory_space<vmem>>, %arg7: memref<1x128xf32, #tpu.memory_space<vmem>>, %arg8: memref<1x128xf32, #tpu.memory_space<vmem>>, %arg9: memref<128x128xbf16, #tpu.memory_space<vmem>>, %arg10: memref<128x128xf32, #tpu.memory_space<vmem>>) attributes {dimension_semantics = [#tpu.dimension_semantics<parallel>, #tpu.dimension_semantics<parallel>, #tpu.dimension_semantics<arbitrary>], iteration_bounds = array<i64: 1, 1, 1>, scalar_prefetch = 0 : i64, scratch_operands = 1 : i64, tpu.core_type = #tpu.core_type<tc>, window_params = [{transform_indices = @transform_0, window_bounds = array<i64: 128, 144>}, {transform_indices = @transform_1, window_bounds = array<i64: 144, 128>}, {transform_indices = @transform_2, window_bounds = array<i64: 1, 128>}, {transform_indices = @transform_3, window_bounds = array<i64: 128, 128>}, {transform_indices = @transform_4, window_bounds = array<i64: 1, 128>}, {transform_indices = @transform_5, window_bounds = array<i64: 1, 128>}, {transform_indices = @transform_6, window_bounds = array<i64: 128, 128>}]} {
    %c0_i32 = arith.constant 0 : i32
    %0 = arith.cmpi eq, %arg2, %c0_i32 : i32
    %1 = arith.extui %0 : i1 to i32
    %c0_i32_0 = arith.constant 0 : i32
    %2 = arith.cmpi ne, %1, %c0_i32_0 : i32
    scf.if %2 {
      %cst_10 = arith.constant 0.000000e+00 : f32
      %12 = vector.broadcast %cst_10 : f32 to vector<128x128xf32>
      %c0_11 = arith.constant 0 : index
      %c0_12 = arith.constant 0 : index
      %13 = vector.load %arg10[%c0_11, %c0_12] : memref<128x128xf32, #tpu.memory_space<vmem>>, vector<128x128xf32>
      tpu.vector_store %arg10[%c0_11, %c0_12], %12 {strides = array<i32>} : memref<128x128xf32, #tpu.memory_space<vmem>>, vector<128x128xf32>,
    } else {
    }
    %c0 = arith.constant 0 : index
    %c0_1 = arith.constant 0 : index
    %3 = vector.load %arg10[%c0, %c0_1] : memref<128x128xf32, #tpu.memory_space<vmem>>, vector<128x128xf32>
    %c0_2 = arith.constant 0 : index
    %c0_3 = arith.constant 0 : index
    %4 = vector.load %arg3[%c0_2, %c0_3] : memref<128x144xbf16, #tpu.memory_space<vmem>>, vector<128x144xbf16>
    %c0_4 = arith.constant 0 : index
    %c0_5 = arith.constant 0 : index
    %5 = vector.load %arg4[%c0_4, %c0_5] : memref<144x128xbf16, #tpu.memory_space<vmem>>, vector<144x128xbf16>
    %cst = arith.constant dense<0.000000e+00> : vector<128x128xf32>
    %6 = tpu.matmul %4, %5, %cst {dimension_numbers = #tpu.dot_dimension_numbers<[1], [0], [0], [1], [0, 0, 1, 1], [], []>} : vector<128x144xbf16>, vector<144x128xbf16>, vector<128x128xf32> -> vector<128x128xf32>
    %7 = arith.addf %3, %6 : vector<128x128xf32>
    %c0_6 = arith.constant 0 : index
    %c0_7 = arith.constant 0 : index
    %8 = vector.load %arg10[%c0_6, %c0_7] : memref<128x128xf32, #tpu.memory_space<vmem>>, vector<128x128xf32>
    tpu.vector_store %arg10[%c0_6, %c0_7], %7 {strides = array<i32>} : memref<128x128xf32, #tpu.memory_space<vmem>>, vector<128x128xf32>,
    %c0_i32_8 = arith.constant 0 : i32
    %9 = arith.cmpi eq, %arg2, %c0_i32_8 : i32
    %10 = arith.extui %9 : i1 to i32
    %c0_i32_9 = arith.constant 0 : i32
    %11 = arith.cmpi ne, %10, %c0_i32_9 : i32
    scf.if %11 {
      %c0_10 = arith.constant 0 : index
      %c0_11 = arith.constant 0 : index
      %12 = vector.load %arg10[%c0_10, %c0_11] : memref<128x128xf32, #tpu.memory_space<vmem>>, vector<128x128xf32>
      %c0_12 = arith.constant 0 : index
      %c0_13 = arith.constant 0 : index
      %13 = vector.load %arg5[%c0_12, %c0_13] : memref<1x128xf32, #tpu.memory_space<vmem>>, vector<1x128xf32>
      %14 = vector.broadcast %13 : vector<1x128xf32> to vector<128x128xf32>
      %15 = arith.addf %12, %14 : vector<128x128xf32>
      %c0_14 = arith.constant 0 : index
      %c0_15 = arith.constant 0 : index
      %16 = vector.load %arg6[%c0_14, %c0_15] : memref<128x128xbf16, #tpu.memory_space<vmem>>, vector<128x128xbf16>
      %17 = arith.extf %16 : vector<128x128xbf16> to vector<128x128xf32>
      %c0_16 = arith.constant 0 : index
      %c0_17 = arith.constant 0 : index
      %18 = vector.load %arg7[%c0_16, %c0_17] : memref<1x128xf32, #tpu.memory_space<vmem>>, vector<1x128xf32>
      %19 = vector.broadcast %18 : vector<1x128xf32> to vector<128x128xf32>
      %20 = arith.mulf %17, %19 : vector<128x128xf32>
      %21 = arith.addf %15, %20 : vector<128x128xf32>
      %c0_18 = arith.constant 0 : index
      %c0_19 = arith.constant 0 : index
      %22 = vector.load %arg8[%c0_18, %c0_19] : memref<1x128xf32, #tpu.memory_space<vmem>>, vector<1x128xf32>
      %23 = vector.broadcast %22 : vector<1x128xf32> to vector<128x128xf32>
      %24 = arith.addf %21, %23 : vector<128x128xf32>
      %25 = arith.truncf %24 : vector<128x128xf32> to vector<128x128xbf16>
      %c0_20 = arith.constant 0 : index
      %c0_21 = arith.constant 0 : index
      %26 = vector.load %arg9[%c0_20, %c0_21] : memref<128x128xbf16, #tpu.memory_space<vmem>>, vector<128x128xbf16>
      tpu.vector_store %arg9[%c0_20, %c0_21], %25 {strides = array<i32>} : memref<128x128xbf16, #tpu.memory_space<vmem>>, vector<128x128xbf16>,
    } else {
    }
    return
  }
  func.func @transform_0(%arg0: i32, %arg1: i32, %arg2: i32) -> (i32, i32) {
    %c0_i32 = arith.constant 0 : i32
    return %arg0, %arg2 : i32, i32
  }
  func.func @transform_1(%arg0: i32, %arg1: i32, %arg2: i32) -> (i32, i32) {
    %c0_i32 = arith.constant 0 : i32
    return %arg2, %arg1 : i32, i32
  }
  func.func @transform_2(%arg0: i32, %arg1: i32, %arg2: i32) -> (i32, i32) {
    %c0_i32 = arith.constant 0 : i32
    %c0_i32_0 = arith.constant 0 : i32
    return %c0_i32, %arg1 : i32, i32
  }
  func.func @transform_3(%arg0: i32, %arg1: i32, %arg2: i32) -> (i32, i32) {
    %c0_i32 = arith.constant 0 : i32
    return %arg0, %arg1 : i32, i32
  }
  func.func @transform_4(%arg0: i32, %arg1: i32, %arg2: i32) -> (i32, i32) {
    %c0_i32 = arith.constant 0 : i32
    %c0_i32_0 = arith.constant 0 : i32
    return %c0_i32, %arg1 : i32, i32
  }
  func.func @transform_5(%arg0: i32, %arg1: i32, %arg2: i32) -> (i32, i32) {
    %c0_i32 = arith.constant 0 : i32
    %c0_i32_0 = arith.constant 0 : i32
    return %c0_i32, %arg1 : i32, i32
  }
  func.func @transform_6(%arg0: i32, %arg1: i32, %arg2: i32) -> (i32, i32) {
    %c0_i32 = arith.constant 0 : i32
    return %arg0, %arg1 : i32, i32
  }
}

module attributes {stable_mosaic.version = 11 : i64} {
  func.func @_conv_kernel(%arg0: i32, %arg1: i32, %arg2: i32, %arg3: memref<32x144xbf16, #tpu.memory_space<vmem>>, %arg4: memref<144x128xbf16, #tpu.memory_space<vmem>>, %arg5: memref<1x128xf32, #tpu.memory_space<vmem>>, %arg6: memref<32x128xbf16, #tpu.memory_space<vmem>>, %arg7: memref<32x128xf32, #tpu.memory_space<vmem>>) attributes {dimension_semantics = [#tpu.dimension_semantics<parallel>, #tpu.dimension_semantics<parallel>, #tpu.dimension_semantics<arbitrary>], iteration_bounds = array<i64: 1, 1, 1>, scalar_prefetch = 0 : i64, scratch_operands = 1 : i64, tpu.core_type = #tpu.core_type<tc>, window_params = [{transform_indices = @transform_0, window_bounds = array<i64: 32, 144>}, {transform_indices = @transform_1, window_bounds = array<i64: 144, 128>}, {transform_indices = @transform_2, window_bounds = array<i64: 1, 128>}, {transform_indices = @transform_3, window_bounds = array<i64: 32, 128>}]} {
    %c0_i32 = arith.constant 0 : i32
    %0 = arith.cmpi eq, %arg2, %c0_i32 : i32
    %1 = arith.extui %0 : i1 to i32
    %c0_i32_0 = arith.constant 0 : i32
    %2 = arith.cmpi ne, %1, %c0_i32_0 : i32
    scf.if %2 {
      %cst_10 = arith.constant 0.000000e+00 : f32
      %12 = vector.broadcast %cst_10 : f32 to vector<32x128xf32>
      %c0_11 = arith.constant 0 : index
      %c0_12 = arith.constant 0 : index
      %13 = vector.load %arg7[%c0_11, %c0_12] : memref<32x128xf32, #tpu.memory_space<vmem>>, vector<32x128xf32>
      tpu.vector_store %arg7[%c0_11, %c0_12], %12 {strides = array<i32>} : memref<32x128xf32, #tpu.memory_space<vmem>>, vector<32x128xf32>,
    } else {
    }
    %c0 = arith.constant 0 : index
    %c0_1 = arith.constant 0 : index
    %3 = vector.load %arg7[%c0, %c0_1] : memref<32x128xf32, #tpu.memory_space<vmem>>, vector<32x128xf32>
    %c0_2 = arith.constant 0 : index
    %c0_3 = arith.constant 0 : index
    %4 = vector.load %arg3[%c0_2, %c0_3] : memref<32x144xbf16, #tpu.memory_space<vmem>>, vector<32x144xbf16>
    %c0_4 = arith.constant 0 : index
    %c0_5 = arith.constant 0 : index
    %5 = vector.load %arg4[%c0_4, %c0_5] : memref<144x128xbf16, #tpu.memory_space<vmem>>, vector<144x128xbf16>
    %cst = arith.constant dense<0.000000e+00> : vector<32x128xf32>
    %6 = tpu.matmul %4, %5, %cst {dimension_numbers = #tpu.dot_dimension_numbers<[1], [0], [0], [1], [0, 0, 1, 1], [], []>} : vector<32x144xbf16>, vector<144x128xbf16>, vector<32x128xf32> -> vector<32x128xf32>
    %7 = arith.addf %3, %6 : vector<32x128xf32>
    %c0_6 = arith.constant 0 : index
    %c0_7 = arith.constant 0 : index
    %8 = vector.load %arg7[%c0_6, %c0_7] : memref<32x128xf32, #tpu.memory_space<vmem>>, vector<32x128xf32>
    tpu.vector_store %arg7[%c0_6, %c0_7], %7 {strides = array<i32>} : memref<32x128xf32, #tpu.memory_space<vmem>>, vector<32x128xf32>,
    %c0_i32_8 = arith.constant 0 : i32
    %9 = arith.cmpi eq, %arg2, %c0_i32_8 : i32
    %10 = arith.extui %9 : i1 to i32
    %c0_i32_9 = arith.constant 0 : i32
    %11 = arith.cmpi ne, %10, %c0_i32_9 : i32
    scf.if %11 {
      %c0_10 = arith.constant 0 : index
      %c0_11 = arith.constant 0 : index
      %12 = vector.load %arg7[%c0_10, %c0_11] : memref<32x128xf32, #tpu.memory_space<vmem>>, vector<32x128xf32>
      %c0_12 = arith.constant 0 : index
      %c0_13 = arith.constant 0 : index
      %13 = vector.load %arg5[%c0_12, %c0_13] : memref<1x128xf32, #tpu.memory_space<vmem>>, vector<1x128xf32>
      %14 = vector.broadcast %13 : vector<1x128xf32> to vector<32x128xf32>
      %15 = arith.addf %12, %14 : vector<32x128xf32>
      %16 = arith.truncf %15 : vector<32x128xf32> to vector<32x128xbf16>
      %c0_14 = arith.constant 0 : index
      %c0_15 = arith.constant 0 : index
      %17 = vector.load %arg6[%c0_14, %c0_15] : memref<32x128xbf16, #tpu.memory_space<vmem>>, vector<32x128xbf16>
      tpu.vector_store %arg6[%c0_14, %c0_15], %16 {strides = array<i32>} : memref<32x128xbf16, #tpu.memory_space<vmem>>, vector<32x128xbf16>,
    } else {
    }
    return
  }
  func.func @transform_0(%arg0: i32, %arg1: i32, %arg2: i32) -> (i32, i32) {
    %c0_i32 = arith.constant 0 : i32
    return %arg0, %arg2 : i32, i32
  }
  func.func @transform_1(%arg0: i32, %arg1: i32, %arg2: i32) -> (i32, i32) {
    %c0_i32 = arith.constant 0 : i32
    return %arg2, %arg1 : i32, i32
  }
  func.func @transform_2(%arg0: i32, %arg1: i32, %arg2: i32) -> (i32, i32) {
    %c0_i32 = arith.constant 0 : i32
    %c0_i32_0 = arith.constant 0 : i32
    return %c0_i32, %arg1 : i32, i32
  }
  func.func @transform_3(%arg0: i32, %arg1: i32, %arg2: i32) -> (i32, i32) {
    %c0_i32 = arith.constant 0 : i32
    return %arg0, %arg1 : i32, i32
  }
}

module attributes {stable_mosaic.version = 11 : i64} {
  func.func @_conv_res_kernel(%arg0: i32, %arg1: i32, %arg2: i32, %arg3: memref<32x288xbf16, #tpu.memory_space<vmem>>, %arg4: memref<288x128xbf16, #tpu.memory_space<vmem>>, %arg5: memref<1x128xf32, #tpu.memory_space<vmem>>, %arg6: memref<32x128xbf16, #tpu.memory_space<vmem>>, %arg7: memref<1x128xf32, #tpu.memory_space<vmem>>, %arg8: memref<1x128xf32, #tpu.memory_space<vmem>>, %arg9: memref<32x128xbf16, #tpu.memory_space<vmem>>, %arg10: memref<32x128xf32, #tpu.memory_space<vmem>>) attributes {dimension_semantics = [#tpu.dimension_semantics<parallel>, #tpu.dimension_semantics<parallel>, #tpu.dimension_semantics<arbitrary>], iteration_bounds = array<i64: 1, 1, 1>, scalar_prefetch = 0 : i64, scratch_operands = 1 : i64, tpu.core_type = #tpu.core_type<tc>, window_params = [{transform_indices = @transform_0, window_bounds = array<i64: 32, 288>}, {transform_indices = @transform_1, window_bounds = array<i64: 288, 128>}, {transform_indices = @transform_2, window_bounds = array<i64: 1, 128>}, {transform_indices = @transform_3, window_bounds = array<i64: 32, 128>}, {transform_indices = @transform_4, window_bounds = array<i64: 1, 128>}, {transform_indices = @transform_5, window_bounds = array<i64: 1, 128>}, {transform_indices = @transform_6, window_bounds = array<i64: 32, 128>}]} {
    %c0_i32 = arith.constant 0 : i32
    %0 = arith.cmpi eq, %arg2, %c0_i32 : i32
    %1 = arith.extui %0 : i1 to i32
    %c0_i32_0 = arith.constant 0 : i32
    %2 = arith.cmpi ne, %1, %c0_i32_0 : i32
    scf.if %2 {
      %cst_10 = arith.constant 0.000000e+00 : f32
      %12 = vector.broadcast %cst_10 : f32 to vector<32x128xf32>
      %c0_11 = arith.constant 0 : index
      %c0_12 = arith.constant 0 : index
      %13 = vector.load %arg10[%c0_11, %c0_12] : memref<32x128xf32, #tpu.memory_space<vmem>>, vector<32x128xf32>
      tpu.vector_store %arg10[%c0_11, %c0_12], %12 {strides = array<i32>} : memref<32x128xf32, #tpu.memory_space<vmem>>, vector<32x128xf32>,
    } else {
    }
    %c0 = arith.constant 0 : index
    %c0_1 = arith.constant 0 : index
    %3 = vector.load %arg10[%c0, %c0_1] : memref<32x128xf32, #tpu.memory_space<vmem>>, vector<32x128xf32>
    %c0_2 = arith.constant 0 : index
    %c0_3 = arith.constant 0 : index
    %4 = vector.load %arg3[%c0_2, %c0_3] : memref<32x288xbf16, #tpu.memory_space<vmem>>, vector<32x288xbf16>
    %c0_4 = arith.constant 0 : index
    %c0_5 = arith.constant 0 : index
    %5 = vector.load %arg4[%c0_4, %c0_5] : memref<288x128xbf16, #tpu.memory_space<vmem>>, vector<288x128xbf16>
    %cst = arith.constant dense<0.000000e+00> : vector<32x128xf32>
    %6 = tpu.matmul %4, %5, %cst {dimension_numbers = #tpu.dot_dimension_numbers<[1], [0], [0], [1], [0, 0, 1, 1], [], []>} : vector<32x288xbf16>, vector<288x128xbf16>, vector<32x128xf32> -> vector<32x128xf32>
    %7 = arith.addf %3, %6 : vector<32x128xf32>
    %c0_6 = arith.constant 0 : index
    %c0_7 = arith.constant 0 : index
    %8 = vector.load %arg10[%c0_6, %c0_7] : memref<32x128xf32, #tpu.memory_space<vmem>>, vector<32x128xf32>
    tpu.vector_store %arg10[%c0_6, %c0_7], %7 {strides = array<i32>} : memref<32x128xf32, #tpu.memory_space<vmem>>, vector<32x128xf32>,
    %c0_i32_8 = arith.constant 0 : i32
    %9 = arith.cmpi eq, %arg2, %c0_i32_8 : i32
    %10 = arith.extui %9 : i1 to i32
    %c0_i32_9 = arith.constant 0 : i32
    %11 = arith.cmpi ne, %10, %c0_i32_9 : i32
    scf.if %11 {
      %c0_10 = arith.constant 0 : index
      %c0_11 = arith.constant 0 : index
      %12 = vector.load %arg10[%c0_10, %c0_11] : memref<32x128xf32, #tpu.memory_space<vmem>>, vector<32x128xf32>
      %c0_12 = arith.constant 0 : index
      %c0_13 = arith.constant 0 : index
      %13 = vector.load %arg5[%c0_12, %c0_13] : memref<1x128xf32, #tpu.memory_space<vmem>>, vector<1x128xf32>
      %14 = vector.broadcast %13 : vector<1x128xf32> to vector<32x128xf32>
      %15 = arith.addf %12, %14 : vector<32x128xf32>
      %c0_14 = arith.constant 0 : index
      %c0_15 = arith.constant 0 : index
      %16 = vector.load %arg6[%c0_14, %c0_15] : memref<32x128xbf16, #tpu.memory_space<vmem>>, vector<32x128xbf16>
      %17 = arith.extf %16 : vector<32x128xbf16> to vector<32x128xf32>
      %c0_16 = arith.constant 0 : index
      %c0_17 = arith.constant 0 : index
      %18 = vector.load %arg7[%c0_16, %c0_17] : memref<1x128xf32, #tpu.memory_space<vmem>>, vector<1x128xf32>
      %19 = vector.broadcast %18 : vector<1x128xf32> to vector<32x128xf32>
      %20 = arith.mulf %17, %19 : vector<32x128xf32>
      %21 = arith.addf %15, %20 : vector<32x128xf32>
      %c0_18 = arith.constant 0 : index
      %c0_19 = arith.constant 0 : index
      %22 = vector.load %arg8[%c0_18, %c0_19] : memref<1x128xf32, #tpu.memory_space<vmem>>, vector<1x128xf32>
      %23 = vector.broadcast %22 : vector<1x128xf32> to vector<32x128xf32>
      %24 = arith.addf %21, %23 : vector<32x128xf32>
      %25 = arith.truncf %24 : vector<32x128xf32> to vector<32x128xbf16>
      %c0_20 = arith.constant 0 : index
      %c0_21 = arith.constant 0 : index
      %26 = vector.load %arg9[%c0_20, %c0_21] : memref<32x128xbf16, #tpu.memory_space<vmem>>, vector<32x128xbf16>
      tpu.vector_store %arg9[%c0_20, %c0_21], %25 {strides = array<i32>} : memref<32x128xbf16, #tpu.memory_space<vmem>>, vector<32x128xbf16>,
    } else {
    }
    return
  }
  func.func @transform_0(%arg0: i32, %arg1: i32, %arg2: i32) -> (i32, i32) {
    %c0_i32 = arith.constant 0 : i32
    return %arg0, %arg2 : i32, i32
  }
  func.func @transform_1(%arg0: i32, %arg1: i32, %arg2: i32) -> (i32, i32) {
    %c0_i32 = arith.constant 0 : i32
    return %arg2, %arg1 : i32, i32
  }
  func.func @transform_2(%arg0: i32, %arg1: i32, %arg2: i32) -> (i32, i32) {
    %c0_i32 = arith.constant 0 : i32
    %c0_i32_0 = arith.constant 0 : i32
    return %c0_i32, %arg1 : i32, i32
  }
  func.func @transform_3(%arg0: i32, %arg1: i32, %arg2: i32) -> (i32, i32) {
    %c0_i32 = arith.constant 0 : i32
    return %arg0, %arg1 : i32, i32
  }
  func.func @transform_4(%arg0: i32, %arg1: i32, %arg2: i32) -> (i32, i32) {
    %c0_i32 = arith.constant 0 : i32
    %c0_i32_0 = arith.constant 0 : i32
    return %c0_i32, %arg1 : i32, i32
  }
  func.func @transform_5(%arg0: i32, %arg1: i32, %arg2: i32) -> (i32, i32) {
    %c0_i32 = arith.constant 0 : i32
    %c0_i32_0 = arith.constant 0 : i32
    return %c0_i32, %arg1 : i32, i32
  }
  func.func @transform_6(%arg0: i32, %arg1: i32, %arg2: i32) -> (i32, i32) {
    %c0_i32 = arith.constant 0 : i32
    return %arg0, %arg1 : i32, i32
  }
}

module attributes {stable_mosaic.version = 11 : i64} {
  func.func @_conv_kernel(%arg0: i32, %arg1: i32, %arg2: i32, %arg3: memref<8x288xbf16, #tpu.memory_space<vmem>>, %arg4: memref<288x128xbf16, #tpu.memory_space<vmem>>, %arg5: memref<1x128xf32, #tpu.memory_space<vmem>>, %arg6: memref<8x128xbf16, #tpu.memory_space<vmem>>, %arg7: memref<8x128xf32, #tpu.memory_space<vmem>>) attributes {dimension_semantics = [#tpu.dimension_semantics<parallel>, #tpu.dimension_semantics<parallel>, #tpu.dimension_semantics<arbitrary>], iteration_bounds = array<i64: 1, 1, 1>, scalar_prefetch = 0 : i64, scratch_operands = 1 : i64, tpu.core_type = #tpu.core_type<tc>, window_params = [{transform_indices = @transform_0, window_bounds = array<i64: 8, 288>}, {transform_indices = @transform_1, window_bounds = array<i64: 288, 128>}, {transform_indices = @transform_2, window_bounds = array<i64: 1, 128>}, {transform_indices = @transform_3, window_bounds = array<i64: 8, 128>}]} {
    %c0_i32 = arith.constant 0 : i32
    %0 = arith.cmpi eq, %arg2, %c0_i32 : i32
    %1 = arith.extui %0 : i1 to i32
    %c0_i32_0 = arith.constant 0 : i32
    %2 = arith.cmpi ne, %1, %c0_i32_0 : i32
    scf.if %2 {
      %cst_10 = arith.constant 0.000000e+00 : f32
      %12 = vector.broadcast %cst_10 : f32 to vector<8x128xf32>
      %c0_11 = arith.constant 0 : index
      %c0_12 = arith.constant 0 : index
      %13 = vector.load %arg7[%c0_11, %c0_12] : memref<8x128xf32, #tpu.memory_space<vmem>>, vector<8x128xf32>
      tpu.vector_store %arg7[%c0_11, %c0_12], %12 {strides = array<i32>} : memref<8x128xf32, #tpu.memory_space<vmem>>, vector<8x128xf32>,
    } else {
    }
    %c0 = arith.constant 0 : index
    %c0_1 = arith.constant 0 : index
    %3 = vector.load %arg7[%c0, %c0_1] : memref<8x128xf32, #tpu.memory_space<vmem>>, vector<8x128xf32>
    %c0_2 = arith.constant 0 : index
    %c0_3 = arith.constant 0 : index
    %4 = vector.load %arg3[%c0_2, %c0_3] : memref<8x288xbf16, #tpu.memory_space<vmem>>, vector<8x288xbf16>
    %c0_4 = arith.constant 0 : index
    %c0_5 = arith.constant 0 : index
    %5 = vector.load %arg4[%c0_4, %c0_5] : memref<288x128xbf16, #tpu.memory_space<vmem>>, vector<288x128xbf16>
    %cst = arith.constant dense<0.000000e+00> : vector<8x128xf32>
    %6 = tpu.matmul %4, %5, %cst {dimension_numbers = #tpu.dot_dimension_numbers<[1], [0], [0], [1], [0, 0, 1, 1], [], []>} : vector<8x288xbf16>, vector<288x128xbf16>, vector<8x128xf32> -> vector<8x128xf32>
    %7 = arith.addf %3, %6 : vector<8x128xf32>
    %c0_6 = arith.constant 0 : index
    %c0_7 = arith.constant 0 : index
    %8 = vector.load %arg7[%c0_6, %c0_7] : memref<8x128xf32, #tpu.memory_space<vmem>>, vector<8x128xf32>
    tpu.vector_store %arg7[%c0_6, %c0_7], %7 {strides = array<i32>} : memref<8x128xf32, #tpu.memory_space<vmem>>, vector<8x128xf32>,
    %c0_i32_8 = arith.constant 0 : i32
    %9 = arith.cmpi eq, %arg2, %c0_i32_8 : i32
    %10 = arith.extui %9 : i1 to i32
    %c0_i32_9 = arith.constant 0 : i32
    %11 = arith.cmpi ne, %10, %c0_i32_9 : i32
    scf.if %11 {
      %c0_10 = arith.constant 0 : index
      %c0_11 = arith.constant 0 : index
      %12 = vector.load %arg7[%c0_10, %c0_11] : memref<8x128xf32, #tpu.memory_space<vmem>>, vector<8x128xf32>
      %c0_12 = arith.constant 0 : index
      %c0_13 = arith.constant 0 : index
      %13 = vector.load %arg5[%c0_12, %c0_13] : memref<1x128xf32, #tpu.memory_space<vmem>>, vector<1x128xf32>
      %14 = vector.broadcast %13 : vector<1x128xf32> to vector<8x128xf32>
      %15 = arith.addf %12, %14 : vector<8x128xf32>
      %16 = arith.truncf %15 : vector<8x128xf32> to vector<8x128xbf16>
      %c0_14 = arith.constant 0 : index
      %c0_15 = arith.constant 0 : index
      %17 = vector.load %arg6[%c0_14, %c0_15] : memref<8x128xbf16, #tpu.memory_space<vmem>>, vector<8x128xbf16>
      tpu.vector_store %arg6[%c0_14, %c0_15], %16 {strides = array<i32>} : memref<8x128xbf16, #tpu.memory_space<vmem>>, vector<8x128xbf16>,
    } else {
    }
    return
  }
  func.func @transform_0(%arg0: i32, %arg1: i32, %arg2: i32) -> (i32, i32) {
    %c0_i32 = arith.constant 0 : i32
    return %arg0, %arg2 : i32, i32
  }
  func.func @transform_1(%arg0: i32, %arg1: i32, %arg2: i32) -> (i32, i32) {
    %c0_i32 = arith.constant 0 : i32
    return %arg2, %arg1 : i32, i32
  }
  func.func @transform_2(%arg0: i32, %arg1: i32, %arg2: i32) -> (i32, i32) {
    %c0_i32 = arith.constant 0 : i32
    %c0_i32_0 = arith.constant 0 : i32
    return %c0_i32, %arg1 : i32, i32
  }
  func.func @transform_3(%arg0: i32, %arg1: i32, %arg2: i32) -> (i32, i32) {
    %c0_i32 = arith.constant 0 : i32
    return %arg0, %arg1 : i32, i32
  }
}

module attributes {stable_mosaic.version = 11 : i64} {
  func.func @_upsample_kernel(%arg0: i32, %arg1: memref<4x2x64xbf16, #tpu.memory_space<vmem>>, %arg2: memref<2x64x128xbf16, #tpu.memory_space<vmem>>, %arg3: memref<1x128xf32, #tpu.memory_space<vmem>>, %arg4: memref<4x2x2x128xbf16, #tpu.memory_space<vmem>>) attributes {dimension_semantics = [#tpu.dimension_semantics<parallel>], iteration_bounds = array<i64: 1>, scalar_prefetch = 0 : i64, scratch_operands = 0 : i64, tpu.core_type = #tpu.core_type<tc>, window_params = [{transform_indices = @transform_0, window_bounds = array<i64: 4, 2, 64>}, {pipeline_mode = #tpu.pipeline_mode<synchronous>, transform_indices = @transform_1, window_bounds = array<i64: 2, 64, 128>}, {pipeline_mode = #tpu.pipeline_mode<synchronous>, transform_indices = @transform_2, window_bounds = array<i64: 1, 128>}, {transform_indices = @transform_3, window_bounds = array<i64: 4, 2, 2, 128>}]} {
    %c0 = arith.constant 0 : index
    %c0_0 = arith.constant 0 : index
    %c0_1 = arith.constant 0 : index
    %0 = vector.load %arg1[%c0, %c0_0, %c0_1] : memref<4x2x64xbf16, #tpu.memory_space<vmem>>, vector<4x2x64xbf16>
    %1 = vector.shape_cast %0 : vector<4x2x64xbf16> to vector<8x64xbf16>
    %c0_2 = arith.constant 0 : index
    %c0_3 = arith.constant 0 : index
    %c0_4 = arith.constant 0 : index
    %2 = vector.load %arg2[%c0_2, %c0_3, %c0_4] : memref<2x64x128xbf16, #tpu.memory_space<vmem>>, vector<1x64x128xbf16>
    %3 = vector.shape_cast %2 : vector<1x64x128xbf16> to vector<64x128xbf16>
    %cst = arith.constant dense<0.000000e+00> : vector<8x128xf32>
    %4 = tpu.matmul %1, %3, %cst {dimension_numbers = #tpu.dot_dimension_numbers<[1], [0], [0], [1], [0, 0, 1, 1], [], []>} : vector<8x64xbf16>, vector<64x128xbf16>, vector<8x128xf32> -> vector<8x128xf32>
    %c0_5 = arith.constant 0 : index
    %c0_6 = arith.constant 0 : index
    %5 = vector.load %arg3[%c0_5, %c0_6] : memref<1x128xf32, #tpu.memory_space<vmem>>, vector<1x128xf32>
    %6 = vector.broadcast %5 : vector<1x128xf32> to vector<8x128xf32>
    %7 = arith.addf %4, %6 : vector<8x128xf32>
    %8 = vector.shape_cast %7 : vector<8x128xf32> to vector<4x2x128xf32>
    %9 = arith.truncf %8 : vector<4x2x128xf32> to vector<4x2x128xbf16>
    %c0_7 = arith.constant 0 : index
    %c0_8 = arith.constant 0 : index
    %c0_9 = arith.constant 0 : index
    %c0_10 = arith.constant 0 : index
    %10 = vector.load %arg4[%c0_7, %c0_8, %c0_9, %c0_10] : memref<4x2x2x128xbf16, #tpu.memory_space<vmem>>, vector<4x1x2x128xbf16>
    %11 = vector.shape_cast %10 : vector<4x1x2x128xbf16> to vector<4x2x128xbf16>
    %12 = vector.shape_cast %9 : vector<4x2x128xbf16> to vector<4x1x2x128xbf16>
    tpu.vector_store %arg4[%c0_7, %c0_8, %c0_9, %c0_10], %12 {strides = array<i32>} : memref<4x2x2x128xbf16, #tpu.memory_space<vmem>>, vector<4x1x2x128xbf16>,
    %c1 = arith.constant 1 : index
    %c0_11 = arith.constant 0 : index
    %c0_12 = arith.constant 0 : index
    %13 = vector.load %arg2[%c1, %c0_11, %c0_12] : memref<2x64x128xbf16, #tpu.memory_space<vmem>>, vector<1x64x128xbf16>
    %14 = vector.shape_cast %13 : vector<1x64x128xbf16> to vector<64x128xbf16>
    %cst_13 = arith.constant dense<0.000000e+00> : vector<8x128xf32>
    %15 = tpu.matmul %1, %14, %cst_13 {dimension_numbers = #tpu.dot_dimension_numbers<[1], [0], [0], [1], [0, 0, 1, 1], [], []>} : vector<8x64xbf16>, vector<64x128xbf16>, vector<8x128xf32> -> vector<8x128xf32>
    %c0_14 = arith.constant 0 : index
    %c0_15 = arith.constant 0 : index
    %16 = vector.load %arg3[%c0_14, %c0_15] : memref<1x128xf32, #tpu.memory_space<vmem>>, vector<1x128xf32>
    %17 = vector.broadcast %16 : vector<1x128xf32> to vector<8x128xf32>
    %18 = arith.addf %15, %17 : vector<8x128xf32>
    %19 = vector.shape_cast %18 : vector<8x128xf32> to vector<4x2x128xf32>
    %20 = arith.truncf %19 : vector<4x2x128xf32> to vector<4x2x128xbf16>
    %c0_16 = arith.constant 0 : index
    %c1_17 = arith.constant 1 : index
    %c0_18 = arith.constant 0 : index
    %c0_19 = arith.constant 0 : index
    %21 = vector.load %arg4[%c0_16, %c1_17, %c0_18, %c0_19] : memref<4x2x2x128xbf16, #tpu.memory_space<vmem>>, vector<4x1x2x128xbf16>
    %22 = vector.shape_cast %21 : vector<4x1x2x128xbf16> to vector<4x2x128xbf16>
    %23 = vector.shape_cast %20 : vector<4x2x128xbf16> to vector<4x1x2x128xbf16>
    tpu.vector_store %arg4[%c0_16, %c1_17, %c0_18, %c0_19], %23 {strides = array<i32>} : memref<4x2x2x128xbf16, #tpu.memory_space<vmem>>, vector<4x1x2x128xbf16>,
    return
  }
  func.func @transform_0(%arg0: i32) -> (i32, i32, i32) {
    %c0_i32 = arith.constant 0 : i32
    %c0_i32_0 = arith.constant 0 : i32
    %c0_i32_1 = arith.constant 0 : i32
    return %arg0, %c0_i32, %c0_i32_0 : i32, i32, i32
  }
  func.func @transform_1(%arg0: i32) -> (i32, i32, i32) {
    %c0_i32 = arith.constant 0 : i32
    %c0_i32_0 = arith.constant 0 : i32
    %c0_i32_1 = arith.constant 0 : i32
    %c0_i32_2 = arith.constant 0 : i32
    return %c0_i32, %c0_i32_0, %c0_i32_1 : i32, i32, i32
  }
  func.func @transform_2(%arg0: i32) -> (i32, i32) {
    %c0_i32 = arith.constant 0 : i32
    %c0_i32_0 = arith.constant 0 : i32
    %c0_i32_1 = arith.constant 0 : i32
    return %c0_i32, %c0_i32_0 : i32, i32
  }
  func.func @transform_3(%arg0: i32) -> (i32, i32, i32, i32) {
    %c0_i32 = arith.constant 0 : i32
    %c0_i32_0 = arith.constant 0 : i32
    %c0_i32_1 = arith.constant 0 : i32
    %c0_i32_2 = arith.constant 0 : i32
    return %arg0, %c0_i32, %c0_i32_0, %c0_i32_1 : i32, i32, i32, i32
  }
}

module attributes {stable_mosaic.version = 11 : i64} {
  func.func @_conv_res_kernel(%arg0: i32, %arg1: i32, %arg2: i32, %arg3: memref<8x576xbf16, #tpu.memory_space<vmem>>, %arg4: memref<576x128xbf16, #tpu.memory_space<vmem>>, %arg5: memref<1x128xf32, #tpu.memory_space<vmem>>, %arg6: memref<8x128xbf16, #tpu.memory_space<vmem>>, %arg7: memref<1x128xf32, #tpu.memory_space<vmem>>, %arg8: memref<1x128xf32, #tpu.memory_space<vmem>>, %arg9: memref<8x128xbf16, #tpu.memory_space<vmem>>, %arg10: memref<8x128xf32, #tpu.memory_space<vmem>>) attributes {dimension_semantics = [#tpu.dimension_semantics<parallel>, #tpu.dimension_semantics<parallel>, #tpu.dimension_semantics<arbitrary>], iteration_bounds = array<i64: 1, 1, 1>, scalar_prefetch = 0 : i64, scratch_operands = 1 : i64, tpu.core_type = #tpu.core_type<tc>, window_params = [{transform_indices = @transform_0, window_bounds = array<i64: 8, 576>}, {transform_indices = @transform_1, window_bounds = array<i64: 576, 128>}, {transform_indices = @transform_2, window_bounds = array<i64: 1, 128>}, {transform_indices = @transform_3, window_bounds = array<i64: 8, 128>}, {transform_indices = @transform_4, window_bounds = array<i64: 1, 128>}, {transform_indices = @transform_5, window_bounds = array<i64: 1, 128>}, {transform_indices = @transform_6, window_bounds = array<i64: 8, 128>}]} {
    %c0_i32 = arith.constant 0 : i32
    %0 = arith.cmpi eq, %arg2, %c0_i32 : i32
    %1 = arith.extui %0 : i1 to i32
    %c0_i32_0 = arith.constant 0 : i32
    %2 = arith.cmpi ne, %1, %c0_i32_0 : i32
    scf.if %2 {
      %cst_10 = arith.constant 0.000000e+00 : f32
      %12 = vector.broadcast %cst_10 : f32 to vector<8x128xf32>
      %c0_11 = arith.constant 0 : index
      %c0_12 = arith.constant 0 : index
      %13 = vector.load %arg10[%c0_11, %c0_12] : memref<8x128xf32, #tpu.memory_space<vmem>>, vector<8x128xf32>
      tpu.vector_store %arg10[%c0_11, %c0_12], %12 {strides = array<i32>} : memref<8x128xf32, #tpu.memory_space<vmem>>, vector<8x128xf32>,
    } else {
    }
    %c0 = arith.constant 0 : index
    %c0_1 = arith.constant 0 : index
    %3 = vector.load %arg10[%c0, %c0_1] : memref<8x128xf32, #tpu.memory_space<vmem>>, vector<8x128xf32>
    %c0_2 = arith.constant 0 : index
    %c0_3 = arith.constant 0 : index
    %4 = vector.load %arg3[%c0_2, %c0_3] : memref<8x576xbf16, #tpu.memory_space<vmem>>, vector<8x576xbf16>
    %c0_4 = arith.constant 0 : index
    %c0_5 = arith.constant 0 : index
    %5 = vector.load %arg4[%c0_4, %c0_5] : memref<576x128xbf16, #tpu.memory_space<vmem>>, vector<576x128xbf16>
    %cst = arith.constant dense<0.000000e+00> : vector<8x128xf32>
    %6 = tpu.matmul %4, %5, %cst {dimension_numbers = #tpu.dot_dimension_numbers<[1], [0], [0], [1], [0, 0, 1, 1], [], []>} : vector<8x576xbf16>, vector<576x128xbf16>, vector<8x128xf32> -> vector<8x128xf32>
    %7 = arith.addf %3, %6 : vector<8x128xf32>
    %c0_6 = arith.constant 0 : index
    %c0_7 = arith.constant 0 : index
    %8 = vector.load %arg10[%c0_6, %c0_7] : memref<8x128xf32, #tpu.memory_space<vmem>>, vector<8x128xf32>
    tpu.vector_store %arg10[%c0_6, %c0_7], %7 {strides = array<i32>} : memref<8x128xf32, #tpu.memory_space<vmem>>, vector<8x128xf32>,
    %c0_i32_8 = arith.constant 0 : i32
    %9 = arith.cmpi eq, %arg2, %c0_i32_8 : i32
    %10 = arith.extui %9 : i1 to i32
    %c0_i32_9 = arith.constant 0 : i32
    %11 = arith.cmpi ne, %10, %c0_i32_9 : i32
    scf.if %11 {
      %c0_10 = arith.constant 0 : index
      %c0_11 = arith.constant 0 : index
      %12 = vector.load %arg10[%c0_10, %c0_11] : memref<8x128xf32, #tpu.memory_space<vmem>>, vector<8x128xf32>
      %c0_12 = arith.constant 0 : index
      %c0_13 = arith.constant 0 : index
      %13 = vector.load %arg5[%c0_12, %c0_13] : memref<1x128xf32, #tpu.memory_space<vmem>>, vector<1x128xf32>
      %14 = vector.broadcast %13 : vector<1x128xf32> to vector<8x128xf32>
      %15 = arith.addf %12, %14 : vector<8x128xf32>
      %c0_14 = arith.constant 0 : index
      %c0_15 = arith.constant 0 : index
      %16 = vector.load %arg6[%c0_14, %c0_15] : memref<8x128xbf16, #tpu.memory_space<vmem>>, vector<8x128xbf16>
      %17 = arith.extf %16 : vector<8x128xbf16> to vector<8x128xf32>
      %c0_16 = arith.constant 0 : index
      %c0_17 = arith.constant 0 : index
      %18 = vector.load %arg7[%c0_16, %c0_17] : memref<1x128xf32, #tpu.memory_space<vmem>>, vector<1x128xf32>
      %19 = vector.broadcast %18 : vector<1x128xf32> to vector<8x128xf32>
      %20 = arith.mulf %17, %19 : vector<8x128xf32>
      %21 = arith.addf %15, %20 : vector<8x128xf32>
      %c0_18 = arith.constant 0 : index
      %c0_19 = arith.constant 0 : index
      %22 = vector.load %arg8[%c0_18, %c0_19] : memref<1x128xf32, #tpu.memory_space<vmem>>, vector<1x128xf32>
      %23 = vector.broadcast %22 : vector<1x128xf32> to vector<8x128xf32>
      %24 = arith.addf %21, %23 : vector<8x128xf32>
      %25 = arith.truncf %24 : vector<8x128xf32> to vector<8x128xbf16>
      %c0_20 = arith.constant 0 : index
      %c0_21 = arith.constant 0 : index
      %26 = vector.load %arg9[%c0_20, %c0_21] : memref<8x128xbf16, #tpu.memory_space<vmem>>, vector<8x128xbf16>
      tpu.vector_store %arg9[%c0_20, %c0_21], %25 {strides = array<i32>} : memref<8x128xbf16, #tpu.memory_space<vmem>>, vector<8x128xbf16>,
    } else {
    }
    return
  }
  func.func @transform_0(%arg0: i32, %arg1: i32, %arg2: i32) -> (i32, i32) {
    %c0_i32 = arith.constant 0 : i32
    return %arg0, %arg2 : i32, i32
  }
  func.func @transform_1(%arg0: i32, %arg1: i32, %arg2: i32) -> (i32, i32) {
    %c0_i32 = arith.constant 0 : i32
    return %arg2, %arg1 : i32, i32
  }
  func.func @transform_2(%arg0: i32, %arg1: i32, %arg2: i32) -> (i32, i32) {
    %c0_i32 = arith.constant 0 : i32
    %c0_i32_0 = arith.constant 0 : i32
    return %c0_i32, %arg1 : i32, i32
  }
  func.func @transform_3(%arg0: i32, %arg1: i32, %arg2: i32) -> (i32, i32) {
    %c0_i32 = arith.constant 0 : i32
    return %arg0, %arg1 : i32, i32
  }
  func.func @transform_4(%arg0: i32, %arg1: i32, %arg2: i32) -> (i32, i32) {
    %c0_i32 = arith.constant 0 : i32
    %c0_i32_0 = arith.constant 0 : i32
    return %c0_i32, %arg1 : i32, i32
  }
  func.func @transform_5(%arg0: i32, %arg1: i32, %arg2: i32) -> (i32, i32) {
    %c0_i32 = arith.constant 0 : i32
    %c0_i32_0 = arith.constant 0 : i32
    return %c0_i32, %arg1 : i32, i32
  }
  func.func @transform_6(%arg0: i32, %arg1: i32, %arg2: i32) -> (i32, i32) {
    %c0_i32 = arith.constant 0 : i32
    return %arg0, %arg1 : i32, i32
  }
}

module attributes {stable_mosaic.version = 11 : i64} {
  func.func @_conv_kernel(%arg0: i32, %arg1: i32, %arg2: i32, %arg3: memref<32x864xbf16, #tpu.memory_space<vmem>>, %arg4: memref<864x128xbf16, #tpu.memory_space<vmem>>, %arg5: memref<1x128xf32, #tpu.memory_space<vmem>>, %arg6: memref<32x128xbf16, #tpu.memory_space<vmem>>, %arg7: memref<32x128xf32, #tpu.memory_space<vmem>>) attributes {dimension_semantics = [#tpu.dimension_semantics<parallel>, #tpu.dimension_semantics<parallel>, #tpu.dimension_semantics<arbitrary>], iteration_bounds = array<i64: 1, 1, 1>, scalar_prefetch = 0 : i64, scratch_operands = 1 : i64, tpu.core_type = #tpu.core_type<tc>, window_params = [{transform_indices = @transform_0, window_bounds = array<i64: 32, 864>}, {transform_indices = @transform_1, window_bounds = array<i64: 864, 128>}, {transform_indices = @transform_2, window_bounds = array<i64: 1, 128>}, {transform_indices = @transform_3, window_bounds = array<i64: 32, 128>}]} {
    %c0_i32 = arith.constant 0 : i32
    %0 = arith.cmpi eq, %arg2, %c0_i32 : i32
    %1 = arith.extui %0 : i1 to i32
    %c0_i32_0 = arith.constant 0 : i32
    %2 = arith.cmpi ne, %1, %c0_i32_0 : i32
    scf.if %2 {
      %cst_10 = arith.constant 0.000000e+00 : f32
      %12 = vector.broadcast %cst_10 : f32 to vector<32x128xf32>
      %c0_11 = arith.constant 0 : index
      %c0_12 = arith.constant 0 : index
      %13 = vector.load %arg7[%c0_11, %c0_12] : memref<32x128xf32, #tpu.memory_space<vmem>>, vector<32x128xf32>
      tpu.vector_store %arg7[%c0_11, %c0_12], %12 {strides = array<i32>} : memref<32x128xf32, #tpu.memory_space<vmem>>, vector<32x128xf32>,
    } else {
    }
    %c0 = arith.constant 0 : index
    %c0_1 = arith.constant 0 : index
    %3 = vector.load %arg7[%c0, %c0_1] : memref<32x128xf32, #tpu.memory_space<vmem>>, vector<32x128xf32>
    %c0_2 = arith.constant 0 : index
    %c0_3 = arith.constant 0 : index
    %4 = vector.load %arg3[%c0_2, %c0_3] : memref<32x864xbf16, #tpu.memory_space<vmem>>, vector<32x864xbf16>
    %c0_4 = arith.constant 0 : index
    %c0_5 = arith.constant 0 : index
    %5 = vector.load %arg4[%c0_4, %c0_5] : memref<864x128xbf16, #tpu.memory_space<vmem>>, vector<864x128xbf16>
    %cst = arith.constant dense<0.000000e+00> : vector<32x128xf32>
    %6 = tpu.matmul %4, %5, %cst {dimension_numbers = #tpu.dot_dimension_numbers<[1], [0], [0], [1], [0, 0, 1, 1], [], []>} : vector<32x864xbf16>, vector<864x128xbf16>, vector<32x128xf32> -> vector<32x128xf32>
    %7 = arith.addf %3, %6 : vector<32x128xf32>
    %c0_6 = arith.constant 0 : index
    %c0_7 = arith.constant 0 : index
    %8 = vector.load %arg7[%c0_6, %c0_7] : memref<32x128xf32, #tpu.memory_space<vmem>>, vector<32x128xf32>
    tpu.vector_store %arg7[%c0_6, %c0_7], %7 {strides = array<i32>} : memref<32x128xf32, #tpu.memory_space<vmem>>, vector<32x128xf32>,
    %c0_i32_8 = arith.constant 0 : i32
    %9 = arith.cmpi eq, %arg2, %c0_i32_8 : i32
    %10 = arith.extui %9 : i1 to i32
    %c0_i32_9 = arith.constant 0 : i32
    %11 = arith.cmpi ne, %10, %c0_i32_9 : i32
    scf.if %11 {
      %c0_10 = arith.constant 0 : index
      %c0_11 = arith.constant 0 : index
      %12 = vector.load %arg7[%c0_10, %c0_11] : memref<32x128xf32, #tpu.memory_space<vmem>>, vector<32x128xf32>
      %c0_12 = arith.constant 0 : index
      %c0_13 = arith.constant 0 : index
      %13 = vector.load %arg5[%c0_12, %c0_13] : memref<1x128xf32, #tpu.memory_space<vmem>>, vector<1x128xf32>
      %14 = vector.broadcast %13 : vector<1x128xf32> to vector<32x128xf32>
      %15 = arith.addf %12, %14 : vector<32x128xf32>
      %16 = arith.truncf %15 : vector<32x128xf32> to vector<32x128xbf16>
      %c0_14 = arith.constant 0 : index
      %c0_15 = arith.constant 0 : index
      %17 = vector.load %arg6[%c0_14, %c0_15] : memref<32x128xbf16, #tpu.memory_space<vmem>>, vector<32x128xbf16>
      tpu.vector_store %arg6[%c0_14, %c0_15], %16 {strides = array<i32>} : memref<32x128xbf16, #tpu.memory_space<vmem>>, vector<32x128xbf16>,
    } else {
    }
    return
  }
  func.func @transform_0(%arg0: i32, %arg1: i32, %arg2: i32) -> (i32, i32) {
    %c0_i32 = arith.constant 0 : i32
    return %arg0, %arg2 : i32, i32
  }
  func.func @transform_1(%arg0: i32, %arg1: i32, %arg2: i32) -> (i32, i32) {
    %c0_i32 = arith.constant 0 : i32
    return %arg2, %arg1 : i32, i32
  }
  func.func @transform_2(%arg0: i32, %arg1: i32, %arg2: i32) -> (i32, i32) {
    %c0_i32 = arith.constant 0 : i32
    %c0_i32_0 = arith.constant 0 : i32
    return %c0_i32, %arg1 : i32, i32
  }
  func.func @transform_3(%arg0: i32, %arg1: i32, %arg2: i32) -> (i32, i32) {
    %c0_i32 = arith.constant 0 : i32
    return %arg0, %arg1 : i32, i32
  }
}

module attributes {stable_mosaic.version = 11 : i64} {
  func.func @_upsample_kernel(%arg0: i32, %arg1: memref<8x4x32xbf16, #tpu.memory_space<vmem>>, %arg2: memref<2x32x128xbf16, #tpu.memory_space<vmem>>, %arg3: memref<1x128xf32, #tpu.memory_space<vmem>>, %arg4: memref<8x2x4x128xbf16, #tpu.memory_space<vmem>>) attributes {dimension_semantics = [#tpu.dimension_semantics<parallel>], iteration_bounds = array<i64: 1>, scalar_prefetch = 0 : i64, scratch_operands = 0 : i64, tpu.core_type = #tpu.core_type<tc>, window_params = [{transform_indices = @transform_0, window_bounds = array<i64: 8, 4, 32>}, {pipeline_mode = #tpu.pipeline_mode<synchronous>, transform_indices = @transform_1, window_bounds = array<i64: 2, 32, 128>}, {pipeline_mode = #tpu.pipeline_mode<synchronous>, transform_indices = @transform_2, window_bounds = array<i64: 1, 128>}, {transform_indices = @transform_3, window_bounds = array<i64: 8, 2, 4, 128>}]} {
    %c0 = arith.constant 0 : index
    %c0_0 = arith.constant 0 : index
    %c0_1 = arith.constant 0 : index
    %0 = vector.load %arg1[%c0, %c0_0, %c0_1] : memref<8x4x32xbf16, #tpu.memory_space<vmem>>, vector<8x4x32xbf16>
    %1 = vector.shape_cast %0 : vector<8x4x32xbf16> to vector<32x32xbf16>
    %c0_2 = arith.constant 0 : index
    %c0_3 = arith.constant 0 : index
    %c0_4 = arith.constant 0 : index
    %2 = vector.load %arg2[%c0_2, %c0_3, %c0_4] : memref<2x32x128xbf16, #tpu.memory_space<vmem>>, vector<1x32x128xbf16>
    %3 = vector.shape_cast %2 : vector<1x32x128xbf16> to vector<32x128xbf16>
    %cst = arith.constant dense<0.000000e+00> : vector<32x128xf32>
    %4 = tpu.matmul %1, %3, %cst {dimension_numbers = #tpu.dot_dimension_numbers<[1], [0], [0], [1], [0, 0, 1, 1], [], []>} : vector<32x32xbf16>, vector<32x128xbf16>, vector<32x128xf32> -> vector<32x128xf32>
    %c0_5 = arith.constant 0 : index
    %c0_6 = arith.constant 0 : index
    %5 = vector.load %arg3[%c0_5, %c0_6] : memref<1x128xf32, #tpu.memory_space<vmem>>, vector<1x128xf32>
    %6 = vector.broadcast %5 : vector<1x128xf32> to vector<32x128xf32>
    %7 = arith.addf %4, %6 : vector<32x128xf32>
    %8 = vector.shape_cast %7 : vector<32x128xf32> to vector<8x4x128xf32>
    %9 = arith.truncf %8 : vector<8x4x128xf32> to vector<8x4x128xbf16>
    %c0_7 = arith.constant 0 : index
    %c0_8 = arith.constant 0 : index
    %c0_9 = arith.constant 0 : index
    %c0_10 = arith.constant 0 : index
    %10 = vector.load %arg4[%c0_7, %c0_8, %c0_9, %c0_10] : memref<8x2x4x128xbf16, #tpu.memory_space<vmem>>, vector<8x1x4x128xbf16>
    %11 = vector.shape_cast %10 : vector<8x1x4x128xbf16> to vector<8x4x128xbf16>
    %12 = vector.shape_cast %9 : vector<8x4x128xbf16> to vector<8x1x4x128xbf16>
    tpu.vector_store %arg4[%c0_7, %c0_8, %c0_9, %c0_10], %12 {strides = array<i32>} : memref<8x2x4x128xbf16, #tpu.memory_space<vmem>>, vector<8x1x4x128xbf16>,
    %c1 = arith.constant 1 : index
    %c0_11 = arith.constant 0 : index
    %c0_12 = arith.constant 0 : index
    %13 = vector.load %arg2[%c1, %c0_11, %c0_12] : memref<2x32x128xbf16, #tpu.memory_space<vmem>>, vector<1x32x128xbf16>
    %14 = vector.shape_cast %13 : vector<1x32x128xbf16> to vector<32x128xbf16>
    %cst_13 = arith.constant dense<0.000000e+00> : vector<32x128xf32>
    %15 = tpu.matmul %1, %14, %cst_13 {dimension_numbers = #tpu.dot_dimension_numbers<[1], [0], [0], [1], [0, 0, 1, 1], [], []>} : vector<32x32xbf16>, vector<32x128xbf16>, vector<32x128xf32> -> vector<32x128xf32>
    %c0_14 = arith.constant 0 : index
    %c0_15 = arith.constant 0 : index
    %16 = vector.load %arg3[%c0_14, %c0_15] : memref<1x128xf32, #tpu.memory_space<vmem>>, vector<1x128xf32>
    %17 = vector.broadcast %16 : vector<1x128xf32> to vector<32x128xf32>
    %18 = arith.addf %15, %17 : vector<32x128xf32>
    %19 = vector.shape_cast %18 : vector<32x128xf32> to vector<8x4x128xf32>
    %20 = arith.truncf %19 : vector<8x4x128xf32> to vector<8x4x128xbf16>
    %c0_16 = arith.constant 0 : index
    %c1_17 = arith.constant 1 : index
    %c0_18 = arith.constant 0 : index
    %c0_19 = arith.constant 0 : index
    %21 = vector.load %arg4[%c0_16, %c1_17, %c0_18, %c0_19] : memref<8x2x4x128xbf16, #tpu.memory_space<vmem>>, vector<8x1x4x128xbf16>
    %22 = vector.shape_cast %21 : vector<8x1x4x128xbf16> to vector<8x4x128xbf16>
    %23 = vector.shape_cast %20 : vector<8x4x128xbf16> to vector<8x1x4x128xbf16>
    tpu.vector_store %arg4[%c0_16, %c1_17, %c0_18, %c0_19], %23 {strides = array<i32>} : memref<8x2x4x128xbf16, #tpu.memory_space<vmem>>, vector<8x1x4x128xbf16>,
    return
  }
  func.func @transform_0(%arg0: i32) -> (i32, i32, i32) {
    %c0_i32 = arith.constant 0 : i32
    %c0_i32_0 = arith.constant 0 : i32
    %c0_i32_1 = arith.constant 0 : i32
    return %arg0, %c0_i32, %c0_i32_0 : i32, i32, i32
  }
  func.func @transform_1(%arg0: i32) -> (i32, i32, i32) {
    %c0_i32 = arith.constant 0 : i32
    %c0_i32_0 = arith.constant 0 : i32
    %c0_i32_1 = arith.constant 0 : i32
    %c0_i32_2 = arith.constant 0 : i32
    return %c0_i32, %c0_i32_0, %c0_i32_1 : i32, i32, i32
  }
  func.func @transform_2(%arg0: i32) -> (i32, i32) {
    %c0_i32 = arith.constant 0 : i32
    %c0_i32_0 = arith.constant 0 : i32
    %c0_i32_1 = arith.constant 0 : i32
    return %c0_i32, %c0_i32_0 : i32, i32
  }
  func.func @transform_3(%arg0: i32) -> (i32, i32, i32, i32) {
    %c0_i32 = arith.constant 0 : i32
    %c0_i32_0 = arith.constant 0 : i32
    %c0_i32_1 = arith.constant 0 : i32
    %c0_i32_2 = arith.constant 0 : i32
    return %arg0, %c0_i32, %c0_i32_0, %c0_i32_1 : i32, i32, i32, i32
  }
}

module attributes {stable_mosaic.version = 11 : i64} {
  func.func @_conv_kernel(%arg0: i32, %arg1: i32, %arg2: i32, %arg3: memref<128x432xbf16, #tpu.memory_space<vmem>>, %arg4: memref<432x128xbf16, #tpu.memory_space<vmem>>, %arg5: memref<1x128xf32, #tpu.memory_space<vmem>>, %arg6: memref<128x128xbf16, #tpu.memory_space<vmem>>, %arg7: memref<128x128xf32, #tpu.memory_space<vmem>>) attributes {dimension_semantics = [#tpu.dimension_semantics<parallel>, #tpu.dimension_semantics<parallel>, #tpu.dimension_semantics<arbitrary>], iteration_bounds = array<i64: 1, 1, 1>, scalar_prefetch = 0 : i64, scratch_operands = 1 : i64, tpu.core_type = #tpu.core_type<tc>, window_params = [{transform_indices = @transform_0, window_bounds = array<i64: 128, 432>}, {transform_indices = @transform_1, window_bounds = array<i64: 432, 128>}, {transform_indices = @transform_2, window_bounds = array<i64: 1, 128>}, {transform_indices = @transform_3, window_bounds = array<i64: 128, 128>}]} {
    %c0_i32 = arith.constant 0 : i32
    %0 = arith.cmpi eq, %arg2, %c0_i32 : i32
    %1 = arith.extui %0 : i1 to i32
    %c0_i32_0 = arith.constant 0 : i32
    %2 = arith.cmpi ne, %1, %c0_i32_0 : i32
    scf.if %2 {
      %cst_10 = arith.constant 0.000000e+00 : f32
      %12 = vector.broadcast %cst_10 : f32 to vector<128x128xf32>
      %c0_11 = arith.constant 0 : index
      %c0_12 = arith.constant 0 : index
      %13 = vector.load %arg7[%c0_11, %c0_12] : memref<128x128xf32, #tpu.memory_space<vmem>>, vector<128x128xf32>
      tpu.vector_store %arg7[%c0_11, %c0_12], %12 {strides = array<i32>} : memref<128x128xf32, #tpu.memory_space<vmem>>, vector<128x128xf32>,
    } else {
    }
    %c0 = arith.constant 0 : index
    %c0_1 = arith.constant 0 : index
    %3 = vector.load %arg7[%c0, %c0_1] : memref<128x128xf32, #tpu.memory_space<vmem>>, vector<128x128xf32>
    %c0_2 = arith.constant 0 : index
    %c0_3 = arith.constant 0 : index
    %4 = vector.load %arg3[%c0_2, %c0_3] : memref<128x432xbf16, #tpu.memory_space<vmem>>, vector<128x432xbf16>
    %c0_4 = arith.constant 0 : index
    %c0_5 = arith.constant 0 : index
    %5 = vector.load %arg4[%c0_4, %c0_5] : memref<432x128xbf16, #tpu.memory_space<vmem>>, vector<432x128xbf16>
    %cst = arith.constant dense<0.000000e+00> : vector<128x128xf32>
    %6 = tpu.matmul %4, %5, %cst {dimension_numbers = #tpu.dot_dimension_numbers<[1], [0], [0], [1], [0, 0, 1, 1], [], []>} : vector<128x432xbf16>, vector<432x128xbf16>, vector<128x128xf32> -> vector<128x128xf32>
    %7 = arith.addf %3, %6 : vector<128x128xf32>
    %c0_6 = arith.constant 0 : index
    %c0_7 = arith.constant 0 : index
    %8 = vector.load %arg7[%c0_6, %c0_7] : memref<128x128xf32, #tpu.memory_space<vmem>>, vector<128x128xf32>
    tpu.vector_store %arg7[%c0_6, %c0_7], %7 {strides = array<i32>} : memref<128x128xf32, #tpu.memory_space<vmem>>, vector<128x128xf32>,
    %c0_i32_8 = arith.constant 0 : i32
    %9 = arith.cmpi eq, %arg2, %c0_i32_8 : i32
    %10 = arith.extui %9 : i1 to i32
    %c0_i32_9 = arith.constant 0 : i32
    %11 = arith.cmpi ne, %10, %c0_i32_9 : i32
    scf.if %11 {
      %c0_10 = arith.constant 0 : index
      %c0_11 = arith.constant 0 : index
      %12 = vector.load %arg7[%c0_10, %c0_11] : memref<128x128xf32, #tpu.memory_space<vmem>>, vector<128x128xf32>
      %c0_12 = arith.constant 0 : index
      %c0_13 = arith.constant 0 : index
      %13 = vector.load %arg5[%c0_12, %c0_13] : memref<1x128xf32, #tpu.memory_space<vmem>>, vector<1x128xf32>
      %14 = vector.broadcast %13 : vector<1x128xf32> to vector<128x128xf32>
      %15 = arith.addf %12, %14 : vector<128x128xf32>
      %16 = arith.truncf %15 : vector<128x128xf32> to vector<128x128xbf16>
      %c0_14 = arith.constant 0 : index
      %c0_15 = arith.constant 0 : index
      %17 = vector.load %arg6[%c0_14, %c0_15] : memref<128x128xbf16, #tpu.memory_space<vmem>>, vector<128x128xbf16>
      tpu.vector_store %arg6[%c0_14, %c0_15], %16 {strides = array<i32>} : memref<128x128xbf16, #tpu.memory_space<vmem>>, vector<128x128xbf16>,
    } else {
    }
    return
  }
  func.func @transform_0(%arg0: i32, %arg1: i32, %arg2: i32) -> (i32, i32) {
    %c0_i32 = arith.constant 0 : i32
    return %arg0, %arg2 : i32, i32
  }
  func.func @transform_1(%arg0: i32, %arg1: i32, %arg2: i32) -> (i32, i32) {
    %c0_i32 = arith.constant 0 : i32
    return %arg2, %arg1 : i32, i32
  }
  func.func @transform_2(%arg0: i32, %arg1: i32, %arg2: i32) -> (i32, i32) {
    %c0_i32 = arith.constant 0 : i32
    %c0_i32_0 = arith.constant 0 : i32
    return %c0_i32, %arg1 : i32, i32
  }
  func.func @transform_3(%arg0: i32, %arg1: i32, %arg2: i32) -> (i32, i32) {
    %c0_i32 = arith.constant 0 : i32
    return %arg0, %arg1 : i32, i32
  }
}

module attributes {stable_mosaic.version = 11 : i64} {
  func.func @_upsample_kernel(%arg0: i32, %arg1: memref<16x8x16xbf16, #tpu.memory_space<vmem>>, %arg2: memref<2x16x128xbf16, #tpu.memory_space<vmem>>, %arg3: memref<1x128xf32, #tpu.memory_space<vmem>>, %arg4: memref<16x2x8x128xbf16, #tpu.memory_space<vmem>>) attributes {dimension_semantics = [#tpu.dimension_semantics<parallel>], iteration_bounds = array<i64: 1>, scalar_prefetch = 0 : i64, scratch_operands = 0 : i64, tpu.core_type = #tpu.core_type<tc>, window_params = [{transform_indices = @transform_0, window_bounds = array<i64: 16, 8, 16>}, {pipeline_mode = #tpu.pipeline_mode<synchronous>, transform_indices = @transform_1, window_bounds = array<i64: 2, 16, 128>}, {pipeline_mode = #tpu.pipeline_mode<synchronous>, transform_indices = @transform_2, window_bounds = array<i64: 1, 128>}, {transform_indices = @transform_3, window_bounds = array<i64: 16, 2, 8, 128>}]} {
    %c0 = arith.constant 0 : index
    %c0_0 = arith.constant 0 : index
    %c0_1 = arith.constant 0 : index
    %0 = vector.load %arg1[%c0, %c0_0, %c0_1] : memref<16x8x16xbf16, #tpu.memory_space<vmem>>, vector<16x8x16xbf16>
    %1 = vector.shape_cast %0 : vector<16x8x16xbf16> to vector<128x16xbf16>
    %c0_2 = arith.constant 0 : index
    %c0_3 = arith.constant 0 : index
    %c0_4 = arith.constant 0 : index
    %2 = vector.load %arg2[%c0_2, %c0_3, %c0_4] : memref<2x16x128xbf16, #tpu.memory_space<vmem>>, vector<1x16x128xbf16>
    %3 = vector.shape_cast %2 : vector<1x16x128xbf16> to vector<16x128xbf16>
    %cst = arith.constant dense<0.000000e+00> : vector<128x128xf32>
    %4 = tpu.matmul %1, %3, %cst {dimension_numbers = #tpu.dot_dimension_numbers<[1], [0], [0], [1], [0, 0, 1, 1], [], []>} : vector<128x16xbf16>, vector<16x128xbf16>, vector<128x128xf32> -> vector<128x128xf32>
    %c0_5 = arith.constant 0 : index
    %c0_6 = arith.constant 0 : index
    %5 = vector.load %arg3[%c0_5, %c0_6] : memref<1x128xf32, #tpu.memory_space<vmem>>, vector<1x128xf32>
    %6 = vector.broadcast %5 : vector<1x128xf32> to vector<128x128xf32>
    %7 = arith.addf %4, %6 : vector<128x128xf32>
    %8 = vector.shape_cast %7 : vector<128x128xf32> to vector<16x8x128xf32>
    %9 = arith.truncf %8 : vector<16x8x128xf32> to vector<16x8x128xbf16>
    %c0_7 = arith.constant 0 : index
    %c0_8 = arith.constant 0 : index
    %c0_9 = arith.constant 0 : index
    %c0_10 = arith.constant 0 : index
    %10 = vector.load %arg4[%c0_7, %c0_8, %c0_9, %c0_10] : memref<16x2x8x128xbf16, #tpu.memory_space<vmem>>, vector<16x1x8x128xbf16>
    %11 = vector.shape_cast %10 : vector<16x1x8x128xbf16> to vector<16x8x128xbf16>
    %12 = vector.shape_cast %9 : vector<16x8x128xbf16> to vector<16x1x8x128xbf16>
    tpu.vector_store %arg4[%c0_7, %c0_8, %c0_9, %c0_10], %12 {strides = array<i32>} : memref<16x2x8x128xbf16, #tpu.memory_space<vmem>>, vector<16x1x8x128xbf16>,
    %c1 = arith.constant 1 : index
    %c0_11 = arith.constant 0 : index
    %c0_12 = arith.constant 0 : index
    %13 = vector.load %arg2[%c1, %c0_11, %c0_12] : memref<2x16x128xbf16, #tpu.memory_space<vmem>>, vector<1x16x128xbf16>
    %14 = vector.shape_cast %13 : vector<1x16x128xbf16> to vector<16x128xbf16>
    %cst_13 = arith.constant dense<0.000000e+00> : vector<128x128xf32>
    %15 = tpu.matmul %1, %14, %cst_13 {dimension_numbers = #tpu.dot_dimension_numbers<[1], [0], [0], [1], [0, 0, 1, 1], [], []>} : vector<128x16xbf16>, vector<16x128xbf16>, vector<128x128xf32> -> vector<128x128xf32>
    %c0_14 = arith.constant 0 : index
    %c0_15 = arith.constant 0 : index
    %16 = vector.load %arg3[%c0_14, %c0_15] : memref<1x128xf32, #tpu.memory_space<vmem>>, vector<1x128xf32>
    %17 = vector.broadcast %16 : vector<1x128xf32> to vector<128x128xf32>
    %18 = arith.addf %15, %17 : vector<128x128xf32>
    %19 = vector.shape_cast %18 : vector<128x128xf32> to vector<16x8x128xf32>
    %20 = arith.truncf %19 : vector<16x8x128xf32> to vector<16x8x128xbf16>
    %c0_16 = arith.constant 0 : index
    %c1_17 = arith.constant 1 : index
    %c0_18 = arith.constant 0 : index
    %c0_19 = arith.constant 0 : index
    %21 = vector.load %arg4[%c0_16, %c1_17, %c0_18, %c0_19] : memref<16x2x8x128xbf16, #tpu.memory_space<vmem>>, vector<16x1x8x128xbf16>
    %22 = vector.shape_cast %21 : vector<16x1x8x128xbf16> to vector<16x8x128xbf16>
    %23 = vector.shape_cast %20 : vector<16x8x128xbf16> to vector<16x1x8x128xbf16>
    tpu.vector_store %arg4[%c0_16, %c1_17, %c0_18, %c0_19], %23 {strides = array<i32>} : memref<16x2x8x128xbf16, #tpu.memory_space<vmem>>, vector<16x1x8x128xbf16>,
    return
  }
  func.func @transform_0(%arg0: i32) -> (i32, i32, i32) {
    %c0_i32 = arith.constant 0 : i32
    %c0_i32_0 = arith.constant 0 : i32
    %c0_i32_1 = arith.constant 0 : i32
    return %arg0, %c0_i32, %c0_i32_0 : i32, i32, i32
  }
  func.func @transform_1(%arg0: i32) -> (i32, i32, i32) {
    %c0_i32 = arith.constant 0 : i32
    %c0_i32_0 = arith.constant 0 : i32
    %c0_i32_1 = arith.constant 0 : i32
    %c0_i32_2 = arith.constant 0 : i32
    return %c0_i32, %c0_i32_0, %c0_i32_1 : i32, i32, i32
  }
  func.func @transform_2(%arg0: i32) -> (i32, i32) {
    %c0_i32 = arith.constant 0 : i32
    %c0_i32_0 = arith.constant 0 : i32
    %c0_i32_1 = arith.constant 0 : i32
    return %c0_i32, %c0_i32_0 : i32, i32
  }
  func.func @transform_3(%arg0: i32) -> (i32, i32, i32, i32) {
    %c0_i32 = arith.constant 0 : i32
    %c0_i32_0 = arith.constant 0 : i32
    %c0_i32_1 = arith.constant 0 : i32
    %c0_i32_2 = arith.constant 0 : i32
    return %arg0, %c0_i32, %c0_i32_0, %c0_i32_1 : i32, i32, i32, i32
  }
}

module attributes {stable_mosaic.version = 11 : i64} {
  func.func @_conv_kernel(%arg0: i32, %arg1: i32, %arg2: i32, %arg3: memref<256x216xbf16, #tpu.memory_space<vmem>>, %arg4: memref<216x128xbf16, #tpu.memory_space<vmem>>, %arg5: memref<1x128xf32, #tpu.memory_space<vmem>>, %arg6: memref<256x128xbf16, #tpu.memory_space<vmem>>, %arg7: memref<256x128xf32, #tpu.memory_space<vmem>>) attributes {dimension_semantics = [#tpu.dimension_semantics<parallel>, #tpu.dimension_semantics<parallel>, #tpu.dimension_semantics<arbitrary>], iteration_bounds = array<i64: 2, 1, 1>, scalar_prefetch = 0 : i64, scratch_operands = 1 : i64, tpu.core_type = #tpu.core_type<tc>, window_params = [{transform_indices = @transform_0, window_bounds = array<i64: 256, 216>}, {transform_indices = @transform_1, window_bounds = array<i64: 216, 128>}, {transform_indices = @transform_2, window_bounds = array<i64: 1, 128>}, {transform_indices = @transform_3, window_bounds = array<i64: 256, 128>}]} {
    %c0_i32 = arith.constant 0 : i32
    %0 = arith.cmpi eq, %arg2, %c0_i32 : i32
    %1 = arith.extui %0 : i1 to i32
    %c0_i32_0 = arith.constant 0 : i32
    %2 = arith.cmpi ne, %1, %c0_i32_0 : i32
    scf.if %2 {
      %cst_10 = arith.constant 0.000000e+00 : f32
      %12 = vector.broadcast %cst_10 : f32 to vector<256x128xf32>
      %c0_11 = arith.constant 0 : index
      %c0_12 = arith.constant 0 : index
      %13 = vector.load %arg7[%c0_11, %c0_12] : memref<256x128xf32, #tpu.memory_space<vmem>>, vector<256x128xf32>
      tpu.vector_store %arg7[%c0_11, %c0_12], %12 {strides = array<i32>} : memref<256x128xf32, #tpu.memory_space<vmem>>, vector<256x128xf32>,
    } else {
    }
    %c0 = arith.constant 0 : index
    %c0_1 = arith.constant 0 : index
    %3 = vector.load %arg7[%c0, %c0_1] : memref<256x128xf32, #tpu.memory_space<vmem>>, vector<256x128xf32>
    %c0_2 = arith.constant 0 : index
    %c0_3 = arith.constant 0 : index
    %4 = vector.load %arg3[%c0_2, %c0_3] : memref<256x216xbf16, #tpu.memory_space<vmem>>, vector<256x216xbf16>
    %c0_4 = arith.constant 0 : index
    %c0_5 = arith.constant 0 : index
    %5 = vector.load %arg4[%c0_4, %c0_5] : memref<216x128xbf16, #tpu.memory_space<vmem>>, vector<216x128xbf16>
    %cst = arith.constant dense<0.000000e+00> : vector<256x128xf32>
    %6 = tpu.matmul %4, %5, %cst {dimension_numbers = #tpu.dot_dimension_numbers<[1], [0], [0], [1], [0, 0, 1, 1], [], []>} : vector<256x216xbf16>, vector<216x128xbf16>, vector<256x128xf32> -> vector<256x128xf32>
    %7 = arith.addf %3, %6 : vector<256x128xf32>
    %c0_6 = arith.constant 0 : index
    %c0_7 = arith.constant 0 : index
    %8 = vector.load %arg7[%c0_6, %c0_7] : memref<256x128xf32, #tpu.memory_space<vmem>>, vector<256x128xf32>
    tpu.vector_store %arg7[%c0_6, %c0_7], %7 {strides = array<i32>} : memref<256x128xf32, #tpu.memory_space<vmem>>, vector<256x128xf32>,
    %c0_i32_8 = arith.constant 0 : i32
    %9 = arith.cmpi eq, %arg2, %c0_i32_8 : i32
    %10 = arith.extui %9 : i1 to i32
    %c0_i32_9 = arith.constant 0 : i32
    %11 = arith.cmpi ne, %10, %c0_i32_9 : i32
    scf.if %11 {
      %c0_10 = arith.constant 0 : index
      %c0_11 = arith.constant 0 : index
      %12 = vector.load %arg7[%c0_10, %c0_11] : memref<256x128xf32, #tpu.memory_space<vmem>>, vector<256x128xf32>
      %c0_12 = arith.constant 0 : index
      %c0_13 = arith.constant 0 : index
      %13 = vector.load %arg5[%c0_12, %c0_13] : memref<1x128xf32, #tpu.memory_space<vmem>>, vector<1x128xf32>
      %14 = vector.broadcast %13 : vector<1x128xf32> to vector<256x128xf32>
      %15 = arith.addf %12, %14 : vector<256x128xf32>
      %16 = arith.truncf %15 : vector<256x128xf32> to vector<256x128xbf16>
      %c0_14 = arith.constant 0 : index
      %c0_15 = arith.constant 0 : index
      %17 = vector.load %arg6[%c0_14, %c0_15] : memref<256x128xbf16, #tpu.memory_space<vmem>>, vector<256x128xbf16>
      tpu.vector_store %arg6[%c0_14, %c0_15], %16 {strides = array<i32>} : memref<256x128xbf16, #tpu.memory_space<vmem>>, vector<256x128xbf16>,
    } else {
    }
    return
  }
  func.func @transform_0(%arg0: i32, %arg1: i32, %arg2: i32) -> (i32, i32) {
    %c0_i32 = arith.constant 0 : i32
    return %arg0, %arg2 : i32, i32
  }
  func.func @transform_1(%arg0: i32, %arg1: i32, %arg2: i32) -> (i32, i32) {
    %c0_i32 = arith.constant 0 : i32
    return %arg2, %arg1 : i32, i32
  }
  func.func @transform_2(%arg0: i32, %arg1: i32, %arg2: i32) -> (i32, i32) {
    %c0_i32 = arith.constant 0 : i32
    %c0_i32_0 = arith.constant 0 : i32
    return %c0_i32, %arg1 : i32, i32
  }
  func.func @transform_3(%arg0: i32, %arg1: i32, %arg2: i32) -> (i32, i32) {
    %c0_i32 = arith.constant 0 : i32
    return %arg0, %arg1 : i32, i32
  }
}

module attributes {stable_mosaic.version = 11 : i64} {
  func.func @_conv_kernel(%arg0: i32, %arg1: i32, %arg2: i32, %arg3: memref<256x8xbf16, #tpu.memory_space<vmem>>, %arg4: memref<8x128xbf16, #tpu.memory_space<vmem>>, %arg5: memref<1x128xf32, #tpu.memory_space<vmem>>, %arg6: memref<256x128xbf16, #tpu.memory_space<vmem>>, %arg7: memref<256x128xf32, #tpu.memory_space<vmem>>) attributes {dimension_semantics = [#tpu.dimension_semantics<parallel>, #tpu.dimension_semantics<parallel>, #tpu.dimension_semantics<arbitrary>], iteration_bounds = array<i64: 2, 1, 1>, scalar_prefetch = 0 : i64, scratch_operands = 1 : i64, tpu.core_type = #tpu.core_type<tc>, window_params = [{transform_indices = @transform_0, window_bounds = array<i64: 256, 8>}, {transform_indices = @transform_1, window_bounds = array<i64: 8, 128>}, {transform_indices = @transform_2, window_bounds = array<i64: 1, 128>}, {transform_indices = @transform_3, window_bounds = array<i64: 256, 128>}]} {
    %c0_i32 = arith.constant 0 : i32
    %0 = arith.cmpi eq, %arg2, %c0_i32 : i32
    %1 = arith.extui %0 : i1 to i32
    %c0_i32_0 = arith.constant 0 : i32
    %2 = arith.cmpi ne, %1, %c0_i32_0 : i32
    scf.if %2 {
      %cst_10 = arith.constant 0.000000e+00 : f32
      %12 = vector.broadcast %cst_10 : f32 to vector<256x128xf32>
      %c0_11 = arith.constant 0 : index
      %c0_12 = arith.constant 0 : index
      %13 = vector.load %arg7[%c0_11, %c0_12] : memref<256x128xf32, #tpu.memory_space<vmem>>, vector<256x128xf32>
      tpu.vector_store %arg7[%c0_11, %c0_12], %12 {strides = array<i32>} : memref<256x128xf32, #tpu.memory_space<vmem>>, vector<256x128xf32>,
    } else {
    }
    %c0 = arith.constant 0 : index
    %c0_1 = arith.constant 0 : index
    %3 = vector.load %arg7[%c0, %c0_1] : memref<256x128xf32, #tpu.memory_space<vmem>>, vector<256x128xf32>
    %c0_2 = arith.constant 0 : index
    %c0_3 = arith.constant 0 : index
    %4 = vector.load %arg3[%c0_2, %c0_3] : memref<256x8xbf16, #tpu.memory_space<vmem>>, vector<256x8xbf16>
    %c0_4 = arith.constant 0 : index
    %c0_5 = arith.constant 0 : index
    %5 = vector.load %arg4[%c0_4, %c0_5] : memref<8x128xbf16, #tpu.memory_space<vmem>>, vector<8x128xbf16>
    %cst = arith.constant dense<0.000000e+00> : vector<256x128xf32>
    %6 = tpu.matmul %4, %5, %cst {dimension_numbers = #tpu.dot_dimension_numbers<[1], [0], [0], [1], [0, 0, 1, 1], [], []>} : vector<256x8xbf16>, vector<8x128xbf16>, vector<256x128xf32> -> vector<256x128xf32>
    %7 = arith.addf %3, %6 : vector<256x128xf32>
    %c0_6 = arith.constant 0 : index
    %c0_7 = arith.constant 0 : index
    %8 = vector.load %arg7[%c0_6, %c0_7] : memref<256x128xf32, #tpu.memory_space<vmem>>, vector<256x128xf32>
    tpu.vector_store %arg7[%c0_6, %c0_7], %7 {strides = array<i32>} : memref<256x128xf32, #tpu.memory_space<vmem>>, vector<256x128xf32>,
    %c0_i32_8 = arith.constant 0 : i32
    %9 = arith.cmpi eq, %arg2, %c0_i32_8 : i32
    %10 = arith.extui %9 : i1 to i32
    %c0_i32_9 = arith.constant 0 : i32
    %11 = arith.cmpi ne, %10, %c0_i32_9 : i32
    scf.if %11 {
      %c0_10 = arith.constant 0 : index
      %c0_11 = arith.constant 0 : index
      %12 = vector.load %arg7[%c0_10, %c0_11] : memref<256x128xf32, #tpu.memory_space<vmem>>, vector<256x128xf32>
      %c0_12 = arith.constant 0 : index
      %c0_13 = arith.constant 0 : index
      %13 = vector.load %arg5[%c0_12, %c0_13] : memref<1x128xf32, #tpu.memory_space<vmem>>, vector<1x128xf32>
      %14 = vector.broadcast %13 : vector<1x128xf32> to vector<256x128xf32>
      %15 = arith.addf %12, %14 : vector<256x128xf32>
      %16 = arith.truncf %15 : vector<256x128xf32> to vector<256x128xbf16>
      %c0_14 = arith.constant 0 : index
      %c0_15 = arith.constant 0 : index
      %17 = vector.load %arg6[%c0_14, %c0_15] : memref<256x128xbf16, #tpu.memory_space<vmem>>, vector<256x128xbf16>
      tpu.vector_store %arg6[%c0_14, %c0_15], %16 {strides = array<i32>} : memref<256x128xbf16, #tpu.memory_space<vmem>>, vector<256x128xbf16>,
    } else {
    }
    return
  }
  func.func @transform_0(%arg0: i32, %arg1: i32, %arg2: i32) -> (i32, i32) {
    %c0_i32 = arith.constant 0 : i32
    return %arg0, %arg2 : i32, i32
  }
  func.func @transform_1(%arg0: i32, %arg1: i32, %arg2: i32) -> (i32, i32) {
    %c0_i32 = arith.constant 0 : i32
    return %arg2, %arg1 : i32, i32
  }
  func.func @transform_2(%arg0: i32, %arg1: i32, %arg2: i32) -> (i32, i32) {
    %c0_i32 = arith.constant 0 : i32
    %c0_i32_0 = arith.constant 0 : i32
    return %c0_i32, %arg1 : i32, i32
  }
  func.func @transform_3(%arg0: i32, %arg1: i32, %arg2: i32) -> (i32, i32) {
    %c0_i32 = arith.constant 0 : i32
    return %arg0, %arg1 : i32, i32
  }
}

</mosaic_0001>

<llo_original>
// kernel: resunet_forward.25
$region0: #{resunet_forward.25}
  #allocation0 [shape = 'u32[]', space=smem, size = 0x4, offset = 0x4, fixed_abs, tag = 'smem constant byte address 0x4 - core index']
  #allocation1 [shape = 'u32[144,128]{1,0:T(1,128)}', space=vmem, size = 0x12000, scoped, tag = 'internal scratch']
  #allocation2 [shape = 'f32[256,128]{1,0:T(8,128)}', space=vmem, size = 0x20000, scoped, tag = 'scratch operand']
  %s0 = inlined_call_operand.vmem [shape: bf16[512,36], index: 0, kind: input, shape index: {}]
  %s1 = inlined_call_operand.vmem [shape: bf16[36,128], index: 1, kind: input, shape index: {}]
  %s2 = inlined_call_operand.vmem [shape: f32[1,128], index: 2, kind: input, shape index: {}]
  %s3 = inlined_call_operand.vmem [shape: bf16[512,128], index: 3, kind: output, shape index: {}]
  %s4 = sld [smem:[#allocation0]]
  $region53: #{resunet_forward.25} parent=0
    _
  %s6 = ssub.s32 1, %s4
  %s7 = scalar_select 0, %s6, %s4
  loop: start=0, step=1, limit=4
  $region2: #{resunet_forward.25} parent=0 // loop_pre_header
    _
  $region3: #{resunet_forward.25} parent=0 // loop_header
    %s9 = sphi 0, %s13
    %p10 = scmp.ge.s32.totalorder %s9, 4
    %s16 = sphi 0, %s35
    %s17 = sphi 0, %s31
    %s18 = sphi 0, %s27
    %s19 = sphi 0, %s16
    %s20 = sphi 0, %s17
    %s21 = sphi 0, %s18
    %s22 = sphi 0, %s19
    %s23 = sphi 0, %s20
    %s24 = sphi 0, %s21
    %s40 = sphi 0, %s42
    %s43 = sphi 0, %s40
    %s44 = sphi 0, %s43
    %s60 = sphi 0, %s44
    %s68 = sphi 0, %s70
    %s71 = sphi 0, %s68
    %s72 = sphi 0, %s71
    %s88 = sphi 0, %s72
    %s94 = sphi 0, %s96
    %s97 = sphi 0, %s94
    %s98 = sphi 0, %s97
    %s114 = sphi 0, %s98
    %s122 = sphi 0, %s124
    %s125 = sphi 0, %s122
    %s126 = sphi 0, %s125
    %s142 = sphi 0, %s126
  $region4: #{resunet_forward.25} parent=0 // loop_header_branch
    %12 = sbr.rel (%p10) target = $region8
  $region5: #{resunet_forward.25} parent=0 // loop_body
    %s14 = ssub.s32 %s9, 1
    %s15 = ssub.s32 %s9, 2
    %s25 = sadd.s32 1, %s18
    %p26 = scmp.ge.s32.totalorder %s25, 1
    %s27 = scalar_select %p26, 0, %s25
    %s28 = sadd.s32 1, %s17
    %s29 = scalar_select %p26, %s28, %s17
    %p30 = scmp.ge.s32.totalorder %s29, 1
    %s31 = scalar_select %p30, 0, %s29
    %s32 = sadd.s32 1, %s16
    %s33 = scalar_select %p30, %s32, %s16
    %p34 = scmp.ge.s32.totalorder %s33, 2
    %s35 = scalar_select %p34, 0, %s33
    %s36 = ssub.s32 %s16, %s35
    %s37 = ssub.s32 %s18, %s27
    %s38 = sor.u32 %s36, %s37
    %p39 = scmp.eq.s32.totalorder %s38, 0
    %s41 = sadd.s32 %s40, 1
    %s42 = scalar_select %p39, %s40, %s41
    %p45 = pneg %p39
    %p46 = scmp.eq.s32.totalorder %s9, 1
    %p47 = por %p45, %p46
    %p48 = scmp.ne.s32.totalorder %s40, %s43
    %p49 = scmp.eq.s32.totalorder %s9, 0
    %p50 = por %p48, %p49
    %p51 = scmp.ne.s32.totalorder %s40, %s43
    %p52 = scmp.eq.s32.totalorder %s14, 1
    %p53 = por %p51, %p52
    %p54 = scmp.ne.s32.totalorder %s43, %s44
    %p55 = scmp.eq.s32.totalorder %s14, 0
    %p56 = por %p54, %p55
    %p57 = scmp.ne.s32.totalorder %s43, %s44
    %p58 = scmp.eq.s32.totalorder %s15, 1
    %p59 = por %p57, %p58
    %p61 = scmp.ne.s32.totalorder %s44, %s60
    %p62 = scmp.eq.s32.totalorder %s15, 0
    %p63 = por %p61, %p62
    %s64 = ssub.s32 %s18, %s27
    %s65 = ssub.s32 %s17, %s31
    %s66 = sor.u32 %s64, %s65
    %p67 = scmp.eq.s32.totalorder %s66, 0
    %s69 = sadd.s32 %s68, 1
    %s70 = scalar_select %p67, %s68, %s69
    %p73 = pneg %p67
    %p74 = scmp.eq.s32.totalorder %s9, 1
    %p75 = por %p73, %p74
    %p76 = scmp.ne.s32.totalorder %s68, %s71
    %p77 = scmp.eq.s32.totalorder %s9, 0
    %p78 = por %p76, %p77
    %p79 = scmp.ne.s32.totalorder %s68, %s71
    %p80 = scmp.eq.s32.totalorder %s14, 1
    %p81 = por %p79, %p80
    %p82 = scmp.ne.s32.totalorder %s71, %s72
    %p83 = scmp.eq.s32.totalorder %s14, 0
    %p84 = por %p82, %p83
    %p85 = scmp.ne.s32.totalorder %s71, %s72
    %p86 = scmp.eq.s32.totalorder %s15, 1
    %p87 = por %p85, %p86
    %p89 = scmp.ne.s32.totalorder %s72, %s88
    %p90 = scmp.eq.s32.totalorder %s15, 0
    %p91 = por %p89, %p90
    %s92 = ssub.s32 %s17, %s31
    %p93 = scmp.eq.s32.totalorder %s92, 0
    %s95 = sadd.s32 %s94, 1
    %s96 = scalar_select %p93, %s94, %s95
    %p99 = pneg %p93
    %p100 = scmp.eq.s32.totalorder %s9, 1
    %p101 = por %p99, %p100
    %p102 = scmp.ne.s32.totalorder %s94, %s97
    %p103 = scmp.eq.s32.totalorder %s9, 0
    %p104 = por %p102, %p103
    %p105 = scmp.ne.s32.totalorder %s94, %s97
    %p106 = scmp.eq.s32.totalorder %s14, 1
    %p107 = por %p105, %p106
    %p108 = scmp.ne.s32.totalorder %s97, %s98
    %p109 = scmp.eq.s32.totalorder %s14, 0
    %p110 = por %p108, %p109
    %p111 = scmp.ne.s32.totalorder %s97, %s98
    %p112 = scmp.eq.s32.totalorder %s15, 1
    %p113 = por %p111, %p112
    %p115 = scmp.ne.s32.totalorder %s98, %s114
    %p116 = scmp.eq.s32.totalorder %s15, 0
    %p117 = por %p115, %p116
    %s118 = ssub.s32 %s16, %s35
    %s119 = ssub.s32 %s17, %s31
    %s120 = sor.u32 %s118, %s119
    %p121 = scmp.eq.s32.totalorder %s120, 0
    %s123 = sadd.s32 %s122, 1
    %s124 = scalar_select %p121, %s122, %s123
    %p127 = pneg %p121
    %p128 = scmp.eq.s32.totalorder %s9, 1
    %p129 = por %p127, %p128
    %p130 = scmp.ne.s32.totalorder %s122, %s125
    %p131 = scmp.eq.s32.totalorder %s9, 0
    %p132 = por %p130, %p131
    %p133 = scmp.ne.s32.totalorder %s122, %s125
    %p134 = scmp.eq.s32.totalorder %s14, 1
    %p135 = por %p133, %p134
    %p136 = scmp.ne.s32.totalorder %s125, %s126
    %p137 = scmp.eq.s32.totalorder %s14, 0
    %p138 = por %p136, %p137
    %p139 = scmp.ne.s32.totalorder %s125, %s126
    %p140 = scmp.eq.s32.totalorder %s15, 1
    %p141 = por %p139, %p140
    %p143 = scmp.ne.s32.totalorder %s126, %s142
    %p144 = scmp.eq.s32.totalorder %s15, 0
    %p145 = por %p143, %p144
    %p146 = scmp.le.s32.totalorder 1, %s9
    %p147 = scmp.lt.s32.totalorder %s9, 3
    %p148 = pnand %p146, %p147
    %p149 = pneg %p148
    // Predicated region
    $region9: #{resunet_forward.25} parent=5 // pred_check
      _
    $region10: #{resunet_forward.25} parent=5 // pred_check_branch
      %151 = sbr.rel (%p148) target = $region12
    $region11: #{resunet_forward.25} parent=5 // pred_region
      %s152 = ssub.s32 %s9, 1
      // Predicated region
      $region13: #{resunet_forward.25} parent=11 // pred_check
        %p153 = pneg %p84
      $region14: #{resunet_forward.25} parent=11 // pred_check_branch
        %155 = sbr.rel (%p153) target = $region16
      $region15: #{resunet_forward.25} parent=11 // pred_region
        %s156 = smul.u32 5, %s21
        %p157 = scmp.lt.s32.totalorder %s156, 4
        %s158 = scalar_select %p157, %s156, 4
        %p159 = scmp.lt.s32.totalorder %s20, 0
        %s160 = scalar_select %p159, %s20, 0
        %s161 = sadd.s32 %s160, %s158
        %s162 = smul.addr %s161, 4
        %s163 = scalar_lea.vmem %s1, %s162
        %s164 = smul.u32 5, %s21
      $region16: #{resunet_forward.25} parent=11 // pred_fallthru
        _
      // Predicated region
      $region17: #{resunet_forward.25} parent=11 // pred_check
        %p165 = pneg %p110
      $region18: #{resunet_forward.25} parent=11 // pred_check_branch
        %167 = sbr.rel (%p165) target = $region20
      $region19: #{resunet_forward.25} parent=11 // pred_region
        %p168 = scmp.lt.s32.totalorder %s20, 0
        %s169 = scalar_select %p168, %s20, 0
        %s170 = scalar_lea.vmem %s2, %s169
      $region20: #{resunet_forward.25} parent=11 // pred_fallthru
        _
    $region12: #{resunet_forward.25} parent=5 // pred_fallthru
      _
    %p171 = scmp.lt.s32.totalorder %s9, 2
    // Predicated region
    $region21: #{resunet_forward.25} parent=5 // pred_check
      %p172 = pneg %p171
    $region22: #{resunet_forward.25} parent=5 // pred_check_branch
      %174 = sbr.rel (%p172) target = $region24
    $region23: #{resunet_forward.25} parent=5 // pred_region
      // Predicated region
      $region25: #{resunet_forward.25} parent=23 // pred_check
        %p175 = pneg %p50
      $region26: #{resunet_forward.25} parent=23 // pred_check_branch
        %177 = sbr.rel (%p175) target = $region28
      $region27: #{resunet_forward.25} parent=23 // pred_region
        %s178 = smul.u32 32, %s16
        %p179 = scmp.lt.s32.totalorder %s178, 63
        %s180 = scalar_select %p179, %s178, 63
        %p181 = scmp.lt.s32.totalorder %s18, 0
        %s182 = scalar_select %p181, %s18, 0
        %s183 = sadd.s32 %s182, %s180
        %s184 = smul.addr %s183, 4
        %s185 = scalar_lea.vmem %s0, %s184
        %s186 = smul.u32 32, %s16
      $region28: #{resunet_forward.25} parent=23 // pred_fallthru
        _
    $region24: #{resunet_forward.25} parent=5 // pred_fallthru
      _
    %p187 = scmp.le.s32.totalorder 1, %s9
    %p188 = scmp.lt.s32.totalorder %s9, 3
    %p189 = pnand %p187, %p188
    %p190 = pneg %p189
    // Predicated region
    $region29: #{resunet_forward.25} parent=5 // pred_check
      _
    $region30: #{resunet_forward.25} parent=5 // pred_check_branch
      %192 = sbr.rel (%p189) target = $region32
    $region31: #{resunet_forward.25} parent=5 // pred_region
      %s193 = ssub.s32 %s9, 1
      %s194 = smul.u32 32, %s19
      %p195 = scmp.lt.s32.totalorder %s194, 63
      %s196 = scalar_select %p195, %s194, 63
      %p197 = scmp.lt.s32.totalorder %s21, 0
      %s198 = scalar_select %p197, %s21, 0
      %s199 = sadd.s32 %s198, %s196
      %s200 = smul.addr %s199, 4
      %s201 = scalar_lea.vmem %s0, %s200
      %p202 = pneg %p56
      %p203 = pneg %p53
      %s204 = smul.u32 5, %s21
      %p205 = scmp.lt.s32.totalorder %s204, 4
      %s206 = scalar_select %p205, %s204, 4
      %p207 = scmp.lt.s32.totalorder %s20, 0
      %s208 = scalar_select %p207, %s20, 0
      %s209 = sadd.s32 %s208, %s206
      %s210 = smul.addr %s209, 4
      %s211 = scalar_lea.vmem %s1, %s210
      %p212 = pneg %p84
      %p213 = pneg %p81
      %p214 = scmp.lt.s32.totalorder %s20, 0
      %s215 = scalar_select %p214, %s20, 0
      %s216 = scalar_lea.vmem %s2, %s215
      %p217 = pneg %p110
      %p218 = pneg %p107
      %p219 = pneg %p138
      %p220 = pneg %p135
      %s221 = smul.u32 32, %s19
      %p222 = scmp.lt.s32.totalorder %s221, 63
      %s223 = scalar_select %p222, %s221, 63
      %p224 = scmp.lt.s32.totalorder %s20, 0
      %s225 = scalar_select %p224, %s20, 0
      %s226 = sadd.s32 %s225, %s223
      %s227 = smul.addr %s226, 4
      %s228 = scalar_lea.vmem %s3, %s227
      %s229 = smul.u32 32, %s19
      %p230 = scmp.lt.s32.totalorder %s229, 63
      %s231 = scalar_select %p230, %s229, 63
      %p232 = scmp.lt.s32.totalorder %s21, 0
      %s233 = scalar_select %p232, %s21, 0
      %s234 = sadd.s32 %s233, %s231
      %s235 = smul.addr %s234, 4
      %s236 = scalar_lea.vmem %s0, %s235
      %s237 = smul.u32 32, %s19
      %s238 = smul.u32 5, %s21
      %p239 = scmp.lt.s32.totalorder %s238, 4
      %s240 = scalar_select %p239, %s238, 4
      %p241 = scmp.lt.s32.totalorder %s20, 0
      %s242 = scalar_select %p241, %s20, 0
      %s243 = sadd.s32 %s242, %s240
      %s244 = smul.addr %s243, 4
      %s245 = scalar_lea.vmem %s1, %s244
      %s246 = smul.u32 5, %s21
      %p247 = scmp.lt.s32.totalorder %s20, 0
      %s248 = scalar_select %p247, %s20, 0
      %s249 = scalar_lea.vmem %s2, %s248
      %s250 = smul.u32 32, %s19
      %p251 = scmp.lt.s32.totalorder %s250, 63
      %s252 = scalar_select %p251, %s250, 63
      %p253 = scmp.lt.s32.totalorder %s20, 0
      %s254 = scalar_select %p253, %s20, 0
      %s255 = sadd.s32 %s254, %s252
      %s256 = smul.addr %s255, 4
      %s257 = scalar_lea.vmem %s3, %s256
      %s258 = smul.u32 32, %s19
      %p260 = scmp.eq.s32.totalorder %s21, 0
      // Predicated region
      $region33: #{resunet_forward.25} parent=31 // pred_check
        %p261 = pneg %p260
      $region34: #{resunet_forward.25} parent=31 // pred_check_branch
        %263 = sbr.rel (%p261) target = $region36
      $region35: #{resunet_forward.25} parent=31 // pred_region
        %264 = vst [vmem:[#allocation2] sm:$0xff] 0.0
        %265 = vst [vmem:[#allocation2 + $0x8] sm:$0xff] 0.0
        %266 = vst [vmem:[#allocation2 + $0x10] sm:$0xff] 0.0
        %267 = vst [vmem:[#allocation2 + $0x18] sm:$0xff] 0.0
        %268 = vst [vmem:[#allocation2 + $0x20] sm:$0xff] 0.0
        %269 = vst [vmem:[#allocation2 + $0x28] sm:$0xff] 0.0
        %270 = vst [vmem:[#allocation2 + $0x30] sm:$0xff] 0.0
        %271 = vst [vmem:[#allocation2 + $0x38] sm:$0xff] 0.0
        %272 = vst [vmem:[#allocation2 + $0x40] sm:$0xff] 0.0
        %273 = vst [vmem:[#allocation2 + $0x48] sm:$0xff] 0.0
        %274 = vst [vmem:[#allocation2 + $0x50] sm:$0xff] 0.0
        %275 = vst [vmem:[#allocation2 + $0x58] sm:$0xff] 0.0
        %276 = vst [vmem:[#allocation2 + $0x60] sm:$0xff] 0.0
        %277 = vst [vmem:[#allocation2 + $0x68] sm:$0xff] 0.0
        %278 = vst [vmem:[#allocation2 + $0x70] sm:$0xff] 0.0
        %279 = vst [vmem:[#allocation2 + $0x78] sm:$0xff] 0.0
        %280 = vst [vmem:[#allocation2 + $0x80] sm:$0xff] 0.0
        %281 = vst [vmem:[#allocation2 + $0x88] sm:$0xff] 0.0
        %282 = vst [vmem:[#allocation2 + $0x90] sm:$0xff] 0.0
        %283 = vst [vmem:[#allocation2 + $0x98] sm:$0xff] 0.0
        %284 = vst [vmem:[#allocation2 + $0xa0] sm:$0xff] 0.0
        %285 = vst [vmem:[#allocation2 + $0xa8] sm:$0xff] 0.0
        %286 = vst [vmem:[#allocation2 + $0xb0] sm:$0xff] 0.0
        %287 = vst [vmem:[#allocation2 + $0xb8] sm:$0xff] 0.0
        %288 = vst [vmem:[#allocation2 + $0xc0] sm:$0xff] 0.0
        %289 = vst [vmem:[#allocation2 + $0xc8] sm:$0xff] 0.0
        %290 = vst [vmem:[#allocation2 + $0xd0] sm:$0xff] 0.0
        %291 = vst [vmem:[#allocation2 + $0xd8] sm:$0xff] 0.0
        %292 = vst [vmem:[#allocation2 + $0xe0] sm:$0xff] 0.0
        %293 = vst [vmem:[#allocation2 + $0xe8] sm:$0xff] 0.0
        %294 = vst [vmem:[#allocation2 + $0xf0] sm:$0xff] 0.0
        %295 = vst [vmem:[#allocation2 + $0xf8] sm:$0xff] 0.0
      $region36: #{resunet_forward.25} parent=31 // pred_fallthru
        _
      %v296 = vld [vmem:[#allocation2] sm:$0xff]
      %v297 = vld [vmem:[#allocation2 + $0x8] sm:$0xff]
      %v298 = vld [vmem:[#allocation2 + $0x10] sm:$0xff]
      %v299 = vld [vmem:[#allocation2 + $0x18] sm:$0xff]
      %v300 = vld [vmem:[#allocation2 + $0x20] sm:$0xff]
      %v301 = vld [vmem:[#allocation2 + $0x28] sm:$0xff]
      %v302 = vld [vmem:[#allocation2 + $0x30] sm:$0xff]
      %v303 = vld [vmem:[#allocation2 + $0x38] sm:$0xff]
      %v304 = vld [vmem:[#allocation2 + $0x40] sm:$0xff]
      %v305 = vld [vmem:[#allocation2 + $0x48] sm:$0xff]
      %v306 = vld [vmem:[#allocation2 + $0x50] sm:$0xff]
      %v307 = vld [vmem:[#allocation2 + $0x58] sm:$0xff]
      %v308 = vld [vmem:[#allocation2 + $0x60] sm:$0xff]
      %v309 = vld [vmem:[#allocation2 + $0x68] sm:$0xff]
      %v310 = vld [vmem:[#allocation2 + $0x70] sm:$0xff]
      %v311 = vld [vmem:[#allocation2 + $0x78] sm:$0xff]
      %v312 = vld [vmem:[#allocation2 + $0x80] sm:$0xff]
      %v313 = vld [vmem:[#allocation2 + $0x88] sm:$0xff]
      %v314 = vld [vmem:[#allocation2 + $0x90] sm:$0xff]
      %v315 = vld [vmem:[#allocation2 + $0x98] sm:$0xff]
      %v316 = vld [vmem:[#allocation2 + $0xa0] sm:$0xff]
      %v317 = vld [vmem:[#allocation2 + $0xa8] sm:$0xff]
      %v318 = vld [vmem:[#allocation2 + $0xb0] sm:$0xff]
      %v319 = vld [vmem:[#allocation2 + $0xb8] sm:$0xff]
      %v320 = vld [vmem:[#allocation2 + $0xc0] sm:$0xff]
      %v321 = vld [vmem:[#allocation2 + $0xc8] sm:$0xff]
      %v322 = vld [vmem:[#allocation2 + $0xd0] sm:$0xff]
      %v323 = vld [vmem:[#allocation2 + $0xd8] sm:$0xff]
      %v324 = vld [vmem:[#allocation2 + $0xe0] sm:$0xff]
      %v325 = vld [vmem:[#allocation2 + $0xe8] sm:$0xff]
      %v326 = vld [vmem:[#allocation2 + $0xf0] sm:$0xff]
      %v327 = vld [vmem:[#allocation2 + $0xf8] sm:$0xff]
      %v328 = vld [vmem:[%s236] sm:$0xf]
      %v329 = vld [vmem:[%s236 + $0x4] sm:$0xf]
      %v330 = vld [vmem:[%s236 + $0x8] sm:$0xf]
      %v331 = vld [vmem:[%s236 + $0xc] sm:$0xf]
      %v332 = vld [vmem:[%s236 + $0x10] sm:$0xf]
      %v333 = vld [vmem:[%s236 + $0x14] sm:$0xf]
      %v334 = vld [vmem:[%s236 + $0x18] sm:$0xf]
      %v335 = vld [vmem:[%s236 + $0x1c] sm:$0xf]
      %v336 = vld [vmem:[%s236 + $0x20] sm:$0xf]
      %v337 = vld [vmem:[%s236 + $0x24] sm:$0xf]
      %v338 = vld [vmem:[%s236 + $0x28] sm:$0xf]
      %v339 = vld [vmem:[%s236 + $0x2c] sm:$0xf]
      %v340 = vld [vmem:[%s236 + $0x30] sm:$0xf]
      %v341 = vld [vmem:[%s236 + $0x34] sm:$0xf]
      %v342 = vld [vmem:[%s236 + $0x38] sm:$0xf]
      %v343 = vld [vmem:[%s236 + $0x3c] sm:$0xf]
      %v344 = vld [vmem:[%s236 + $0x40] sm:$0xf]
      %v345 = vld [vmem:[%s236 + $0x44] sm:$0xf]
      %v346 = vld [vmem:[%s236 + $0x48] sm:$0xf]
      %v347 = vld [vmem:[%s236 + $0x4c] sm:$0xf]
      %v348 = vld [vmem:[%s236 + $0x50] sm:$0xf]
      %v349 = vld [vmem:[%s236 + $0x54] sm:$0xf]
      %v350 = vld [vmem:[%s236 + $0x58] sm:$0xf]
      %v351 = vld [vmem:[%s236 + $0x5c] sm:$0xf]
      %v352 = vld [vmem:[%s236 + $0x60] sm:$0xf]
      %v353 = vld [vmem:[%s236 + $0x64] sm:$0xf]
      %v354 = vld [vmem:[%s236 + $0x68] sm:$0xf]
      %v355 = vld [vmem:[%s236 + $0x6c] sm:$0xf]
      %v356 = vld [vmem:[%s236 + $0x70] sm:$0xf]
      %v357 = vld [vmem:[%s236 + $0x74] sm:$0xf]
      %v358 = vld [vmem:[%s236 + $0x78] sm:$0xf]
      %v359 = vld [vmem:[%s236 + $0x7c] sm:$0xf]
      %v360 = vld [vmem:[%s245] sm:$0xf]
      %v361 = vld [vmem:[%s245 + $0x4] sm:$0xf]
      %v362 = vld [vmem:[%s245 + $0x8] sm:$0xf]
      %v363 = vld [vmem:[%s245 + $0xc] sm:$0xf]
      %v364 = vld [vmem:[%s245 + $0x10] sm:$0x3]
      %v397 = vunpack.c.l.b16 %v328
      %v398 = vunpack.c.l.b16 %v329
      %v399 = vunpack.c.l.b16 %v330
      %v400 = vunpack.c.l.b16 %v331
      %v401 = vunpack.c.l.b16 %v332
      %v402 = vunpack.c.l.b16 %v333
      %v403 = vunpack.c.l.b16 %v334
      %v404 = vunpack.c.l.b16 %v335
      %v405 = vunpack.c.l.b16 %v336
      %v406 = vunpack.c.l.b16 %v337
      %v407 = vunpack.c.l.b16 %v338
      %v408 = vunpack.c.l.b16 %v339
      %v409 = vunpack.c.l.b16 %v340
      %v410 = vunpack.c.l.b16 %v341
      %v411 = vunpack.c.l.b16 %v342
      %v412 = vunpack.c.l.b16 %v343
      %v413 = vunpack.c.l.b16 %v344
      %v414 = vunpack.c.l.b16 %v345
      %v415 = vunpack.c.l.b16 %v346
      %v416 = vunpack.c.l.b16 %v347
      %v417 = vunpack.c.l.b16 %v348
      %v418 = vunpack.c.l.b16 %v349
      %v419 = vunpack.c.l.b16 %v350
      %v420 = vunpack.c.l.b16 %v351
      %v421 = vunpack.c.l.b16 %v352
      %v422 = vunpack.c.l.b16 %v353
      %v423 = vunpack.c.l.b16 %v354
      %v424 = vunpack.c.l.b16 %v355
      %v425 = vunpack.c.l.b16 %v356
      %v426 = vunpack.c.l.b16 %v357
      %v427 = vunpack.c.l.b16 %v358
      %v428 = vunpack.c.l.b16 %v359
      %v429 = vpack.c.b16 %v398, %v397
      %v430 = vpack.c.b16 %v400, %v399
      %v431 = vpack.c.b16 %v402, %v401
      %v432 = vpack.c.b16 %v404, %v403
      %v433 = vpack.c.b16 %v406, %v405
      %v434 = vpack.c.b16 %v408, %v407
      %v435 = vpack.c.b16 %v410, %v409
      %v436 = vpack.c.b16 %v412, %v411
      %v437 = vpack.c.b16 %v414, %v413
      %v438 = vpack.c.b16 %v416, %v415
      %v439 = vpack.c.b16 %v418, %v417
      %v440 = vpack.c.b16 %v420, %v419
      %v441 = vpack.c.b16 %v422, %v421
      %v442 = vpack.c.b16 %v424, %v423
      %v443 = vpack.c.b16 %v426, %v425
      %v444 = vpack.c.b16 %v428, %v427
      %v450 = vunpack.c.l.b16 %v360
      %v451 = vunpack.c.l.b16 %v361
      %v452 = vunpack.c.l.b16 %v362
      %v453 = vunpack.c.l.b16 %v363
      %v454 = vunpack.c.l.b16 %v364
      %v455 = vpack.c.b16 %v451, %v450
      %v456 = vpack.c.b16 %v453, %v452
      %v457 = vpack.c.b16 %v454, %v454
      %vm460 = vcmask 293888
      %v462 = vsel %vm460, %v429, 0
      %v465 = vsel %vm460, %v430, 0
      %v468 = vsel %vm460, %v431, 0
      %v471 = vsel %vm460, %v432, 0
      %v474 = vsel %vm460, %v433, 0
      %v477 = vsel %vm460, %v434, 0
      %v480 = vsel %vm460, %v435, 0
      %v483 = vsel %vm460, %v436, 0
      %v486 = vsel %vm460, %v437, 0
      %v489 = vsel %vm460, %v438, 0
      %v492 = vsel %vm460, %v439, 0
      %v495 = vsel %vm460, %v440, 0
      %v498 = vsel %vm460, %v441, 0
      %v501 = vsel %vm460, %v442, 0
      %v504 = vsel %vm460, %v443, 0
      %v507 = vsel %vm460, %v444, 0
      %vm509 = vcmask 1041408
      %v511 = vsel %vm509, %v457, 0
      %513 = vmatprep.subr.bf16.mxu0 0
      %514 = vmatpush1.bf16.msra.mxu0 %v455
      %515 = vmatprep.subr.bf16.mxu0 0
      %516 = vmatpush1.bf16.msra.mxu0 %v456
      %517 = vmatprep.subr.bf16.mxu0 0
      %518 = vmatpush1.bf16.msra.mxu0 %v511
      %519 = vmatprep.subr.bf16.mxu0 0
      %520 = vmatpush1.bf16.msra.mxu0 0
      %521 = vmatprep.subr.bf16.mxu0 0
      %522 = vmatpush1.bf16.msra.mxu0 0
      %523 = vmatprep.subr.bf16.mxu0 0
      %524 = vmatpush1.bf16.msra.mxu0 0
      %525 = vmatprep.subr.bf16.mxu0 0
      %526 = vmatpush1.bf16.msra.mxu0 0
      %527 = vmatprep.subr.bf16.mxu0 0
      %528 = vmatpush1.bf16.msra.mxu0 0
      %529 = vmatprep.subr.bf16.mxu0 0
      %530 = vmatpush1.bf16.msra.mxu0 0
      %531 = vmatprep.subr.bf16.mxu0 0
      %532 = vmatpush1.bf16.msra.mxu0 0
      %533 = vmatprep.subr.bf16.mxu0 0
      %534 = vmatpush1.bf16.msra.mxu0 0
      %535 = vmatprep.subr.bf16.mxu0 0
      %536 = vmatpush1.bf16.msra.mxu0 0
      %537 = vmatprep.subr.bf16.mxu0 0
      %538 = vmatpush1.bf16.msra.mxu0 0
      %539 = vmatprep.subr.bf16.mxu0 0
      %540 = vmatpush1.bf16.msra.mxu0 0
      %541 = vmatprep.subr.bf16.mxu0 0
      %542 = vmatpush1.bf16.msra.mxu0 0
      %543 = vmatprep.subr.bf16.mxu0 0
      %544 = vmatpush1.bf16.msra.mxu0 0
      %545 = vmatprep.mubr.bf16.mxu0 0
      %546 = vmatmul.mubr.bf16.gmra.mrb[0].mxu0 %v462
      %v547 = vpop.f32.mrb[0].mxu0
      %v548 = vadd.f32 0.0, %v547
      %v549 = vpop.f32.mrb[0].mxu0
      %v550 = vpop.f32.mrb[0].mxu0
      %v551 = vadd.f32 0.0, %v550
      %v552 = vpop.f32.mrb[0].mxu0
      %553 = vmatprep.mubr.bf16.mxu0 0
      %554 = vmatmul.mubr.bf16.gmra.mrb[0].mxu0 %v465
      %v555 = vpop.f32.mrb[0].mxu0
      %v556 = vadd.f32 0.0, %v555
      %v557 = vpop.f32.mrb[0].mxu0
      %v558 = vpop.f32.mrb[0].mxu0
      %v559 = vadd.f32 0.0, %v558
      %v560 = vpop.f32.mrb[0].mxu0
      %561 = vmatprep.mubr.bf16.mxu0 0
      %562 = vmatmul.mubr.bf16.gmra.mrb[0].mxu0 %v468
      %v563 = vpop.f32.mrb[0].mxu0
      %v564 = vadd.f32 0.0, %v563
      %v565 = vpop.f32.mrb[0].mxu0
      %v566 = vpop.f32.mrb[0].mxu0
      %v567 = vadd.f32 0.0, %v566
      %v568 = vpop.f32.mrb[0].mxu0
      %569 = vmatprep.mubr.bf16.mxu0 0
      %570 = vmatmul.mubr.bf16.gmra.mrb[0].mxu0 %v471
      %v571 = vpop.f32.mrb[0].mxu0
      %v572 = vadd.f32 0.0, %v571
      %v573 = vpop.f32.mrb[0].mxu0
      %v574 = vpop.f32.mrb[0].mxu0
      %v575 = vadd.f32 0.0, %v574
      %v576 = vpop.f32.mrb[0].mxu0
      %577 = vmatprep.mubr.bf16.mxu0 0
      %578 = vmatmul.mubr.bf16.gmra.mrb[0].mxu0 %v474
      %v579 = vpop.f32.mrb[0].mxu0
      %v580 = vadd.f32 0.0, %v579
      %v581 = vpop.f32.mrb[0].mxu0
      %v582 = vpop.f32.mrb[0].mxu0
      %v583 = vadd.f32 0.0, %v582
      %v584 = vpop.f32.mrb[0].mxu0
      %585 = vmatprep.mubr.bf16.mxu0 0
      %586 = vmatmul.mubr.bf16.gmra.mrb[0].mxu0 %v477
      %v587 = vpop.f32.mrb[0].mxu0
      %v588 = vadd.f32 0.0, %v587
      %v589 = vpop.f32.mrb[0].mxu0
      %v590 = vpop.f32.mrb[0].mxu0
      %v591 = vadd.f32 0.0, %v590
      %v592 = vpop.f32.mrb[0].mxu0
      %593 = vmatprep.mubr.bf16.mxu0 0
      %594 = vmatmul.mubr.bf16.gmra.mrb[0].mxu0 %v480
      %v595 = vpop.f32.mrb[0].mxu0
      %v596 = vadd.f32 0.0, %v595
      %v597 = vpop.f32.mrb[0].mxu0
      %v598 = vpop.f32.mrb[0].mxu0
      %v599 = vadd.f32 0.0, %v598
      %v600 = vpop.f32.mrb[0].mxu0
      %601 = vmatprep.mubr.bf16.mxu0 0
      %602 = vmatmul.mubr.bf16.gmra.mrb[0].mxu0 %v483
      %v603 = vpop.f32.mrb[0].mxu0
      %v604 = vadd.f32 0.0, %v603
      %v605 = vpop.f32.mrb[0].mxu0
      %v606 = vpop.f32.mrb[0].mxu0
      %v607 = vadd.f32 0.0, %v606
      %v608 = vpop.f32.mrb[0].mxu0
      %609 = vmatprep.mubr.bf16.mxu0 0
      %610 = vmatmul.mubr.bf16.gmra.mrb[0].mxu0 %v486
      %v611 = vpop.f32.mrb[0].mxu0
      %v612 = vadd.f32 0.0, %v611
      %v613 = vpop.f32.mrb[0].mxu0
      %v614 = vpop.f32.mrb[0].mxu0
      %v615 = vadd.f32 0.0, %v614
      %v616 = vpop.f32.mrb[0].mxu0
      %617 = vmatprep.mubr.bf16.mxu0 0
      %618 = vmatmul.mubr.bf16.gmra.mrb[0].mxu0 %v489
      %v619 = vpop.f32.mrb[0].mxu0
      %v620 = vadd.f32 0.0, %v619
      %v621 = vpop.f32.mrb[0].mxu0
      %v622 = vpop.f32.mrb[0].mxu0
      %v623 = vadd.f32 0.0, %v622
      %v624 = vpop.f32.mrb[0].mxu0
      %625 = vmatprep.mubr.bf16.mxu0 0
      %626 = vmatmul.mubr.bf16.gmra.mrb[0].mxu0 %v492
      %v627 = vpop.f32.mrb[0].mxu0
      %v628 = vadd.f32 0.0, %v627
      %v629 = vpop.f32.mrb[0].mxu0
      %v630 = vpop.f32.mrb[0].mxu0
      %v631 = vadd.f32 0.0, %v630
      %v632 = vpop.f32.mrb[0].mxu0
      %633 = vmatprep.mubr.bf16.mxu0 0
      %634 = vmatmul.mubr.bf16.gmra.mrb[0].mxu0 %v495
      %v635 = vpop.f32.mrb[0].mxu0
      %v636 = vadd.f32 0.0, %v635
      %v637 = vpop.f32.mrb[0].mxu0
      %v638 = vpop.f32.mrb[0].mxu0
      %v639 = vadd.f32 0.0, %v638
      %v640 = vpop.f32.mrb[0].mxu0
      %641 = vmatprep.mubr.bf16.mxu0 0
      %642 = vmatmul.mubr.bf16.gmra.mrb[0].mxu0 %v498
      %v643 = vpop.f32.mrb[0].mxu0
      %v644 = vadd.f32 0.0, %v643
      %v645 = vpop.f32.mrb[0].mxu0
      %v646 = vpop.f32.mrb[0].mxu0
      %v647 = vadd.f32 0.0, %v646
      %v648 = vpop.f32.mrb[0].mxu0
      %649 = vmatprep.mubr.bf16.mxu0 0
      %650 = vmatmul.mubr.bf16.gmra.mrb[0].mxu0 %v501
      %v651 = vpop.f32.mrb[0].mxu0
      %v652 = vadd.f32 0.0, %v651
      %v653 = vpop.f32.mrb[0].mxu0
      %v654 = vpop.f32.mrb[0].mxu0
      %v655 = vadd.f32 0.0, %v654
      %v656 = vpop.f32.mrb[0].mxu0
      %657 = vmatprep.mubr.bf16.mxu0 0
      %658 = vmatmul.mubr.bf16.gmra.mrb[0].mxu0 %v504
      %v659 = vpop.f32.mrb[0].mxu0
      %v660 = vadd.f32 0.0, %v659
      %v661 = vpop.f32.mrb[0].mxu0
      %v662 = vpop.f32.mrb[0].mxu0
      %v663 = vadd.f32 0.0, %v662
      %v664 = vpop.f32.mrb[0].mxu0
      %665 = vmatprep.mubr.bf16.mxu0 0
      %666 = vmatmul.mubr.bf16.gmra.mrb[0].mxu0 %v507
      %v667 = vpop.f32.mrb[0].mxu0
      %v668 = vadd.f32 0.0, %v667
      %v669 = vpop.f32.mrb[0].mxu0
      %v670 = vpop.f32.mrb[0].mxu0
      %v671 = vadd.f32 0.0, %v670
      %v672 = vpop.f32.mrb[0].mxu0
      %673 = vdwg.mxu0
      %v674 = vadd.f32 %v296, %v548
      %v675 = vadd.f32 %v297, %v551
      %v676 = vadd.f32 %v298, %v556
      %v677 = vadd.f32 %v299, %v559
      %v678 = vadd.f32 %v300, %v564
      %v679 = vadd.f32 %v301, %v567
      %v680 = vadd.f32 %v302, %v572
      %v681 = vadd.f32 %v303, %v575
      %v682 = vadd.f32 %v304, %v580
      %v683 = vadd.f32 %v305, %v583
      %v684 = vadd.f32 %v306, %v588
      %v685 = vadd.f32 %v307, %v591
      %v686 = vadd.f32 %v308, %v596
      %v687 = vadd.f32 %v309, %v599
      %v688 = vadd.f32 %v310, %v604
      %v689 = vadd.f32 %v311, %v607
      %v690 = vadd.f32 %v312, %v612
      %v691 = vadd.f32 %v313, %v615
      %v692 = vadd.f32 %v314, %v620
      %v693 = vadd.f32 %v315, %v623
      %v694 = vadd.f32 %v316, %v628
      %v695 = vadd.f32 %v317, %v631
      %v696 = vadd.f32 %v318, %v636
      %v697 = vadd.f32 %v319, %v639
      %v698 = vadd.f32 %v320, %v644
      %v699 = vadd.f32 %v321, %v647
      %v700 = vadd.f32 %v322, %v652
      %v701 = vadd.f32 %v323, %v655
      %v702 = vadd.f32 %v324, %v660
      %v703 = vadd.f32 %v325, %v663
      %v704 = vadd.f32 %v326, %v668
      %v705 = vadd.f32 %v327, %v671
      %706 = vst [vmem:[#allocation2] sm:$0xff] %v674
      %707 = vst [vmem:[#allocation2 + $0x8] sm:$0xff] %v675
      %708 = vst [vmem:[#allocation2 + $0x10] sm:$0xff] %v676
      %709 = vst [vmem:[#allocation2 + $0x18] sm:$0xff] %v677
      %710 = vst [vmem:[#allocation2 + $0x20] sm:$0xff] %v678
      %711 = vst [vmem:[#allocation2 + $0x28] sm:$0xff] %v679
      %712 = vst [vmem:[#allocation2 + $0x30] sm:$0xff] %v680
      %713 = vst [vmem:[#allocation2 + $0x38] sm:$0xff] %v681
      %714 = vst [vmem:[#allocation2 + $0x40] sm:$0xff] %v682
      %715 = vst [vmem:[#allocation2 + $0x48] sm:$0xff] %v683
      %716 = vst [vmem:[#allocation2 + $0x50] sm:$0xff] %v684
      %717 = vst [vmem:[#allocation2 + $0x58] sm:$0xff] %v685
      %718 = vst [vmem:[#allocation2 + $0x60] sm:$0xff] %v686
      %719 = vst [vmem:[#allocation2 + $0x68] sm:$0xff] %v687
      %720 = vst [vmem:[#allocation2 + $0x70] sm:$0xff] %v688
      %721 = vst [vmem:[#allocation2 + $0x78] sm:$0xff] %v689
      %722 = vst [vmem:[#allocation2 + $0x80] sm:$0xff] %v690
      %723 = vst [vmem:[#allocation2 + $0x88] sm:$0xff] %v691
      %724 = vst [vmem:[#allocation2 + $0x90] sm:$0xff] %v692
      %725 = vst [vmem:[#allocation2 + $0x98] sm:$0xff] %v693
      %726 = vst [vmem:[#allocation2 + $0xa0] sm:$0xff] %v694
      %727 = vst [vmem:[#allocation2 + $0xa8] sm:$0xff] %v695
      %728 = vst [vmem:[#allocation2 + $0xb0] sm:$0xff] %v696
      %729 = vst [vmem:[#allocation2 + $0xb8] sm:$0xff] %v697
      %730 = vst [vmem:[#allocation2 + $0xc0] sm:$0xff] %v698
      %731 = vst [vmem:[#allocation2 + $0xc8] sm:$0xff] %v699
      %732 = vst [vmem:[#allocation2 + $0xd0] sm:$0xff] %v700
      %733 = vst [vmem:[#allocation2 + $0xd8] sm:$0xff] %v701
      %734 = vst [vmem:[#allocation2 + $0xe0] sm:$0xff] %v702
      %735 = vst [vmem:[#allocation2 + $0xe8] sm:$0xff] %v703
      %736 = vst [vmem:[#allocation2 + $0xf0] sm:$0xff] %v704
      %737 = vst [vmem:[#allocation2 + $0xf8] sm:$0xff] %v705
      // Predicated region
      $region37: #{resunet_forward.25} parent=31 // pred_check
        %p738 = pneg %p260
      $region38: #{resunet_forward.25} parent=31 // pred_check_branch
        %740 = sbr.rel (%p738) target = $region40
      $region39: #{resunet_forward.25} parent=31 // pred_region
        %v741 = vld [vmem:[#allocation2] sm:$0xff]
        %v742 = vld [vmem:[#allocation2 + $0x8] sm:$0xff]
        %v743 = vld [vmem:[#allocation2 + $0x10] sm:$0xff]
        %v744 = vld [vmem:[#allocation2 + $0x18] sm:$0xff]
        %v745 = vld [vmem:[#allocation2 + $0x20] sm:$0xff]
        %v746 = vld [vmem:[#allocation2 + $0x28] sm:$0xff]
        %v747 = vld [vmem:[#allocation2 + $0x30] sm:$0xff]
        %v748 = vld [vmem:[#allocation2 + $0x38] sm:$0xff]
        %v749 = vld [vmem:[#allocation2 + $0x40] sm:$0xff]
        %v750 = vld [vmem:[#allocation2 + $0x48] sm:$0xff]
        %v751 = vld [vmem:[#allocation2 + $0x50] sm:$0xff]
        %v752 = vld [vmem:[#allocation2 + $0x58] sm:$0xff]
        %v753 = vld [vmem:[#allocation2 + $0x60] sm:$0xff]
        %v754 = vld [vmem:[#allocation2 + $0x68] sm:$0xff]
        %v755 = vld [vmem:[#allocation2 + $0x70] sm:$0xff]
        %v756 = vld [vmem:[#allocation2 + $0x78] sm:$0xff]
        %v757 = vld [vmem:[#allocation2 + $0x80] sm:$0xff]
        %v758 = vld [vmem:[#allocation2 + $0x88] sm:$0xff]
        %v759 = vld [vmem:[#allocation2 + $0x90] sm:$0xff]
        %v760 = vld [vmem:[#allocation2 + $0x98] sm:$0xff]
        %v761 = vld [vmem:[#allocation2 + $0xa0] sm:$0xff]
        %v762 = vld [vmem:[#allocation2 + $0xa8] sm:$0xff]
        %v763 = vld [vmem:[#allocation2 + $0xb0] sm:$0xff]
        %v764 = vld [vmem:[#allocation2 + $0xb8] sm:$0xff]
        %v765 = vld [vmem:[#allocation2 + $0xc0] sm:$0xff]
        %v766 = vld [vmem:[#allocation2 + $0xc8] sm:$0xff]
        %v767 = vld [vmem:[#allocation2 + $0xd0] sm:$0xff]
        %v768 = vld [vmem:[#allocation2 + $0xd8] sm:$0xff]
        %v769 = vld [vmem:[#allocation2 + $0xe0] sm:$0xff]
        %v770 = vld [vmem:[#allocation2 + $0xe8] sm:$0xff]
        %v771 = vld [vmem:[#allocation2 + $0xf0] sm:$0xff]
        %v772 = vld [vmem:[#allocation2 + $0xf8] sm:$0xff]
        %v773 = vld [vmem:[%s249] sm:$0x1]
        %v775 = vlaneseq
        %v776 = vshrl.u32 %v775, 7
        %v777 = vsub.s32 0, %v776
        %v778 = vrot.slane %v773, %v777
        %v780 = vadd.f32 %v741, %v778
        %v781 = vadd.f32 %v742, %v778
        %v782 = vadd.f32 %v743, %v778
        %v783 = vadd.f32 %v744, %v778
        %v784 = vadd.f32 %v745, %v778
        %v785 = vadd.f32 %v746, %v778
        %v786 = vadd.f32 %v747, %v778
        %v787 = vadd.f32 %v748, %v778
        %v788 = vadd.f32 %v749, %v778
        %v789 = vadd.f32 %v750, %v778
        %v790 = vadd.f32 %v751, %v778
        %v791 = vadd.f32 %v752, %v778
        %v792 = vadd.f32 %v753, %v778
        %v793 = vadd.f32 %v754, %v778
        %v794 = vadd.f32 %v755, %v778
        %v795 = vadd.f32 %v756, %v778
        %v796 = vadd.f32 %v757, %v778
        %v797 = vadd.f32 %v758, %v778
        %v798 = vadd.f32 %v759, %v778
        %v799 = vadd.f32 %v760, %v778
        %v800 = vadd.f32 %v761, %v778
        %v801 = vadd.f32 %v762, %v778
        %v802 = vadd.f32 %v763, %v778
        %v803 = vadd.f32 %v764, %v778
        %v804 = vadd.f32 %v765, %v778
        %v805 = vadd.f32 %v766, %v778
        %v806 = vadd.f32 %v767, %v778
        %v807 = vadd.f32 %v768, %v778
        %v808 = vadd.f32 %v769, %v778
        %v809 = vadd.f32 %v770, %v778
        %v810 = vadd.f32 %v771, %v778
        %v811 = vadd.f32 %v772, %v778
        %v812 = vpack.c.bf16 %v781, %v780
        %v813 = vpack.c.bf16 %v783, %v782
        %v814 = vpack.c.bf16 %v785, %v784
        %v815 = vpack.c.bf16 %v787, %v786
        %v816 = vpack.c.bf16 %v789, %v788
        %v817 = vpack.c.bf16 %v791, %v790
        %v818 = vpack.c.bf16 %v793, %v792
        %v819 = vpack.c.bf16 %v795, %v794
        %v820 = vpack.c.bf16 %v797, %v796
        %v821 = vpack.c.bf16 %v799, %v798
        %v822 = vpack.c.bf16 %v801, %v800
        %v823 = vpack.c.bf16 %v803, %v802
        %v824 = vpack.c.bf16 %v805, %v804
        %v825 = vpack.c.bf16 %v807, %v806
        %v826 = vpack.c.bf16 %v809, %v808
        %v827 = vpack.c.bf16 %v811, %v810
        %v844 = vunpack.c.l.b16 %v812
        %v845 = vunpack.c.h.b16 %v812
        %v846 = vunpack.c.l.b16 %v813
        %v847 = vunpack.c.h.b16 %v813
        %v848 = vunpack.c.l.b16 %v814
        %v849 = vunpack.c.h.b16 %v814
        %v850 = vunpack.c.l.b16 %v815
        %v851 = vunpack.c.h.b16 %v815
        %v852 = vunpack.c.l.b16 %v816
        %v853 = vunpack.c.h.b16 %v816
        %v854 = vunpack.c.l.b16 %v817
        %v855 = vunpack.c.h.b16 %v817
        %v856 = vunpack.c.l.b16 %v818
        %v857 = vunpack.c.h.b16 %v818
        %v858 = vunpack.c.l.b16 %v819
        %v859 = vunpack.c.h.b16 %v819
        %v860 = vunpack.c.l.b16 %v820
        %v861 = vunpack.c.h.b16 %v820
        %v862 = vunpack.c.l.b16 %v821
        %v863 = vunpack.c.h.b16 %v821
        %v864 = vunpack.c.l.b16 %v822
        %v865 = vunpack.c.h.b16 %v822
        %v866 = vunpack.c.l.b16 %v823
        %v867 = vunpack.c.h.b16 %v823
        %v868 = vunpack.c.l.b16 %v824
        %v869 = vunpack.c.h.b16 %v824
        %v870 = vunpack.c.l.b16 %v825
        %v871 = vunpack.c.h.b16 %v825
        %v872 = vunpack.c.l.b16 %v826
        %v873 = vunpack.c.h.b16 %v826
        %v874 = vunpack.c.l.b16 %v827
        %v875 = vunpack.c.h.b16 %v827
        %v876 = vpack.c.b16 %v844, %v844
        %v877 = vpack.c.b16 %v845, %v845
        %v878 = vpack.c.b16 %v846, %v846
        %v879 = vpack.c.b16 %v847, %v847
        %v880 = vpack.c.b16 %v848, %v848
        %v881 = vpack.c.b16 %v849, %v849
        %v882 = vpack.c.b16 %v850, %v850
        %v883 = vpack.c.b16 %v851, %v851
        %v884 = vpack.c.b16 %v852, %v852
        %v885 = vpack.c.b16 %v853, %v853
        %v886 = vpack.c.b16 %v854, %v854
        %v887 = vpack.c.b16 %v855, %v855
        %v888 = vpack.c.b16 %v856, %v856
        %v889 = vpack.c.b16 %v857, %v857
        %v890 = vpack.c.b16 %v858, %v858
        %v891 = vpack.c.b16 %v859, %v859
        %v892 = vpack.c.b16 %v860, %v860
        %v893 = vpack.c.b16 %v861, %v861
        %v894 = vpack.c.b16 %v862, %v862
        %v895 = vpack.c.b16 %v863, %v863
        %v896 = vpack.c.b16 %v864, %v864
        %v897 = vpack.c.b16 %v865, %v865
        %v898 = vpack.c.b16 %v866, %v866
        %v899 = vpack.c.b16 %v867, %v867
        %v900 = vpack.c.b16 %v868, %v868
        %v901 = vpack.c.b16 %v869, %v869
        %v902 = vpack.c.b16 %v870, %v870
        %v903 = vpack.c.b16 %v871, %v871
        %v904 = vpack.c.b16 %v872, %v872
        %v905 = vpack.c.b16 %v873, %v873
        %v906 = vpack.c.b16 %v874, %v874
        %v907 = vpack.c.b16 %v875, %v875
        %940 = vst [vmem:[%s257] sm:$0xf] %v876
        %941 = vst [vmem:[%s257 + $0x4] sm:$0xf] %v877
        %942 = vst [vmem:[%s257 + $0x8] sm:$0xf] %v878
        %943 = vst [vmem:[%s257 + $0xc] sm:$0xf] %v879
        %944 = vst [vmem:[%s257 + $0x10] sm:$0xf] %v880
        %945 = vst [vmem:[%s257 + $0x14] sm:$0xf] %v881
        %946 = vst [vmem:[%s257 + $0x18] sm:$0xf] %v882
        %947 = vst [vmem:[%s257 + $0x1c] sm:$0xf] %v883
        %948 = vst [vmem:[%s257 + $0x20] sm:$0xf] %v884
        %949 = vst [vmem:[%s257 + $0x24] sm:$0xf] %v885
        %950 = vst [vmem:[%s257 + $0x28] sm:$0xf] %v886
        %951 = vst [vmem:[%s257 + $0x2c] sm:$0xf] %v887
        %952 = vst [vmem:[%s257 + $0x30] sm:$0xf] %v888
        %953 = vst [vmem:[%s257 + $0x34] sm:$0xf] %v889
        %954 = vst [vmem:[%s257 + $0x38] sm:$0xf] %v890
        %955 = vst [vmem:[%s257 + $0x3c] sm:$0xf] %v891
        %956 = vst [vmem:[%s257 + $0x40] sm:$0xf] %v892
        %957 = vst [vmem:[%s257 + $0x44] sm:$0xf] %v893
        %958 = vst [vmem:[%s257 + $0x48] sm:$0xf] %v894
        %959 = vst [vmem:[%s257 + $0x4c] sm:$0xf] %v895
        %960 = vst [vmem:[%s257 + $0x50] sm:$0xf] %v896
        %961 = vst [vmem:[%s257 + $0x54] sm:$0xf] %v897
        %962 = vst [vmem:[%s257 + $0x58] sm:$0xf] %v898
        %963 = vst [vmem:[%s257 + $0x5c] sm:$0xf] %v899
        %964 = vst [vmem:[%s257 + $0x60] sm:$0xf] %v900
        %965 = vst [vmem:[%s257 + $0x64] sm:$0xf] %v901
        %966 = vst [vmem:[%s257 + $0x68] sm:$0xf] %v902
        %967 = vst [vmem:[%s257 + $0x6c] sm:$0xf] %v903
        %968 = vst [vmem:[%s257 + $0x70] sm:$0xf] %v904
        %969 = vst [vmem:[%s257 + $0x74] sm:$0xf] %v905
        %970 = vst [vmem:[%s257 + $0x78] sm:$0xf] %v906
        %971 = vst [vmem:[%s257 + $0x7c] sm:$0xf] %v907
      $region40: #{resunet_forward.25} parent=31 // pred_fallthru
        _
      %s972 = smul.u32 32, %s19
      %p973 = scmp.lt.s32.totalorder %s972, 63
      %s974 = scalar_select %p973, %s972, 63
      %p975 = scmp.lt.s32.totalorder %s20, 0
      %s976 = scalar_select %p975, %s20, 0
      %s977 = sadd.s32 %s976, %s974
      %s978 = smul.addr %s977, 4
      %s979 = scalar_lea.vmem %s3, %s978
      // Predicated region
      $region41: #{resunet_forward.25} parent=31 // pred_check
        %p980 = pneg %p135
      $region42: #{resunet_forward.25} parent=31 // pred_check_branch
        %982 = sbr.rel (%p980) target = $region44
      $region43: #{resunet_forward.25} parent=31 // pred_region
        %s983 = smul.u32 32, %s19
      $region44: #{resunet_forward.25} parent=31 // pred_fallthru
        _
    $region32: #{resunet_forward.25} parent=5 // pred_fallthru
      _
    %p984 = scmp.le.s32.totalorder 2, %s9
    // Predicated region
    $region45: #{resunet_forward.25} parent=5 // pred_check
      %p985 = pneg %p984
    $region46: #{resunet_forward.25} parent=5 // pred_check_branch
      %987 = sbr.rel (%p985) target = $region48
    $region47: #{resunet_forward.25} parent=5 // pred_region
      %s988 = ssub.s32 %s9, 2
      // Predicated region
      $region49: #{resunet_forward.25} parent=47 // pred_check
        %p989 = pneg %p141
      $region50: #{resunet_forward.25} parent=47 // pred_check_branch
        %991 = sbr.rel (%p989) target = $region52
      $region51: #{resunet_forward.25} parent=47 // pred_region
        %s992 = smul.u32 32, %s22
        %p993 = scmp.lt.s32.totalorder %s992, 63
        %s994 = scalar_select %p993, %s992, 63
        %p995 = scmp.lt.s32.totalorder %s23, 0
        %s996 = scalar_select %p995, %s23, 0
        %s997 = sadd.s32 %s996, %s994
        %s998 = smul.addr %s997, 4
        %s999 = scalar_lea.vmem %s3, %s998
      $region52: #{resunet_forward.25} parent=47 // pred_fallthru
        _
    $region48: #{resunet_forward.25} parent=5 // pred_fallthru
      _
  $region6: #{resunet_forward.25} parent=0 // loop_footer
    %s13 = sadd.s32 1, %s9
  $region7: #{resunet_forward.25} parent=0 // loop_footer_branch
    %8 = sbr.rel target = $region3
  $region8: #{resunet_forward.25} parent=0 // loop_exit
    _

// kernel: resunet_forward.27
$region0: #{resunet_forward.27}
  #allocation0 [shape = 'u32[]', space=smem, size = 0x4, offset = 0x4, fixed_abs, tag = 'smem constant byte address 0x4 - core index']
  #allocation1 [shape = 'u32[144,128]{1,0:T(1,128)}', space=vmem, size = 0x12000, scoped, tag = 'internal scratch']
  #allocation2 [shape = 'f32[256,128]{1,0:T(8,128)}', space=vmem, size = 0x20000, scoped, tag = 'scratch operand']
  %s0 = inlined_call_operand.vmem [shape: bf16[512,72], index: 0, kind: input, shape index: {}]
  %s1 = inlined_call_operand.vmem [shape: bf16[72,128], index: 1, kind: input, shape index: {}]
  %s2 = inlined_call_operand.vmem [shape: f32[1,128], index: 2, kind: input, shape index: {}]
  %s3 = inlined_call_operand.vmem [shape: bf16[512,128], index: 3, kind: input, shape index: {}]
  %s4 = inlined_call_operand.vmem [shape: f32[1,128], index: 4, kind: input, shape index: {}]
  %s5 = inlined_call_operand.vmem [shape: f32[1,128], index: 5, kind: input, shape index: {}]
  %s6 = inlined_call_operand.vmem [shape: bf16[512,128], index: 6, kind: output, shape index: {}]
  %s7 = sld [smem:[#allocation0]]
  $region65: #{resunet_forward.27} parent=0
    _
  %s9 = ssub.s32 1, %s7
  %s10 = scalar_select 0, %s9, %s7
  loop: start=0, step=1, limit=4
  $region2: #{resunet_forward.27} parent=0 // loop_pre_header
    _
  $region3: #{resunet_forward.27} parent=0 // loop_header
    %s12 = sphi 0, %s16
    %p13 = scmp.ge.s32.totalorder %s12, 4
    %s19 = sphi 0, %s38
    %s20 = sphi 0, %s34
    %s21 = sphi 0, %s30
    %s22 = sphi 0, %s19
    %s23 = sphi 0, %s20
    %s24 = sphi 0, %s21
    %s25 = sphi 0, %s22
    %s26 = sphi 0, %s23
    %s27 = sphi 0, %s24
    %s43 = sphi 0, %s45
    %s46 = sphi 0, %s43
    %s47 = sphi 0, %s46
    %s63 = sphi 0, %s47
    %s71 = sphi 0, %s73
    %s74 = sphi 0, %s71
    %s75 = sphi 0, %s74
    %s91 = sphi 0, %s75
    %s97 = sphi 0, %s99
    %s100 = sphi 0, %s97
    %s101 = sphi 0, %s100
    %s117 = sphi 0, %s101
    %s125 = sphi 0, %s127
    %s128 = sphi 0, %s125
    %s129 = sphi 0, %s128
    %s145 = sphi 0, %s129
    %s151 = sphi 0, %s153
    %s154 = sphi 0, %s151
    %s155 = sphi 0, %s154
    %s171 = sphi 0, %s155
    %s177 = sphi 0, %s179
    %s180 = sphi 0, %s177
    %s181 = sphi 0, %s180
    %s197 = sphi 0, %s181
    %s205 = sphi 0, %s207
    %s208 = sphi 0, %s205
    %s209 = sphi 0, %s208
    %s225 = sphi 0, %s209
  $region4: #{resunet_forward.27} parent=0 // loop_header_branch
    %15 = sbr.rel (%p13) target = $region8
  $region5: #{resunet_forward.27} parent=0 // loop_body
    %s17 = ssub.s32 %s12, 1
    %s18 = ssub.s32 %s12, 2
    %s28 = sadd.s32 1, %s21
    %p29 = scmp.ge.s32.totalorder %s28, 1
    %s30 = scalar_select %p29, 0, %s28
    %s31 = sadd.s32 1, %s20
    %s32 = scalar_select %p29, %s31, %s20
    %p33 = scmp.ge.s32.totalorder %s32, 1
    %s34 = scalar_select %p33, 0, %s32
    %s35 = sadd.s32 1, %s19
    %s36 = scalar_select %p33, %s35, %s19
    %p37 = scmp.ge.s32.totalorder %s36, 2
    %s38 = scalar_select %p37, 0, %s36
    %s39 = ssub.s32 %s19, %s38
    %s40 = ssub.s32 %s21, %s30
    %s41 = sor.u32 %s39, %s40
    %p42 = scmp.eq.s32.totalorder %s41, 0
    %s44 = sadd.s32 %s43, 1
    %s45 = scalar_select %p42, %s43, %s44
    %p48 = pneg %p42
    %p49 = scmp.eq.s32.totalorder %s12, 1
    %p50 = por %p48, %p49
    %p51 = scmp.ne.s32.totalorder %s43, %s46
    %p52 = scmp.eq.s32.totalorder %s12, 0
    %p53 = por %p51, %p52
    %p54 = scmp.ne.s32.totalorder %s43, %s46
    %p55 = scmp.eq.s32.totalorder %s17, 1
    %p56 = por %p54, %p55
    %p57 = scmp.ne.s32.totalorder %s46, %s47
    %p58 = scmp.eq.s32.totalorder %s17, 0
    %p59 = por %p57, %p58
    %p60 = scmp.ne.s32.totalorder %s46, %s47
    %p61 = scmp.eq.s32.totalorder %s18, 1
    %p62 = por %p60, %p61
    %p64 = scmp.ne.s32.totalorder %s47, %s63
    %p65 = scmp.eq.s32.totalorder %s18, 0
    %p66 = por %p64, %p65
    %s67 = ssub.s32 %s21, %s30
    %s68 = ssub.s32 %s20, %s34
    %s69 = sor.u32 %s67, %s68
    %p70 = scmp.eq.s32.totalorder %s69, 0
    %s72 = sadd.s32 %s71, 1
    %s73 = scalar_select %p70, %s71, %s72
    %p76 = pneg %p70
    %p77 = scmp.eq.s32.totalorder %s12, 1
    %p78 = por %p76, %p77
    %p79 = scmp.ne.s32.totalorder %s71, %s74
    %p80 = scmp.eq.s32.totalorder %s12, 0
    %p81 = por %p79, %p80
    %p82 = scmp.ne.s32.totalorder %s71, %s74
    %p83 = scmp.eq.s32.totalorder %s17, 1
    %p84 = por %p82, %p83
    %p85 = scmp.ne.s32.totalorder %s74, %s75
    %p86 = scmp.eq.s32.totalorder %s17, 0
    %p87 = por %p85, %p86
    %p88 = scmp.ne.s32.totalorder %s74, %s75
    %p89 = scmp.eq.s32.totalorder %s18, 1
    %p90 = por %p88, %p89
    %p92 = scmp.ne.s32.totalorder %s75, %s91
    %p93 = scmp.eq.s32.totalorder %s18, 0
    %p94 = por %p92, %p93
    %s95 = ssub.s32 %s20, %s34
    %p96 = scmp.eq.s32.totalorder %s95, 0
    %s98 = sadd.s32 %s97, 1
    %s99 = scalar_select %p96, %s97, %s98
    %p102 = pneg %p96
    %p103 = scmp.eq.s32.totalorder %s12, 1
    %p104 = por %p102, %p103
    %p105 = scmp.ne.s32.totalorder %s97, %s100
    %p106 = scmp.eq.s32.totalorder %s12, 0
    %p107 = por %p105, %p106
    %p108 = scmp.ne.s32.totalorder %s97, %s100
    %p109 = scmp.eq.s32.totalorder %s17, 1
    %p110 = por %p108, %p109
    %p111 = scmp.ne.s32.totalorder %s100, %s101
    %p112 = scmp.eq.s32.totalorder %s17, 0
    %p113 = por %p111, %p112
    %p114 = scmp.ne.s32.totalorder %s100, %s101
    %p115 = scmp.eq.s32.totalorder %s18, 1
    %p116 = por %p114, %p115
    %p118 = scmp.ne.s32.totalorder %s101, %s117
    %p119 = scmp.eq.s32.totalorder %s18, 0
    %p120 = por %p118, %p119
    %s121 = ssub.s32 %s19, %s38
    %s122 = ssub.s32 %s20, %s34
    %s123 = sor.u32 %s121, %s122
    %p124 = scmp.eq.s32.totalorder %s123, 0
    %s126 = sadd.s32 %s125, 1
    %s127 = scalar_select %p124, %s125, %s126
    %p130 = pneg %p124
    %p131 = scmp.eq.s32.totalorder %s12, 1
    %p132 = por %p130, %p131
    %p133 = scmp.ne.s32.totalorder %s125, %s128
    %p134 = scmp.eq.s32.totalorder %s12, 0
    %p135 = por %p133, %p134
    %p136 = scmp.ne.s32.totalorder %s125, %s128
    %p137 = scmp.eq.s32.totalorder %s17, 1
    %p138 = por %p136, %p137
    %p139 = scmp.ne.s32.totalorder %s128, %s129
    %p140 = scmp.eq.s32.totalorder %s17, 0
    %p141 = por %p139, %p140
    %p142 = scmp.ne.s32.totalorder %s128, %s129
    %p143 = scmp.eq.s32.totalorder %s18, 1
    %p144 = por %p142, %p143
    %p146 = scmp.ne.s32.totalorder %s129, %s145
    %p147 = scmp.eq.s32.totalorder %s18, 0
    %p148 = por %p146, %p147
    %s149 = ssub.s32 %s20, %s34
    %p150 = scmp.eq.s32.totalorder %s149, 0
    %s152 = sadd.s32 %s151, 1
    %s153 = scalar_select %p150, %s151, %s152
    %p156 = pneg %p150
    %p157 = scmp.eq.s32.totalorder %s12, 1
    %p158 = por %p156, %p157
    %p159 = scmp.ne.s32.totalorder %s151, %s154
    %p160 = scmp.eq.s32.totalorder %s12, 0
    %p161 = por %p159, %p160
    %p162 = scmp.ne.s32.totalorder %s151, %s154
    %p163 = scmp.eq.s32.totalorder %s17, 1
    %p164 = por %p162, %p163
    %p165 = scmp.ne.s32.totalorder %s154, %s155
    %p166 = scmp.eq.s32.totalorder %s17, 0
    %p167 = por %p165, %p166
    %p168 = scmp.ne.s32.totalorder %s154, %s155
    %p169 = scmp.eq.s32.totalorder %s18, 1
    %p170 = por %p168, %p169
    %p172 = scmp.ne.s32.totalorder %s155, %s171
    %p173 = scmp.eq.s32.totalorder %s18, 0
    %p174 = por %p172, %p173
    %s175 = ssub.s32 %s20, %s34
    %p176 = scmp.eq.s32.totalorder %s175, 0
    %s178 = sadd.s32 %s177, 1
    %s179 = scalar_select %p176, %s177, %s178
    %p182 = pneg %p176
    %p183 = scmp.eq.s32.totalorder %s12, 1
    %p184 = por %p182, %p183
    %p185 = scmp.ne.s32.totalorder %s177, %s180
    %p186 = scmp.eq.s32.totalorder %s12, 0
    %p187 = por %p185, %p186
    %p188 = scmp.ne.s32.totalorder %s177, %s180
    %p189 = scmp.eq.s32.totalorder %s17, 1
    %p190 = por %p188, %p189
    %p191 = scmp.ne.s32.totalorder %s180, %s181
    %p192 = scmp.eq.s32.totalorder %s17, 0
    %p193 = por %p191, %p192
    %p194 = scmp.ne.s32.totalorder %s180, %s181
    %p195 = scmp.eq.s32.totalorder %s18, 1
    %p196 = por %p194, %p195
    %p198 = scmp.ne.s32.totalorder %s181, %s197
    %p199 = scmp.eq.s32.totalorder %s18, 0
    %p200 = por %p198, %p199
    %s201 = ssub.s32 %s19, %s38
    %s202 = ssub.s32 %s20, %s34
    %s203 = sor.u32 %s201, %s202
    %p204 = scmp.eq.s32.totalorder %s203, 0
    %s206 = sadd.s32 %s205, 1
    %s207 = scalar_select %p204, %s205, %s206
    %p210 = pneg %p204
    %p211 = scmp.eq.s32.totalorder %s12, 1
    %p212 = por %p210, %p211
    %p213 = scmp.ne.s32.totalorder %s205, %s208
    %p214 = scmp.eq.s32.totalorder %s12, 0
    %p215 = por %p213, %p214
    %p216 = scmp.ne.s32.totalorder %s205, %s208
    %p217 = scmp.eq.s32.totalorder %s17, 1
    %p218 = por %p216, %p217
    %p219 = scmp.ne.s32.totalorder %s208, %s209
    %p220 = scmp.eq.s32.totalorder %s17, 0
    %p221 = por %p219, %p220
    %p222 = scmp.ne.s32.totalorder %s208, %s209
    %p223 = scmp.eq.s32.totalorder %s18, 1
    %p224 = por %p222, %p223
    %p226 = scmp.ne.s32.totalorder %s209, %s225
    %p227 = scmp.eq.s32.totalorder %s18, 0
    %p228 = por %p226, %p227
    %p229 = scmp.le.s32.totalorder 1, %s12
    %p230 = scmp.lt.s32.totalorder %s12, 3
    %p231 = pnand %p229, %p230
    %p232 = pneg %p231
    // Predicated region
    $region9: #{resunet_forward.27} parent=5 // pred_check
      _
    $region10: #{resunet_forward.27} parent=5 // pred_check_branch
      %234 = sbr.rel (%p231) target = $region12
    $region11: #{resunet_forward.27} parent=5 // pred_region
      %s235 = ssub.s32 %s12, 1
      // Predicated region
      $region13: #{resunet_forward.27} parent=11 // pred_check
        %p236 = pneg %p87
      $region14: #{resunet_forward.27} parent=11 // pred_check_branch
        %238 = sbr.rel (%p236) target = $region16
      $region15: #{resunet_forward.27} parent=11 // pred_region
        %s239 = smul.u32 9, %s24
        %p240 = scmp.lt.s32.totalorder %s239, 8
        %s241 = scalar_select %p240, %s239, 8
        %p242 = scmp.lt.s32.totalorder %s23, 0
        %s243 = scalar_select %p242, %s23, 0
        %s244 = sadd.s32 %s243, %s241
        %s245 = smul.addr %s244, 4
        %s246 = scalar_lea.vmem %s1, %s245
        %s247 = smul.u32 9, %s24
      $region16: #{resunet_forward.27} parent=11 // pred_fallthru
        _
      // Predicated region
      $region17: #{resunet_forward.27} parent=11 // pred_check
        %p248 = pneg %p113
      $region18: #{resunet_forward.27} parent=11 // pred_check_branch
        %250 = sbr.rel (%p248) target = $region20
      $region19: #{resunet_forward.27} parent=11 // pred_region
        %p251 = scmp.lt.s32.totalorder %s23, 0
        %s252 = scalar_select %p251, %s23, 0
        %s253 = scalar_lea.vmem %s2, %s252
      $region20: #{resunet_forward.27} parent=11 // pred_fallthru
        _
      // Predicated region
      $region21: #{resunet_forward.27} parent=11 // pred_check
        %p254 = pneg %p167
      $region22: #{resunet_forward.27} parent=11 // pred_check_branch
        %256 = sbr.rel (%p254) target = $region24
      $region23: #{resunet_forward.27} parent=11 // pred_region
        %p257 = scmp.lt.s32.totalorder %s23, 0
        %s258 = scalar_select %p257, %s23, 0
        %s259 = scalar_lea.vmem %s4, %s258
      $region24: #{resunet_forward.27} parent=11 // pred_fallthru
        _
      // Predicated region
      $region25: #{resunet_forward.27} parent=11 // pred_check
        %p260 = pneg %p193
      $region26: #{resunet_forward.27} parent=11 // pred_check_branch
        %262 = sbr.rel (%p260) target = $region28
      $region27: #{resunet_forward.27} parent=11 // pred_region
        %p263 = scmp.lt.s32.totalorder %s23, 0
        %s264 = scalar_select %p263, %s23, 0
        %s265 = scalar_lea.vmem %s5, %s264
      $region28: #{resunet_forward.27} parent=11 // pred_fallthru
        _
    $region12: #{resunet_forward.27} parent=5 // pred_fallthru
      _
    %p266 = scmp.lt.s32.totalorder %s12, 2
    // Predicated region
    $region29: #{resunet_forward.27} parent=5 // pred_check
      %p267 = pneg %p266
    $region30: #{resunet_forward.27} parent=5 // pred_check_branch
      %269 = sbr.rel (%p267) target = $region32
    $region31: #{resunet_forward.27} parent=5 // pred_region
      // Predicated region
      $region33: #{resunet_forward.27} parent=31 // pred_check
        %p270 = pneg %p53
      $region34: #{resunet_forward.27} parent=31 // pred_check_branch
        %272 = sbr.rel (%p270) target = $region36
      $region35: #{resunet_forward.27} parent=31 // pred_region
        %s273 = smul.u32 32, %s19
        %p274 = scmp.lt.s32.totalorder %s273, 63
        %s275 = scalar_select %p274, %s273, 63
        %p276 = scmp.lt.s32.totalorder %s21, 0
        %s277 = scalar_select %p276, %s21, 0
        %s278 = sadd.s32 %s277, %s275
        %s279 = smul.addr %s278, 4
        %s280 = scalar_lea.vmem %s0, %s279
        %s281 = smul.u32 32, %s19
      $region36: #{resunet_forward.27} parent=31 // pred_fallthru
        _
      // Predicated region
      $region37: #{resunet_forward.27} parent=31 // pred_check
        %p282 = pneg %p135
      $region38: #{resunet_forward.27} parent=31 // pred_check_branch
        %284 = sbr.rel (%p282) target = $region40
      $region39: #{resunet_forward.27} parent=31 // pred_region
        %s285 = smul.u32 32, %s19
        %p286 = scmp.lt.s32.totalorder %s285, 63
        %s287 = scalar_select %p286, %s285, 63
        %p288 = scmp.lt.s32.totalorder %s20, 0
        %s289 = scalar_select %p288, %s20, 0
        %s290 = sadd.s32 %s289, %s287
        %s291 = smul.addr %s290, 4
        %s292 = scalar_lea.vmem %s3, %s291
        %s293 = smul.u32 32, %s19
      $region40: #{resunet_forward.27} parent=31 // pred_fallthru
        _
    $region32: #{resunet_forward.27} parent=5 // pred_fallthru
      _
    %p294 = scmp.le.s32.totalorder 1, %s12
    %p295 = scmp.lt.s32.totalorder %s12, 3
    %p296 = pnand %p294, %p295
    %p297 = pneg %p296
    // Predicated region
    $region41: #{resunet_forward.27} parent=5 // pred_check
      _
    $region42: #{resunet_forward.27} parent=5 // pred_check_branch
      %299 = sbr.rel (%p296) target = $region44
    $region43: #{resunet_forward.27} parent=5 // pred_region
      %s300 = ssub.s32 %s12, 1
      %s301 = smul.u32 32, %s22
      %p302 = scmp.lt.s32.totalorder %s301, 63
      %s303 = scalar_select %p302, %s301, 63
      %p304 = scmp.lt.s32.totalorder %s24, 0
      %s305 = scalar_select %p304, %s24, 0
      %s306 = sadd.s32 %s305, %s303
      %s307 = smul.addr %s306, 4
      %s308 = scalar_lea.vmem %s0, %s307
      %p309 = pneg %p59
      %p310 = pneg %p56
      %s311 = smul.u32 9, %s24
      %p312 = scmp.lt.s32.totalorder %s311, 8
      %s313 = scalar_select %p312, %s311, 8
      %p314 = scmp.lt.s32.totalorder %s23, 0
      %s315 = scalar_select %p314, %s23, 0
      %s316 = sadd.s32 %s315, %s313
      %s317 = smul.addr %s316, 4
      %s318 = scalar_lea.vmem %s1, %s317
      %p319 = pneg %p87
      %p320 = pneg %p84
      %p321 = scmp.lt.s32.totalorder %s23, 0
      %s322 = scalar_select %p321, %s23, 0
      %s323 = scalar_lea.vmem %s2, %s322
      %p324 = pneg %p113
      %p325 = pneg %p110
      %s326 = smul.u32 32, %s22
      %p327 = scmp.lt.s32.totalorder %s326, 63
      %s328 = scalar_select %p327, %s326, 63
      %p329 = scmp.lt.s32.totalorder %s23, 0
      %s330 = scalar_select %p329, %s23, 0
      %s331 = sadd.s32 %s330, %s328
      %s332 = smul.addr %s331, 4
      %s333 = scalar_lea.vmem %s3, %s332
      %p334 = pneg %p141
      %p335 = pneg %p138
      %p336 = scmp.lt.s32.totalorder %s23, 0
      %s337 = scalar_select %p336, %s23, 0
      %s338 = scalar_lea.vmem %s4, %s337
      %p339 = pneg %p167
      %p340 = pneg %p164
      %p341 = scmp.lt.s32.totalorder %s23, 0
      %s342 = scalar_select %p341, %s23, 0
      %s343 = scalar_lea.vmem %s5, %s342
      %p344 = pneg %p193
      %p345 = pneg %p190
      %p346 = pneg %p221
      %p347 = pneg %p218
      %s348 = smul.u32 32, %s22
      %p349 = scmp.lt.s32.totalorder %s348, 63
      %s350 = scalar_select %p349, %s348, 63
      %p351 = scmp.lt.s32.totalorder %s23, 0
      %s352 = scalar_select %p351, %s23, 0
      %s353 = sadd.s32 %s352, %s350
      %s354 = smul.addr %s353, 4
      %s355 = scalar_lea.vmem %s6, %s354
      %s356 = smul.u32 32, %s22
      %p357 = scmp.lt.s32.totalorder %s356, 63
      %s358 = scalar_select %p357, %s356, 63
      %p359 = scmp.lt.s32.totalorder %s24, 0
      %s360 = scalar_select %p359, %s24, 0
      %s361 = sadd.s32 %s360, %s358
      %s362 = smul.addr %s361, 4
      %s363 = scalar_lea.vmem %s0, %s362
      %s364 = smul.u32 32, %s22
      %s365 = smul.u32 9, %s24
      %p366 = scmp.lt.s32.totalorder %s365, 8
      %s367 = scalar_select %p366, %s365, 8
      %p368 = scmp.lt.s32.totalorder %s23, 0
      %s369 = scalar_select %p368, %s23, 0
      %s370 = sadd.s32 %s369, %s367
      %s371 = smul.addr %s370, 4
      %s372 = scalar_lea.vmem %s1, %s371
      %s373 = smul.u32 9, %s24
      %p374 = scmp.lt.s32.totalorder %s23, 0
      %s375 = scalar_select %p374, %s23, 0
      %s376 = scalar_lea.vmem %s2, %s375
      %s377 = smul.u32 32, %s22
      %p378 = scmp.lt.s32.totalorder %s377, 63
      %s379 = scalar_select %p378, %s377, 63
      %p380 = scmp.lt.s32.totalorder %s23, 0
      %s381 = scalar_select %p380, %s23, 0
      %s382 = sadd.s32 %s381, %s379
      %s383 = smul.addr %s382, 4
      %s384 = scalar_lea.vmem %s3, %s383
      %s385 = smul.u32 32, %s22
      %p386 = scmp.lt.s32.totalorder %s23, 0
      %s387 = scalar_select %p386, %s23, 0
      %s388 = scalar_lea.vmem %s4, %s387
      %p389 = scmp.lt.s32.totalorder %s23, 0
      %s390 = scalar_select %p389, %s23, 0
      %s391 = scalar_lea.vmem %s5, %s390
      %s392 = smul.u32 32, %s22
      %p393 = scmp.lt.s32.totalorder %s392, 63
      %s394 = scalar_select %p393, %s392, 63
      %p395 = scmp.lt.s32.totalorder %s23, 0
      %s396 = scalar_select %p395, %s23, 0
      %s397 = sadd.s32 %s396, %s394
      %s398 = smul.addr %s397, 4
      %s399 = scalar_lea.vmem %s6, %s398
      %s400 = smul.u32 32, %s22
      %p402 = scmp.eq.s32.totalorder %s24, 0
      // Predicated region
      $region45: #{resunet_forward.27} parent=43 // pred_check
        %p403 = pneg %p402
      $region46: #{resunet_forward.27} parent=43 // pred_check_branch
        %405 = sbr.rel (%p403) target = $region48
      $region47: #{resunet_forward.27} parent=43 // pred_region
        %406 = vst [vmem:[#allocation2] sm:$0xff] 0.0
        %407 = vst [vmem:[#allocation2 + $0x8] sm:$0xff] 0.0
        %408 = vst [vmem:[#allocation2 + $0x10] sm:$0xff] 0.0
        %409 = vst [vmem:[#allocation2 + $0x18] sm:$0xff] 0.0
        %410 = vst [vmem:[#allocation2 + $0x20] sm:$0xff] 0.0
        %411 = vst [vmem:[#allocation2 + $0x28] sm:$0xff] 0.0
        %412 = vst [vmem:[#allocation2 + $0x30] sm:$0xff] 0.0
        %413 = vst [vmem:[#allocation2 + $0x38] sm:$0xff] 0.0
        %414 = vst [vmem:[#allocation2 + $0x40] sm:$0xff] 0.0
        %415 = vst [vmem:[#allocation2 + $0x48] sm:$0xff] 0.0
        %416 = vst [vmem:[#allocation2 + $0x50] sm:$0xff] 0.0
        %417 = vst [vmem:[#allocation2 + $0x58] sm:$0xff] 0.0
        %418 = vst [vmem:[#allocation2 + $0x60] sm:$0xff] 0.0
        %419 = vst [vmem:[#allocation2 + $0x68] sm:$0xff] 0.0
        %420 = vst [vmem:[#allocation2 + $0x70] sm:$0xff] 0.0
        %421 = vst [vmem:[#allocation2 + $0x78] sm:$0xff] 0.0
        %422 = vst [vmem:[#allocation2 + $0x80] sm:$0xff] 0.0
        %423 = vst [vmem:[#allocation2 + $0x88] sm:$0xff] 0.0
        %424 = vst [vmem:[#allocation2 + $0x90] sm:$0xff] 0.0
        %425 = vst [vmem:[#allocation2 + $0x98] sm:$0xff] 0.0
        %426 = vst [vmem:[#allocation2 + $0xa0] sm:$0xff] 0.0
        %427 = vst [vmem:[#allocation2 + $0xa8] sm:$0xff] 0.0
        %428 = vst [vmem:[#allocation2 + $0xb0] sm:$0xff] 0.0
        %429 = vst [vmem:[#allocation2 + $0xb8] sm:$0xff] 0.0
        %430 = vst [vmem:[#allocation2 + $0xc0] sm:$0xff] 0.0
        %431 = vst [vmem:[#allocation2 + $0xc8] sm:$0xff] 0.0
        %432 = vst [vmem:[#allocation2 + $0xd0] sm:$0xff] 0.0
        %433 = vst [vmem:[#allocation2 + $0xd8] sm:$0xff] 0.0
        %434 = vst [vmem:[#allocation2 + $0xe0] sm:$0xff] 0.0
        %435 = vst [vmem:[#allocation2 + $0xe8] sm:$0xff] 0.0
        %436 = vst [vmem:[#allocation2 + $0xf0] sm:$0xff] 0.0
        %437 = vst [vmem:[#allocation2 + $0xf8] sm:$0xff] 0.0
      $region48: #{resunet_forward.27} parent=43 // pred_fallthru
        _
      %v438 = vld [vmem:[#allocation2] sm:$0xff]
      %v439 = vld [vmem:[#allocation2 + $0x8] sm:$0xff]
      %v440 = vld [vmem:[#allocation2 + $0x10] sm:$0xff]
      %v441 = vld [vmem:[#allocation2 + $0x18] sm:$0xff]
      %v442 = vld [vmem:[#allocation2 + $0x20] sm:$0xff]
      %v443 = vld [vmem:[#allocation2 + $0x28] sm:$0xff]
      %v444 = vld [vmem:[#allocation2 + $0x30] sm:$0xff]
      %v445 = vld [vmem:[#allocation2 + $0x38] sm:$0xff]
      %v446 = vld [vmem:[#allocation2 + $0x40] sm:$0xff]
      %v447 = vld [vmem:[#allocation2 + $0x48] sm:$0xff]
      %v448 = vld [vmem:[#allocation2 + $0x50] sm:$0xff]
      %v449 = vld [vmem:[#allocation2 + $0x58] sm:$0xff]
      %v450 = vld [vmem:[#allocation2 + $0x60] sm:$0xff]
      %v451 = vld [vmem:[#allocation2 + $0x68] sm:$0xff]
      %v452 = vld [vmem:[#allocation2 + $0x70] sm:$0xff]
      %v453 = vld [vmem:[#allocation2 + $0x78] sm:$0xff]
      %v454 = vld [vmem:[#allocation2 + $0x80] sm:$0xff]
      %v455 = vld [vmem:[#allocation2 + $0x88] sm:$0xff]
      %v456 = vld [vmem:[#allocation2 + $0x90] sm:$0xff]
      %v457 = vld [vmem:[#allocation2 + $0x98] sm:$0xff]
      %v458 = vld [vmem:[#allocation2 + $0xa0] sm:$0xff]
      %v459 = vld [vmem:[#allocation2 + $0xa8] sm:$0xff]
      %v460 = vld [vmem:[#allocation2 + $0xb0] sm:$0xff]
      %v461 = vld [vmem:[#allocation2 + $0xb8] sm:$0xff]
      %v462 = vld [vmem:[#allocation2 + $0xc0] sm:$0xff]
      %v463 = vld [vmem:[#allocation2 + $0xc8] sm:$0xff]
      %v464 = vld [vmem:[#allocation2 + $0xd0] sm:$0xff]
      %v465 = vld [vmem:[#allocation2 + $0xd8] sm:$0xff]
      %v466 = vld [vmem:[#allocation2 + $0xe0] sm:$0xff]
      %v467 = vld [vmem:[#allocation2 + $0xe8] sm:$0xff]
      %v468 = vld [vmem:[#allocation2 + $0xf0] sm:$0xff]
      %v469 = vld [vmem:[#allocation2 + $0xf8] sm:$0xff]
      %v470 = vld [vmem:[%s363] sm:$0xf]
      %v471 = vld [vmem:[%s363 + $0x4] sm:$0xf]
      %v472 = vld [vmem:[%s363 + $0x8] sm:$0xf]
      %v473 = vld [vmem:[%s363 + $0xc] sm:$0xf]
      %v474 = vld [vmem:[%s363 + $0x10] sm:$0xf]
      %v475 = vld [vmem:[%s363 + $0x14] sm:$0xf]
      %v476 = vld [vmem:[%s363 + $0x18] sm:$0xf]
      %v477 = vld [vmem:[%s363 + $0x1c] sm:$0xf]
      %v478 = vld [vmem:[%s363 + $0x20] sm:$0xf]
      %v479 = vld [vmem:[%s363 + $0x24] sm:$0xf]
      %v480 = vld [vmem:[%s363 + $0x28] sm:$0xf]
      %v481 = vld [vmem:[%s363 + $0x2c] sm:$0xf]
      %v482 = vld [vmem:[%s363 + $0x30] sm:$0xf]
      %v483 = vld [vmem:[%s363 + $0x34] sm:$0xf]
      %v484 = vld [vmem:[%s363 + $0x38] sm:$0xf]
      %v485 = vld [vmem:[%s363 + $0x3c] sm:$0xf]
      %v486 = vld [vmem:[%s363 + $0x40] sm:$0xf]
      %v487 = vld [vmem:[%s363 + $0x44] sm:$0xf]
      %v488 = vld [vmem:[%s363 + $0x48] sm:$0xf]
      %v489 = vld [vmem:[%s363 + $0x4c] sm:$0xf]
      %v490 = vld [vmem:[%s363 + $0x50] sm:$0xf]
      %v491 = vld [vmem:[%s363 + $0x54] sm:$0xf]
      %v492 = vld [vmem:[%s363 + $0x58] sm:$0xf]
      %v493 = vld [vmem:[%s363 + $0x5c] sm:$0xf]
      %v494 = vld [vmem:[%s363 + $0x60] sm:$0xf]
      %v495 = vld [vmem:[%s363 + $0x64] sm:$0xf]
      %v496 = vld [vmem:[%s363 + $0x68] sm:$0xf]
      %v497 = vld [vmem:[%s363 + $0x6c] sm:$0xf]
      %v498 = vld [vmem:[%s363 + $0x70] sm:$0xf]
      %v499 = vld [vmem:[%s363 + $0x74] sm:$0xf]
      %v500 = vld [vmem:[%s363 + $0x78] sm:$0xf]
      %v501 = vld [vmem:[%s363 + $0x7c] sm:$0xf]
      %v502 = vld [vmem:[%s372] sm:$0xf]
      %v503 = vld [vmem:[%s372 + $0x4] sm:$0xf]
      %v504 = vld [vmem:[%s372 + $0x8] sm:$0xf]
      %v505 = vld [vmem:[%s372 + $0xc] sm:$0xf]
      %v506 = vld [vmem:[%s372 + $0x10] sm:$0xf]
      %v507 = vld [vmem:[%s372 + $0x14] sm:$0xf]
      %v508 = vld [vmem:[%s372 + $0x18] sm:$0xf]
      %v509 = vld [vmem:[%s372 + $0x1c] sm:$0xf]
      %v510 = vld [vmem:[%s372 + $0x20] sm:$0xf]
      %v543 = vunpack.c.l.b16 %v470
      %v544 = vunpack.c.l.b16 %v471
      %v545 = vunpack.c.l.b16 %v472
      %v546 = vunpack.c.l.b16 %v473
      %v547 = vunpack.c.l.b16 %v474
      %v548 = vunpack.c.l.b16 %v475
      %v549 = vunpack.c.l.b16 %v476
      %v550 = vunpack.c.l.b16 %v477
      %v551 = vunpack.c.l.b16 %v478
      %v552 = vunpack.c.l.b16 %v479
      %v553 = vunpack.c.l.b16 %v480
      %v554 = vunpack.c.l.b16 %v481
      %v555 = vunpack.c.l.b16 %v482
      %v556 = vunpack.c.l.b16 %v483
      %v557 = vunpack.c.l.b16 %v484
      %v558 = vunpack.c.l.b16 %v485
      %v559 = vunpack.c.l.b16 %v486
      %v560 = vunpack.c.l.b16 %v487
      %v561 = vunpack.c.l.b16 %v488
      %v562 = vunpack.c.l.b16 %v489
      %v563 = vunpack.c.l.b16 %v490
      %v564 = vunpack.c.l.b16 %v491
      %v565 = vunpack.c.l.b16 %v492
      %v566 = vunpack.c.l.b16 %v493
      %v567 = vunpack.c.l.b16 %v494
      %v568 = vunpack.c.l.b16 %v495
      %v569 = vunpack.c.l.b16 %v496
      %v570 = vunpack.c.l.b16 %v497
      %v571 = vunpack.c.l.b16 %v498
      %v572 = vunpack.c.l.b16 %v499
      %v573 = vunpack.c.l.b16 %v500
      %v574 = vunpack.c.l.b16 %v501
      %v575 = vpack.c.b16 %v544, %v543
      %v576 = vpack.c.b16 %v546, %v545
      %v577 = vpack.c.b16 %v548, %v547
      %v578 = vpack.c.b16 %v550, %v549
      %v579 = vpack.c.b16 %v552, %v551
      %v580 = vpack.c.b16 %v554, %v553
      %v581 = vpack.c.b16 %v556, %v555
      %v582 = vpack.c.b16 %v558, %v557
      %v583 = vpack.c.b16 %v560, %v559
      %v584 = vpack.c.b16 %v562, %v561
      %v585 = vpack.c.b16 %v564, %v563
      %v586 = vpack.c.b16 %v566, %v565
      %v587 = vpack.c.b16 %v568, %v567
      %v588 = vpack.c.b16 %v570, %v569
      %v589 = vpack.c.b16 %v572, %v571
      %v590 = vpack.c.b16 %v574, %v573
      %v600 = vunpack.c.l.b16 %v502
      %v601 = vunpack.c.l.b16 %v503
      %v602 = vunpack.c.l.b16 %v504
      %v603 = vunpack.c.l.b16 %v505
      %v604 = vunpack.c.l.b16 %v506
      %v605 = vunpack.c.l.b16 %v507
      %v606 = vunpack.c.l.b16 %v508
      %v607 = vunpack.c.l.b16 %v509
      %v608 = vunpack.c.l.b16 %v510
      %v609 = vpack.c.b16 %v601, %v600
      %v610 = vpack.c.b16 %v603, %v602
      %v611 = vpack.c.b16 %v605, %v604
      %v612 = vpack.c.b16 %v607, %v606
      %v613 = vpack.c.b16 %v608, %v608
      %vm618 = vcmask 588800
      %v620 = vsel %vm618, %v575, 0
      %v623 = vsel %vm618, %v576, 0
      %v626 = vsel %vm618, %v577, 0
      %v629 = vsel %vm618, %v578, 0
      %v632 = vsel %vm618, %v579, 0
      %v635 = vsel %vm618, %v580, 0
      %v638 = vsel %vm618, %v581, 0
      %v641 = vsel %vm618, %v582, 0
      %v644 = vsel %vm618, %v583, 0
      %v647 = vsel %vm618, %v584, 0
      %v650 = vsel %vm618, %v585, 0
      %v653 = vsel %vm618, %v586, 0
      %v656 = vsel %vm618, %v587, 0
      %v659 = vsel %vm618, %v588, 0
      %v662 = vsel %vm618, %v589, 0
      %v665 = vsel %vm618, %v590, 0
      %vm667 = vcmask 1043456
      %v669 = vsel %vm667, %v613, 0
      %671 = vmatprep.subr.bf16.mxu0 0
      %672 = vmatpush1.bf16.msra.mxu0 %v609
      %673 = vmatprep.subr.bf16.mxu0 0
      %674 = vmatpush1.bf16.msra.mxu0 %v610
      %675 = vmatprep.subr.bf16.mxu0 0
      %676 = vmatpush1.bf16.msra.mxu0 %v611
      %677 = vmatprep.subr.bf16.mxu0 0
      %678 = vmatpush1.bf16.msra.mxu0 %v612
      %679 = vmatprep.subr.bf16.mxu0 0
      %680 = vmatpush1.bf16.msra.mxu0 %v669
      %681 = vmatprep.subr.bf16.mxu0 0
      %682 = vmatpush1.bf16.msra.mxu0 0
      %683 = vmatprep.subr.bf16.mxu0 0
      %684 = vmatpush1.bf16.msra.mxu0 0
      %685 = vmatprep.subr.bf16.mxu0 0
      %686 = vmatpush1.bf16.msra.mxu0 0
      %687 = vmatprep.subr.bf16.mxu0 0
      %688 = vmatpush1.bf16.msra.mxu0 0
      %689 = vmatprep.subr.bf16.mxu0 0
      %690 = vmatpush1.bf16.msra.mxu0 0
      %691 = vmatprep.subr.bf16.mxu0 0
      %692 = vmatpush1.bf16.msra.mxu0 0
      %693 = vmatprep.subr.bf16.mxu0 0
      %694 = vmatpush1.bf16.msra.mxu0 0
      %695 = vmatprep.subr.bf16.mxu0 0
      %696 = vmatpush1.bf16.msra.mxu0 0
      %697 = vmatprep.subr.bf16.mxu0 0
      %698 = vmatpush1.bf16.msra.mxu0 0
      %699 = vmatprep.subr.bf16.mxu0 0
      %700 = vmatpush1.bf16.msra.mxu0 0
      %701 = vmatprep.subr.bf16.mxu0 0
      %702 = vmatpush1.bf16.msra.mxu0 0
      %703 = vmatprep.mubr.bf16.mxu0 0
      %704 = vmatmul.mubr.bf16.gmra.mrb[0].mxu0 %v620
      %v705 = vpop.f32.mrb[0].mxu0
      %v706 = vadd.f32 0.0, %v705
      %v707 = vpop.f32.mrb[0].mxu0
      %v708 = vpop.f32.mrb[0].mxu0
      %v709 = vadd.f32 0.0, %v708
      %v710 = vpop.f32.mrb[0].mxu0
      %711 = vmatprep.mubr.bf16.mxu0 0
      %712 = vmatmul.mubr.bf16.gmra.mrb[0].mxu0 %v623
      %v713 = vpop.f32.mrb[0].mxu0
      %v714 = vadd.f32 0.0, %v713
      %v715 = vpop.f32.mrb[0].mxu0
      %v716 = vpop.f32.mrb[0].mxu0
      %v717 = vadd.f32 0.0, %v716
      %v718 = vpop.f32.mrb[0].mxu0
      %719 = vmatprep.mubr.bf16.mxu0 0
      %720 = vmatmul.mubr.bf16.gmra.mrb[0].mxu0 %v626
      %v721 = vpop.f32.mrb[0].mxu0
      %v722 = vadd.f32 0.0, %v721
      %v723 = vpop.f32.mrb[0].mxu0
      %v724 = vpop.f32.mrb[0].mxu0
      %v725 = vadd.f32 0.0, %v724
      %v726 = vpop.f32.mrb[0].mxu0
      %727 = vmatprep.mubr.bf16.mxu0 0
      %728 = vmatmul.mubr.bf16.gmra.mrb[0].mxu0 %v629
      %v729 = vpop.f32.mrb[0].mxu0
      %v730 = vadd.f32 0.0, %v729
      %v731 = vpop.f32.mrb[0].mxu0
      %v732 = vpop.f32.mrb[0].mxu0
      %v733 = vadd.f32 0.0, %v732
      %v734 = vpop.f32.mrb[0].mxu0
      %735 = vmatprep.mubr.bf16.mxu0 0
      %736 = vmatmul.mubr.bf16.gmra.mrb[0].mxu0 %v632
      %v737 = vpop.f32.mrb[0].mxu0
      %v738 = vadd.f32 0.0, %v737
      %v739 = vpop.f32.mrb[0].mxu0
      %v740 = vpop.f32.mrb[0].mxu0
      %v741 = vadd.f32 0.0, %v740
      %v742 = vpop.f32.mrb[0].mxu0
      %743 = vmatprep.mubr.bf16.mxu0 0
      %744 = vmatmul.mubr.bf16.gmra.mrb[0].mxu0 %v635
      %v745 = vpop.f32.mrb[0].mxu0
      %v746 = vadd.f32 0.0, %v745
      %v747 = vpop.f32.mrb[0].mxu0
      %v748 = vpop.f32.mrb[0].mxu0
      %v749 = vadd.f32 0.0, %v748
      %v750 = vpop.f32.mrb[0].mxu0
      %751 = vmatprep.mubr.bf16.mxu0 0
      %752 = vmatmul.mubr.bf16.gmra.mrb[0].mxu0 %v638
      %v753 = vpop.f32.mrb[0].mxu0
      %v754 = vadd.f32 0.0, %v753
      %v755 = vpop.f32.mrb[0].mxu0
      %v756 = vpop.f32.mrb[0].mxu0
      %v757 = vadd.f32 0.0, %v756
      %v758 = vpop.f32.mrb[0].mxu0
      %759 = vmatprep.mubr.bf16.mxu0 0
      %760 = vmatmul.mubr.bf16.gmra.mrb[0].mxu0 %v641
      %v761 = vpop.f32.mrb[0].mxu0
      %v762 = vadd.f32 0.0, %v761
      %v763 = vpop.f32.mrb[0].mxu0
      %v764 = vpop.f32.mrb[0].mxu0
      %v765 = vadd.f32 0.0, %v764
      %v766 = vpop.f32.mrb[0].mxu0
      %767 = vmatprep.mubr.bf16.mxu0 0
      %768 = vmatmul.mubr.bf16.gmra.mrb[0].mxu0 %v644
      %v769 = vpop.f32.mrb[0].mxu0
      %v770 = vadd.f32 0.0, %v769
      %v771 = vpop.f32.mrb[0].mxu0
      %v772 = vpop.f32.mrb[0].mxu0
      %v773 = vadd.f32 0.0, %v772
      %v774 = vpop.f32.mrb[0].mxu0
      %775 = vmatprep.mubr.bf16.mxu0 0
      %776 = vmatmul.mubr.bf16.gmra.mrb[0].mxu0 %v647
      %v777 = vpop.f32.mrb[0].mxu0
      %v778 = vadd.f32 0.0, %v777
      %v779 = vpop.f32.mrb[0].mxu0
      %v780 = vpop.f32.mrb[0].mxu0
      %v781 = vadd.f32 0.0, %v780
      %v782 = vpop.f32.mrb[0].mxu0
      %783 = vmatprep.mubr.bf16.mxu0 0
      %784 = vmatmul.mubr.bf16.gmra.mrb[0].mxu0 %v650
      %v785 = vpop.f32.mrb[0].mxu0
      %v786 = vadd.f32 0.0, %v785
      %v787 = vpop.f32.mrb[0].mxu0
      %v788 = vpop.f32.mrb[0].mxu0
      %v789 = vadd.f32 0.0, %v788
      %v790 = vpop.f32.mrb[0].mxu0
      %791 = vmatprep.mubr.bf16.mxu0 0
      %792 = vmatmul.mubr.bf16.gmra.mrb[0].mxu0 %v653
      %v793 = vpop.f32.mrb[0].mxu0
      %v794 = vadd.f32 0.0, %v793
      %v795 = vpop.f32.mrb[0].mxu0
      %v796 = vpop.f32.mrb[0].mxu0
      %v797 = vadd.f32 0.0, %v796
      %v798 = vpop.f32.mrb[0].mxu0
      %799 = vmatprep.mubr.bf16.mxu0 0
      %800 = vmatmul.mubr.bf16.gmra.mrb[0].mxu0 %v656
      %v801 = vpop.f32.mrb[0].mxu0
      %v802 = vadd.f32 0.0, %v801
      %v803 = vpop.f32.mrb[0].mxu0
      %v804 = vpop.f32.mrb[0].mxu0
      %v805 = vadd.f32 0.0, %v804
      %v806 = vpop.f32.mrb[0].mxu0
      %807 = vmatprep.mubr.bf16.mxu0 0
      %808 = vmatmul.mubr.bf16.gmra.mrb[0].mxu0 %v659
      %v809 = vpop.f32.mrb[0].mxu0
      %v810 = vadd.f32 0.0, %v809
      %v811 = vpop.f32.mrb[0].mxu0
      %v812 = vpop.f32.mrb[0].mxu0
      %v813 = vadd.f32 0.0, %v812
      %v814 = vpop.f32.mrb[0].mxu0
      %815 = vmatprep.mubr.bf16.mxu0 0
      %816 = vmatmul.mubr.bf16.gmra.mrb[0].mxu0 %v662
      %v817 = vpop.f32.mrb[0].mxu0
      %v818 = vadd.f32 0.0, %v817
      %v819 = vpop.f32.mrb[0].mxu0
      %v820 = vpop.f32.mrb[0].mxu0
      %v821 = vadd.f32 0.0, %v820
      %v822 = vpop.f32.mrb[0].mxu0
      %823 = vmatprep.mubr.bf16.mxu0 0
      %824 = vmatmul.mubr.bf16.gmra.mrb[0].mxu0 %v665
      %v825 = vpop.f32.mrb[0].mxu0
      %v826 = vadd.f32 0.0, %v825
      %v827 = vpop.f32.mrb[0].mxu0
      %v828 = vpop.f32.mrb[0].mxu0
      %v829 = vadd.f32 0.0, %v828
      %v830 = vpop.f32.mrb[0].mxu0
      %831 = vdwg.mxu0
      %v832 = vadd.f32 %v438, %v706
      %v833 = vadd.f32 %v439, %v709
      %v834 = vadd.f32 %v440, %v714
      %v835 = vadd.f32 %v441, %v717
      %v836 = vadd.f32 %v442, %v722
      %v837 = vadd.f32 %v443, %v725
      %v838 = vadd.f32 %v444, %v730
      %v839 = vadd.f32 %v445, %v733
      %v840 = vadd.f32 %v446, %v738
      %v841 = vadd.f32 %v447, %v741
      %v842 = vadd.f32 %v448, %v746
      %v843 = vadd.f32 %v449, %v749
      %v844 = vadd.f32 %v450, %v754
      %v845 = vadd.f32 %v451, %v757
      %v846 = vadd.f32 %v452, %v762
      %v847 = vadd.f32 %v453, %v765
      %v848 = vadd.f32 %v454, %v770
      %v849 = vadd.f32 %v455, %v773
      %v850 = vadd.f32 %v456, %v778
      %v851 = vadd.f32 %v457, %v781
      %v852 = vadd.f32 %v458, %v786
      %v853 = vadd.f32 %v459, %v789
      %v854 = vadd.f32 %v460, %v794
      %v855 = vadd.f32 %v461, %v797
      %v856 = vadd.f32 %v462, %v802
      %v857 = vadd.f32 %v463, %v805
      %v858 = vadd.f32 %v464, %v810
      %v859 = vadd.f32 %v465, %v813
      %v860 = vadd.f32 %v466, %v818
      %v861 = vadd.f32 %v467, %v821
      %v862 = vadd.f32 %v468, %v826
      %v863 = vadd.f32 %v469, %v829
      %864 = vst [vmem:[#allocation2] sm:$0xff] %v832
      %865 = vst [vmem:[#allocation2 + $0x8] sm:$0xff] %v833
      %866 = vst [vmem:[#allocation2 + $0x10] sm:$0xff] %v834
      %867 = vst [vmem:[#allocation2 + $0x18] sm:$0xff] %v835
      %868 = vst [vmem:[#allocation2 + $0x20] sm:$0xff] %v836
      %869 = vst [vmem:[#allocation2 + $0x28] sm:$0xff] %v837
      %870 = vst [vmem:[#allocation2 + $0x30] sm:$0xff] %v838
      %871 = vst [vmem:[#allocation2 + $0x38] sm:$0xff] %v839
      %872 = vst [vmem:[#allocation2 + $0x40] sm:$0xff] %v840
      %873 = vst [vmem:[#allocation2 + $0x48] sm:$0xff] %v841
      %874 = vst [vmem:[#allocation2 + $0x50] sm:$0xff] %v842
      %875 = vst [vmem:[#allocation2 + $0x58] sm:$0xff] %v843
      %876 = vst [vmem:[#allocation2 + $0x60] sm:$0xff] %v844
      %877 = vst [vmem:[#allocation2 + $0x68] sm:$0xff] %v845
      %878 = vst [vmem:[#allocation2 + $0x70] sm:$0xff] %v846
      %879 = vst [vmem:[#allocation2 + $0x78] sm:$0xff] %v847
      %880 = vst [vmem:[#allocation2 + $0x80] sm:$0xff] %v848
      %881 = vst [vmem:[#allocation2 + $0x88] sm:$0xff] %v849
      %882 = vst [vmem:[#allocation2 + $0x90] sm:$0xff] %v850
      %883 = vst [vmem:[#allocation2 + $0x98] sm:$0xff] %v851
      %884 = vst [vmem:[#allocation2 + $0xa0] sm:$0xff] %v852
      %885 = vst [vmem:[#allocation2 + $0xa8] sm:$0xff] %v853
      %886 = vst [vmem:[#allocation2 + $0xb0] sm:$0xff] %v854
      %887 = vst [vmem:[#allocation2 + $0xb8] sm:$0xff] %v855
      %888 = vst [vmem:[#allocation2 + $0xc0] sm:$0xff] %v856
      %889 = vst [vmem:[#allocation2 + $0xc8] sm:$0xff] %v857
      %890 = vst [vmem:[#allocation2 + $0xd0] sm:$0xff] %v858
      %891 = vst [vmem:[#allocation2 + $0xd8] sm:$0xff] %v859
      %892 = vst [vmem:[#allocation2 + $0xe0] sm:$0xff] %v860
      %893 = vst [vmem:[#allocation2 + $0xe8] sm:$0xff] %v861
      %894 = vst [vmem:[#allocation2 + $0xf0] sm:$0xff] %v862
      %895 = vst [vmem:[#allocation2 + $0xf8] sm:$0xff] %v863
      // Predicated region
      $region49: #{resunet_forward.27} parent=43 // pred_check
        %p896 = pneg %p402
      $region50: #{resunet_forward.27} parent=43 // pred_check_branch
        %898 = sbr.rel (%p896) target = $region52
      $region51: #{resunet_forward.27} parent=43 // pred_region
        %v899 = vld [vmem:[#allocation2] sm:$0xff]
        %v900 = vld [vmem:[#allocation2 + $0x8] sm:$0xff]
        %v901 = vld [vmem:[#allocation2 + $0x10] sm:$0xff]
        %v902 = vld [vmem:[#allocation2 + $0x18] sm:$0xff]
        %v903 = vld [vmem:[#allocation2 + $0x20] sm:$0xff]
        %v904 = vld [vmem:[#allocation2 + $0x28] sm:$0xff]
        %v905 = vld [vmem:[#allocation2 + $0x30] sm:$0xff]
        %v906 = vld [vmem:[#allocation2 + $0x38] sm:$0xff]
        %v907 = vld [vmem:[#allocation2 + $0x40] sm:$0xff]
        %v908 = vld [vmem:[#allocation2 + $0x48] sm:$0xff]
        %v909 = vld [vmem:[#allocation2 + $0x50] sm:$0xff]
        %v910 = vld [vmem:[#allocation2 + $0x58] sm:$0xff]
        %v911 = vld [vmem:[#allocation2 + $0x60] sm:$0xff]
        %v912 = vld [vmem:[#allocation2 + $0x68] sm:$0xff]
        %v913 = vld [vmem:[#allocation2 + $0x70] sm:$0xff]
        %v914 = vld [vmem:[#allocation2 + $0x78] sm:$0xff]
        %v915 = vld [vmem:[#allocation2 + $0x80] sm:$0xff]
        %v916 = vld [vmem:[#allocation2 + $0x88] sm:$0xff]
        %v917 = vld [vmem:[#allocation2 + $0x90] sm:$0xff]
        %v918 = vld [vmem:[#allocation2 + $0x98] sm:$0xff]
        %v919 = vld [vmem:[#allocation2 + $0xa0] sm:$0xff]
        %v920 = vld [vmem:[#allocation2 + $0xa8] sm:$0xff]
        %v921 = vld [vmem:[#allocation2 + $0xb0] sm:$0xff]
        %v922 = vld [vmem:[#allocation2 + $0xb8] sm:$0xff]
        %v923 = vld [vmem:[#allocation2 + $0xc0] sm:$0xff]
        %v924 = vld [vmem:[#allocation2 + $0xc8] sm:$0xff]
        %v925 = vld [vmem:[#allocation2 + $0xd0] sm:$0xff]
        %v926 = vld [vmem:[#allocation2 + $0xd8] sm:$0xff]
        %v927 = vld [vmem:[#allocation2 + $0xe0] sm:$0xff]
        %v928 = vld [vmem:[#allocation2 + $0xe8] sm:$0xff]
        %v929 = vld [vmem:[#allocation2 + $0xf0] sm:$0xff]
        %v930 = vld [vmem:[#allocation2 + $0xf8] sm:$0xff]
        %v931 = vld [vmem:[%s376] sm:$0x1]
        %v933 = vlaneseq
        %v934 = vshrl.u32 %v933, 7
        %v935 = vsub.s32 0, %v934
        %v936 = vrot.slane %v931, %v935
        %v938 = vadd.f32 %v899, %v936
        %v939 = vadd.f32 %v900, %v936
        %v940 = vadd.f32 %v901, %v936
        %v941 = vadd.f32 %v902, %v936
        %v942 = vadd.f32 %v903, %v936
        %v943 = vadd.f32 %v904, %v936
        %v944 = vadd.f32 %v905, %v936
        %v945 = vadd.f32 %v906, %v936
        %v946 = vadd.f32 %v907, %v936
        %v947 = vadd.f32 %v908, %v936
        %v948 = vadd.f32 %v909, %v936
        %v949 = vadd.f32 %v910, %v936
        %v950 = vadd.f32 %v911, %v936
        %v951 = vadd.f32 %v912, %v936
        %v952 = vadd.f32 %v913, %v936
        %v953 = vadd.f32 %v914, %v936
        %v954 = vadd.f32 %v915, %v936
        %v955 = vadd.f32 %v916, %v936
        %v956 = vadd.f32 %v917, %v936
        %v957 = vadd.f32 %v918, %v936
        %v958 = vadd.f32 %v919, %v936
        %v959 = vadd.f32 %v920, %v936
        %v960 = vadd.f32 %v921, %v936
        %v961 = vadd.f32 %v922, %v936
        %v962 = vadd.f32 %v923, %v936
        %v963 = vadd.f32 %v924, %v936
        %v964 = vadd.f32 %v925, %v936
        %v965 = vadd.f32 %v926, %v936
        %v966 = vadd.f32 %v927, %v936
        %v967 = vadd.f32 %v928, %v936
        %v968 = vadd.f32 %v929, %v936
        %v969 = vadd.f32 %v930, %v936
        %v970 = vld [vmem:[%s384] sm:$0xf]
        %v971 = vld [vmem:[%s384 + $0x4] sm:$0xf]
        %v972 = vld [vmem:[%s384 + $0x8] sm:$0xf]
        %v973 = vld [vmem:[%s384 + $0xc] sm:$0xf]
        %v974 = vld [vmem:[%s384 + $0x10] sm:$0xf]
        %v975 = vld [vmem:[%s384 + $0x14] sm:$0xf]
        %v976 = vld [vmem:[%s384 + $0x18] sm:$0xf]
        %v977 = vld [vmem:[%s384 + $0x1c] sm:$0xf]
        %v978 = vld [vmem:[%s384 + $0x20] sm:$0xf]
        %v979 = vld [vmem:[%s384 + $0x24] sm:$0xf]
        %v980 = vld [vmem:[%s384 + $0x28] sm:$0xf]
        %v981 = vld [vmem:[%s384 + $0x2c] sm:$0xf]
        %v982 = vld [vmem:[%s384 + $0x30] sm:$0xf]
        %v983 = vld [vmem:[%s384 + $0x34] sm:$0xf]
        %v984 = vld [vmem:[%s384 + $0x38] sm:$0xf]
        %v985 = vld [vmem:[%s384 + $0x3c] sm:$0xf]
        %v986 = vld [vmem:[%s384 + $0x40] sm:$0xf]
        %v987 = vld [vmem:[%s384 + $0x44] sm:$0xf]
        %v988 = vld [vmem:[%s384 + $0x48] sm:$0xf]
        %v989 = vld [vmem:[%s384 + $0x4c] sm:$0xf]
        %v990 = vld [vmem:[%s384 + $0x50] sm:$0xf]
        %v991 = vld [vmem:[%s384 + $0x54] sm:$0xf]
        %v992 = vld [vmem:[%s384 + $0x58] sm:$0xf]
        %v993 = vld [vmem:[%s384 + $0x5c] sm:$0xf]
        %v994 = vld [vmem:[%s384 + $0x60] sm:$0xf]
        %v995 = vld [vmem:[%s384 + $0x64] sm:$0xf]
        %v996 = vld [vmem:[%s384 + $0x68] sm:$0xf]
        %v997 = vld [vmem:[%s384 + $0x6c] sm:$0xf]
        %v998 = vld [vmem:[%s384 + $0x70] sm:$0xf]
        %v999 = vld [vmem:[%s384 + $0x74] sm:$0xf]
        %v1000 = vld [vmem:[%s384 + $0x78] sm:$0xf]
        %v1001 = vld [vmem:[%s384 + $0x7c] sm:$0xf]
        %v1002 = vunpack.c.l.bf16 %v970
        %v1003 = vunpack.c.l.bf16 %v971
        %v1004 = vunpack.c.l.bf16 %v972
        %v1005 = vunpack.c.l.bf16 %v973
        %v1006 = vunpack.c.l.bf16 %v974
        %v1007 = vunpack.c.l.bf16 %v975
        %v1008 = vunpack.c.l.bf16 %v976
        %v1009 = vunpack.c.l.bf16 %v977
        %v1010 = vunpack.c.l.bf16 %v978
        %v1011 = vunpack.c.l.bf16 %v979
        %v1012 = vunpack.c.l.bf16 %v980
        %v1013 = vunpack.c.l.bf16 %v981
        %v1014 = vunpack.c.l.bf16 %v982
        %v1015 = vunpack.c.l.bf16 %v983
        %v1016 = vunpack.c.l.bf16 %v984
        %v1017 = vunpack.c.l.bf16 %v985
        %v1018 = vunpack.c.l.bf16 %v986
        %v1019 = vunpack.c.l.bf16 %v987
        %v1020 = vunpack.c.l.bf16 %v988
        %v1021 = vunpack.c.l.bf16 %v989
        %v1022 = vunpack.c.l.bf16 %v990
        %v1023 = vunpack.c.l.bf16 %v991
        %v1024 = vunpack.c.l.bf16 %v992
        %v1025 = vunpack.c.l.bf16 %v993
        %v1026 = vunpack.c.l.bf16 %v994
        %v1027 = vunpack.c.l.bf16 %v995
        %v1028 = vunpack.c.l.bf16 %v996
        %v1029 = vunpack.c.l.bf16 %v997
        %v1030 = vunpack.c.l.bf16 %v998
        %v1031 = vunpack.c.l.bf16 %v999
        %v1032 = vunpack.c.l.bf16 %v1000
        %v1033 = vunpack.c.l.bf16 %v1001
        %v1034 = vld [vmem:[%s388] sm:$0x1]
        %v1036 = vlaneseq
        %v1037 = vshrl.u32 %v1036, 7
        %v1038 = vsub.s32 0, %v1037
        %v1039 = vrot.slane %v1034, %v1038
        %v1041 = vmul.f32 %v1002, %v1039
        %v1042 = vmul.f32 %v1003, %v1039
        %v1043 = vmul.f32 %v1004, %v1039
        %v1044 = vmul.f32 %v1005, %v1039
        %v1045 = vmul.f32 %v1006, %v1039
        %v1046 = vmul.f32 %v1007, %v1039
        %v1047 = vmul.f32 %v1008, %v1039
        %v1048 = vmul.f32 %v1009, %v1039
        %v1049 = vmul.f32 %v1010, %v1039
        %v1050 = vmul.f32 %v1011, %v1039
        %v1051 = vmul.f32 %v1012, %v1039
        %v1052 = vmul.f32 %v1013, %v1039
        %v1053 = vmul.f32 %v1014, %v1039
        %v1054 = vmul.f32 %v1015, %v1039
        %v1055 = vmul.f32 %v1016, %v1039
        %v1056 = vmul.f32 %v1017, %v1039
        %v1057 = vmul.f32 %v1018, %v1039
        %v1058 = vmul.f32 %v1019, %v1039
        %v1059 = vmul.f32 %v1020, %v1039
        %v1060 = vmul.f32 %v1021, %v1039
        %v1061 = vmul.f32 %v1022, %v1039
        %v1062 = vmul.f32 %v1023, %v1039
        %v1063 = vmul.f32 %v1024, %v1039
        %v1064 = vmul.f32 %v1025, %v1039
        %v1065 = vmul.f32 %v1026, %v1039
        %v1066 = vmul.f32 %v1027, %v1039
        %v1067 = vmul.f32 %v1028, %v1039
        %v1068 = vmul.f32 %v1029, %v1039
        %v1069 = vmul.f32 %v1030, %v1039
        %v1070 = vmul.f32 %v1031, %v1039
        %v1071 = vmul.f32 %v1032, %v1039
        %v1072 = vmul.f32 %v1033, %v1039
        %v1073 = vadd.f32 %v938, %v1041
        %v1074 = vadd.f32 %v939, %v1042
        %v1075 = vadd.f32 %v940, %v1043
        %v1076 = vadd.f32 %v941, %v1044
        %v1077 = vadd.f32 %v942, %v1045
        %v1078 = vadd.f32 %v943, %v1046
        %v1079 = vadd.f32 %v944, %v1047
        %v1080 = vadd.f32 %v945, %v1048
        %v1081 = vadd.f32 %v946, %v1049
        %v1082 = vadd.f32 %v947, %v1050
        %v1083 = vadd.f32 %v948, %v1051
        %v1084 = vadd.f32 %v949, %v1052
        %v1085 = vadd.f32 %v950, %v1053
        %v1086 = vadd.f32 %v951, %v1054
        %v1087 = vadd.f32 %v952, %v1055
        %v1088 = vadd.f32 %v953, %v1056
        %v1089 = vadd.f32 %v954, %v1057
        %v1090 = vadd.f32 %v955, %v1058
        %v1091 = vadd.f32 %v956, %v1059
        %v1092 = vadd.f32 %v957, %v1060
        %v1093 = vadd.f32 %v958, %v1061
        %v1094 = vadd.f32 %v959, %v1062
        %v1095 = vadd.f32 %v960, %v1063
        %v1096 = vadd.f32 %v961, %v1064
        %v1097 = vadd.f32 %v962, %v1065
        %v1098 = vadd.f32 %v963, %v1066
        %v1099 = vadd.f32 %v964, %v1067
        %v1100 = vadd.f32 %v965, %v1068
        %v1101 = vadd.f32 %v966, %v1069
        %v1102 = vadd.f32 %v967, %v1070
        %v1103 = vadd.f32 %v968, %v1071
        %v1104 = vadd.f32 %v969, %v1072
        %v1105 = vld [vmem:[%s391] sm:$0x1]
        %v1107 = vlaneseq
        %v1108 = vshrl.u32 %v1107, 7
        %v1109 = vsub.s32 0, %v1108
        %v1110 = vrot.slane %v1105, %v1109
        %v1112 = vadd.f32 %v1073, %v1110
        %v1113 = vadd.f32 %v1074, %v1110
        %v1114 = vadd.f32 %v1075, %v1110
        %v1115 = vadd.f32 %v1076, %v1110
        %v1116 = vadd.f32 %v1077, %v1110
        %v1117 = vadd.f32 %v1078, %v1110
        %v1118 = vadd.f32 %v1079, %v1110
        %v1119 = vadd.f32 %v1080, %v1110
        %v1120 = vadd.f32 %v1081, %v1110
        %v1121 = vadd.f32 %v1082, %v1110
        %v1122 = vadd.f32 %v1083, %v1110
        %v1123 = vadd.f32 %v1084, %v1110
        %v1124 = vadd.f32 %v1085, %v1110
        %v1125 = vadd.f32 %v1086, %v1110
        %v1126 = vadd.f32 %v1087, %v1110
        %v1127 = vadd.f32 %v1088, %v1110
        %v1128 = vadd.f32 %v1089, %v1110
        %v1129 = vadd.f32 %v1090, %v1110
        %v1130 = vadd.f32 %v1091, %v1110
        %v1131 = vadd.f32 %v1092, %v1110
        %v1132 = vadd.f32 %v1093, %v1110
        %v1133 = vadd.f32 %v1094, %v1110
        %v1134 = vadd.f32 %v1095, %v1110
        %v1135 = vadd.f32 %v1096, %v1110
        %v1136 = vadd.f32 %v1097, %v1110
        %v1137 = vadd.f32 %v1098, %v1110
        %v1138 = vadd.f32 %v1099, %v1110
        %v1139 = vadd.f32 %v1100, %v1110
        %v1140 = vadd.f32 %v1101, %v1110
        %v1141 = vadd.f32 %v1102, %v1110
        %v1142 = vadd.f32 %v1103, %v1110
        %v1143 = vadd.f32 %v1104, %v1110
        %v1144 = vpack.c.bf16 %v1113, %v1112
        %v1145 = vpack.c.bf16 %v1115, %v1114
        %v1146 = vpack.c.bf16 %v1117, %v1116
        %v1147 = vpack.c.bf16 %v1119, %v1118
        %v1148 = vpack.c.bf16 %v1121, %v1120
        %v1149 = vpack.c.bf16 %v1123, %v1122
        %v1150 = vpack.c.bf16 %v1125, %v1124
        %v1151 = vpack.c.bf16 %v1127, %v1126
        %v1152 = vpack.c.bf16 %v1129, %v1128
        %v1153 = vpack.c.bf16 %v1131, %v1130
        %v1154 = vpack.c.bf16 %v1133, %v1132
        %v1155 = vpack.c.bf16 %v1135, %v1134
        %v1156 = vpack.c.bf16 %v1137, %v1136
        %v1157 = vpack.c.bf16 %v1139, %v1138
        %v1158 = vpack.c.bf16 %v1141, %v1140
        %v1159 = vpack.c.bf16 %v1143, %v1142
        %v1176 = vunpack.c.l.b16 %v1144
        %v1177 = vunpack.c.h.b16 %v1144
        %v1178 = vunpack.c.l.b16 %v1145
        %v1179 = vunpack.c.h.b16 %v1145
        %v1180 = vunpack.c.l.b16 %v1146
        %v1181 = vunpack.c.h.b16 %v1146
        %v1182 = vunpack.c.l.b16 %v1147
        %v1183 = vunpack.c.h.b16 %v1147
        %v1184 = vunpack.c.l.b16 %v1148
        %v1185 = vunpack.c.h.b16 %v1148
        %v1186 = vunpack.c.l.b16 %v1149
        %v1187 = vunpack.c.h.b16 %v1149
        %v1188 = vunpack.c.l.b16 %v1150
        %v1189 = vunpack.c.h.b16 %v1150
        %v1190 = vunpack.c.l.b16 %v1151
        %v1191 = vunpack.c.h.b16 %v1151
        %v1192 = vunpack.c.l.b16 %v1152
        %v1193 = vunpack.c.h.b16 %v1152
        %v1194 = vunpack.c.l.b16 %v1153
        %v1195 = vunpack.c.h.b16 %v1153
        %v1196 = vunpack.c.l.b16 %v1154
        %v1197 = vunpack.c.h.b16 %v1154
        %v1198 = vunpack.c.l.b16 %v1155
        %v1199 = vunpack.c.h.b16 %v1155
        %v1200 = vunpack.c.l.b16 %v1156
        %v1201 = vunpack.c.h.b16 %v1156
        %v1202 = vunpack.c.l.b16 %v1157
        %v1203 = vunpack.c.h.b16 %v1157
        %v1204 = vunpack.c.l.b16 %v1158
        %v1205 = vunpack.c.h.b16 %v1158
        %v1206 = vunpack.c.l.b16 %v1159
        %v1207 = vunpack.c.h.b16 %v1159
        %v1208 = vpack.c.b16 %v1176, %v1176
        %v1209 = vpack.c.b16 %v1177, %v1177
        %v1210 = vpack.c.b16 %v1178, %v1178
        %v1211 = vpack.c.b16 %v1179, %v1179
        %v1212 = vpack.c.b16 %v1180, %v1180
        %v1213 = vpack.c.b16 %v1181, %v1181
        %v1214 = vpack.c.b16 %v1182, %v1182
        %v1215 = vpack.c.b16 %v1183, %v1183
        %v1216 = vpack.c.b16 %v1184, %v1184
        %v1217 = vpack.c.b16 %v1185, %v1185
        %v1218 = vpack.c.b16 %v1186, %v1186
        %v1219 = vpack.c.b16 %v1187, %v1187
        %v1220 = vpack.c.b16 %v1188, %v1188
        %v1221 = vpack.c.b16 %v1189, %v1189
        %v1222 = vpack.c.b16 %v1190, %v1190
        %v1223 = vpack.c.b16 %v1191, %v1191
        %v1224 = vpack.c.b16 %v1192, %v1192
        %v1225 = vpack.c.b16 %v1193, %v1193
        %v1226 = vpack.c.b16 %v1194, %v1194
        %v1227 = vpack.c.b16 %v1195, %v1195
        %v1228 = vpack.c.b16 %v1196, %v1196
        %v1229 = vpack.c.b16 %v1197, %v1197
        %v1230 = vpack.c.b16 %v1198, %v1198
        %v1231 = vpack.c.b16 %v1199, %v1199
        %v1232 = vpack.c.b16 %v1200, %v1200
        %v1233 = vpack.c.b16 %v1201, %v1201
        %v1234 = vpack.c.b16 %v1202, %v1202
        %v1235 = vpack.c.b16 %v1203, %v1203
        %v1236 = vpack.c.b16 %v1204, %v1204
        %v1237 = vpack.c.b16 %v1205, %v1205
        %v1238 = vpack.c.b16 %v1206, %v1206
        %v1239 = vpack.c.b16 %v1207, %v1207
        %1272 = vst [vmem:[%s399] sm:$0xf] %v1208
        %1273 = vst [vmem:[%s399 + $0x4] sm:$0xf] %v1209
        %1274 = vst [vmem:[%s399 + $0x8] sm:$0xf] %v1210
        %1275 = vst [vmem:[%s399 + $0xc] sm:$0xf] %v1211
        %1276 = vst [vmem:[%s399 + $0x10] sm:$0xf] %v1212
        %1277 = vst [vmem:[%s399 + $0x14] sm:$0xf] %v1213
        %1278 = vst [vmem:[%s399 + $0x18] sm:$0xf] %v1214
        %1279 = vst [vmem:[%s399 + $0x1c] sm:$0xf] %v1215
        %1280 = vst [vmem:[%s399 + $0x20] sm:$0xf] %v1216
        %1281 = vst [vmem:[%s399 + $0x24] sm:$0xf] %v1217
        %1282 = vst [vmem:[%s399 + $0x28] sm:$0xf] %v1218
        %1283 = vst [vmem:[%s399 + $0x2c] sm:$0xf] %v1219
        %1284 = vst [vmem:[%s399 + $0x30] sm:$0xf] %v1220
        %1285 = vst [vmem:[%s399 + $0x34] sm:$0xf] %v1221
        %1286 = vst [vmem:[%s399 + $0x38] sm:$0xf] %v1222
        %1287 = vst [vmem:[%s399 + $0x3c] sm:$0xf] %v1223
        %1288 = vst [vmem:[%s399 + $0x40] sm:$0xf] %v1224
        %1289 = vst [vmem:[%s399 + $0x44] sm:$0xf] %v1225
        %1290 = vst [vmem:[%s399 + $0x48] sm:$0xf] %v1226
        %1291 = vst [vmem:[%s399 + $0x4c] sm:$0xf] %v1227
        %1292 = vst [vmem:[%s399 + $0x50] sm:$0xf] %v1228
        %1293 = vst [vmem:[%s399 + $0x54] sm:$0xf] %v1229
        %1294 = vst [vmem:[%s399 + $0x58] sm:$0xf] %v1230
        %1295 = vst [vmem:[%s399 + $0x5c] sm:$0xf] %v1231
        %1296 = vst [vmem:[%s399 + $0x60] sm:$0xf] %v1232
        %1297 = vst [vmem:[%s399 + $0x64] sm:$0xf] %v1233
        %1298 = vst [vmem:[%s399 + $0x68] sm:$0xf] %v1234
        %1299 = vst [vmem:[%s399 + $0x6c] sm:$0xf] %v1235
        %1300 = vst [vmem:[%s399 + $0x70] sm:$0xf] %v1236
        %1301 = vst [vmem:[%s399 + $0x74] sm:$0xf] %v1237
        %1302 = vst [vmem:[%s399 + $0x78] sm:$0xf] %v1238
        %1303 = vst [vmem:[%s399 + $0x7c] sm:$0xf] %v1239
      $region52: #{resunet_forward.27} parent=43 // pred_fallthru
        _
      %s1304 = smul.u32 32, %s22
      %p1305 = scmp.lt.s32.totalorder %s1304, 63
      %s1306 = scalar_select %p1305, %s1304, 63
      %p1307 = scmp.lt.s32.totalorder %s23, 0
      %s1308 = scalar_select %p1307, %s23, 0
      %s1309 = sadd.s32 %s1308, %s1306
      %s1310 = smul.addr %s1309, 4
      %s1311 = scalar_lea.vmem %s6, %s1310
      // Predicated region
      $region53: #{resunet_forward.27} parent=43 // pred_check
        %p1312 = pneg %p218
      $region54: #{resunet_forward.27} parent=43 // pred_check_branch
        %1314 = sbr.rel (%p1312) target = $region56
      $region55: #{resunet_forward.27} parent=43 // pred_region
        %s1315 = smul.u32 32, %s22
      $region56: #{resunet_forward.27} parent=43 // pred_fallthru
        _
    $region44: #{resunet_forward.27} parent=5 // pred_fallthru
      _
    %p1316 = scmp.le.s32.totalorder 2, %s12
    // Predicated region
    $region57: #{resunet_forward.27} parent=5 // pred_check
      %p1317 = pneg %p1316
    $region58: #{resunet_forward.27} parent=5 // pred_check_branch
      %1319 = sbr.rel (%p1317) target = $region60
    $region59: #{resunet_forward.27} parent=5 // pred_region
      %s1320 = ssub.s32 %s12, 2
      // Predicated region
      $region61: #{resunet_forward.27} parent=59 // pred_check
        %p1321 = pneg %p224
      $region62: #{resunet_forward.27} parent=59 // pred_check_branch
        %1323 = sbr.rel (%p1321) target = $region64
      $region63: #{resunet_forward.27} parent=59 // pred_region
        %s1324 = smul.u32 32, %s25
        %p1325 = scmp.lt.s32.totalorder %s1324, 63
        %s1326 = scalar_select %p1325, %s1324, 63
        %p1327 = scmp.lt.s32.totalorder %s26, 0
        %s1328 = scalar_select %p1327, %s26, 0
        %s1329 = sadd.s32 %s1328, %s1326
        %s1330 = smul.addr %s1329, 4
        %s1331 = scalar_lea.vmem %s6, %s1330
      $region64: #{resunet_forward.27} parent=59 // pred_fallthru
        _
    $region60: #{resunet_forward.27} parent=5 // pred_fallthru
      _
  $region6: #{resunet_forward.27} parent=0 // loop_footer
    %s16 = sadd.s32 1, %s12
  $region7: #{resunet_forward.27} parent=0 // loop_footer_branch
    %11 = sbr.rel target = $region3
  $region8: #{resunet_forward.27} parent=0 // loop_exit
    _

// kernel: resunet_forward.29
$region0: #{resunet_forward.29}
  #allocation0 [shape = 'u32[]', space=smem, size = 0x4, offset = 0x4, fixed_abs, tag = 'smem constant byte address 0x4 - core index']
  #allocation1 [shape = 'u32[144,128]{1,0:T(1,128)}', space=vmem, size = 0x12000, scoped, tag = 'internal scratch']
  #allocation2 [shape = 'f32[128,128]{1,0:T(8,128)}', space=vmem, size = 0x10000, scoped, tag = 'scratch operand']
  %s0 = inlined_call_operand.vmem [shape: bf16[128,72], index: 0, kind: input, shape index: {}]
  %s1 = inlined_call_operand.vmem [shape: bf16[72,128], index: 1, kind: input, shape index: {}]
  %s2 = inlined_call_operand.vmem [shape: f32[1,128], index: 2, kind: input, shape index: {}]
  %s3 = inlined_call_operand.vmem [shape: bf16[128,128], index: 3, kind: output, shape index: {}]
  %s4 = sld [smem:[#allocation0]]
  $region30: #{resunet_forward.29} parent=0
    _
  %s6 = ssub.s32 1, %s4
  %s7 = scalar_select 0, %s6, %s4
  // Predicated region
  $region2: #{resunet_forward.29} parent=0 // pred_check
    _
  $region3: #{resunet_forward.29} parent=0 // pred_check_branch
    %9 = sbr.rel (0) target = $region5
  $region4: #{resunet_forward.29} parent=0 // pred_region
    _
  $region5: #{resunet_forward.29} parent=0 // pred_fallthru
    _
  // Predicated region
  $region6: #{resunet_forward.29} parent=0 // pred_check
    _
  $region7: #{resunet_forward.29} parent=0 // pred_check_branch
    %11 = sbr.rel (0) target = $region9
  $region8: #{resunet_forward.29} parent=0 // pred_region
    _
  $region9: #{resunet_forward.29} parent=0 // pred_fallthru
    _
  // Predicated region
  $region10: #{resunet_forward.29} parent=0 // pred_check
    _
  $region11: #{resunet_forward.29} parent=0 // pred_check_branch
    %13 = sbr.rel (0) target = $region13
  $region12: #{resunet_forward.29} parent=0 // pred_region
    _
  $region13: #{resunet_forward.29} parent=0 // pred_fallthru
    _
  %p15 = scmp.eq.s32.totalorder 0, 0
  // Predicated region
  $region14: #{resunet_forward.29} parent=0 // pred_check
    %p16 = pneg %p15
  $region15: #{resunet_forward.29} parent=0 // pred_check_branch
    %18 = sbr.rel (%p16) target = $region17
  $region16: #{resunet_forward.29} parent=0 // pred_region
    %19 = vst [vmem:[#allocation2] sm:$0xff] 0.0
    %20 = vst [vmem:[#allocation2 + $0x8] sm:$0xff] 0.0
    %21 = vst [vmem:[#allocation2 + $0x10] sm:$0xff] 0.0
    %22 = vst [vmem:[#allocation2 + $0x18] sm:$0xff] 0.0
    %23 = vst [vmem:[#allocation2 + $0x20] sm:$0xff] 0.0
    %24 = vst [vmem:[#allocation2 + $0x28] sm:$0xff] 0.0
    %25 = vst [vmem:[#allocation2 + $0x30] sm:$0xff] 0.0
    %26 = vst [vmem:[#allocation2 + $0x38] sm:$0xff] 0.0
    %27 = vst [vmem:[#allocation2 + $0x40] sm:$0xff] 0.0
    %28 = vst [vmem:[#allocation2 + $0x48] sm:$0xff] 0.0
    %29 = vst [vmem:[#allocation2 + $0x50] sm:$0xff] 0.0
    %30 = vst [vmem:[#allocation2 + $0x58] sm:$0xff] 0.0
    %31 = vst [vmem:[#allocation2 + $0x60] sm:$0xff] 0.0
    %32 = vst [vmem:[#allocation2 + $0x68] sm:$0xff] 0.0
    %33 = vst [vmem:[#allocation2 + $0x70] sm:$0xff] 0.0
    %34 = vst [vmem:[#allocation2 + $0x78] sm:$0xff] 0.0
  $region17: #{resunet_forward.29} parent=0 // pred_fallthru
    _
  %v35 = vld [vmem:[#allocation2] sm:$0xff]
  %v36 = vld [vmem:[#allocation2 + $0x8] sm:$0xff]
  %v37 = vld [vmem:[#allocation2 + $0x10] sm:$0xff]
  %v38 = vld [vmem:[#allocation2 + $0x18] sm:$0xff]
  %v39 = vld [vmem:[#allocation2 + $0x20] sm:$0xff]
  %v40 = vld [vmem:[#allocation2 + $0x28] sm:$0xff]
  %v41 = vld [vmem:[#allocation2 + $0x30] sm:$0xff]
  %v42 = vld [vmem:[#allocation2 + $0x38] sm:$0xff]
  %v43 = vld [vmem:[#allocation2 + $0x40] sm:$0xff]
  %v44 = vld [vmem:[#allocation2 + $0x48] sm:$0xff]
  %v45 = vld [vmem:[#allocation2 + $0x50] sm:$0xff]
  %v46 = vld [vmem:[#allocation2 + $0x58] sm:$0xff]
  %v47 = vld [vmem:[#allocation2 + $0x60] sm:$0xff]
  %v48 = vld [vmem:[#allocation2 + $0x68] sm:$0xff]
  %v49 = vld [vmem:[#allocation2 + $0x70] sm:$0xff]
  %v50 = vld [vmem:[#allocation2 + $0x78] sm:$0xff]
  %v51 = vld [vmem:[%s0] sm:$0xf]
  %v52 = vld [vmem:[%s0 + $0x4] sm:$0xf]
  %v53 = vld [vmem:[%s0 + $0x8] sm:$0xf]
  %v54 = vld [vmem:[%s0 + $0xc] sm:$0xf]
  %v55 = vld [vmem:[%s0 + $0x10] sm:$0xf]
  %v56 = vld [vmem:[%s0 + $0x14] sm:$0xf]
  %v57 = vld [vmem:[%s0 + $0x18] sm:$0xf]
  %v58 = vld [vmem:[%s0 + $0x1c] sm:$0xf]
  %v59 = vld [vmem:[%s0 + $0x20] sm:$0xf]
  %v60 = vld [vmem:[%s0 + $0x24] sm:$0xf]
  %v61 = vld [vmem:[%s0 + $0x28] sm:$0xf]
  %v62 = vld [vmem:[%s0 + $0x2c] sm:$0xf]
  %v63 = vld [vmem:[%s0 + $0x30] sm:$0xf]
  %v64 = vld [vmem:[%s0 + $0x34] sm:$0xf]
  %v65 = vld [vmem:[%s0 + $0x38] sm:$0xf]
  %v66 = vld [vmem:[%s0 + $0x3c] sm:$0xf]
  %v67 = vld [vmem:[%s1] sm:$0xf]
  %v68 = vld [vmem:[%s1 + $0x4] sm:$0xf]
  %v69 = vld [vmem:[%s1 + $0x8] sm:$0xf]
  %v70 = vld [vmem:[%s1 + $0xc] sm:$0xf]
  %v71 = vld [vmem:[%s1 + $0x10] sm:$0xf]
  %v72 = vld [vmem:[%s1 + $0x14] sm:$0xf]
  %v73 = vld [vmem:[%s1 + $0x18] sm:$0xf]
  %v74 = vld [vmem:[%s1 + $0x1c] sm:$0xf]
  %v75 = vld [vmem:[%s1 + $0x20] sm:$0xf]
  %v92 = vunpack.c.l.b16 %v51
  %v93 = vunpack.c.l.b16 %v52
  %v94 = vunpack.c.l.b16 %v53
  %v95 = vunpack.c.l.b16 %v54
  %v96 = vunpack.c.l.b16 %v55
  %v97 = vunpack.c.l.b16 %v56
  %v98 = vunpack.c.l.b16 %v57
  %v99 = vunpack.c.l.b16 %v58
  %v100 = vunpack.c.l.b16 %v59
  %v101 = vunpack.c.l.b16 %v60
  %v102 = vunpack.c.l.b16 %v61
  %v103 = vunpack.c.l.b16 %v62
  %v104 = vunpack.c.l.b16 %v63
  %v105 = vunpack.c.l.b16 %v64
  %v106 = vunpack.c.l.b16 %v65
  %v107 = vunpack.c.l.b16 %v66
  %v108 = vpack.c.b16 %v93, %v92
  %v109 = vpack.c.b16 %v95, %v94
  %v110 = vpack.c.b16 %v97, %v96
  %v111 = vpack.c.b16 %v99, %v98
  %v112 = vpack.c.b16 %v101, %v100
  %v113 = vpack.c.b16 %v103, %v102
  %v114 = vpack.c.b16 %v105, %v104
  %v115 = vpack.c.b16 %v107, %v106
  %v125 = vunpack.c.l.b16 %v67
  %v126 = vunpack.c.l.b16 %v68
  %v127 = vunpack.c.l.b16 %v69
  %v128 = vunpack.c.l.b16 %v70
  %v129 = vunpack.c.l.b16 %v71
  %v130 = vunpack.c.l.b16 %v72
  %v131 = vunpack.c.l.b16 %v73
  %v132 = vunpack.c.l.b16 %v74
  %v133 = vunpack.c.l.b16 %v75
  %v134 = vpack.c.b16 %v126, %v125
  %v135 = vpack.c.b16 %v128, %v127
  %v136 = vpack.c.b16 %v130, %v129
  %v137 = vpack.c.b16 %v132, %v131
  %v138 = vpack.c.b16 %v133, %v133
  %vm143 = vcmask 588800
  %v145 = vsel %vm143, %v108, 0
  %v148 = vsel %vm143, %v109, 0
  %v151 = vsel %vm143, %v110, 0
  %v154 = vsel %vm143, %v111, 0
  %v157 = vsel %vm143, %v112, 0
  %v160 = vsel %vm143, %v113, 0
  %v163 = vsel %vm143, %v114, 0
  %v166 = vsel %vm143, %v115, 0
  %vm168 = vcmask 1043456
  %v170 = vsel %vm168, %v138, 0
  %172 = vmatprep.subr.bf16.mxu0 0
  %173 = vmatpush1.bf16.msra.mxu0 %v134
  %174 = vmatprep.subr.bf16.mxu0 0
  %175 = vmatpush1.bf16.msra.mxu0 %v135
  %176 = vmatprep.subr.bf16.mxu0 0
  %177 = vmatpush1.bf16.msra.mxu0 %v136
  %178 = vmatprep.subr.bf16.mxu0 0
  %179 = vmatpush1.bf16.msra.mxu0 %v137
  %180 = vmatprep.subr.bf16.mxu0 0
  %181 = vmatpush1.bf16.msra.mxu0 %v170
  %182 = vmatprep.subr.bf16.mxu0 0
  %183 = vmatpush1.bf16.msra.mxu0 0
  %184 = vmatprep.subr.bf16.mxu0 0
  %185 = vmatpush1.bf16.msra.mxu0 0
  %186 = vmatprep.subr.bf16.mxu0 0
  %187 = vmatpush1.bf16.msra.mxu0 0
  %188 = vmatprep.subr.bf16.mxu0 0
  %189 = vmatpush1.bf16.msra.mxu0 0
  %190 = vmatprep.subr.bf16.mxu0 0
  %191 = vmatpush1.bf16.msra.mxu0 0
  %192 = vmatprep.subr.bf16.mxu0 0
  %193 = vmatpush1.bf16.msra.mxu0 0
  %194 = vmatprep.subr.bf16.mxu0 0
  %195 = vmatpush1.bf16.msra.mxu0 0
  %196 = vmatprep.subr.bf16.mxu0 0
  %197 = vmatpush1.bf16.msra.mxu0 0
  %198 = vmatprep.subr.bf16.mxu0 0
  %199 = vmatpush1.bf16.msra.mxu0 0
  %200 = vmatprep.subr.bf16.mxu0 0
  %201 = vmatpush1.bf16.msra.mxu0 0
  %202 = vmatprep.subr.bf16.mxu0 0
  %203 = vmatpush1.bf16.msra.mxu0 0
  %204 = vmatprep.mubr.bf16.mxu0 0
  %205 = vmatmul.mubr.bf16.gmra.mrb[0].mxu0 %v145
  %v206 = vpop.f32.mrb[0].mxu0
  %v207 = vadd.f32 0.0, %v206
  %v208 = vpop.f32.mrb[0].mxu0
  %v209 = vpop.f32.mrb[0].mxu0
  %v210 = vadd.f32 0.0, %v209
  %v211 = vpop.f32.mrb[0].mxu0
  %212 = vmatprep.mubr.bf16.mxu0 0
  %213 = vmatmul.mubr.bf16.gmra.mrb[0].mxu0 %v148
  %v214 = vpop.f32.mrb[0].mxu0
  %v215 = vadd.f32 0.0, %v214
  %v216 = vpop.f32.mrb[0].mxu0
  %v217 = vpop.f32.mrb[0].mxu0
  %v218 = vadd.f32 0.0, %v217
  %v219 = vpop.f32.mrb[0].mxu0
  %220 = vmatprep.mubr.bf16.mxu0 0
  %221 = vmatmul.mubr.bf16.gmra.mrb[0].mxu0 %v151
  %v222 = vpop.f32.mrb[0].mxu0
  %v223 = vadd.f32 0.0, %v222
  %v224 = vpop.f32.mrb[0].mxu0
  %v225 = vpop.f32.mrb[0].mxu0
  %v226 = vadd.f32 0.0, %v225
  %v227 = vpop.f32.mrb[0].mxu0
  %228 = vmatprep.mubr.bf16.mxu0 0
  %229 = vmatmul.mubr.bf16.gmra.mrb[0].mxu0 %v154
  %v230 = vpop.f32.mrb[0].mxu0
  %v231 = vadd.f32 0.0, %v230
  %v232 = vpop.f32.mrb[0].mxu0
  %v233 = vpop.f32.mrb[0].mxu0
  %v234 = vadd.f32 0.0, %v233
  %v235 = vpop.f32.mrb[0].mxu0
  %236 = vmatprep.mubr.bf16.mxu0 0
  %237 = vmatmul.mubr.bf16.gmra.mrb[0].mxu0 %v157
  %v238 = vpop.f32.mrb[0].mxu0
  %v239 = vadd.f32 0.0, %v238
  %v240 = vpop.f32.mrb[0].mxu0
  %v241 = vpop.f32.mrb[0].mxu0
  %v242 = vadd.f32 0.0, %v241
  %v243 = vpop.f32.mrb[0].mxu0
  %244 = vmatprep.mubr.bf16.mxu0 0
  %245 = vmatmul.mubr.bf16.gmra.mrb[0].mxu0 %v160
  %v246 = vpop.f32.mrb[0].mxu0
  %v247 = vadd.f32 0.0, %v246
  %v248 = vpop.f32.mrb[0].mxu0
  %v249 = vpop.f32.mrb[0].mxu0
  %v250 = vadd.f32 0.0, %v249
  %v251 = vpop.f32.mrb[0].mxu0
  %252 = vmatprep.mubr.bf16.mxu0 0
  %253 = vmatmul.mubr.bf16.gmra.mrb[0].mxu0 %v163
  %v254 = vpop.f32.mrb[0].mxu0
  %v255 = vadd.f32 0.0, %v254
  %v256 = vpop.f32.mrb[0].mxu0
  %v257 = vpop.f32.mrb[0].mxu0
  %v258 = vadd.f32 0.0, %v257
  %v259 = vpop.f32.mrb[0].mxu0
  %260 = vmatprep.mubr.bf16.mxu0 0
  %261 = vmatmul.mubr.bf16.gmra.mrb[0].mxu0 %v166
  %v262 = vpop.f32.mrb[0].mxu0
  %v263 = vadd.f32 0.0, %v262
  %v264 = vpop.f32.mrb[0].mxu0
  %v265 = vpop.f32.mrb[0].mxu0
  %v266 = vadd.f32 0.0, %v265
  %v267 = vpop.f32.mrb[0].mxu0
  %268 = vdwg.mxu0
  %v269 = vadd.f32 %v35, %v207
  %v270 = vadd.f32 %v36, %v210
  %v271 = vadd.f32 %v37, %v215
  %v272 = vadd.f32 %v38, %v218
  %v273 = vadd.f32 %v39, %v223
  %v274 = vadd.f32 %v40, %v226
  %v275 = vadd.f32 %v41, %v231
  %v276 = vadd.f32 %v42, %v234
  %v277 = vadd.f32 %v43, %v239
  %v278 = vadd.f32 %v44, %v242
  %v279 = vadd.f32 %v45, %v247
  %v280 = vadd.f32 %v46, %v250
  %v281 = vadd.f32 %v47, %v255
  %v282 = vadd.f32 %v48, %v258
  %v283 = vadd.f32 %v49, %v263
  %v284 = vadd.f32 %v50, %v266
  %285 = vst [vmem:[#allocation2] sm:$0xff] %v269
  %286 = vst [vmem:[#allocation2 + $0x8] sm:$0xff] %v270
  %287 = vst [vmem:[#allocation2 + $0x10] sm:$0xff] %v271
  %288 = vst [vmem:[#allocation2 + $0x18] sm:$0xff] %v272
  %289 = vst [vmem:[#allocation2 + $0x20] sm:$0xff] %v273
  %290 = vst [vmem:[#allocation2 + $0x28] sm:$0xff] %v274
  %291 = vst [vmem:[#allocation2 + $0x30] sm:$0xff] %v275
  %292 = vst [vmem:[#allocation2 + $0x38] sm:$0xff] %v276
  %293 = vst [vmem:[#allocation2 + $0x40] sm:$0xff] %v277
  %294 = vst [vmem:[#allocation2 + $0x48] sm:$0xff] %v278
  %295 = vst [vmem:[#allocation2 + $0x50] sm:$0xff] %v279
  %296 = vst [vmem:[#allocation2 + $0x58] sm:$0xff] %v280
  %297 = vst [vmem:[#allocation2 + $0x60] sm:$0xff] %v281
  %298 = vst [vmem:[#allocation2 + $0x68] sm:$0xff] %v282
  %299 = vst [vmem:[#allocation2 + $0x70] sm:$0xff] %v283
  %300 = vst [vmem:[#allocation2 + $0x78] sm:$0xff] %v284
  // Predicated region
  $region18: #{resunet_forward.29} parent=0 // pred_check
    %p301 = pneg %p15
  $region19: #{resunet_forward.29} parent=0 // pred_check_branch
    %303 = sbr.rel (%p301) target = $region21
  $region20: #{resunet_forward.29} parent=0 // pred_region
    %v304 = vld [vmem:[#allocation2] sm:$0xff]
    %v305 = vld [vmem:[#allocation2 + $0x8] sm:$0xff]
    %v306 = vld [vmem:[#allocation2 + $0x10] sm:$0xff]
    %v307 = vld [vmem:[#allocation2 + $0x18] sm:$0xff]
    %v308 = vld [vmem:[#allocation2 + $0x20] sm:$0xff]
    %v309 = vld [vmem:[#allocation2 + $0x28] sm:$0xff]
    %v310 = vld [vmem:[#allocation2 + $0x30] sm:$0xff]
    %v311 = vld [vmem:[#allocation2 + $0x38] sm:$0xff]
    %v312 = vld [vmem:[#allocation2 + $0x40] sm:$0xff]
    %v313 = vld [vmem:[#allocation2 + $0x48] sm:$0xff]
    %v314 = vld [vmem:[#allocation2 + $0x50] sm:$0xff]
    %v315 = vld [vmem:[#allocation2 + $0x58] sm:$0xff]
    %v316 = vld [vmem:[#allocation2 + $0x60] sm:$0xff]
    %v317 = vld [vmem:[#allocation2 + $0x68] sm:$0xff]
    %v318 = vld [vmem:[#allocation2 + $0x70] sm:$0xff]
    %v319 = vld [vmem:[#allocation2 + $0x78] sm:$0xff]
    %v320 = vld [vmem:[%s2] sm:$0x1]
    %v322 = vlaneseq
    %v323 = vshrl.u32 %v322, 7
    %v324 = vsub.s32 0, %v323
    %v325 = vrot.slane %v320, %v324
    %v327 = vadd.f32 %v304, %v325
    %v328 = vadd.f32 %v305, %v325
    %v329 = vadd.f32 %v306, %v325
    %v330 = vadd.f32 %v307, %v325
    %v331 = vadd.f32 %v308, %v325
    %v332 = vadd.f32 %v309, %v325
    %v333 = vadd.f32 %v310, %v325
    %v334 = vadd.f32 %v311, %v325
    %v335 = vadd.f32 %v312, %v325
    %v336 = vadd.f32 %v313, %v325
    %v337 = vadd.f32 %v314, %v325
    %v338 = vadd.f32 %v315, %v325
    %v339 = vadd.f32 %v316, %v325
    %v340 = vadd.f32 %v317, %v325
    %v341 = vadd.f32 %v318, %v325
    %v342 = vadd.f32 %v319, %v325
    %v343 = vpack.c.bf16 %v328, %v327
    %v344 = vpack.c.bf16 %v330, %v329
    %v345 = vpack.c.bf16 %v332, %v331
    %v346 = vpack.c.bf16 %v334, %v333
    %v347 = vpack.c.bf16 %v336, %v335
    %v348 = vpack.c.bf16 %v338, %v337
    %v349 = vpack.c.bf16 %v340, %v339
    %v350 = vpack.c.bf16 %v342, %v341
    %v359 = vunpack.c.l.b16 %v343
    %v360 = vunpack.c.h.b16 %v343
    %v361 = vunpack.c.l.b16 %v344
    %v362 = vunpack.c.h.b16 %v344
    %v363 = vunpack.c.l.b16 %v345
    %v364 = vunpack.c.h.b16 %v345
    %v365 = vunpack.c.l.b16 %v346
    %v366 = vunpack.c.h.b16 %v346
    %v367 = vunpack.c.l.b16 %v347
    %v368 = vunpack.c.h.b16 %v347
    %v369 = vunpack.c.l.b16 %v348
    %v370 = vunpack.c.h.b16 %v348
    %v371 = vunpack.c.l.b16 %v349
    %v372 = vunpack.c.h.b16 %v349
    %v373 = vunpack.c.l.b16 %v350
    %v374 = vunpack.c.h.b16 %v350
    %v375 = vpack.c.b16 %v359, %v359
    %v376 = vpack.c.b16 %v360, %v360
    %v377 = vpack.c.b16 %v361, %v361
    %v378 = vpack.c.b16 %v362, %v362
    %v379 = vpack.c.b16 %v363, %v363
    %v380 = vpack.c.b16 %v364, %v364
    %v381 = vpack.c.b16 %v365, %v365
    %v382 = vpack.c.b16 %v366, %v366
    %v383 = vpack.c.b16 %v367, %v367
    %v384 = vpack.c.b16 %v368, %v368
    %v385 = vpack.c.b16 %v369, %v369
    %v386 = vpack.c.b16 %v370, %v370
    %v387 = vpack.c.b16 %v371, %v371
    %v388 = vpack.c.b16 %v372, %v372
    %v389 = vpack.c.b16 %v373, %v373
    %v390 = vpack.c.b16 %v374, %v374
    %407 = vst [vmem:[%s3] sm:$0xf] %v375
    %408 = vst [vmem:[%s3 + $0x4] sm:$0xf] %v376
    %409 = vst [vmem:[%s3 + $0x8] sm:$0xf] %v377
    %410 = vst [vmem:[%s3 + $0xc] sm:$0xf] %v378
    %411 = vst [vmem:[%s3 + $0x10] sm:$0xf] %v379
    %412 = vst [vmem:[%s3 + $0x14] sm:$0xf] %v380
    %413 = vst [vmem:[%s3 + $0x18] sm:$0xf] %v381
    %414 = vst [vmem:[%s3 + $0x1c] sm:$0xf] %v382
    %415 = vst [vmem:[%s3 + $0x20] sm:$0xf] %v383
    %416 = vst [vmem:[%s3 + $0x24] sm:$0xf] %v384
    %417 = vst [vmem:[%s3 + $0x28] sm:$0xf] %v385
    %418 = vst [vmem:[%s3 + $0x2c] sm:$0xf] %v386
    %419 = vst [vmem:[%s3 + $0x30] sm:$0xf] %v387
    %420 = vst [vmem:[%s3 + $0x34] sm:$0xf] %v388
    %421 = vst [vmem:[%s3 + $0x38] sm:$0xf] %v389
    %422 = vst [vmem:[%s3 + $0x3c] sm:$0xf] %v390
  $region21: #{resunet_forward.29} parent=0 // pred_fallthru
    _
  // Predicated region
  $region22: #{resunet_forward.29} parent=0 // pred_check
    _
  $region23: #{resunet_forward.29} parent=0 // pred_check_branch
    %424 = sbr.rel (0) target = $region25
  $region24: #{resunet_forward.29} parent=0 // pred_region
    _
  $region25: #{resunet_forward.29} parent=0 // pred_fallthru
    _
  // Predicated region
  $region26: #{resunet_forward.29} parent=0 // pred_check
    _
  $region27: #{resunet_forward.29} parent=0 // pred_check_branch
    %426 = sbr.rel (0) target = $region29
  $region28: #{resunet_forward.29} parent=0 // pred_region
    _
  $region29: #{resunet_forward.29} parent=0 // pred_fallthru
    _

// kernel: resunet_forward.30
$region0: #{resunet_forward.30}
  #allocation0 [shape = 'u32[]', space=smem, size = 0x4, offset = 0x4, fixed_abs, tag = 'smem constant byte address 0x4 - core index']
  #allocation1 [shape = 'u32[144,128]{1,0:T(1,128)}', space=vmem, size = 0x12000, scoped, tag = 'internal scratch']
  #allocation2 [shape = 'f32[128,128]{1,0:T(8,128)}', space=vmem, size = 0x10000, scoped, tag = 'scratch operand']
  %s0 = inlined_call_operand.vmem [shape: bf16[128,144], index: 0, kind: input, shape index: {}]
  %s1 = inlined_call_operand.vmem [shape: bf16[144,128], index: 1, kind: input, shape index: {}]
  %s2 = inlined_call_operand.vmem [shape: f32[1,128], index: 2, kind: input, shape index: {}]
  %s3 = inlined_call_operand.vmem [shape: bf16[128,128], index: 3, kind: input, shape index: {}]
  %s4 = inlined_call_operand.vmem [shape: f32[1,128], index: 4, kind: input, shape index: {}]
  %s5 = inlined_call_operand.vmem [shape: f32[1,128], index: 5, kind: input, shape index: {}]
  %s6 = inlined_call_operand.vmem [shape: bf16[128,128], index: 6, kind: output, shape index: {}]
  %s7 = sld [smem:[#allocation0]]
  $region42: #{resunet_forward.30} parent=0
    _
  %s9 = ssub.s32 1, %s7
  %s10 = scalar_select 0, %s9, %s7
  // Predicated region
  $region2: #{resunet_forward.30} parent=0 // pred_check
    _
  $region3: #{resunet_forward.30} parent=0 // pred_check_branch
    %12 = sbr.rel (0) target = $region5
  $region4: #{resunet_forward.30} parent=0 // pred_region
    _
  $region5: #{resunet_forward.30} parent=0 // pred_fallthru
    _
  // Predicated region
  $region6: #{resunet_forward.30} parent=0 // pred_check
    _
  $region7: #{resunet_forward.30} parent=0 // pred_check_branch
    %14 = sbr.rel (0) target = $region9
  $region8: #{resunet_forward.30} parent=0 // pred_region
    _
  $region9: #{resunet_forward.30} parent=0 // pred_fallthru
    _
  // Predicated region
  $region10: #{resunet_forward.30} parent=0 // pred_check
    _
  $region11: #{resunet_forward.30} parent=0 // pred_check_branch
    %16 = sbr.rel (0) target = $region13
  $region12: #{resunet_forward.30} parent=0 // pred_region
    _
  $region13: #{resunet_forward.30} parent=0 // pred_fallthru
    _
  // Predicated region
  $region14: #{resunet_forward.30} parent=0 // pred_check
    _
  $region15: #{resunet_forward.30} parent=0 // pred_check_branch
    %18 = sbr.rel (0) target = $region17
  $region16: #{resunet_forward.30} parent=0 // pred_region
    _
  $region17: #{resunet_forward.30} parent=0 // pred_fallthru
    _
  // Predicated region
  $region18: #{resunet_forward.30} parent=0 // pred_check
    _
  $region19: #{resunet_forward.30} parent=0 // pred_check_branch
    %20 = sbr.rel (0) target = $region21
  $region20: #{resunet_forward.30} parent=0 // pred_region
    _
  $region21: #{resunet_forward.30} parent=0 // pred_fallthru
    _
  // Predicated region
  $region22: #{resunet_forward.30} parent=0 // pred_check
    _
  $region23: #{resunet_forward.30} parent=0 // pred_check_branch
    %22 = sbr.rel (0) target = $region25
  $region24: #{resunet_forward.30} parent=0 // pred_region
    _
  $region25: #{resunet_forward.30} parent=0 // pred_fallthru
    _
  %p24 = scmp.eq.s32.totalorder 0, 0
  // Predicated region
  $region26: #{resunet_forward.30} parent=0 // pred_check
    %p25 = pneg %p24
  $region27: #{resunet_forward.30} parent=0 // pred_check_branch
    %27 = sbr.rel (%p25) target = $region29
  $region28: #{resunet_forward.30} parent=0 // pred_region
    %28 = vst [vmem:[#allocation2] sm:$0xff] 0.0
    %29 = vst [vmem:[#allocation2 + $0x8] sm:$0xff] 0.0
    %30 = vst [vmem:[#allocation2 + $0x10] sm:$0xff] 0.0
    %31 = vst [vmem:[#allocation2 + $0x18] sm:$0xff] 0.0
    %32 = vst [vmem:[#allocation2 + $0x20] sm:$0xff] 0.0
    %33 = vst [vmem:[#allocation2 + $0x28] sm:$0xff] 0.0
    %34 = vst [vmem:[#allocation2 + $0x30] sm:$0xff] 0.0
    %35 = vst [vmem:[#allocation2 + $0x38] sm:$0xff] 0.0
    %36 = vst [vmem:[#allocation2 + $0x40] sm:$0xff] 0.0
    %37 = vst [vmem:[#allocation2 + $0x48] sm:$0xff] 0.0
    %38 = vst [vmem:[#allocation2 + $0x50] sm:$0xff] 0.0
    %39 = vst [vmem:[#allocation2 + $0x58] sm:$0xff] 0.0
    %40 = vst [vmem:[#allocation2 + $0x60] sm:$0xff] 0.0
    %41 = vst [vmem:[#allocation2 + $0x68] sm:$0xff] 0.0
    %42 = vst [vmem:[#allocation2 + $0x70] sm:$0xff] 0.0
    %43 = vst [vmem:[#allocation2 + $0x78] sm:$0xff] 0.0
  $region29: #{resunet_forward.30} parent=0 // pred_fallthru
    _
  %v44 = vld [vmem:[#allocation2] sm:$0xff]
  %v45 = vld [vmem:[#allocation2 + $0x8] sm:$0xff]
  %v46 = vld [vmem:[#allocation2 + $0x10] sm:$0xff]
  %v47 = vld [vmem:[#allocation2 + $0x18] sm:$0xff]
  %v48 = vld [vmem:[#allocation2 + $0x20] sm:$0xff]
  %v49 = vld [vmem:[#allocation2 + $0x28] sm:$0xff]
  %v50 = vld [vmem:[#allocation2 + $0x30] sm:$0xff]
  %v51 = vld [vmem:[#allocation2 + $0x38] sm:$0xff]
  %v52 = vld [vmem:[#allocation2 + $0x40] sm:$0xff]
  %v53 = vld [vmem:[#allocation2 + $0x48] sm:$0xff]
  %v54 = vld [vmem:[#allocation2 + $0x50] sm:$0xff]
  %v55 = vld [vmem:[#allocation2 + $0x58] sm:$0xff]
  %v56 = vld [vmem:[#allocation2 + $0x60] sm:$0xff]
  %v57 = vld [vmem:[#allocation2 + $0x68] sm:$0xff]
  %v58 = vld [vmem:[#allocation2 + $0x70] sm:$0xff]
  %v59 = vld [vmem:[#allocation2 + $0x78] sm:$0xff]
  %v60 = vld [vmem:[%s0] sm:$0xff]
  %v61 = vld [vmem:[%s0 + $0x8] sm:$0xff]
  %v62 = vld [vmem:[%s0 + $0x10] sm:$0xff]
  %v63 = vld [vmem:[%s0 + $0x18] sm:$0xff]
  %v64 = vld [vmem:[%s0 + $0x20] sm:$0xff]
  %v65 = vld [vmem:[%s0 + $0x28] sm:$0xff]
  %v66 = vld [vmem:[%s0 + $0x30] sm:$0xff]
  %v67 = vld [vmem:[%s0 + $0x38] sm:$0xff]
  %v68 = vld [vmem:[%s0 + $0x40] sm:$0xff]
  %v69 = vld [vmem:[%s0 + $0x48] sm:$0xff]
  %v70 = vld [vmem:[%s0 + $0x50] sm:$0xff]
  %v71 = vld [vmem:[%s0 + $0x58] sm:$0xff]
  %v72 = vld [vmem:[%s0 + $0x60] sm:$0xff]
  %v73 = vld [vmem:[%s0 + $0x68] sm:$0xff]
  %v74 = vld [vmem:[%s0 + $0x70] sm:$0xff]
  %v75 = vld [vmem:[%s0 + $0x78] sm:$0xff]
  %v76 = vld [vmem:[%s1] sm:$0xf]
  %v77 = vld [vmem:[%s1 + $0x4] sm:$0xf]
  %v78 = vld [vmem:[%s1 + $0x8] sm:$0xf]
  %v79 = vld [vmem:[%s1 + $0xc] sm:$0xf]
  %v80 = vld [vmem:[%s1 + $0x10] sm:$0xf]
  %v81 = vld [vmem:[%s1 + $0x14] sm:$0xf]
  %v82 = vld [vmem:[%s1 + $0x18] sm:$0xf]
  %v83 = vld [vmem:[%s1 + $0x1c] sm:$0xf]
  %v84 = vld [vmem:[%s1 + $0x20] sm:$0xf]
  %v85 = vld [vmem:[%s1 + $0x24] sm:$0xf]
  %v86 = vld [vmem:[%s1 + $0x28] sm:$0xf]
  %v87 = vld [vmem:[%s1 + $0x2c] sm:$0xf]
  %v88 = vld [vmem:[%s1 + $0x30] sm:$0xf]
  %v89 = vld [vmem:[%s1 + $0x34] sm:$0xf]
  %v90 = vld [vmem:[%s1 + $0x38] sm:$0xf]
  %v91 = vld [vmem:[%s1 + $0x3c] sm:$0xf]
  %v92 = vld [vmem:[%s1 + $0x40] sm:$0xf]
  %v93 = vld [vmem:[%s1 + $0x44] sm:$0xf]
  %v110 = vunpack.c.l.b16 %v60
  %v111 = vunpack.c.h.b16 %v60
  %v112 = vunpack.c.l.b16 %v61
  %v113 = vunpack.c.h.b16 %v61
  %v114 = vunpack.c.l.b16 %v62
  %v115 = vunpack.c.h.b16 %v62
  %v116 = vunpack.c.l.b16 %v63
  %v117 = vunpack.c.h.b16 %v63
  %v118 = vunpack.c.l.b16 %v64
  %v119 = vunpack.c.h.b16 %v64
  %v120 = vunpack.c.l.b16 %v65
  %v121 = vunpack.c.h.b16 %v65
  %v122 = vunpack.c.l.b16 %v66
  %v123 = vunpack.c.h.b16 %v66
  %v124 = vunpack.c.l.b16 %v67
  %v125 = vunpack.c.h.b16 %v67
  %v126 = vunpack.c.l.b16 %v68
  %v127 = vunpack.c.h.b16 %v68
  %v128 = vunpack.c.l.b16 %v69
  %v129 = vunpack.c.h.b16 %v69
  %v130 = vunpack.c.l.b16 %v70
  %v131 = vunpack.c.h.b16 %v70
  %v132 = vunpack.c.l.b16 %v71
  %v133 = vunpack.c.h.b16 %v71
  %v134 = vunpack.c.l.b16 %v72
  %v135 = vunpack.c.h.b16 %v72
  %v136 = vunpack.c.l.b16 %v73
  %v137 = vunpack.c.h.b16 %v73
  %v138 = vunpack.c.l.b16 %v74
  %v139 = vunpack.c.h.b16 %v74
  %v140 = vunpack.c.l.b16 %v75
  %v141 = vunpack.c.h.b16 %v75
  %v142 = vpack.c.b16 %v112, %v110
  %v143 = vpack.c.b16 %v113, %v111
  %v144 = vpack.c.b16 %v116, %v114
  %v145 = vpack.c.b16 %v117, %v115
  %v146 = vpack.c.b16 %v120, %v118
  %v147 = vpack.c.b16 %v121, %v119
  %v148 = vpack.c.b16 %v124, %v122
  %v149 = vpack.c.b16 %v125, %v123
  %v150 = vpack.c.b16 %v128, %v126
  %v151 = vpack.c.b16 %v129, %v127
  %v152 = vpack.c.b16 %v132, %v130
  %v153 = vpack.c.b16 %v133, %v131
  %v154 = vpack.c.b16 %v136, %v134
  %v155 = vpack.c.b16 %v137, %v135
  %v156 = vpack.c.b16 %v140, %v138
  %v157 = vpack.c.b16 %v141, %v139
  %v184 = vunpack.c.l.b16 %v76
  %v185 = vunpack.c.l.b16 %v77
  %v186 = vunpack.c.l.b16 %v78
  %v187 = vunpack.c.l.b16 %v79
  %v188 = vunpack.c.l.b16 %v80
  %v189 = vunpack.c.l.b16 %v81
  %v190 = vunpack.c.l.b16 %v82
  %v191 = vunpack.c.l.b16 %v83
  %v192 = vunpack.c.l.b16 %v84
  %v193 = vunpack.c.l.b16 %v85
  %v194 = vunpack.c.l.b16 %v86
  %v195 = vunpack.c.l.b16 %v87
  %v196 = vunpack.c.l.b16 %v88
  %v197 = vunpack.c.l.b16 %v89
  %v198 = vunpack.c.l.b16 %v90
  %v199 = vunpack.c.l.b16 %v91
  %v200 = vunpack.c.l.b16 %v92
  %v201 = vunpack.c.l.b16 %v93
  %v202 = vpack.c.b16 %v185, %v184
  %v203 = vpack.c.b16 %v187, %v186
  %v204 = vpack.c.b16 %v189, %v188
  %v205 = vpack.c.b16 %v191, %v190
  %v206 = vpack.c.b16 %v193, %v192
  %v207 = vpack.c.b16 %v195, %v194
  %v208 = vpack.c.b16 %v197, %v196
  %v209 = vpack.c.b16 %v199, %v198
  %v210 = vpack.c.b16 %v201, %v200
  %vm220 = vcmask 130048
  %v222 = vsel %vm220, %v143, 0
  %v225 = vsel %vm220, %v145, 0
  %v228 = vsel %vm220, %v147, 0
  %v231 = vsel %vm220, %v149, 0
  %v234 = vsel %vm220, %v151, 0
  %v237 = vsel %vm220, %v153, 0
  %v240 = vsel %vm220, %v155, 0
  %v243 = vsel %vm220, %v157, 0
  %245 = vmatprep.subr.bf16.mxu0 0
  %246 = vmatpush1.bf16.msra.mxu0 %v202
  %247 = vmatprep.subr.bf16.mxu0 0
  %248 = vmatpush1.bf16.msra.mxu0 %v203
  %249 = vmatprep.subr.bf16.mxu0 0
  %250 = vmatpush1.bf16.msra.mxu0 %v204
  %251 = vmatprep.subr.bf16.mxu0 0
  %252 = vmatpush1.bf16.msra.mxu0 %v205
  %253 = vmatprep.subr.bf16.mxu0 0
  %254 = vmatpush1.bf16.msra.mxu0 %v206
  %255 = vmatprep.subr.bf16.mxu0 0
  %256 = vmatpush1.bf16.msra.mxu0 %v207
  %257 = vmatprep.subr.bf16.mxu0 0
  %258 = vmatpush1.bf16.msra.mxu0 %v208
  %259 = vmatprep.subr.bf16.mxu0 0
  %260 = vmatpush1.bf16.msra.mxu0 %v209
  %261 = vmatprep.subr.bf16.mxu0 0
  %262 = vmatpush1.bf16.msra.mxu0 %v210
  %263 = vmatprep.subr.bf16.mxu0 0
  %264 = vmatpush1.bf16.msra.mxu0 0
  %265 = vmatprep.subr.bf16.mxu0 0
  %266 = vmatpush1.bf16.msra.mxu0 0
  %267 = vmatprep.subr.bf16.mxu0 0
  %268 = vmatpush1.bf16.msra.mxu0 0
  %269 = vmatprep.subr.bf16.mxu0 0
  %270 = vmatpush1.bf16.msra.mxu0 0
  %271 = vmatprep.subr.bf16.mxu0 0
  %272 = vmatpush1.bf16.msra.mxu0 0
  %273 = vmatprep.subr.bf16.mxu0 0
  %274 = vmatpush1.bf16.msra.mxu0 0
  %275 = vmatprep.subr.bf16.mxu0 0
  %276 = vmatpush1.bf16.msra.mxu0 0
  %277 = vmatprep.mubr.bf16.mxu0 %v222
  %278 = vmatmul.mubr.bf16.gmra.mrb[0].mxu0 %v142
  %v279 = vpop.f32.mrb[0].mxu0
  %v280 = vadd.f32 0.0, %v279
  %v281 = vpop.f32.mrb[0].mxu0
  %v282 = vpop.f32.mrb[0].mxu0
  %v283 = vadd.f32 0.0, %v282
  %v284 = vpop.f32.mrb[0].mxu0
  %285 = vmatprep.mubr.bf16.mxu0 %v225
  %286 = vmatmul.mubr.bf16.gmra.mrb[0].mxu0 %v144
  %v287 = vpop.f32.mrb[0].mxu0
  %v288 = vadd.f32 0.0, %v287
  %v289 = vpop.f32.mrb[0].mxu0
  %v290 = vpop.f32.mrb[0].mxu0
  %v291 = vadd.f32 0.0, %v290
  %v292 = vpop.f32.mrb[0].mxu0
  %293 = vmatprep.mubr.bf16.mxu0 %v228
  %294 = vmatmul.mubr.bf16.gmra.mrb[0].mxu0 %v146
  %v295 = vpop.f32.mrb[0].mxu0
  %v296 = vadd.f32 0.0, %v295
  %v297 = vpop.f32.mrb[0].mxu0
  %v298 = vpop.f32.mrb[0].mxu0
  %v299 = vadd.f32 0.0, %v298
  %v300 = vpop.f32.mrb[0].mxu0
  %301 = vmatprep.mubr.bf16.mxu0 %v231
  %302 = vmatmul.mubr.bf16.gmra.mrb[0].mxu0 %v148
  %v303 = vpop.f32.mrb[0].mxu0
  %v304 = vadd.f32 0.0, %v303
  %v305 = vpop.f32.mrb[0].mxu0
  %v306 = vpop.f32.mrb[0].mxu0
  %v307 = vadd.f32 0.0, %v306
  %v308 = vpop.f32.mrb[0].mxu0
  %309 = vmatprep.mubr.bf16.mxu0 %v234
  %310 = vmatmul.mubr.bf16.gmra.mrb[0].mxu0 %v150
  %v311 = vpop.f32.mrb[0].mxu0
  %v312 = vadd.f32 0.0, %v311
  %v313 = vpop.f32.mrb[0].mxu0
  %v314 = vpop.f32.mrb[0].mxu0
  %v315 = vadd.f32 0.0, %v314
  %v316 = vpop.f32.mrb[0].mxu0
  %317 = vmatprep.mubr.bf16.mxu0 %v237
  %318 = vmatmul.mubr.bf16.gmra.mrb[0].mxu0 %v152
  %v319 = vpop.f32.mrb[0].mxu0
  %v320 = vadd.f32 0.0, %v319
  %v321 = vpop.f32.mrb[0].mxu0
  %v322 = vpop.f32.mrb[0].mxu0
  %v323 = vadd.f32 0.0, %v322
  %v324 = vpop.f32.mrb[0].mxu0
  %325 = vmatprep.mubr.bf16.mxu0 %v240
  %326 = vmatmul.mubr.bf16.gmra.mrb[0].mxu0 %v154
  %v327 = vpop.f32.mrb[0].mxu0
  %v328 = vadd.f32 0.0, %v327
  %v329 = vpop.f32.mrb[0].mxu0
  %v330 = vpop.f32.mrb[0].mxu0
  %v331 = vadd.f32 0.0, %v330
  %v332 = vpop.f32.mrb[0].mxu0
  %333 = vmatprep.mubr.bf16.mxu0 %v243
  %334 = vmatmul.mubr.bf16.gmra.mrb[0].mxu0 %v156
  %v335 = vpop.f32.mrb[0].mxu0
  %v336 = vadd.f32 0.0, %v335
  %v337 = vpop.f32.mrb[0].mxu0
  %v338 = vpop.f32.mrb[0].mxu0
  %v339 = vadd.f32 0.0, %v338
  %v340 = vpop.f32.mrb[0].mxu0
  %341 = vdwg.mxu0
  %v342 = vadd.f32 %v44, %v280
  %v343 = vadd.f32 %v45, %v283
  %v344 = vadd.f32 %v46, %v288
  %v345 = vadd.f32 %v47, %v291
  %v346 = vadd.f32 %v48, %v296
  %v347 = vadd.f32 %v49, %v299
  %v348 = vadd.f32 %v50, %v304
  %v349 = vadd.f32 %v51, %v307
  %v350 = vadd.f32 %v52, %v312
  %v351 = vadd.f32 %v53, %v315
  %v352 = vadd.f32 %v54, %v320
  %v353 = vadd.f32 %v55, %v323
  %v354 = vadd.f32 %v56, %v328
  %v355 = vadd.f32 %v57, %v331
  %v356 = vadd.f32 %v58, %v336
  %v357 = vadd.f32 %v59, %v339
  %358 = vst [vmem:[#allocation2] sm:$0xff] %v342
  %359 = vst [vmem:[#allocation2 + $0x8] sm:$0xff] %v343
  %360 = vst [vmem:[#allocation2 + $0x10] sm:$0xff] %v344
  %361 = vst [vmem:[#allocation2 + $0x18] sm:$0xff] %v345
  %362 = vst [vmem:[#allocation2 + $0x20] sm:$0xff] %v346
  %363 = vst [vmem:[#allocation2 + $0x28] sm:$0xff] %v347
  %364 = vst [vmem:[#allocation2 + $0x30] sm:$0xff] %v348
  %365 = vst [vmem:[#allocation2 + $0x38] sm:$0xff] %v349
  %366 = vst [vmem:[#allocation2 + $0x40] sm:$0xff] %v350
  %367 = vst [vmem:[#allocation2 + $0x48] sm:$0xff] %v351
  %368 = vst [vmem:[#allocation2 + $0x50] sm:$0xff] %v352
  %369 = vst [vmem:[#allocation2 + $0x58] sm:$0xff] %v353
  %370 = vst [vmem:[#allocation2 + $0x60] sm:$0xff] %v354
  %371 = vst [vmem:[#allocation2 + $0x68] sm:$0xff] %v355
  %372 = vst [vmem:[#allocation2 + $0x70] sm:$0xff] %v356
  %373 = vst [vmem:[#allocation2 + $0x78] sm:$0xff] %v357
  // Predicated region
  $region30: #{resunet_forward.30} parent=0 // pred_check
    %p374 = pneg %p24
  $region31: #{resunet_forward.30} parent=0 // pred_check_branch
    %376 = sbr.rel (%p374) target = $region33
  $region32: #{resunet_forward.30} parent=0 // pred_region
    %v377 = vld [vmem:[#allocation2] sm:$0xff]
    %v378 = vld [vmem:[#allocation2 + $0x8] sm:$0xff]
    %v379 = vld [vmem:[#allocation2 + $0x10] sm:$0xff]
    %v380 = vld [vmem:[#allocation2 + $0x18] sm:$0xff]
    %v381 = vld [vmem:[#allocation2 + $0x20] sm:$0xff]
    %v382 = vld [vmem:[#allocation2 + $0x28] sm:$0xff]
    %v383 = vld [vmem:[#allocation2 + $0x30] sm:$0xff]
    %v384 = vld [vmem:[#allocation2 + $0x38] sm:$0xff]
    %v385 = vld [vmem:[#allocation2 + $0x40] sm:$0xff]
    %v386 = vld [vmem:[#allocation2 + $0x48] sm:$0xff]
    %v387 = vld [vmem:[#allocation2 + $0x50] sm:$0xff]
    %v388 = vld [vmem:[#allocation2 + $0x58] sm:$0xff]
    %v389 = vld [vmem:[#allocation2 + $0x60] sm:$0xff]
    %v390 = vld [vmem:[#allocation2 + $0x68] sm:$0xff]
    %v391 = vld [vmem:[#allocation2 + $0x70] sm:$0xff]
    %v392 = vld [vmem:[#allocation2 + $0x78] sm:$0xff]
    %v393 = vld [vmem:[%s2] sm:$0x1]
    %v395 = vlaneseq
    %v396 = vshrl.u32 %v395, 7
    %v397 = vsub.s32 0, %v396
    %v398 = vrot.slane %v393, %v397
    %v400 = vadd.f32 %v377, %v398
    %v401 = vadd.f32 %v378, %v398
    %v402 = vadd.f32 %v379, %v398
    %v403 = vadd.f32 %v380, %v398
    %v404 = vadd.f32 %v381, %v398
    %v405 = vadd.f32 %v382, %v398
    %v406 = vadd.f32 %v383, %v398
    %v407 = vadd.f32 %v384, %v398
    %v408 = vadd.f32 %v385, %v398
    %v409 = vadd.f32 %v386, %v398
    %v410 = vadd.f32 %v387, %v398
    %v411 = vadd.f32 %v388, %v398
    %v412 = vadd.f32 %v389, %v398
    %v413 = vadd.f32 %v390, %v398
    %v414 = vadd.f32 %v391, %v398
    %v415 = vadd.f32 %v392, %v398
    %v416 = vld [vmem:[%s3] sm:$0xf]
    %v417 = vld [vmem:[%s3 + $0x4] sm:$0xf]
    %v418 = vld [vmem:[%s3 + $0x8] sm:$0xf]
    %v419 = vld [vmem:[%s3 + $0xc] sm:$0xf]
    %v420 = vld [vmem:[%s3 + $0x10] sm:$0xf]
    %v421 = vld [vmem:[%s3 + $0x14] sm:$0xf]
    %v422 = vld [vmem:[%s3 + $0x18] sm:$0xf]
    %v423 = vld [vmem:[%s3 + $0x1c] sm:$0xf]
    %v424 = vld [vmem:[%s3 + $0x20] sm:$0xf]
    %v425 = vld [vmem:[%s3 + $0x24] sm:$0xf]
    %v426 = vld [vmem:[%s3 + $0x28] sm:$0xf]
    %v427 = vld [vmem:[%s3 + $0x2c] sm:$0xf]
    %v428 = vld [vmem:[%s3 + $0x30] sm:$0xf]
    %v429 = vld [vmem:[%s3 + $0x34] sm:$0xf]
    %v430 = vld [vmem:[%s3 + $0x38] sm:$0xf]
    %v431 = vld [vmem:[%s3 + $0x3c] sm:$0xf]
    %v432 = vunpack.c.l.bf16 %v416
    %v433 = vunpack.c.l.bf16 %v417
    %v434 = vunpack.c.l.bf16 %v418
    %v435 = vunpack.c.l.bf16 %v419
    %v436 = vunpack.c.l.bf16 %v420
    %v437 = vunpack.c.l.bf16 %v421
    %v438 = vunpack.c.l.bf16 %v422
    %v439 = vunpack.c.l.bf16 %v423
    %v440 = vunpack.c.l.bf16 %v424
    %v441 = vunpack.c.l.bf16 %v425
    %v442 = vunpack.c.l.bf16 %v426
    %v443 = vunpack.c.l.bf16 %v427
    %v444 = vunpack.c.l.bf16 %v428
    %v445 = vunpack.c.l.bf16 %v429
    %v446 = vunpack.c.l.bf16 %v430
    %v447 = vunpack.c.l.bf16 %v431
    %v448 = vld [vmem:[%s4] sm:$0x1]
    %v450 = vlaneseq
    %v451 = vshrl.u32 %v450, 7
    %v452 = vsub.s32 0, %v451
    %v453 = vrot.slane %v448, %v452
    %v455 = vmul.f32 %v432, %v453
    %v456 = vmul.f32 %v433, %v453
    %v457 = vmul.f32 %v434, %v453
    %v458 = vmul.f32 %v435, %v453
    %v459 = vmul.f32 %v436, %v453
    %v460 = vmul.f32 %v437, %v453
    %v461 = vmul.f32 %v438, %v453
    %v462 = vmul.f32 %v439, %v453
    %v463 = vmul.f32 %v440, %v453
    %v464 = vmul.f32 %v441, %v453
    %v465 = vmul.f32 %v442, %v453
    %v466 = vmul.f32 %v443, %v453
    %v467 = vmul.f32 %v444, %v453
    %v468 = vmul.f32 %v445, %v453
    %v469 = vmul.f32 %v446, %v453
    %v470 = vmul.f32 %v447, %v453
    %v471 = vadd.f32 %v400, %v455
    %v472 = vadd.f32 %v401, %v456
    %v473 = vadd.f32 %v402, %v457
    %v474 = vadd.f32 %v403, %v458
    %v475 = vadd.f32 %v404, %v459
    %v476 = vadd.f32 %v405, %v460
    %v477 = vadd.f32 %v406, %v461
    %v478 = vadd.f32 %v407, %v462
    %v479 = vadd.f32 %v408, %v463
    %v480 = vadd.f32 %v409, %v464
    %v481 = vadd.f32 %v410, %v465
    %v482 = vadd.f32 %v411, %v466
    %v483 = vadd.f32 %v412, %v467
    %v484 = vadd.f32 %v413, %v468
    %v485 = vadd.f32 %v414, %v469
    %v486 = vadd.f32 %v415, %v470
    %v487 = vld [vmem:[%s5] sm:$0x1]
    %v489 = vlaneseq
    %v490 = vshrl.u32 %v489, 7
    %v491 = vsub.s32 0, %v490
    %v492 = vrot.slane %v487, %v491
    %v494 = vadd.f32 %v471, %v492
    %v495 = vadd.f32 %v472, %v492
    %v496 = vadd.f32 %v473, %v492
    %v497 = vadd.f32 %v474, %v492
    %v498 = vadd.f32 %v475, %v492
    %v499 = vadd.f32 %v476, %v492
    %v500 = vadd.f32 %v477, %v492
    %v501 = vadd.f32 %v478, %v492
    %v502 = vadd.f32 %v479, %v492
    %v503 = vadd.f32 %v480, %v492
    %v504 = vadd.f32 %v481, %v492
    %v505 = vadd.f32 %v482, %v492
    %v506 = vadd.f32 %v483, %v492
    %v507 = vadd.f32 %v484, %v492
    %v508 = vadd.f32 %v485, %v492
    %v509 = vadd.f32 %v486, %v492
    %v510 = vpack.c.bf16 %v495, %v494
    %v511 = vpack.c.bf16 %v497, %v496
    %v512 = vpack.c.bf16 %v499, %v498
    %v513 = vpack.c.bf16 %v501, %v500
    %v514 = vpack.c.bf16 %v503, %v502
    %v515 = vpack.c.bf16 %v505, %v504
    %v516 = vpack.c.bf16 %v507, %v506
    %v517 = vpack.c.bf16 %v509, %v508
    %v526 = vunpack.c.l.b16 %v510
    %v527 = vunpack.c.h.b16 %v510
    %v528 = vunpack.c.l.b16 %v511
    %v529 = vunpack.c.h.b16 %v511
    %v530 = vunpack.c.l.b16 %v512
    %v531 = vunpack.c.h.b16 %v512
    %v532 = vunpack.c.l.b16 %v513
    %v533 = vunpack.c.h.b16 %v513
    %v534 = vunpack.c.l.b16 %v514
    %v535 = vunpack.c.h.b16 %v514
    %v536 = vunpack.c.l.b16 %v515
    %v537 = vunpack.c.h.b16 %v515
    %v538 = vunpack.c.l.b16 %v516
    %v539 = vunpack.c.h.b16 %v516
    %v540 = vunpack.c.l.b16 %v517
    %v541 = vunpack.c.h.b16 %v517
    %v542 = vpack.c.b16 %v526, %v526
    %v543 = vpack.c.b16 %v527, %v527
    %v544 = vpack.c.b16 %v528, %v528
    %v545 = vpack.c.b16 %v529, %v529
    %v546 = vpack.c.b16 %v530, %v530
    %v547 = vpack.c.b16 %v531, %v531
    %v548 = vpack.c.b16 %v532, %v532
    %v549 = vpack.c.b16 %v533, %v533
    %v550 = vpack.c.b16 %v534, %v534
    %v551 = vpack.c.b16 %v535, %v535
    %v552 = vpack.c.b16 %v536, %v536
    %v553 = vpack.c.b16 %v537, %v537
    %v554 = vpack.c.b16 %v538, %v538
    %v555 = vpack.c.b16 %v539, %v539
    %v556 = vpack.c.b16 %v540, %v540
    %v557 = vpack.c.b16 %v541, %v541
    %574 = vst [vmem:[%s6] sm:$0xf] %v542
    %575 = vst [vmem:[%s6 + $0x4] sm:$0xf] %v543
    %576 = vst [vmem:[%s6 + $0x8] sm:$0xf] %v544
    %577 = vst [vmem:[%s6 + $0xc] sm:$0xf] %v545
    %578 = vst [vmem:[%s6 + $0x10] sm:$0xf] %v546
    %579 = vst [vmem:[%s6 + $0x14] sm:$0xf] %v547
    %580 = vst [vmem:[%s6 + $0x18] sm:$0xf] %v548
    %581 = vst [vmem:[%s6 + $0x1c] sm:$0xf] %v549
    %582 = vst [vmem:[%s6 + $0x20] sm:$0xf] %v550
    %583 = vst [vmem:[%s6 + $0x24] sm:$0xf] %v551
    %584 = vst [vmem:[%s6 + $0x28] sm:$0xf] %v552
    %585 = vst [vmem:[%s6 + $0x2c] sm:$0xf] %v553
    %586 = vst [vmem:[%s6 + $0x30] sm:$0xf] %v554
    %587 = vst [vmem:[%s6 + $0x34] sm:$0xf] %v555
    %588 = vst [vmem:[%s6 + $0x38] sm:$0xf] %v556
    %589 = vst [vmem:[%s6 + $0x3c] sm:$0xf] %v557
  $region33: #{resunet_forward.30} parent=0 // pred_fallthru
    _
  // Predicated region
  $region34: #{resunet_forward.30} parent=0 // pred_check
    _
  $region35: #{resunet_forward.30} parent=0 // pred_check_branch
    %591 = sbr.rel (0) target = $region37
  $region36: #{resunet_forward.30} parent=0 // pred_region
    _
  $region37: #{resunet_forward.30} parent=0 // pred_fallthru
    _
  // Predicated region
  $region38: #{resunet_forward.30} parent=0 // pred_check
    _
  $region39: #{resunet_forward.30} parent=0 // pred_check_branch
    %593 = sbr.rel (0) target = $region41
  $region40: #{resunet_forward.30} parent=0 // pred_region
    _
  $region41: #{resunet_forward.30} parent=0 // pred_fallthru
    _

// kernel: resunet_forward.32
$region0: #{resunet_forward.32}
  #allocation0 [shape = 'u32[]', space=smem, size = 0x4, offset = 0x4, fixed_abs, tag = 'smem constant byte address 0x4 - core index']
  #allocation1 [shape = 'u32[144,128]{1,0:T(1,128)}', space=vmem, size = 0x12000, scoped, tag = 'internal scratch']
  #allocation2 [shape = 'f32[32,128]{1,0:T(8,128)}', space=vmem, size = 0x4000, scoped, tag = 'scratch operand']
  %s0 = inlined_call_operand.vmem [shape: bf16[32,144], index: 0, kind: input, shape index: {}]
  %s1 = inlined_call_operand.vmem [shape: bf16[144,128], index: 1, kind: input, shape index: {}]
  %s2 = inlined_call_operand.vmem [shape: f32[1,128], index: 2, kind: input, shape index: {}]
  %s3 = inlined_call_operand.vmem [shape: bf16[32,128], index: 3, kind: output, shape index: {}]
  %s4 = sld [smem:[#allocation0]]
  $region30: #{resunet_forward.32} parent=0
    _
  %s6 = ssub.s32 1, %s4
  %s7 = scalar_select 0, %s6, %s4
  // Predicated region
  $region2: #{resunet_forward.32} parent=0 // pred_check
    _
  $region3: #{resunet_forward.32} parent=0 // pred_check_branch
    %9 = sbr.rel (0) target = $region5
  $region4: #{resunet_forward.32} parent=0 // pred_region
    _
  $region5: #{resunet_forward.32} parent=0 // pred_fallthru
    _
  // Predicated region
  $region6: #{resunet_forward.32} parent=0 // pred_check
    _
  $region7: #{resunet_forward.32} parent=0 // pred_check_branch
    %11 = sbr.rel (0) target = $region9
  $region8: #{resunet_forward.32} parent=0 // pred_region
    _
  $region9: #{resunet_forward.32} parent=0 // pred_fallthru
    _
  // Predicated region
  $region10: #{resunet_forward.32} parent=0 // pred_check
    _
  $region11: #{resunet_forward.32} parent=0 // pred_check_branch
    %13 = sbr.rel (0) target = $region13
  $region12: #{resunet_forward.32} parent=0 // pred_region
    _
  $region13: #{resunet_forward.32} parent=0 // pred_fallthru
    _
  %p15 = scmp.eq.s32.totalorder 0, 0
  // Predicated region
  $region14: #{resunet_forward.32} parent=0 // pred_check
    %p16 = pneg %p15
  $region15: #{resunet_forward.32} parent=0 // pred_check_branch
    %18 = sbr.rel (%p16) target = $region17
  $region16: #{resunet_forward.32} parent=0 // pred_region
    %19 = vst [vmem:[#allocation2] sm:$0xff] 0.0
    %20 = vst [vmem:[#allocation2 + $0x8] sm:$0xff] 0.0
    %21 = vst [vmem:[#allocation2 + $0x10] sm:$0xff] 0.0
    %22 = vst [vmem:[#allocation2 + $0x18] sm:$0xff] 0.0
  $region17: #{resunet_forward.32} parent=0 // pred_fallthru
    _
  %v23 = vld [vmem:[#allocation2] sm:$0xff]
  %v24 = vld [vmem:[#allocation2 + $0x8] sm:$0xff]
  %v25 = vld [vmem:[#allocation2 + $0x10] sm:$0xff]
  %v26 = vld [vmem:[#allocation2 + $0x18] sm:$0xff]
  %v27 = vld [vmem:[%s0] sm:$0xff]
  %v28 = vld [vmem:[%s0 + $0x8] sm:$0xff]
  %v29 = vld [vmem:[%s0 + $0x10] sm:$0xff]
  %v30 = vld [vmem:[%s0 + $0x18] sm:$0xff]
  %v31 = vld [vmem:[%s1] sm:$0xf]
  %v32 = vld [vmem:[%s1 + $0x4] sm:$0xf]
  %v33 = vld [vmem:[%s1 + $0x8] sm:$0xf]
  %v34 = vld [vmem:[%s1 + $0xc] sm:$0xf]
  %v35 = vld [vmem:[%s1 + $0x10] sm:$0xf]
  %v36 = vld [vmem:[%s1 + $0x14] sm:$0xf]
  %v37 = vld [vmem:[%s1 + $0x18] sm:$0xf]
  %v38 = vld [vmem:[%s1 + $0x1c] sm:$0xf]
  %v39 = vld [vmem:[%s1 + $0x20] sm:$0xf]
  %v40 = vld [vmem:[%s1 + $0x24] sm:$0xf]
  %v41 = vld [vmem:[%s1 + $0x28] sm:$0xf]
  %v42 = vld [vmem:[%s1 + $0x2c] sm:$0xf]
  %v43 = vld [vmem:[%s1 + $0x30] sm:$0xf]
  %v44 = vld [vmem:[%s1 + $0x34] sm:$0xf]
  %v45 = vld [vmem:[%s1 + $0x38] sm:$0xf]
  %v46 = vld [vmem:[%s1 + $0x3c] sm:$0xf]
  %v47 = vld [vmem:[%s1 + $0x40] sm:$0xf]
  %v48 = vld [vmem:[%s1 + $0x44] sm:$0xf]
  %v53 = vunpack.c.l.b16 %v27
  %v54 = vunpack.c.h.b16 %v27
  %v55 = vunpack.c.l.b16 %v28
  %v56 = vunpack.c.h.b16 %v28
  %v57 = vunpack.c.l.b16 %v29
  %v58 = vunpack.c.h.b16 %v29
  %v59 = vunpack.c.l.b16 %v30
  %v60 = vunpack.c.h.b16 %v30
  %v61 = vpack.c.b16 %v55, %v53
  %v62 = vpack.c.b16 %v56, %v54
  %v63 = vpack.c.b16 %v59, %v57
  %v64 = vpack.c.b16 %v60, %v58
  %v85 = vunpack.c.l.b16 %v31
  %v86 = vunpack.c.l.b16 %v32
  %v87 = vunpack.c.l.b16 %v33
  %v88 = vunpack.c.l.b16 %v34
  %v89 = vunpack.c.l.b16 %v35
  %v90 = vunpack.c.l.b16 %v36
  %v91 = vunpack.c.l.b16 %v37
  %v92 = vunpack.c.l.b16 %v38
  %v93 = vunpack.c.l.b16 %v39
  %v94 = vunpack.c.l.b16 %v40
  %v95 = vunpack.c.l.b16 %v41
  %v96 = vunpack.c.l.b16 %v42
  %v97 = vunpack.c.l.b16 %v43
  %v98 = vunpack.c.l.b16 %v44
  %v99 = vunpack.c.l.b16 %v45
  %v100 = vunpack.c.l.b16 %v46
  %v101 = vunpack.c.l.b16 %v47
  %v102 = vunpack.c.l.b16 %v48
  %v103 = vpack.c.b16 %v86, %v85
  %v104 = vpack.c.b16 %v88, %v87
  %v105 = vpack.c.b16 %v90, %v89
  %v106 = vpack.c.b16 %v92, %v91
  %v107 = vpack.c.b16 %v94, %v93
  %v108 = vpack.c.b16 %v96, %v95
  %v109 = vpack.c.b16 %v98, %v97
  %v110 = vpack.c.b16 %v100, %v99
  %v111 = vpack.c.b16 %v102, %v101
  %vm121 = vcmask 130048
  %v123 = vsel %vm121, %v62, 0
  %v126 = vsel %vm121, %v64, 0
  %128 = vmatprep.subr.bf16.mxu0 0
  %129 = vmatpush1.bf16.msra.mxu0 %v103
  %130 = vmatprep.subr.bf16.mxu0 0
  %131 = vmatpush1.bf16.msra.mxu0 %v104
  %132 = vmatprep.subr.bf16.mxu0 0
  %133 = vmatpush1.bf16.msra.mxu0 %v105
  %134 = vmatprep.subr.bf16.mxu0 0
  %135 = vmatpush1.bf16.msra.mxu0 %v106
  %136 = vmatprep.subr.bf16.mxu0 0
  %137 = vmatpush1.bf16.msra.mxu0 %v107
  %138 = vmatprep.subr.bf16.mxu0 0
  %139 = vmatpush1.bf16.msra.mxu0 %v108
  %140 = vmatprep.subr.bf16.mxu0 0
  %141 = vmatpush1.bf16.msra.mxu0 %v109
  %142 = vmatprep.subr.bf16.mxu0 0
  %143 = vmatpush1.bf16.msra.mxu0 %v110
  %144 = vmatprep.subr.bf16.mxu0 0
  %145 = vmatpush1.bf16.msra.mxu0 %v111
  %146 = vmatprep.subr.bf16.mxu0 0
  %147 = vmatpush1.bf16.msra.mxu0 0
  %148 = vmatprep.subr.bf16.mxu0 0
  %149 = vmatpush1.bf16.msra.mxu0 0
  %150 = vmatprep.subr.bf16.mxu0 0
  %151 = vmatpush1.bf16.msra.mxu0 0
  %152 = vmatprep.subr.bf16.mxu0 0
  %153 = vmatpush1.bf16.msra.mxu0 0
  %154 = vmatprep.subr.bf16.mxu0 0
  %155 = vmatpush1.bf16.msra.mxu0 0
  %156 = vmatprep.subr.bf16.mxu0 0
  %157 = vmatpush1.bf16.msra.mxu0 0
  %158 = vmatprep.subr.bf16.mxu0 0
  %159 = vmatpush1.bf16.msra.mxu0 0
  %160 = vmatprep.mubr.bf16.mxu0 %v123
  %161 = vmatmul.mubr.bf16.gmra.mrb[0].mxu0 %v61
  %v162 = vpop.f32.mrb[0].mxu0
  %v163 = vadd.f32 0.0, %v162
  %v164 = vpop.f32.mrb[0].mxu0
  %v165 = vpop.f32.mrb[0].mxu0
  %v166 = vadd.f32 0.0, %v165
  %v167 = vpop.f32.mrb[0].mxu0
  %168 = vmatprep.mubr.bf16.mxu0 %v126
  %169 = vmatmul.mubr.bf16.gmra.mrb[0].mxu0 %v63
  %v170 = vpop.f32.mrb[0].mxu0
  %v171 = vadd.f32 0.0, %v170
  %v172 = vpop.f32.mrb[0].mxu0
  %v173 = vpop.f32.mrb[0].mxu0
  %v174 = vadd.f32 0.0, %v173
  %v175 = vpop.f32.mrb[0].mxu0
  %176 = vdwg.mxu0
  %v177 = vadd.f32 %v23, %v163
  %v178 = vadd.f32 %v24, %v166
  %v179 = vadd.f32 %v25, %v171
  %v180 = vadd.f32 %v26, %v174
  %181 = vst [vmem:[#allocation2] sm:$0xff] %v177
  %182 = vst [vmem:[#allocation2 + $0x8] sm:$0xff] %v178
  %183 = vst [vmem:[#allocation2 + $0x10] sm:$0xff] %v179
  %184 = vst [vmem:[#allocation2 + $0x18] sm:$0xff] %v180
  // Predicated region
  $region18: #{resunet_forward.32} parent=0 // pred_check
    %p185 = pneg %p15
  $region19: #{resunet_forward.32} parent=0 // pred_check_branch
    %187 = sbr.rel (%p185) target = $region21
  $region20: #{resunet_forward.32} parent=0 // pred_region
    %v188 = vld [vmem:[#allocation2] sm:$0xff]
    %v189 = vld [vmem:[#allocation2 + $0x8] sm:$0xff]
    %v190 = vld [vmem:[#allocation2 + $0x10] sm:$0xff]
    %v191 = vld [vmem:[#allocation2 + $0x18] sm:$0xff]
    %v192 = vld [vmem:[%s2] sm:$0x1]
    %v194 = vlaneseq
    %v195 = vshrl.u32 %v194, 7
    %v196 = vsub.s32 0, %v195
    %v197 = vrot.slane %v192, %v196
    %v199 = vadd.f32 %v188, %v197
    %v200 = vadd.f32 %v189, %v197
    %v201 = vadd.f32 %v190, %v197
    %v202 = vadd.f32 %v191, %v197
    %v203 = vpack.c.bf16 %v200, %v199
    %v204 = vpack.c.bf16 %v202, %v201
    %v207 = vunpack.c.l.b16 %v203
    %v208 = vunpack.c.h.b16 %v203
    %v209 = vunpack.c.l.b16 %v204
    %v210 = vunpack.c.h.b16 %v204
    %v211 = vpack.c.b16 %v207, %v207
    %v212 = vpack.c.b16 %v208, %v208
    %v213 = vpack.c.b16 %v209, %v209
    %v214 = vpack.c.b16 %v210, %v210
    %219 = vst [vmem:[%s3] sm:$0xf] %v211
    %220 = vst [vmem:[%s3 + $0x4] sm:$0xf] %v212
    %221 = vst [vmem:[%s3 + $0x8] sm:$0xf] %v213
    %222 = vst [vmem:[%s3 + $0xc] sm:$0xf] %v214
  $region21: #{resunet_forward.32} parent=0 // pred_fallthru
    _
  // Predicated region
  $region22: #{resunet_forward.32} parent=0 // pred_check
    _
  $region23: #{resunet_forward.32} parent=0 // pred_check_branch
    %224 = sbr.rel (0) target = $region25
  $region24: #{resunet_forward.32} parent=0 // pred_region
    _
  $region25: #{resunet_forward.32} parent=0 // pred_fallthru
    _
  // Predicated region
  $region26: #{resunet_forward.32} parent=0 // pred_check
    _
  $region27: #{resunet_forward.32} parent=0 // pred_check_branch
    %226 = sbr.rel (0) target = $region29
  $region28: #{resunet_forward.32} parent=0 // pred_region
    _
  $region29: #{resunet_forward.32} parent=0 // pred_fallthru
    _

// kernel: resunet_forward.33
$region0: #{resunet_forward.33}
  #allocation0 [shape = 'u32[]', space=smem, size = 0x4, offset = 0x4, fixed_abs, tag = 'smem constant byte address 0x4 - core index']
  #allocation1 [shape = 'u32[144,128]{1,0:T(1,128)}', space=vmem, size = 0x12000, scoped, tag = 'internal scratch']
  #allocation2 [shape = 'f32[32,128]{1,0:T(8,128)}', space=vmem, size = 0x4000, scoped, tag = 'scratch operand']
  %s0 = inlined_call_operand.vmem [shape: bf16[32,288], index: 0, kind: input, shape index: {}]
  %s1 = inlined_call_operand.vmem [shape: bf16[288,128], index: 1, kind: input, shape index: {}]
  %s2 = inlined_call_operand.vmem [shape: f32[1,128], index: 2, kind: input, shape index: {}]
  %s3 = inlined_call_operand.vmem [shape: bf16[32,128], index: 3, kind: input, shape index: {}]
  %s4 = inlined_call_operand.vmem [shape: f32[1,128], index: 4, kind: input, shape index: {}]
  %s5 = inlined_call_operand.vmem [shape: f32[1,128], index: 5, kind: input, shape index: {}]
  %s6 = inlined_call_operand.vmem [shape: bf16[32,128], index: 6, kind: output, shape index: {}]
  %s7 = sld [smem:[#allocation0]]
  $region42: #{resunet_forward.33} parent=0
    _
  %s9 = ssub.s32 1, %s7
  %s10 = scalar_select 0, %s9, %s7
  // Predicated region
  $region2: #{resunet_forward.33} parent=0 // pred_check
    _
  $region3: #{resunet_forward.33} parent=0 // pred_check_branch
    %12 = sbr.rel (0) target = $region5
  $region4: #{resunet_forward.33} parent=0 // pred_region
    _
  $region5: #{resunet_forward.33} parent=0 // pred_fallthru
    _
  // Predicated region
  $region6: #{resunet_forward.33} parent=0 // pred_check
    _
  $region7: #{resunet_forward.33} parent=0 // pred_check_branch
    %14 = sbr.rel (0) target = $region9
  $region8: #{resunet_forward.33} parent=0 // pred_region
    _
  $region9: #{resunet_forward.33} parent=0 // pred_fallthru
    _
  // Predicated region
  $region10: #{resunet_forward.33} parent=0 // pred_check
    _
  $region11: #{resunet_forward.33} parent=0 // pred_check_branch
    %16 = sbr.rel (0) target = $region13
  $region12: #{resunet_forward.33} parent=0 // pred_region
    _
  $region13: #{resunet_forward.33} parent=0 // pred_fallthru
    _
  // Predicated region
  $region14: #{resunet_forward.33} parent=0 // pred_check
    _
  $region15: #{resunet_forward.33} parent=0 // pred_check_branch
    %18 = sbr.rel (0) target = $region17
  $region16: #{resunet_forward.33} parent=0 // pred_region
    _
  $region17: #{resunet_forward.33} parent=0 // pred_fallthru
    _
  // Predicated region
  $region18: #{resunet_forward.33} parent=0 // pred_check
    _
  $region19: #{resunet_forward.33} parent=0 // pred_check_branch
    %20 = sbr.rel (0) target = $region21
  $region20: #{resunet_forward.33} parent=0 // pred_region
    _
  $region21: #{resunet_forward.33} parent=0 // pred_fallthru
    _
  // Predicated region
  $region22: #{resunet_forward.33} parent=0 // pred_check
    _
  $region23: #{resunet_forward.33} parent=0 // pred_check_branch
    %22 = sbr.rel (0) target = $region25
  $region24: #{resunet_forward.33} parent=0 // pred_region
    _
  $region25: #{resunet_forward.33} parent=0 // pred_fallthru
    _
  %p24 = scmp.eq.s32.totalorder 0, 0
  // Predicated region
  $region26: #{resunet_forward.33} parent=0 // pred_check
    %p25 = pneg %p24
  $region27: #{resunet_forward.33} parent=0 // pred_check_branch
    %27 = sbr.rel (%p25) target = $region29
  $region28: #{resunet_forward.33} parent=0 // pred_region
    %28 = vst [vmem:[#allocation2] sm:$0xff] 0.0
    %29 = vst [vmem:[#allocation2 + $0x8] sm:$0xff] 0.0
    %30 = vst [vmem:[#allocation2 + $0x10] sm:$0xff] 0.0
    %31 = vst [vmem:[#allocation2 + $0x18] sm:$0xff] 0.0
  $region29: #{resunet_forward.33} parent=0 // pred_fallthru
    _
  %v32 = vld [vmem:[#allocation2] sm:$0xff]
  %v33 = vld [vmem:[#allocation2 + $0x8] sm:$0xff]
  %v34 = vld [vmem:[#allocation2 + $0x10] sm:$0xff]
  %v35 = vld [vmem:[#allocation2 + $0x18] sm:$0xff]
  %v36 = vld [vmem:[%s0] sm:$0xff]
  %v37 = vld [vmem:[%s0 + $0x8] sm:$0xf]
  %v38 = vld [vmem:[%s0 + $0xc] sm:$0xff]
  %v39 = vld [vmem:[%s0 + $0x14] sm:$0xf]
  %v40 = vld [vmem:[%s0 + $0x18] sm:$0xff]
  %v41 = vld [vmem:[%s0 + $0x20] sm:$0xf]
  %v42 = vld [vmem:[%s0 + $0x24] sm:$0xff]
  %v43 = vld [vmem:[%s0 + $0x2c] sm:$0xf]
  %v44 = vld [vmem:[%s1] sm:$0xf]
  %v45 = vld [vmem:[%s1 + $0x4] sm:$0xf]
  %v46 = vld [vmem:[%s1 + $0x8] sm:$0xf]
  %v47 = vld [vmem:[%s1 + $0xc] sm:$0xf]
  %v48 = vld [vmem:[%s1 + $0x10] sm:$0xf]
  %v49 = vld [vmem:[%s1 + $0x14] sm:$0xf]
  %v50 = vld [vmem:[%s1 + $0x18] sm:$0xf]
  %v51 = vld [vmem:[%s1 + $0x1c] sm:$0xf]
  %v52 = vld [vmem:[%s1 + $0x20] sm:$0xf]
  %v53 = vld [vmem:[%s1 + $0x24] sm:$0xf]
  %v54 = vld [vmem:[%s1 + $0x28] sm:$0xf]
  %v55 = vld [vmem:[%s1 + $0x2c] sm:$0xf]
  %v56 = vld [vmem:[%s1 + $0x30] sm:$0xf]
  %v57 = vld [vmem:[%s1 + $0x34] sm:$0xf]
  %v58 = vld [vmem:[%s1 + $0x38] sm:$0xf]
  %v59 = vld [vmem:[%s1 + $0x3c] sm:$0xf]
  %v60 = vld [vmem:[%s1 + $0x40] sm:$0xf]
  %v61 = vld [vmem:[%s1 + $0x44] sm:$0xf]
  %v62 = vld [vmem:[%s1 + $0x48] sm:$0xf]
  %v63 = vld [vmem:[%s1 + $0x4c] sm:$0xf]
  %v64 = vld [vmem:[%s1 + $0x50] sm:$0xf]
  %v65 = vld [vmem:[%s1 + $0x54] sm:$0xf]
  %v66 = vld [vmem:[%s1 + $0x58] sm:$0xf]
  %v67 = vld [vmem:[%s1 + $0x5c] sm:$0xf]
  %v68 = vld [vmem:[%s1 + $0x60] sm:$0xf]
  %v69 = vld [vmem:[%s1 + $0x64] sm:$0xf]
  %v70 = vld [vmem:[%s1 + $0x68] sm:$0xf]
  %v71 = vld [vmem:[%s1 + $0x6c] sm:$0xf]
  %v72 = vld [vmem:[%s1 + $0x70] sm:$0xf]
  %v73 = vld [vmem:[%s1 + $0x74] sm:$0xf]
  %v74 = vld [vmem:[%s1 + $0x78] sm:$0xf]
  %v75 = vld [vmem:[%s1 + $0x7c] sm:$0xf]
  %v76 = vld [vmem:[%s1 + $0x80] sm:$0xf]
  %v77 = vld [vmem:[%s1 + $0x84] sm:$0xf]
  %v78 = vld [vmem:[%s1 + $0x88] sm:$0xf]
  %v79 = vld [vmem:[%s1 + $0x8c] sm:$0xf]
  %v88 = vunpack.c.l.b16 %v36
  %v89 = vunpack.c.h.b16 %v36
  %v90 = vunpack.c.l.b16 %v37
  %v91 = vunpack.c.l.b16 %v38
  %v92 = vunpack.c.h.b16 %v38
  %v93 = vunpack.c.l.b16 %v39
  %v94 = vunpack.c.l.b16 %v40
  %v95 = vunpack.c.h.b16 %v40
  %v96 = vunpack.c.l.b16 %v41
  %v97 = vunpack.c.l.b16 %v42
  %v98 = vunpack.c.h.b16 %v42
  %v99 = vunpack.c.l.b16 %v43
  %v100 = vpack.c.b16 %v91, %v88
  %v101 = vpack.c.b16 %v92, %v89
  %v102 = vpack.c.b16 %v93, %v90
  %v103 = vpack.c.b16 %v97, %v94
  %v104 = vpack.c.b16 %v98, %v95
  %v105 = vpack.c.b16 %v99, %v96
  %v146 = vunpack.c.l.b16 %v44
  %v147 = vunpack.c.l.b16 %v45
  %v148 = vunpack.c.l.b16 %v46
  %v149 = vunpack.c.l.b16 %v47
  %v150 = vunpack.c.l.b16 %v48
  %v151 = vunpack.c.l.b16 %v49
  %v152 = vunpack.c.l.b16 %v50
  %v153 = vunpack.c.l.b16 %v51
  %v154 = vunpack.c.l.b16 %v52
  %v155 = vunpack.c.l.b16 %v53
  %v156 = vunpack.c.l.b16 %v54
  %v157 = vunpack.c.l.b16 %v55
  %v158 = vunpack.c.l.b16 %v56
  %v159 = vunpack.c.l.b16 %v57
  %v160 = vunpack.c.l.b16 %v58
  %v161 = vunpack.c.l.b16 %v59
  %v162 = vunpack.c.l.b16 %v60
  %v163 = vunpack.c.l.b16 %v61
  %v164 = vunpack.c.l.b16 %v62
  %v165 = vunpack.c.l.b16 %v63
  %v166 = vunpack.c.l.b16 %v64
  %v167 = vunpack.c.l.b16 %v65
  %v168 = vunpack.c.l.b16 %v66
  %v169 = vunpack.c.l.b16 %v67
  %v170 = vunpack.c.l.b16 %v68
  %v171 = vunpack.c.l.b16 %v69
  %v172 = vunpack.c.l.b16 %v70
  %v173 = vunpack.c.l.b16 %v71
  %v174 = vunpack.c.l.b16 %v72
  %v175 = vunpack.c.l.b16 %v73
  %v176 = vunpack.c.l.b16 %v74
  %v177 = vunpack.c.l.b16 %v75
  %v178 = vunpack.c.l.b16 %v76
  %v179 = vunpack.c.l.b16 %v77
  %v180 = vunpack.c.l.b16 %v78
  %v181 = vunpack.c.l.b16 %v79
  %v182 = vpack.c.b16 %v147, %v146
  %v183 = vpack.c.b16 %v149, %v148
  %v184 = vpack.c.b16 %v151, %v150
  %v185 = vpack.c.b16 %v153, %v152
  %v186 = vpack.c.b16 %v155, %v154
  %v187 = vpack.c.b16 %v157, %v156
  %v188 = vpack.c.b16 %v159, %v158
  %v189 = vpack.c.b16 %v161, %v160
  %v190 = vpack.c.b16 %v163, %v162
  %v191 = vpack.c.b16 %v165, %v164
  %v192 = vpack.c.b16 %v167, %v166
  %v193 = vpack.c.b16 %v169, %v168
  %v194 = vpack.c.b16 %v171, %v170
  %v195 = vpack.c.b16 %v173, %v172
  %v196 = vpack.c.b16 %v175, %v174
  %v197 = vpack.c.b16 %v177, %v176
  %v198 = vpack.c.b16 %v179, %v178
  %v199 = vpack.c.b16 %v181, %v180
  %vm218 = vcmask 261120
  %v220 = vsel %vm218, %v102, 0
  %v223 = vsel %vm218, %v105, 0
  %225 = vmatprep.subr.bf16.mxu0 0
  %226 = vmatpush1.bf16.msra.mxu0 %v182
  %227 = vmatprep.subr.bf16.mxu0 0
  %228 = vmatpush1.bf16.msra.mxu0 %v183
  %229 = vmatprep.subr.bf16.mxu0 0
  %230 = vmatpush1.bf16.msra.mxu0 %v184
  %231 = vmatprep.subr.bf16.mxu0 0
  %232 = vmatpush1.bf16.msra.mxu0 %v185
  %233 = vmatprep.subr.bf16.mxu0 0
  %234 = vmatpush1.bf16.msra.mxu0 %v186
  %235 = vmatprep.subr.bf16.mxu0 0
  %236 = vmatpush1.bf16.msra.mxu0 %v187
  %237 = vmatprep.subr.bf16.mxu0 0
  %238 = vmatpush1.bf16.msra.mxu0 %v188
  %239 = vmatprep.subr.bf16.mxu0 0
  %240 = vmatpush1.bf16.msra.mxu0 %v189
  %241 = vmatprep.subr.bf16.mxu0 0
  %242 = vmatpush1.bf16.msra.mxu0 %v190
  %243 = vmatprep.subr.bf16.mxu0 0
  %244 = vmatpush1.bf16.msra.mxu0 %v191
  %245 = vmatprep.subr.bf16.mxu0 0
  %246 = vmatpush1.bf16.msra.mxu0 %v192
  %247 = vmatprep.subr.bf16.mxu0 0
  %248 = vmatpush1.bf16.msra.mxu0 %v193
  %249 = vmatprep.subr.bf16.mxu0 0
  %250 = vmatpush1.bf16.msra.mxu0 %v194
  %251 = vmatprep.subr.bf16.mxu0 0
  %252 = vmatpush1.bf16.msra.mxu0 %v195
  %253 = vmatprep.subr.bf16.mxu0 0
  %254 = vmatpush1.bf16.msra.mxu0 %v196
  %255 = vmatprep.subr.bf16.mxu0 0
  %256 = vmatpush1.bf16.msra.mxu0 %v197
  %257 = vmatprep.mubr.bf16.mxu0 %v101
  %258 = vmatmul.mubr.bf16.gmra.mrb[0].mxu0 %v100
  %v259 = vpop.f32.mrb[0].mxu0
  %v260 = vadd.f32 0.0, %v259
  %v261 = vpop.f32.mrb[0].mxu0
  %v262 = vpop.f32.mrb[0].mxu0
  %v263 = vadd.f32 0.0, %v262
  %v264 = vpop.f32.mrb[0].mxu0
  %265 = vmatprep.mubr.bf16.mxu0 %v104
  %266 = vmatmul.mubr.bf16.gmra.mrb[0].mxu0 %v103
  %v267 = vpop.f32.mrb[0].mxu0
  %v268 = vadd.f32 0.0, %v267
  %v269 = vpop.f32.mrb[0].mxu0
  %v270 = vpop.f32.mrb[0].mxu0
  %v271 = vadd.f32 0.0, %v270
  %v272 = vpop.f32.mrb[0].mxu0
  %273 = vdwg.mxu0
  %274 = vmatprep.subr.bf16.mxu0 0
  %275 = vmatpush1.bf16.msra.mxu0 %v198
  %276 = vmatprep.subr.bf16.mxu0 0
  %277 = vmatpush1.bf16.msra.mxu0 %v199
  %278 = vmatprep.subr.bf16.mxu0 0
  %279 = vmatpush1.bf16.msra.mxu0 0
  %280 = vmatprep.subr.bf16.mxu0 0
  %281 = vmatpush1.bf16.msra.mxu0 0
  %282 = vmatprep.subr.bf16.mxu0 0
  %283 = vmatpush1.bf16.msra.mxu0 0
  %284 = vmatprep.subr.bf16.mxu0 0
  %285 = vmatpush1.bf16.msra.mxu0 0
  %286 = vmatprep.subr.bf16.mxu0 0
  %287 = vmatpush1.bf16.msra.mxu0 0
  %288 = vmatprep.subr.bf16.mxu0 0
  %289 = vmatpush1.bf16.msra.mxu0 0
  %290 = vmatprep.subr.bf16.mxu0 0
  %291 = vmatpush1.bf16.msra.mxu0 0
  %292 = vmatprep.subr.bf16.mxu0 0
  %293 = vmatpush1.bf16.msra.mxu0 0
  %294 = vmatprep.subr.bf16.mxu0 0
  %295 = vmatpush1.bf16.msra.mxu0 0
  %296 = vmatprep.subr.bf16.mxu0 0
  %297 = vmatpush1.bf16.msra.mxu0 0
  %298 = vmatprep.subr.bf16.mxu0 0
  %299 = vmatpush1.bf16.msra.mxu0 0
  %300 = vmatprep.subr.bf16.mxu0 0
  %301 = vmatpush1.bf16.msra.mxu0 0
  %302 = vmatprep.subr.bf16.mxu0 0
  %303 = vmatpush1.bf16.msra.mxu0 0
  %304 = vmatprep.subr.bf16.mxu0 0
  %305 = vmatpush1.bf16.msra.mxu0 0
  %306 = vmatprep.mubr.bf16.mxu0 0
  %307 = vmatmul.mubr.bf16.gmra.mrb[0].mxu0 %v220
  %v308 = vpop.f32.mrb[0].mxu0
  %v309 = vadd.f32 %v260, %v308
  %v310 = vpop.f32.mrb[0].mxu0
  %v311 = vpop.f32.mrb[0].mxu0
  %v312 = vadd.f32 %v263, %v311
  %v313 = vpop.f32.mrb[0].mxu0
  %314 = vmatprep.mubr.bf16.mxu0 0
  %315 = vmatmul.mubr.bf16.gmra.mrb[0].mxu0 %v223
  %v316 = vpop.f32.mrb[0].mxu0
  %v317 = vadd.f32 %v268, %v316
  %v318 = vpop.f32.mrb[0].mxu0
  %v319 = vpop.f32.mrb[0].mxu0
  %v320 = vadd.f32 %v271, %v319
  %v321 = vpop.f32.mrb[0].mxu0
  %322 = vdwg.mxu0
  %v323 = vadd.f32 %v32, %v309
  %v324 = vadd.f32 %v33, %v312
  %v325 = vadd.f32 %v34, %v317
  %v326 = vadd.f32 %v35, %v320
  %327 = vst [vmem:[#allocation2] sm:$0xff] %v323
  %328 = vst [vmem:[#allocation2 + $0x8] sm:$0xff] %v324
  %329 = vst [vmem:[#allocation2 + $0x10] sm:$0xff] %v325
  %330 = vst [vmem:[#allocation2 + $0x18] sm:$0xff] %v326
  // Predicated region
  $region30: #{resunet_forward.33} parent=0 // pred_check
    %p331 = pneg %p24
  $region31: #{resunet_forward.33} parent=0 // pred_check_branch
    %333 = sbr.rel (%p331) target = $region33
  $region32: #{resunet_forward.33} parent=0 // pred_region
    %v334 = vld [vmem:[#allocation2] sm:$0xff]
    %v335 = vld [vmem:[#allocation2 + $0x8] sm:$0xff]
    %v336 = vld [vmem:[#allocation2 + $0x10] sm:$0xff]
    %v337 = vld [vmem:[#allocation2 + $0x18] sm:$0xff]
    %v338 = vld [vmem:[%s2] sm:$0x1]
    %v340 = vlaneseq
    %v341 = vshrl.u32 %v340, 7
    %v342 = vsub.s32 0, %v341
    %v343 = vrot.slane %v338, %v342
    %v345 = vadd.f32 %v334, %v343
    %v346 = vadd.f32 %v335, %v343
    %v347 = vadd.f32 %v336, %v343
    %v348 = vadd.f32 %v337, %v343
    %v349 = vld [vmem:[%s3] sm:$0xf]
    %v350 = vld [vmem:[%s3 + $0x4] sm:$0xf]
    %v351 = vld [vmem:[%s3 + $0x8] sm:$0xf]
    %v352 = vld [vmem:[%s3 + $0xc] sm:$0xf]
    %v353 = vunpack.c.l.bf16 %v349
    %v354 = vunpack.c.l.bf16 %v350
    %v355 = vunpack.c.l.bf16 %v351
    %v356 = vunpack.c.l.bf16 %v352
    %v357 = vld [vmem:[%s4] sm:$0x1]
    %v359 = vlaneseq
    %v360 = vshrl.u32 %v359, 7
    %v361 = vsub.s32 0, %v360
    %v362 = vrot.slane %v357, %v361
    %v364 = vmul.f32 %v353, %v362
    %v365 = vmul.f32 %v354, %v362
    %v366 = vmul.f32 %v355, %v362
    %v367 = vmul.f32 %v356, %v362
    %v368 = vadd.f32 %v345, %v364
    %v369 = vadd.f32 %v346, %v365
    %v370 = vadd.f32 %v347, %v366
    %v371 = vadd.f32 %v348, %v367
    %v372 = vld [vmem:[%s5] sm:$0x1]
    %v374 = vlaneseq
    %v375 = vshrl.u32 %v374, 7
    %v376 = vsub.s32 0, %v375
    %v377 = vrot.slane %v372, %v376
    %v379 = vadd.f32 %v368, %v377
    %v380 = vadd.f32 %v369, %v377
    %v381 = vadd.f32 %v370, %v377
    %v382 = vadd.f32 %v371, %v377
    %v383 = vpack.c.bf16 %v380, %v379
    %v384 = vpack.c.bf16 %v382, %v381
    %v387 = vunpack.c.l.b16 %v383
    %v388 = vunpack.c.h.b16 %v383
    %v389 = vunpack.c.l.b16 %v384
    %v390 = vunpack.c.h.b16 %v384
    %v391 = vpack.c.b16 %v387, %v387
    %v392 = vpack.c.b16 %v388, %v388
    %v393 = vpack.c.b16 %v389, %v389
    %v394 = vpack.c.b16 %v390, %v390
    %399 = vst [vmem:[%s6] sm:$0xf] %v391
    %400 = vst [vmem:[%s6 + $0x4] sm:$0xf] %v392
    %401 = vst [vmem:[%s6 + $0x8] sm:$0xf] %v393
    %402 = vst [vmem:[%s6 + $0xc] sm:$0xf] %v394
  $region33: #{resunet_forward.33} parent=0 // pred_fallthru
    _
  // Predicated region
  $region34: #{resunet_forward.33} parent=0 // pred_check
    _
  $region35: #{resunet_forward.33} parent=0 // pred_check_branch
    %404 = sbr.rel (0) target = $region37
  $region36: #{resunet_forward.33} parent=0 // pred_region
    _
  $region37: #{resunet_forward.33} parent=0 // pred_fallthru
    _
  // Predicated region
  $region38: #{resunet_forward.33} parent=0 // pred_check
    _
  $region39: #{resunet_forward.33} parent=0 // pred_check_branch
    %406 = sbr.rel (0) target = $region41
  $region40: #{resunet_forward.33} parent=0 // pred_region
    _
  $region41: #{resunet_forward.33} parent=0 // pred_fallthru
    _

// kernel: resunet_forward.35
$region0: #{resunet_forward.35}
  #allocation0 [shape = 'u32[]', space=smem, size = 0x4, offset = 0x4, fixed_abs, tag = 'smem constant byte address 0x4 - core index']
  #allocation1 [shape = 'u32[144,128]{1,0:T(1,128)}', space=vmem, size = 0x12000, scoped, tag = 'internal scratch']
  #allocation2 [shape = 'f32[8,128]{1,0:T(8,128)}', space=vmem, size = 0x1000, scoped, tag = 'scratch operand']
  %s0 = inlined_call_operand.vmem [shape: bf16[8,288], index: 0, kind: input, shape index: {}]
  %s1 = inlined_call_operand.vmem [shape: bf16[288,128], index: 1, kind: input, shape index: {}]
  %s2 = inlined_call_operand.vmem [shape: f32[1,128], index: 2, kind: input, shape index: {}]
  %s3 = inlined_call_operand.vmem [shape: bf16[8,128], index: 3, kind: output, shape index: {}]
  %s4 = sld [smem:[#allocation0]]
  $region30: #{resunet_forward.35} parent=0
    _
  %s6 = ssub.s32 1, %s4
  %s7 = scalar_select 0, %s6, %s4
  // Predicated region
  $region2: #{resunet_forward.35} parent=0 // pred_check
    _
  $region3: #{resunet_forward.35} parent=0 // pred_check_branch
    %9 = sbr.rel (0) target = $region5
  $region4: #{resunet_forward.35} parent=0 // pred_region
    _
  $region5: #{resunet_forward.35} parent=0 // pred_fallthru
    _
  // Predicated region
  $region6: #{resunet_forward.35} parent=0 // pred_check
    _
  $region7: #{resunet_forward.35} parent=0 // pred_check_branch
    %11 = sbr.rel (0) target = $region9
  $region8: #{resunet_forward.35} parent=0 // pred_region
    _
  $region9: #{resunet_forward.35} parent=0 // pred_fallthru
    _
  // Predicated region
  $region10: #{resunet_forward.35} parent=0 // pred_check
    _
  $region11: #{resunet_forward.35} parent=0 // pred_check_branch
    %13 = sbr.rel (0) target = $region13
  $region12: #{resunet_forward.35} parent=0 // pred_region
    _
  $region13: #{resunet_forward.35} parent=0 // pred_fallthru
    _
  %p15 = scmp.eq.s32.totalorder 0, 0
  // Predicated region
  $region14: #{resunet_forward.35} parent=0 // pred_check
    %p16 = pneg %p15
  $region15: #{resunet_forward.35} parent=0 // pred_check_branch
    %18 = sbr.rel (%p16) target = $region17
  $region16: #{resunet_forward.35} parent=0 // pred_region
    %19 = vst [vmem:[#allocation2] sm:$0xff] 0.0
  $region17: #{resunet_forward.35} parent=0 // pred_fallthru
    _
  %v20 = vld [vmem:[#allocation2] sm:$0xff]
  %v21 = vld [vmem:[%s0] sm:$0xff]
  %v22 = vld [vmem:[%s0 + $0x8] sm:$0xf]
  %v23 = vld [vmem:[%s1] sm:$0xf]
  %v24 = vld [vmem:[%s1 + $0x4] sm:$0xf]
  %v25 = vld [vmem:[%s1 + $0x8] sm:$0xf]
  %v26 = vld [vmem:[%s1 + $0xc] sm:$0xf]
  %v27 = vld [vmem:[%s1 + $0x10] sm:$0xf]
  %v28 = vld [vmem:[%s1 + $0x14] sm:$0xf]
  %v29 = vld [vmem:[%s1 + $0x18] sm:$0xf]
  %v30 = vld [vmem:[%s1 + $0x1c] sm:$0xf]
  %v31 = vld [vmem:[%s1 + $0x20] sm:$0xf]
  %v32 = vld [vmem:[%s1 + $0x24] sm:$0xf]
  %v33 = vld [vmem:[%s1 + $0x28] sm:$0xf]
  %v34 = vld [vmem:[%s1 + $0x2c] sm:$0xf]
  %v35 = vld [vmem:[%s1 + $0x30] sm:$0xf]
  %v36 = vld [vmem:[%s1 + $0x34] sm:$0xf]
  %v37 = vld [vmem:[%s1 + $0x38] sm:$0xf]
  %v38 = vld [vmem:[%s1 + $0x3c] sm:$0xf]
  %v39 = vld [vmem:[%s1 + $0x40] sm:$0xf]
  %v40 = vld [vmem:[%s1 + $0x44] sm:$0xf]
  %v41 = vld [vmem:[%s1 + $0x48] sm:$0xf]
  %v42 = vld [vmem:[%s1 + $0x4c] sm:$0xf]
  %v43 = vld [vmem:[%s1 + $0x50] sm:$0xf]
  %v44 = vld [vmem:[%s1 + $0x54] sm:$0xf]
  %v45 = vld [vmem:[%s1 + $0x58] sm:$0xf]
  %v46 = vld [vmem:[%s1 + $0x5c] sm:$0xf]
  %v47 = vld [vmem:[%s1 + $0x60] sm:$0xf]
  %v48 = vld [vmem:[%s1 + $0x64] sm:$0xf]
  %v49 = vld [vmem:[%s1 + $0x68] sm:$0xf]
  %v50 = vld [vmem:[%s1 + $0x6c] sm:$0xf]
  %v51 = vld [vmem:[%s1 + $0x70] sm:$0xf]
  %v52 = vld [vmem:[%s1 + $0x74] sm:$0xf]
  %v53 = vld [vmem:[%s1 + $0x78] sm:$0xf]
  %v54 = vld [vmem:[%s1 + $0x7c] sm:$0xf]
  %v55 = vld [vmem:[%s1 + $0x80] sm:$0xf]
  %v56 = vld [vmem:[%s1 + $0x84] sm:$0xf]
  %v57 = vld [vmem:[%s1 + $0x88] sm:$0xf]
  %v58 = vld [vmem:[%s1 + $0x8c] sm:$0xf]
  %v61 = vunpack.c.l.b16 %v21
  %v62 = vunpack.c.h.b16 %v21
  %v63 = vunpack.c.l.b16 %v22
  %v64 = vpack.c.b16 %v61, %v61
  %v65 = vpack.c.b16 %v62, %v62
  %v66 = vpack.c.b16 %v63, %v63
  %v105 = vunpack.c.l.b16 %v23
  %v106 = vunpack.c.l.b16 %v24
  %v107 = vunpack.c.l.b16 %v25
  %v108 = vunpack.c.l.b16 %v26
  %v109 = vunpack.c.l.b16 %v27
  %v110 = vunpack.c.l.b16 %v28
  %v111 = vunpack.c.l.b16 %v29
  %v112 = vunpack.c.l.b16 %v30
  %v113 = vunpack.c.l.b16 %v31
  %v114 = vunpack.c.l.b16 %v32
  %v115 = vunpack.c.l.b16 %v33
  %v116 = vunpack.c.l.b16 %v34
  %v117 = vunpack.c.l.b16 %v35
  %v118 = vunpack.c.l.b16 %v36
  %v119 = vunpack.c.l.b16 %v37
  %v120 = vunpack.c.l.b16 %v38
  %v121 = vunpack.c.l.b16 %v39
  %v122 = vunpack.c.l.b16 %v40
  %v123 = vunpack.c.l.b16 %v41
  %v124 = vunpack.c.l.b16 %v42
  %v125 = vunpack.c.l.b16 %v43
  %v126 = vunpack.c.l.b16 %v44
  %v127 = vunpack.c.l.b16 %v45
  %v128 = vunpack.c.l.b16 %v46
  %v129 = vunpack.c.l.b16 %v47
  %v130 = vunpack.c.l.b16 %v48
  %v131 = vunpack.c.l.b16 %v49
  %v132 = vunpack.c.l.b16 %v50
  %v133 = vunpack.c.l.b16 %v51
  %v134 = vunpack.c.l.b16 %v52
  %v135 = vunpack.c.l.b16 %v53
  %v136 = vunpack.c.l.b16 %v54
  %v137 = vunpack.c.l.b16 %v55
  %v138 = vunpack.c.l.b16 %v56
  %v139 = vunpack.c.l.b16 %v57
  %v140 = vunpack.c.l.b16 %v58
  %v141 = vpack.c.b16 %v106, %v105
  %v142 = vpack.c.b16 %v108, %v107
  %v143 = vpack.c.b16 %v110, %v109
  %v144 = vpack.c.b16 %v112, %v111
  %v145 = vpack.c.b16 %v114, %v113
  %v146 = vpack.c.b16 %v116, %v115
  %v147 = vpack.c.b16 %v118, %v117
  %v148 = vpack.c.b16 %v120, %v119
  %v149 = vpack.c.b16 %v122, %v121
  %v150 = vpack.c.b16 %v124, %v123
  %v151 = vpack.c.b16 %v126, %v125
  %v152 = vpack.c.b16 %v128, %v127
  %v153 = vpack.c.b16 %v130, %v129
  %v154 = vpack.c.b16 %v132, %v131
  %v155 = vpack.c.b16 %v134, %v133
  %v156 = vpack.c.b16 %v136, %v135
  %v157 = vpack.c.b16 %v138, %v137
  %v158 = vpack.c.b16 %v140, %v139
  %vm177 = vcmask 261120
  %v179 = vsel %vm177, %v66, 0
  %181 = vmatprep.subr.bf16.mxu0 0
  %182 = vmatpush1.bf16.msra.mxu0 %v141
  %183 = vmatprep.subr.bf16.mxu0 0
  %184 = vmatpush1.bf16.msra.mxu0 %v142
  %185 = vmatprep.subr.bf16.mxu0 0
  %186 = vmatpush1.bf16.msra.mxu0 %v143
  %187 = vmatprep.subr.bf16.mxu0 0
  %188 = vmatpush1.bf16.msra.mxu0 %v144
  %189 = vmatprep.subr.bf16.mxu0 0
  %190 = vmatpush1.bf16.msra.mxu0 %v145
  %191 = vmatprep.subr.bf16.mxu0 0
  %192 = vmatpush1.bf16.msra.mxu0 %v146
  %193 = vmatprep.subr.bf16.mxu0 0
  %194 = vmatpush1.bf16.msra.mxu0 %v147
  %195 = vmatprep.subr.bf16.mxu0 0
  %196 = vmatpush1.bf16.msra.mxu0 %v148
  %197 = vmatprep.subr.bf16.mxu0 0
  %198 = vmatpush1.bf16.msra.mxu0 %v149
  %199 = vmatprep.subr.bf16.mxu0 0
  %200 = vmatpush1.bf16.msra.mxu0 %v150
  %201 = vmatprep.subr.bf16.mxu0 0
  %202 = vmatpush1.bf16.msra.mxu0 %v151
  %203 = vmatprep.subr.bf16.mxu0 0
  %204 = vmatpush1.bf16.msra.mxu0 %v152
  %205 = vmatprep.subr.bf16.mxu0 0
  %206 = vmatpush1.bf16.msra.mxu0 %v153
  %207 = vmatprep.subr.bf16.mxu0 0
  %208 = vmatpush1.bf16.msra.mxu0 %v154
  %209 = vmatprep.subr.bf16.mxu0 0
  %210 = vmatpush1.bf16.msra.mxu0 %v155
  %211 = vmatprep.subr.bf16.mxu0 0
  %212 = vmatpush1.bf16.msra.mxu0 %v156
  %213 = vmatprep.mubr.bf16.mxu0 %v65
  %214 = vmatmul.mubr.bf16.gmra.mrb[0].mxu0 %v64
  %v215 = vpop.f32.mrb[0].mxu0
  %v216 = vadd.f32 0.0, %v215
  %v217 = vpop.f32.mrb[0].mxu0
  %v218 = vpop.f32.mrb[0].mxu0
  %v219 = vpop.f32.mrb[0].mxu0
  %220 = vdwg.mxu0
  %221 = vmatprep.subr.bf16.mxu0 0
  %222 = vmatpush1.bf16.msra.mxu0 %v157
  %223 = vmatprep.subr.bf16.mxu0 0
  %224 = vmatpush1.bf16.msra.mxu0 %v158
  %225 = vmatprep.subr.bf16.mxu0 0
  %226 = vmatpush1.bf16.msra.mxu0 0
  %227 = vmatprep.subr.bf16.mxu0 0
  %228 = vmatpush1.bf16.msra.mxu0 0
  %229 = vmatprep.subr.bf16.mxu0 0
  %230 = vmatpush1.bf16.msra.mxu0 0
  %231 = vmatprep.subr.bf16.mxu0 0
  %232 = vmatpush1.bf16.msra.mxu0 0
  %233 = vmatprep.subr.bf16.mxu0 0
  %234 = vmatpush1.bf16.msra.mxu0 0
  %235 = vmatprep.subr.bf16.mxu0 0
  %236 = vmatpush1.bf16.msra.mxu0 0
  %237 = vmatprep.subr.bf16.mxu0 0
  %238 = vmatpush1.bf16.msra.mxu0 0
  %239 = vmatprep.subr.bf16.mxu0 0
  %240 = vmatpush1.bf16.msra.mxu0 0
  %241 = vmatprep.subr.bf16.mxu0 0
  %242 = vmatpush1.bf16.msra.mxu0 0
  %243 = vmatprep.subr.bf16.mxu0 0
  %244 = vmatpush1.bf16.msra.mxu0 0
  %245 = vmatprep.subr.bf16.mxu0 0
  %246 = vmatpush1.bf16.msra.mxu0 0
  %247 = vmatprep.subr.bf16.mxu0 0
  %248 = vmatpush1.bf16.msra.mxu0 0
  %249 = vmatprep.subr.bf16.mxu0 0
  %250 = vmatpush1.bf16.msra.mxu0 0
  %251 = vmatprep.subr.bf16.mxu0 0
  %252 = vmatpush1.bf16.msra.mxu0 0
  %253 = vmatprep.mubr.bf16.mxu0 0
  %254 = vmatmul.mubr.bf16.gmra.mrb[0].mxu0 %v179
  %v255 = vpop.f32.mrb[0].mxu0
  %v256 = vadd.f32 %v216, %v255
  %v257 = vpop.f32.mrb[0].mxu0
  %v258 = vpop.f32.mrb[0].mxu0
  %v259 = vpop.f32.mrb[0].mxu0
  %260 = vdwg.mxu0
  %v261 = vadd.f32 %v20, %v256
  %262 = vst [vmem:[#allocation2] sm:$0xff] %v261
  // Predicated region
  $region18: #{resunet_forward.35} parent=0 // pred_check
    %p263 = pneg %p15
  $region19: #{resunet_forward.35} parent=0 // pred_check_branch
    %265 = sbr.rel (%p263) target = $region21
  $region20: #{resunet_forward.35} parent=0 // pred_region
    %v266 = vld [vmem:[#allocation2] sm:$0xff]
    %v267 = vld [vmem:[%s2] sm:$0x1]
    %v269 = vlaneseq
    %v270 = vshrl.u32 %v269, 7
    %v271 = vsub.s32 0, %v270
    %v272 = vrot.slane %v267, %v271
    %v274 = vadd.f32 %v266, %v272
    %v275 = vpack.c.bf16 %v274, %v274
    %276 = vst [vmem:[%s3] sm:$0xf] %v275
  $region21: #{resunet_forward.35} parent=0 // pred_fallthru
    _
  // Predicated region
  $region22: #{resunet_forward.35} parent=0 // pred_check
    _
  $region23: #{resunet_forward.35} parent=0 // pred_check_branch
    %278 = sbr.rel (0) target = $region25
  $region24: #{resunet_forward.35} parent=0 // pred_region
    _
  $region25: #{resunet_forward.35} parent=0 // pred_fallthru
    _
  // Predicated region
  $region26: #{resunet_forward.35} parent=0 // pred_check
    _
  $region27: #{resunet_forward.35} parent=0 // pred_check_branch
    %280 = sbr.rel (0) target = $region29
  $region28: #{resunet_forward.35} parent=0 // pred_region
    _
  $region29: #{resunet_forward.35} parent=0 // pred_fallthru
    _

// kernel: resunet_forward.37
$region0: #{resunet_forward.37}
  #allocation0 [shape = 'u32[]', space=smem, size = 0x4, offset = 0x4, fixed_abs, tag = 'smem constant byte address 0x4 - core index']
  #allocation1 [shape = 'u32[144,128]{1,0:T(1,128)}', space=vmem, size = 0x12000, scoped, tag = 'internal scratch']
  %s0 = inlined_call_operand.vmem [shape: bf16[4,2,64], index: 0, kind: input, shape index: {}]
  %s1 = inlined_call_operand.vmem [shape: bf16[2,64,128], index: 1, kind: input, shape index: {}]
  %s2 = inlined_call_operand.vmem [shape: f32[1,128], index: 2, kind: input, shape index: {}]
  %s3 = inlined_call_operand.vmem [shape: bf16[4,2,2,128], index: 3, kind: output, shape index: {}]
  %s4 = sld [smem:[#allocation0]]
  $region22: #{resunet_forward.37} parent=0
    _
  %s6 = ssub.s32 1, %s4
  %s7 = scalar_select 0, %s6, %s4
  // Predicated region
  $region2: #{resunet_forward.37} parent=0 // pred_check
    _
  $region3: #{resunet_forward.37} parent=0 // pred_check_branch
    %9 = sbr.rel (0) target = $region5
  $region4: #{resunet_forward.37} parent=0 // pred_region
    _
  $region5: #{resunet_forward.37} parent=0 // pred_fallthru
    _
  // Predicated region
  $region6: #{resunet_forward.37} parent=0 // pred_check
    _
  $region7: #{resunet_forward.37} parent=0 // pred_check_branch
    %11 = sbr.rel (0) target = $region9
  $region8: #{resunet_forward.37} parent=0 // pred_region
    _
  $region9: #{resunet_forward.37} parent=0 // pred_fallthru
    _
  // Predicated region
  $region10: #{resunet_forward.37} parent=0 // pred_check
    _
  $region11: #{resunet_forward.37} parent=0 // pred_check_branch
    %13 = sbr.rel (0) target = $region13
  $region12: #{resunet_forward.37} parent=0 // pred_region
    _
  $region13: #{resunet_forward.37} parent=0 // pred_fallthru
    _
  %v15 = vld [vmem:[%s0] sm:$0x1]
  %v16 = vld [vmem:[%s0 + $0x1] sm:$0x1]
  %v17 = vld [vmem:[%s0 + $0x2] sm:$0x1]
  %v18 = vld [vmem:[%s0 + $0x3] sm:$0x1]
  %v19 = vld [vmem:[%s1] sm:$0xf]
  %v20 = vld [vmem:[%s1 + $0x4] sm:$0xf]
  %v21 = vld [vmem:[%s1 + $0x8] sm:$0xf]
  %v22 = vld [vmem:[%s1 + $0xc] sm:$0xf]
  %v23 = vld [vmem:[%s1 + $0x10] sm:$0xf]
  %v24 = vld [vmem:[%s1 + $0x14] sm:$0xf]
  %v25 = vld [vmem:[%s1 + $0x18] sm:$0xf]
  %v26 = vld [vmem:[%s1 + $0x1c] sm:$0xf]
  %v27 = vld [vmem:[%s2] sm:$0x1]
  %v29 = vlaneseq
  %v30 = vshrl.u32 %v29, 7
  %v31 = vsub.s32 0, %v30
  %v32 = vrot.slane %v27, %v31
  %v38 = vcombine.low %v15, %v16
  %v39 = vcombine.low %v17, %v18
  %v41 = vunpack.c.l.s4 1966171168
  %v42 = vunpack.c.0.s8 %v41
  %v43 = vlaneseq
  %v44 = vshrl.u32 %v43, 7
  %v45 = vsub.s32 %v42, %v44
  %v46 = vrot.slane %v38, %v45
  %v48 = vunpack.c.l.s4 1966171168
  %v49 = vunpack.c.0.s8 %v48
  %v50 = vlaneseq
  %v51 = vshrl.u32 %v50, 7
  %v52 = vsub.s32 %v49, %v51
  %v53 = vrot.slane %v39, %v52
  %v54 = vcombine.low %v46, %v53
  %v56 = vunpack.c.l.s4 1966171168
  %v57 = vunpack.c.0.s8 %v56
  %v58 = vlaneseq
  %v59 = vshrl.u32 %v58, 7
  %v60 = vsub.s32 %v57, %v59
  %v61 = vrot.slane %v54, %v60
  %v70 = vunpack.c.l.b16 %v19
  %v71 = vunpack.c.l.b16 %v20
  %v72 = vunpack.c.l.b16 %v21
  %v73 = vunpack.c.l.b16 %v22
  %v74 = vunpack.c.l.b16 %v23
  %v75 = vunpack.c.l.b16 %v24
  %v76 = vunpack.c.l.b16 %v25
  %v77 = vunpack.c.l.b16 %v26
  %v78 = vpack.c.b16 %v71, %v70
  %v79 = vpack.c.b16 %v73, %v72
  %v80 = vpack.c.b16 %v75, %v74
  %v81 = vpack.c.b16 %v77, %v76
  %vm86 = vcmask 523264
  %v88 = vsel %vm86, %v61, 0
  %90 = vmatprep.subr.bf16.mxu0 0
  %91 = vmatpush1.bf16.msra.mxu0 %v78
  %92 = vmatprep.subr.bf16.mxu0 0
  %93 = vmatpush1.bf16.msra.mxu0 %v79
  %94 = vmatprep.subr.bf16.mxu0 0
  %95 = vmatpush1.bf16.msra.mxu0 %v80
  %96 = vmatprep.subr.bf16.mxu0 0
  %97 = vmatpush1.bf16.msra.mxu0 %v81
  %98 = vmatprep.subr.bf16.mxu0 0
  %99 = vmatpush1.bf16.msra.mxu0 0
  %100 = vmatprep.subr.bf16.mxu0 0
  %101 = vmatpush1.bf16.msra.mxu0 0
  %102 = vmatprep.subr.bf16.mxu0 0
  %103 = vmatpush1.bf16.msra.mxu0 0
  %104 = vmatprep.subr.bf16.mxu0 0
  %105 = vmatpush1.bf16.msra.mxu0 0
  %106 = vmatprep.subr.bf16.mxu0 0
  %107 = vmatpush1.bf16.msra.mxu0 0
  %108 = vmatprep.subr.bf16.mxu0 0
  %109 = vmatpush1.bf16.msra.mxu0 0
  %110 = vmatprep.subr.bf16.mxu0 0
  %111 = vmatpush1.bf16.msra.mxu0 0
  %112 = vmatprep.subr.bf16.mxu0 0
  %113 = vmatpush1.bf16.msra.mxu0 0
  %114 = vmatprep.subr.bf16.mxu0 0
  %115 = vmatpush1.bf16.msra.mxu0 0
  %116 = vmatprep.subr.bf16.mxu0 0
  %117 = vmatpush1.bf16.msra.mxu0 0
  %118 = vmatprep.subr.bf16.mxu0 0
  %119 = vmatpush1.bf16.msra.mxu0 0
  %120 = vmatprep.subr.bf16.mxu0 0
  %121 = vmatpush1.bf16.msra.mxu0 0
  %122 = vmatprep.mubr.bf16.mxu0 0
  %123 = vmatmul.mubr.bf16.gmra.mrb[0].mxu0 %v88
  %v124 = vpop.f32.mrb[0].mxu0
  %v125 = vadd.f32 %v32, %v124
  %v126 = vpop.f32.mrb[0].mxu0
  %v127 = vpop.f32.mrb[0].mxu0
  %v128 = vpop.f32.mrb[0].mxu0
  %129 = vdwg.mxu0
  %v131 = vcombine.high %v125, %v125
  %v133 = vunpack.c.l.s4 1983009808
  %v134 = vunpack.c.0.s8 %v133
  %v135 = vlaneseq
  %v136 = vshrl.u32 %v135, 7
  %v137 = vsub.s32 %v134, %v136
  %v138 = vrot.slane %v125, %v137
  %v140 = vunpack.c.l.s4 1983009808
  %v141 = vunpack.c.0.s8 %v140
  %v142 = vlaneseq
  %v143 = vshrl.u32 %v142, 7
  %v144 = vsub.s32 %v141, %v143
  %v145 = vrot.slane %v131, %v144
  %v146 = vcombine.high %v138, %v138
  %v147 = vcombine.high %v145, %v145
  %v152 = vpack.c.bf16 %v138, %v138
  %v153 = vpack.c.bf16 %v146, %v146
  %v154 = vpack.c.bf16 %v145, %v145
  %v155 = vpack.c.bf16 %v147, %v147
  %156 = vst [vmem:[%s3] sm:$0x1] %v152
  %157 = vst [vmem:[%s3 + $0x2] sm:$0x1] %v153
  %158 = vst [vmem:[%s3 + $0x4] sm:$0x1] %v154
  %159 = vst [vmem:[%s3 + $0x6] sm:$0x1] %v155
  %s160 = scalar_lea.vmem %s1, 32
  %v161 = vld [vmem:[%s160] sm:$0xf]
  %v162 = vld [vmem:[%s160 + $0x4] sm:$0xf]
  %v163 = vld [vmem:[%s160 + $0x8] sm:$0xf]
  %v164 = vld [vmem:[%s160 + $0xc] sm:$0xf]
  %v165 = vld [vmem:[%s160 + $0x10] sm:$0xf]
  %v166 = vld [vmem:[%s160 + $0x14] sm:$0xf]
  %v167 = vld [vmem:[%s160 + $0x18] sm:$0xf]
  %v168 = vld [vmem:[%s160 + $0x1c] sm:$0xf]
  %v169 = vld [vmem:[%s2] sm:$0x1]
  %v171 = vlaneseq
  %v172 = vshrl.u32 %v171, 7
  %v173 = vsub.s32 0, %v172
  %v174 = vrot.slane %v169, %v173
  %v184 = vunpack.c.l.b16 %v161
  %v185 = vunpack.c.l.b16 %v162
  %v186 = vunpack.c.l.b16 %v163
  %v187 = vunpack.c.l.b16 %v164
  %v188 = vunpack.c.l.b16 %v165
  %v189 = vunpack.c.l.b16 %v166
  %v190 = vunpack.c.l.b16 %v167
  %v191 = vunpack.c.l.b16 %v168
  %v192 = vpack.c.b16 %v185, %v184
  %v193 = vpack.c.b16 %v187, %v186
  %v194 = vpack.c.b16 %v189, %v188
  %v195 = vpack.c.b16 %v191, %v190
  %200 = vmatprep.subr.bf16.mxu0 0
  %201 = vmatpush1.bf16.msra.mxu0 %v192
  %202 = vmatprep.subr.bf16.mxu0 0
  %203 = vmatpush1.bf16.msra.mxu0 %v193
  %204 = vmatprep.subr.bf16.mxu0 0
  %205 = vmatpush1.bf16.msra.mxu0 %v194
  %206 = vmatprep.subr.bf16.mxu0 0
  %207 = vmatpush1.bf16.msra.mxu0 %v195
  %208 = vmatprep.subr.bf16.mxu0 0
  %209 = vmatpush1.bf16.msra.mxu0 0
  %210 = vmatprep.subr.bf16.mxu0 0
  %211 = vmatpush1.bf16.msra.mxu0 0
  %212 = vmatprep.subr.bf16.mxu0 0
  %213 = vmatpush1.bf16.msra.mxu0 0
  %214 = vmatprep.subr.bf16.mxu0 0
  %215 = vmatpush1.bf16.msra.mxu0 0
  %216 = vmatprep.subr.bf16.mxu0 0
  %217 = vmatpush1.bf16.msra.mxu0 0
  %218 = vmatprep.subr.bf16.mxu0 0
  %219 = vmatpush1.bf16.msra.mxu0 0
  %220 = vmatprep.subr.bf16.mxu0 0
  %221 = vmatpush1.bf16.msra.mxu0 0
  %222 = vmatprep.subr.bf16.mxu0 0
  %223 = vmatpush1.bf16.msra.mxu0 0
  %224 = vmatprep.subr.bf16.mxu0 0
  %225 = vmatpush1.bf16.msra.mxu0 0
  %226 = vmatprep.subr.bf16.mxu0 0
  %227 = vmatpush1.bf16.msra.mxu0 0
  %228 = vmatprep.subr.bf16.mxu0 0
  %229 = vmatpush1.bf16.msra.mxu0 0
  %230 = vmatprep.subr.bf16.mxu0 0
  %231 = vmatpush1.bf16.msra.mxu0 0
  %232 = vmatprep.mubr.bf16.mxu0 0
  %233 = vmatmul.mubr.bf16.gmra.mrb[0].mxu0 %v88
  %v234 = vpop.f32.mrb[0].mxu0
  %v235 = vadd.f32 %v174, %v234
  %v236 = vpop.f32.mrb[0].mxu0
  %v237 = vpop.f32.mrb[0].mxu0
  %v238 = vpop.f32.mrb[0].mxu0
  %239 = vdwg.mxu0
  %v241 = vcombine.high %v235, %v235
  %v243 = vunpack.c.l.s4 1983009808
  %v244 = vunpack.c.0.s8 %v243
  %v245 = vlaneseq
  %v246 = vshrl.u32 %v245, 7
  %v247 = vsub.s32 %v244, %v246
  %v248 = vrot.slane %v235, %v247
  %v250 = vunpack.c.l.s4 1983009808
  %v251 = vunpack.c.0.s8 %v250
  %v252 = vlaneseq
  %v253 = vshrl.u32 %v252, 7
  %v254 = vsub.s32 %v251, %v253
  %v255 = vrot.slane %v241, %v254
  %v256 = vcombine.high %v248, %v248
  %v257 = vcombine.high %v255, %v255
  %v262 = vpack.c.bf16 %v248, %v248
  %v263 = vpack.c.bf16 %v256, %v256
  %v264 = vpack.c.bf16 %v255, %v255
  %v265 = vpack.c.bf16 %v257, %v257
  %s266 = scalar_lea.vmem %s3, 1
  %267 = vst [vmem:[%s266] sm:$0x1] %v262
  %268 = vst [vmem:[%s266 + $0x2] sm:$0x1] %v263
  %269 = vst [vmem:[%s266 + $0x4] sm:$0x1] %v264
  %270 = vst [vmem:[%s266 + $0x6] sm:$0x1] %v265
  // Predicated region
  $region14: #{resunet_forward.37} parent=0 // pred_check
    _
  $region15: #{resunet_forward.37} parent=0 // pred_check_branch
    %272 = sbr.rel (0) target = $region17
  $region16: #{resunet_forward.37} parent=0 // pred_region
    _
  $region17: #{resunet_forward.37} parent=0 // pred_fallthru
    _
  // Predicated region
  $region18: #{resunet_forward.37} parent=0 // pred_check
    _
  $region19: #{resunet_forward.37} parent=0 // pred_check_branch
    %274 = sbr.rel (0) target = $region21
  $region20: #{resunet_forward.37} parent=0 // pred_region
    _
  $region21: #{resunet_forward.37} parent=0 // pred_fallthru
    _

// kernel: resunet_forward.36
$region0: #{resunet_forward.36}
  #allocation0 [shape = 'u32[]', space=smem, size = 0x4, offset = 0x4, fixed_abs, tag = 'smem constant byte address 0x4 - core index']
  #allocation1 [shape = 'u32[144,128]{1,0:T(1,128)}', space=vmem, size = 0x12000, scoped, tag = 'internal scratch']
  #allocation2 [shape = 'f32[8,128]{1,0:T(8,128)}', space=vmem, size = 0x1000, scoped, tag = 'scratch operand']
  %s0 = inlined_call_operand.vmem [shape: bf16[8,576], index: 0, kind: input, shape index: {}]
  %s1 = inlined_call_operand.vmem [shape: bf16[576,128], index: 1, kind: input, shape index: {}]
  %s2 = inlined_call_operand.vmem [shape: f32[1,128], index: 2, kind: input, shape index: {}]
  %s3 = inlined_call_operand.vmem [shape: bf16[8,128], index: 3, kind: input, shape index: {}]
  %s4 = inlined_call_operand.vmem [shape: f32[1,128], index: 4, kind: input, shape index: {}]
  %s5 = inlined_call_operand.vmem [shape: f32[1,128], index: 5, kind: input, shape index: {}]
  %s6 = inlined_call_operand.vmem [shape: bf16[8,128], index: 6, kind: output, shape index: {}]
  %s7 = sld [smem:[#allocation0]]
  $region42: #{resunet_forward.36} parent=0
    _
  %s9 = ssub.s32 1, %s7
  %s10 = scalar_select 0, %s9, %s7
  // Predicated region
  $region2: #{resunet_forward.36} parent=0 // pred_check
    _
  $region3: #{resunet_forward.36} parent=0 // pred_check_branch
    %12 = sbr.rel (0) target = $region5
  $region4: #{resunet_forward.36} parent=0 // pred_region
    _
  $region5: #{resunet_forward.36} parent=0 // pred_fallthru
    _
  // Predicated region
  $region6: #{resunet_forward.36} parent=0 // pred_check
    _
  $region7: #{resunet_forward.36} parent=0 // pred_check_branch
    %14 = sbr.rel (0) target = $region9
  $region8: #{resunet_forward.36} parent=0 // pred_region
    _
  $region9: #{resunet_forward.36} parent=0 // pred_fallthru
    _
  // Predicated region
  $region10: #{resunet_forward.36} parent=0 // pred_check
    _
  $region11: #{resunet_forward.36} parent=0 // pred_check_branch
    %16 = sbr.rel (0) target = $region13
  $region12: #{resunet_forward.36} parent=0 // pred_region
    _
  $region13: #{resunet_forward.36} parent=0 // pred_fallthru
    _
  // Predicated region
  $region14: #{resunet_forward.36} parent=0 // pred_check
    _
  $region15: #{resunet_forward.36} parent=0 // pred_check_branch
    %18 = sbr.rel (0) target = $region17
  $region16: #{resunet_forward.36} parent=0 // pred_region
    _
  $region17: #{resunet_forward.36} parent=0 // pred_fallthru
    _
  // Predicated region
  $region18: #{resunet_forward.36} parent=0 // pred_check
    _
  $region19: #{resunet_forward.36} parent=0 // pred_check_branch
    %20 = sbr.rel (0) target = $region21
  $region20: #{resunet_forward.36} parent=0 // pred_region
    _
  $region21: #{resunet_forward.36} parent=0 // pred_fallthru
    _
  // Predicated region
  $region22: #{resunet_forward.36} parent=0 // pred_check
    _
  $region23: #{resunet_forward.36} parent=0 // pred_check_branch
    %22 = sbr.rel (0) target = $region25
  $region24: #{resunet_forward.36} parent=0 // pred_region
    _
  $region25: #{resunet_forward.36} parent=0 // pred_fallthru
    _
  %p24 = scmp.eq.s32.totalorder 0, 0
  // Predicated region
  $region26: #{resunet_forward.36} parent=0 // pred_check
    %p25 = pneg %p24
  $region27: #{resunet_forward.36} parent=0 // pred_check_branch
    %27 = sbr.rel (%p25) target = $region29
  $region28: #{resunet_forward.36} parent=0 // pred_region
    %28 = vst [vmem:[#allocation2] sm:$0xff] 0.0
  $region29: #{resunet_forward.36} parent=0 // pred_fallthru
    _
  %v29 = vld [vmem:[#allocation2] sm:$0xff]
  %v30 = vld [vmem:[%s0] sm:$0xff]
  %v31 = vld [vmem:[%s0 + $0x8] sm:$0xff]
  %v32 = vld [vmem:[%s0 + $0x10] sm:$0xf]
  %v33 = vld [vmem:[%s1] sm:$0xf]
  %v34 = vld [vmem:[%s1 + $0x4] sm:$0xf]
  %v35 = vld [vmem:[%s1 + $0x8] sm:$0xf]
  %v36 = vld [vmem:[%s1 + $0xc] sm:$0xf]
  %v37 = vld [vmem:[%s1 + $0x10] sm:$0xf]
  %v38 = vld [vmem:[%s1 + $0x14] sm:$0xf]
  %v39 = vld [vmem:[%s1 + $0x18] sm:$0xf]
  %v40 = vld [vmem:[%s1 + $0x1c] sm:$0xf]
  %v41 = vld [vmem:[%s1 + $0x20] sm:$0xf]
  %v42 = vld [vmem:[%s1 + $0x24] sm:$0xf]
  %v43 = vld [vmem:[%s1 + $0x28] sm:$0xf]
  %v44 = vld [vmem:[%s1 + $0x2c] sm:$0xf]
  %v45 = vld [vmem:[%s1 + $0x30] sm:$0xf]
  %v46 = vld [vmem:[%s1 + $0x34] sm:$0xf]
  %v47 = vld [vmem:[%s1 + $0x38] sm:$0xf]
  %v48 = vld [vmem:[%s1 + $0x3c] sm:$0xf]
  %v49 = vld [vmem:[%s1 + $0x40] sm:$0xf]
  %v50 = vld [vmem:[%s1 + $0x44] sm:$0xf]
  %v51 = vld [vmem:[%s1 + $0x48] sm:$0xf]
  %v52 = vld [vmem:[%s1 + $0x4c] sm:$0xf]
  %v53 = vld [vmem:[%s1 + $0x50] sm:$0xf]
  %v54 = vld [vmem:[%s1 + $0x54] sm:$0xf]
  %v55 = vld [vmem:[%s1 + $0x58] sm:$0xf]
  %v56 = vld [vmem:[%s1 + $0x5c] sm:$0xf]
  %v57 = vld [vmem:[%s1 + $0x60] sm:$0xf]
  %v58 = vld [vmem:[%s1 + $0x64] sm:$0xf]
  %v59 = vld [vmem:[%s1 + $0x68] sm:$0xf]
  %v60 = vld [vmem:[%s1 + $0x6c] sm:$0xf]
  %v61 = vld [vmem:[%s1 + $0x70] sm:$0xf]
  %v62 = vld [vmem:[%s1 + $0x74] sm:$0xf]
  %v63 = vld [vmem:[%s1 + $0x78] sm:$0xf]
  %v64 = vld [vmem:[%s1 + $0x7c] sm:$0xf]
  %v65 = vld [vmem:[%s1 + $0x80] sm:$0xf]
  %v66 = vld [vmem:[%s1 + $0x84] sm:$0xf]
  %v67 = vld [vmem:[%s1 + $0x88] sm:$0xf]
  %v68 = vld [vmem:[%s1 + $0x8c] sm:$0xf]
  %v69 = vld [vmem:[%s1 + $0x90] sm:$0xf]
  %v70 = vld [vmem:[%s1 + $0x94] sm:$0xf]
  %v71 = vld [vmem:[%s1 + $0x98] sm:$0xf]
  %v72 = vld [vmem:[%s1 + $0x9c] sm:$0xf]
  %v73 = vld [vmem:[%s1 + $0xa0] sm:$0xf]
  %v74 = vld [vmem:[%s1 + $0xa4] sm:$0xf]
  %v75 = vld [vmem:[%s1 + $0xa8] sm:$0xf]
  %v76 = vld [vmem:[%s1 + $0xac] sm:$0xf]
  %v77 = vld [vmem:[%s1 + $0xb0] sm:$0xf]
  %v78 = vld [vmem:[%s1 + $0xb4] sm:$0xf]
  %v79 = vld [vmem:[%s1 + $0xb8] sm:$0xf]
  %v80 = vld [vmem:[%s1 + $0xbc] sm:$0xf]
  %v81 = vld [vmem:[%s1 + $0xc0] sm:$0xf]
  %v82 = vld [vmem:[%s1 + $0xc4] sm:$0xf]
  %v83 = vld [vmem:[%s1 + $0xc8] sm:$0xf]
  %v84 = vld [vmem:[%s1 + $0xcc] sm:$0xf]
  %v85 = vld [vmem:[%s1 + $0xd0] sm:$0xf]
  %v86 = vld [vmem:[%s1 + $0xd4] sm:$0xf]
  %v87 = vld [vmem:[%s1 + $0xd8] sm:$0xf]
  %v88 = vld [vmem:[%s1 + $0xdc] sm:$0xf]
  %v89 = vld [vmem:[%s1 + $0xe0] sm:$0xf]
  %v90 = vld [vmem:[%s1 + $0xe4] sm:$0xf]
  %v91 = vld [vmem:[%s1 + $0xe8] sm:$0xf]
  %v92 = vld [vmem:[%s1 + $0xec] sm:$0xf]
  %v93 = vld [vmem:[%s1 + $0xf0] sm:$0xf]
  %v94 = vld [vmem:[%s1 + $0xf4] sm:$0xf]
  %v95 = vld [vmem:[%s1 + $0xf8] sm:$0xf]
  %v96 = vld [vmem:[%s1 + $0xfc] sm:$0xf]
  %v97 = vld [vmem:[%s1 + $0x100] sm:$0xf]
  %v98 = vld [vmem:[%s1 + $0x104] sm:$0xf]
  %v99 = vld [vmem:[%s1 + $0x108] sm:$0xf]
  %v100 = vld [vmem:[%s1 + $0x10c] sm:$0xf]
  %v101 = vld [vmem:[%s1 + $0x110] sm:$0xf]
  %v102 = vld [vmem:[%s1 + $0x114] sm:$0xf]
  %v103 = vld [vmem:[%s1 + $0x118] sm:$0xf]
  %v104 = vld [vmem:[%s1 + $0x11c] sm:$0xf]
  %v108 = vunpack.c.l.b16 %v30
  %v109 = vunpack.c.h.b16 %v30
  %v110 = vunpack.c.l.b16 %v31
  %v111 = vunpack.c.h.b16 %v31
  %v112 = vunpack.c.l.b16 %v32
  %v113 = vpack.c.b16 %v108, %v108
  %v114 = vpack.c.b16 %v109, %v109
  %v115 = vpack.c.b16 %v110, %v110
  %v116 = vpack.c.b16 %v111, %v111
  %v117 = vpack.c.b16 %v112, %v112
  %v194 = vunpack.c.l.b16 %v33
  %v195 = vunpack.c.l.b16 %v34
  %v196 = vunpack.c.l.b16 %v35
  %v197 = vunpack.c.l.b16 %v36
  %v198 = vunpack.c.l.b16 %v37
  %v199 = vunpack.c.l.b16 %v38
  %v200 = vunpack.c.l.b16 %v39
  %v201 = vunpack.c.l.b16 %v40
  %v202 = vunpack.c.l.b16 %v41
  %v203 = vunpack.c.l.b16 %v42
  %v204 = vunpack.c.l.b16 %v43
  %v205 = vunpack.c.l.b16 %v44
  %v206 = vunpack.c.l.b16 %v45
  %v207 = vunpack.c.l.b16 %v46
  %v208 = vunpack.c.l.b16 %v47
  %v209 = vunpack.c.l.b16 %v48
  %v210 = vunpack.c.l.b16 %v49
  %v211 = vunpack.c.l.b16 %v50
  %v212 = vunpack.c.l.b16 %v51
  %v213 = vunpack.c.l.b16 %v52
  %v214 = vunpack.c.l.b16 %v53
  %v215 = vunpack.c.l.b16 %v54
  %v216 = vunpack.c.l.b16 %v55
  %v217 = vunpack.c.l.b16 %v56
  %v218 = vunpack.c.l.b16 %v57
  %v219 = vunpack.c.l.b16 %v58
  %v220 = vunpack.c.l.b16 %v59
  %v221 = vunpack.c.l.b16 %v60
  %v222 = vunpack.c.l.b16 %v61
  %v223 = vunpack.c.l.b16 %v62
  %v224 = vunpack.c.l.b16 %v63
  %v225 = vunpack.c.l.b16 %v64
  %v226 = vunpack.c.l.b16 %v65
  %v227 = vunpack.c.l.b16 %v66
  %v228 = vunpack.c.l.b16 %v67
  %v229 = vunpack.c.l.b16 %v68
  %v230 = vunpack.c.l.b16 %v69
  %v231 = vunpack.c.l.b16 %v70
  %v232 = vunpack.c.l.b16 %v71
  %v233 = vunpack.c.l.b16 %v72
  %v234 = vunpack.c.l.b16 %v73
  %v235 = vunpack.c.l.b16 %v74
  %v236 = vunpack.c.l.b16 %v75
  %v237 = vunpack.c.l.b16 %v76
  %v238 = vunpack.c.l.b16 %v77
  %v239 = vunpack.c.l.b16 %v78
  %v240 = vunpack.c.l.b16 %v79
  %v241 = vunpack.c.l.b16 %v80
  %v242 = vunpack.c.l.b16 %v81
  %v243 = vunpack.c.l.b16 %v82
  %v244 = vunpack.c.l.b16 %v83
  %v245 = vunpack.c.l.b16 %v84
  %v246 = vunpack.c.l.b16 %v85
  %v247 = vunpack.c.l.b16 %v86
  %v248 = vunpack.c.l.b16 %v87
  %v249 = vunpack.c.l.b16 %v88
  %v250 = vunpack.c.l.b16 %v89
  %v251 = vunpack.c.l.b16 %v90
  %v252 = vunpack.c.l.b16 %v91
  %v253 = vunpack.c.l.b16 %v92
  %v254 = vunpack.c.l.b16 %v93
  %v255 = vunpack.c.l.b16 %v94
  %v256 = vunpack.c.l.b16 %v95
  %v257 = vunpack.c.l.b16 %v96
  %v258 = vunpack.c.l.b16 %v97
  %v259 = vunpack.c.l.b16 %v98
  %v260 = vunpack.c.l.b16 %v99
  %v261 = vunpack.c.l.b16 %v100
  %v262 = vunpack.c.l.b16 %v101
  %v263 = vunpack.c.l.b16 %v102
  %v264 = vunpack.c.l.b16 %v103
  %v265 = vunpack.c.l.b16 %v104
  %v266 = vpack.c.b16 %v195, %v194
  %v267 = vpack.c.b16 %v197, %v196
  %v268 = vpack.c.b16 %v199, %v198
  %v269 = vpack.c.b16 %v201, %v200
  %v270 = vpack.c.b16 %v203, %v202
  %v271 = vpack.c.b16 %v205, %v204
  %v272 = vpack.c.b16 %v207, %v206
  %v273 = vpack.c.b16 %v209, %v208
  %v274 = vpack.c.b16 %v211, %v210
  %v275 = vpack.c.b16 %v213, %v212
  %v276 = vpack.c.b16 %v215, %v214
  %v277 = vpack.c.b16 %v217, %v216
  %v278 = vpack.c.b16 %v219, %v218
  %v279 = vpack.c.b16 %v221, %v220
  %v280 = vpack.c.b16 %v223, %v222
  %v281 = vpack.c.b16 %v225, %v224
  %v282 = vpack.c.b16 %v227, %v226
  %v283 = vpack.c.b16 %v229, %v228
  %v284 = vpack.c.b16 %v231, %v230
  %v285 = vpack.c.b16 %v233, %v232
  %v286 = vpack.c.b16 %v235, %v234
  %v287 = vpack.c.b16 %v237, %v236
  %v288 = vpack.c.b16 %v239, %v238
  %v289 = vpack.c.b16 %v241, %v240
  %v290 = vpack.c.b16 %v243, %v242
  %v291 = vpack.c.b16 %v245, %v244
  %v292 = vpack.c.b16 %v247, %v246
  %v293 = vpack.c.b16 %v249, %v248
  %v294 = vpack.c.b16 %v251, %v250
  %v295 = vpack.c.b16 %v253, %v252
  %v296 = vpack.c.b16 %v255, %v254
  %v297 = vpack.c.b16 %v257, %v256
  %v298 = vpack.c.b16 %v259, %v258
  %v299 = vpack.c.b16 %v261, %v260
  %v300 = vpack.c.b16 %v263, %v262
  %v301 = vpack.c.b16 %v265, %v264
  %vm338 = vcmask 523264
  %v340 = vsel %vm338, %v117, 0
  %342 = vmatprep.subr.bf16.mxu0 0
  %343 = vmatpush1.bf16.msra.mxu0 %v266
  %344 = vmatprep.subr.bf16.mxu0 0
  %345 = vmatpush1.bf16.msra.mxu0 %v267
  %346 = vmatprep.subr.bf16.mxu0 0
  %347 = vmatpush1.bf16.msra.mxu0 %v268
  %348 = vmatprep.subr.bf16.mxu0 0
  %349 = vmatpush1.bf16.msra.mxu0 %v269
  %350 = vmatprep.subr.bf16.mxu0 0
  %351 = vmatpush1.bf16.msra.mxu0 %v270
  %352 = vmatprep.subr.bf16.mxu0 0
  %353 = vmatpush1.bf16.msra.mxu0 %v271
  %354 = vmatprep.subr.bf16.mxu0 0
  %355 = vmatpush1.bf16.msra.mxu0 %v272
  %356 = vmatprep.subr.bf16.mxu0 0
  %357 = vmatpush1.bf16.msra.mxu0 %v273
  %358 = vmatprep.subr.bf16.mxu0 0
  %359 = vmatpush1.bf16.msra.mxu0 %v274
  %360 = vmatprep.subr.bf16.mxu0 0
  %361 = vmatpush1.bf16.msra.mxu0 %v275
  %362 = vmatprep.subr.bf16.mxu0 0
  %363 = vmatpush1.bf16.msra.mxu0 %v276
  %364 = vmatprep.subr.bf16.mxu0 0
  %365 = vmatpush1.bf16.msra.mxu0 %v277
  %366 = vmatprep.subr.bf16.mxu0 0
  %367 = vmatpush1.bf16.msra.mxu0 %v278
  %368 = vmatprep.subr.bf16.mxu0 0
  %369 = vmatpush1.bf16.msra.mxu0 %v279
  %370 = vmatprep.subr.bf16.mxu0 0
  %371 = vmatpush1.bf16.msra.mxu0 %v280
  %372 = vmatprep.subr.bf16.mxu0 0
  %373 = vmatpush1.bf16.msra.mxu0 %v281
  %374 = vmatprep.mubr.bf16.mxu0 %v114
  %375 = vmatmul.mubr.bf16.gmra.mrb[0].mxu0 %v113
  %v376 = vpop.f32.mrb[0].mxu0
  %v377 = vadd.f32 0.0, %v376
  %v378 = vpop.f32.mrb[0].mxu0
  %v379 = vpop.f32.mrb[0].mxu0
  %v380 = vpop.f32.mrb[0].mxu0
  %381 = vdwg.mxu0
  %382 = vmatprep.subr.bf16.mxu0 0
  %383 = vmatpush1.bf16.msra.mxu0 %v282
  %384 = vmatprep.subr.bf16.mxu0 0
  %385 = vmatpush1.bf16.msra.mxu0 %v283
  %386 = vmatprep.subr.bf16.mxu0 0
  %387 = vmatpush1.bf16.msra.mxu0 %v284
  %388 = vmatprep.subr.bf16.mxu0 0
  %389 = vmatpush1.bf16.msra.mxu0 %v285
  %390 = vmatprep.subr.bf16.mxu0 0
  %391 = vmatpush1.bf16.msra.mxu0 %v286
  %392 = vmatprep.subr.bf16.mxu0 0
  %393 = vmatpush1.bf16.msra.mxu0 %v287
  %394 = vmatprep.subr.bf16.mxu0 0
  %395 = vmatpush1.bf16.msra.mxu0 %v288
  %396 = vmatprep.subr.bf16.mxu0 0
  %397 = vmatpush1.bf16.msra.mxu0 %v289
  %398 = vmatprep.subr.bf16.mxu0 0
  %399 = vmatpush1.bf16.msra.mxu0 %v290
  %400 = vmatprep.subr.bf16.mxu0 0
  %401 = vmatpush1.bf16.msra.mxu0 %v291
  %402 = vmatprep.subr.bf16.mxu0 0
  %403 = vmatpush1.bf16.msra.mxu0 %v292
  %404 = vmatprep.subr.bf16.mxu0 0
  %405 = vmatpush1.bf16.msra.mxu0 %v293
  %406 = vmatprep.subr.bf16.mxu0 0
  %407 = vmatpush1.bf16.msra.mxu0 %v294
  %408 = vmatprep.subr.bf16.mxu0 0
  %409 = vmatpush1.bf16.msra.mxu0 %v295
  %410 = vmatprep.subr.bf16.mxu0 0
  %411 = vmatpush1.bf16.msra.mxu0 %v296
  %412 = vmatprep.subr.bf16.mxu0 0
  %413 = vmatpush1.bf16.msra.mxu0 %v297
  %414 = vmatprep.mubr.bf16.mxu0 %v116
  %415 = vmatmul.mubr.bf16.gmra.mrb[0].mxu0 %v115
  %v416 = vpop.f32.mrb[0].mxu0
  %v417 = vadd.f32 %v377, %v416
  %v418 = vpop.f32.mrb[0].mxu0
  %v419 = vpop.f32.mrb[0].mxu0
  %v420 = vpop.f32.mrb[0].mxu0
  %421 = vdwg.mxu0
  %422 = vmatprep.subr.bf16.mxu0 0
  %423 = vmatpush1.bf16.msra.mxu0 %v298
  %424 = vmatprep.subr.bf16.mxu0 0
  %425 = vmatpush1.bf16.msra.mxu0 %v299
  %426 = vmatprep.subr.bf16.mxu0 0
  %427 = vmatpush1.bf16.msra.mxu0 %v300
  %428 = vmatprep.subr.bf16.mxu0 0
  %429 = vmatpush1.bf16.msra.mxu0 %v301
  %430 = vmatprep.subr.bf16.mxu0 0
  %431 = vmatpush1.bf16.msra.mxu0 0
  %432 = vmatprep.subr.bf16.mxu0 0
  %433 = vmatpush1.bf16.msra.mxu0 0
  %434 = vmatprep.subr.bf16.mxu0 0
  %435 = vmatpush1.bf16.msra.mxu0 0
  %436 = vmatprep.subr.bf16.mxu0 0
  %437 = vmatpush1.bf16.msra.mxu0 0
  %438 = vmatprep.subr.bf16.mxu0 0
  %439 = vmatpush1.bf16.msra.mxu0 0
  %440 = vmatprep.subr.bf16.mxu0 0
  %441 = vmatpush1.bf16.msra.mxu0 0
  %442 = vmatprep.subr.bf16.mxu0 0
  %443 = vmatpush1.bf16.msra.mxu0 0
  %444 = vmatprep.subr.bf16.mxu0 0
  %445 = vmatpush1.bf16.msra.mxu0 0
  %446 = vmatprep.subr.bf16.mxu0 0
  %447 = vmatpush1.bf16.msra.mxu0 0
  %448 = vmatprep.subr.bf16.mxu0 0
  %449 = vmatpush1.bf16.msra.mxu0 0
  %450 = vmatprep.subr.bf16.mxu0 0
  %451 = vmatpush1.bf16.msra.mxu0 0
  %452 = vmatprep.subr.bf16.mxu0 0
  %453 = vmatpush1.bf16.msra.mxu0 0
  %454 = vmatprep.mubr.bf16.mxu0 0
  %455 = vmatmul.mubr.bf16.gmra.mrb[0].mxu0 %v340
  %v456 = vpop.f32.mrb[0].mxu0
  %v457 = vadd.f32 %v417, %v456
  %v458 = vpop.f32.mrb[0].mxu0
  %v459 = vpop.f32.mrb[0].mxu0
  %v460 = vpop.f32.mrb[0].mxu0
  %461 = vdwg.mxu0
  %v462 = vadd.f32 %v29, %v457
  %463 = vst [vmem:[#allocation2] sm:$0xff] %v462
  // Predicated region
  $region30: #{resunet_forward.36} parent=0 // pred_check
    %p464 = pneg %p24
  $region31: #{resunet_forward.36} parent=0 // pred_check_branch
    %466 = sbr.rel (%p464) target = $region33
  $region32: #{resunet_forward.36} parent=0 // pred_region
    %v467 = vld [vmem:[#allocation2] sm:$0xff]
    %v468 = vld [vmem:[%s2] sm:$0x1]
    %v470 = vlaneseq
    %v471 = vshrl.u32 %v470, 7
    %v472 = vsub.s32 0, %v471
    %v473 = vrot.slane %v468, %v472
    %v475 = vadd.f32 %v467, %v473
    %v476 = vld [vmem:[%s3] sm:$0xf]
    %v477 = vunpack.c.l.bf16 %v476
    %v478 = vld [vmem:[%s4] sm:$0x1]
    %v480 = vlaneseq
    %v481 = vshrl.u32 %v480, 7
    %v482 = vsub.s32 0, %v481
    %v483 = vrot.slane %v478, %v482
    %v485 = vmul.f32 %v477, %v483
    %v486 = vadd.f32 %v475, %v485
    %v487 = vld [vmem:[%s5] sm:$0x1]
    %v489 = vlaneseq
    %v490 = vshrl.u32 %v489, 7
    %v491 = vsub.s32 0, %v490
    %v492 = vrot.slane %v487, %v491
    %v494 = vadd.f32 %v486, %v492
    %v495 = vpack.c.bf16 %v494, %v494
    %496 = vst [vmem:[%s6] sm:$0xf] %v495
  $region33: #{resunet_forward.36} parent=0 // pred_fallthru
    _
  // Predicated region
  $region34: #{resunet_forward.36} parent=0 // pred_check
    _
  $region35: #{resunet_forward.36} parent=0 // pred_check_branch
    %498 = sbr.rel (0) target = $region37
  $region36: #{resunet_forward.36} parent=0 // pred_region
    _
  $region37: #{resunet_forward.36} parent=0 // pred_fallthru
    _
  // Predicated region
  $region38: #{resunet_forward.36} parent=0 // pred_check
    _
  $region39: #{resunet_forward.36} parent=0 // pred_check_branch
    %500 = sbr.rel (0) target = $region41
  $region40: #{resunet_forward.36} parent=0 // pred_region
    _
  $region41: #{resunet_forward.36} parent=0 // pred_fallthru
    _

// kernel: resunet_forward.39
$region0: #{resunet_forward.39}
  #allocation0 [shape = 'u32[]', space=smem, size = 0x4, offset = 0x4, fixed_abs, tag = 'smem constant byte address 0x4 - core index']
  #allocation1 [shape = 'u32[144,128]{1,0:T(1,128)}', space=vmem, size = 0x12000, scoped, tag = 'internal scratch']
  #allocation2 [shape = 'f32[32,128]{1,0:T(8,128)}', space=vmem, size = 0x4000, scoped, tag = 'scratch operand']
  %s0 = inlined_call_operand.vmem [shape: bf16[32,864], index: 0, kind: input, shape index: {}]
  %s1 = inlined_call_operand.vmem [shape: bf16[864,128], index: 1, kind: input, shape index: {}]
  %s2 = inlined_call_operand.vmem [shape: f32[1,128], index: 2, kind: input, shape index: {}]
  %s3 = inlined_call_operand.vmem [shape: bf16[32,128], index: 3, kind: output, shape index: {}]
  %s4 = sld [smem:[#allocation0]]
  $region30: #{resunet_forward.39} parent=0
    _
  %s6 = ssub.s32 1, %s4
  %s7 = scalar_select 0, %s6, %s4
  // Predicated region
  $region2: #{resunet_forward.39} parent=0 // pred_check
    _
  $region3: #{resunet_forward.39} parent=0 // pred_check_branch
    %9 = sbr.rel (0) target = $region5
  $region4: #{resunet_forward.39} parent=0 // pred_region
    _
  $region5: #{resunet_forward.39} parent=0 // pred_fallthru
    _
  // Predicated region
  $region6: #{resunet_forward.39} parent=0 // pred_check
    _
  $region7: #{resunet_forward.39} parent=0 // pred_check_branch
    %11 = sbr.rel (0) target = $region9
  $region8: #{resunet_forward.39} parent=0 // pred_region
    _
  $region9: #{resunet_forward.39} parent=0 // pred_fallthru
    _
  // Predicated region
  $region10: #{resunet_forward.39} parent=0 // pred_check
    _
  $region11: #{resunet_forward.39} parent=0 // pred_check_branch
    %13 = sbr.rel (0) target = $region13
  $region12: #{resunet_forward.39} parent=0 // pred_region
    _
  $region13: #{resunet_forward.39} parent=0 // pred_fallthru
    _
  %p15 = scmp.eq.s32.totalorder 0, 0
  // Predicated region
  $region14: #{resunet_forward.39} parent=0 // pred_check
    %p16 = pneg %p15
  $region15: #{resunet_forward.39} parent=0 // pred_check_branch
    %18 = sbr.rel (%p16) target = $region17
  $region16: #{resunet_forward.39} parent=0 // pred_region
    %19 = vst [vmem:[#allocation2] sm:$0xff] 0.0
    %20 = vst [vmem:[#allocation2 + $0x8] sm:$0xff] 0.0
    %21 = vst [vmem:[#allocation2 + $0x10] sm:$0xff] 0.0
    %22 = vst [vmem:[#allocation2 + $0x18] sm:$0xff] 0.0
  $region17: #{resunet_forward.39} parent=0 // pred_fallthru
    _
  %v23 = vld [vmem:[#allocation2] sm:$0xff]
  %v24 = vld [vmem:[#allocation2 + $0x8] sm:$0xff]
  %v25 = vld [vmem:[#allocation2 + $0x10] sm:$0xff]
  %v26 = vld [vmem:[#allocation2 + $0x18] sm:$0xff]
  %v27 = vld [vmem:[%s0] sm:$0xff]
  %v28 = vld [vmem:[%s0 + $0x8] sm:$0xff]
  %v29 = vld [vmem:[%s0 + $0x10] sm:$0xff]
  %v30 = vld [vmem:[%s0 + $0x18] sm:$0xf]
  %v31 = vld [vmem:[%s0 + $0x1c] sm:$0xff]
  %v32 = vld [vmem:[%s0 + $0x24] sm:$0xff]
  %v33 = vld [vmem:[%s0 + $0x2c] sm:$0xff]
  %v34 = vld [vmem:[%s0 + $0x34] sm:$0xf]
  %v35 = vld [vmem:[%s0 + $0x38] sm:$0xff]
  %v36 = vld [vmem:[%s0 + $0x40] sm:$0xff]
  %v37 = vld [vmem:[%s0 + $0x48] sm:$0xff]
  %v38 = vld [vmem:[%s0 + $0x50] sm:$0xf]
  %v39 = vld [vmem:[%s0 + $0x54] sm:$0xff]
  %v40 = vld [vmem:[%s0 + $0x5c] sm:$0xff]
  %v41 = vld [vmem:[%s0 + $0x64] sm:$0xff]
  %v42 = vld [vmem:[%s0 + $0x6c] sm:$0xf]
  %v43 = vld [vmem:[%s1] sm:$0xf]
  %v44 = vld [vmem:[%s1 + $0x4] sm:$0xf]
  %v45 = vld [vmem:[%s1 + $0x8] sm:$0xf]
  %v46 = vld [vmem:[%s1 + $0xc] sm:$0xf]
  %v47 = vld [vmem:[%s1 + $0x10] sm:$0xf]
  %v48 = vld [vmem:[%s1 + $0x14] sm:$0xf]
  %v49 = vld [vmem:[%s1 + $0x18] sm:$0xf]
  %v50 = vld [vmem:[%s1 + $0x1c] sm:$0xf]
  %v51 = vld [vmem:[%s1 + $0x20] sm:$0xf]
  %v52 = vld [vmem:[%s1 + $0x24] sm:$0xf]
  %v53 = vld [vmem:[%s1 + $0x28] sm:$0xf]
  %v54 = vld [vmem:[%s1 + $0x2c] sm:$0xf]
  %v55 = vld [vmem:[%s1 + $0x30] sm:$0xf]
  %v56 = vld [vmem:[%s1 + $0x34] sm:$0xf]
  %v57 = vld [vmem:[%s1 + $0x38] sm:$0xf]
  %v58 = vld [vmem:[%s1 + $0x3c] sm:$0xf]
  %v59 = vld [vmem:[%s1 + $0x40] sm:$0xf]
  %v60 = vld [vmem:[%s1 + $0x44] sm:$0xf]
  %v61 = vld [vmem:[%s1 + $0x48] sm:$0xf]
  %v62 = vld [vmem:[%s1 + $0x4c] sm:$0xf]
  %v63 = vld [vmem:[%s1 + $0x50] sm:$0xf]
  %v64 = vld [vmem:[%s1 + $0x54] sm:$0xf]
  %v65 = vld [vmem:[%s1 + $0x58] sm:$0xf]
  %v66 = vld [vmem:[%s1 + $0x5c] sm:$0xf]
  %v67 = vld [vmem:[%s1 + $0x60] sm:$0xf]
  %v68 = vld [vmem:[%s1 + $0x64] sm:$0xf]
  %v69 = vld [vmem:[%s1 + $0x68] sm:$0xf]
  %v70 = vld [vmem:[%s1 + $0x6c] sm:$0xf]
  %v71 = vld [vmem:[%s1 + $0x70] sm:$0xf]
  %v72 = vld [vmem:[%s1 + $0x74] sm:$0xf]
  %v73 = vld [vmem:[%s1 + $0x78] sm:$0xf]
  %v74 = vld [vmem:[%s1 + $0x7c] sm:$0xf]
  %v75 = vld [vmem:[%s1 + $0x80] sm:$0xf]
  %v76 = vld [vmem:[%s1 + $0x84] sm:$0xf]
  %v77 = vld [vmem:[%s1 + $0x88] sm:$0xf]
  %v78 = vld [vmem:[%s1 + $0x8c] sm:$0xf]
  %v79 = vld [vmem:[%s1 + $0x90] sm:$0xf]
  %v80 = vld [vmem:[%s1 + $0x94] sm:$0xf]
  %v81 = vld [vmem:[%s1 + $0x98] sm:$0xf]
  %v82 = vld [vmem:[%s1 + $0x9c] sm:$0xf]
  %v83 = vld [vmem:[%s1 + $0xa0] sm:$0xf]
  %v84 = vld [vmem:[%s1 + $0xa4] sm:$0xf]
  %v85 = vld [vmem:[%s1 + $0xa8] sm:$0xf]
  %v86 = vld [vmem:[%s1 + $0xac] sm:$0xf]
  %v87 = vld [vmem:[%s1 + $0xb0] sm:$0xf]
  %v88 = vld [vmem:[%s1 + $0xb4] sm:$0xf]
  %v89 = vld [vmem:[%s1 + $0xb8] sm:$0xf]
  %v90 = vld [vmem:[%s1 + $0xbc] sm:$0xf]
  %v91 = vld [vmem:[%s1 + $0xc0] sm:$0xf]
  %v92 = vld [vmem:[%s1 + $0xc4] sm:$0xf]
  %v93 = vld [vmem:[%s1 + $0xc8] sm:$0xf]
  %v94 = vld [vmem:[%s1 + $0xcc] sm:$0xf]
  %v95 = vld [vmem:[%s1 + $0xd0] sm:$0xf]
  %v96 = vld [vmem:[%s1 + $0xd4] sm:$0xf]
  %v97 = vld [vmem:[%s1 + $0xd8] sm:$0xf]
  %v98 = vld [vmem:[%s1 + $0xdc] sm:$0xf]
  %v99 = vld [vmem:[%s1 + $0xe0] sm:$0xf]
  %v100 = vld [vmem:[%s1 + $0xe4] sm:$0xf]
  %v101 = vld [vmem:[%s1 + $0xe8] sm:$0xf]
  %v102 = vld [vmem:[%s1 + $0xec] sm:$0xf]
  %v103 = vld [vmem:[%s1 + $0xf0] sm:$0xf]
  %v104 = vld [vmem:[%s1 + $0xf4] sm:$0xf]
  %v105 = vld [vmem:[%s1 + $0xf8] sm:$0xf]
  %v106 = vld [vmem:[%s1 + $0xfc] sm:$0xf]
  %v107 = vld [vmem:[%s1 + $0x100] sm:$0xf]
  %v108 = vld [vmem:[%s1 + $0x104] sm:$0xf]
  %v109 = vld [vmem:[%s1 + $0x108] sm:$0xf]
  %v110 = vld [vmem:[%s1 + $0x10c] sm:$0xf]
  %v111 = vld [vmem:[%s1 + $0x110] sm:$0xf]
  %v112 = vld [vmem:[%s1 + $0x114] sm:$0xf]
  %v113 = vld [vmem:[%s1 + $0x118] sm:$0xf]
  %v114 = vld [vmem:[%s1 + $0x11c] sm:$0xf]
  %v115 = vld [vmem:[%s1 + $0x120] sm:$0xf]
  %v116 = vld [vmem:[%s1 + $0x124] sm:$0xf]
  %v117 = vld [vmem:[%s1 + $0x128] sm:$0xf]
  %v118 = vld [vmem:[%s1 + $0x12c] sm:$0xf]
  %v119 = vld [vmem:[%s1 + $0x130] sm:$0xf]
  %v120 = vld [vmem:[%s1 + $0x134] sm:$0xf]
  %v121 = vld [vmem:[%s1 + $0x138] sm:$0xf]
  %v122 = vld [vmem:[%s1 + $0x13c] sm:$0xf]
  %v123 = vld [vmem:[%s1 + $0x140] sm:$0xf]
  %v124 = vld [vmem:[%s1 + $0x144] sm:$0xf]
  %v125 = vld [vmem:[%s1 + $0x148] sm:$0xf]
  %v126 = vld [vmem:[%s1 + $0x14c] sm:$0xf]
  %v127 = vld [vmem:[%s1 + $0x150] sm:$0xf]
  %v128 = vld [vmem:[%s1 + $0x154] sm:$0xf]
  %v129 = vld [vmem:[%s1 + $0x158] sm:$0xf]
  %v130 = vld [vmem:[%s1 + $0x15c] sm:$0xf]
  %v131 = vld [vmem:[%s1 + $0x160] sm:$0xf]
  %v132 = vld [vmem:[%s1 + $0x164] sm:$0xf]
  %v133 = vld [vmem:[%s1 + $0x168] sm:$0xf]
  %v134 = vld [vmem:[%s1 + $0x16c] sm:$0xf]
  %v135 = vld [vmem:[%s1 + $0x170] sm:$0xf]
  %v136 = vld [vmem:[%s1 + $0x174] sm:$0xf]
  %v137 = vld [vmem:[%s1 + $0x178] sm:$0xf]
  %v138 = vld [vmem:[%s1 + $0x17c] sm:$0xf]
  %v139 = vld [vmem:[%s1 + $0x180] sm:$0xf]
  %v140 = vld [vmem:[%s1 + $0x184] sm:$0xf]
  %v141 = vld [vmem:[%s1 + $0x188] sm:$0xf]
  %v142 = vld [vmem:[%s1 + $0x18c] sm:$0xf]
  %v143 = vld [vmem:[%s1 + $0x190] sm:$0xf]
  %v144 = vld [vmem:[%s1 + $0x194] sm:$0xf]
  %v145 = vld [vmem:[%s1 + $0x198] sm:$0xf]
  %v146 = vld [vmem:[%s1 + $0x19c] sm:$0xf]
  %v147 = vld [vmem:[%s1 + $0x1a0] sm:$0xf]
  %v148 = vld [vmem:[%s1 + $0x1a4] sm:$0xf]
  %v149 = vld [vmem:[%s1 + $0x1a8] sm:$0xf]
  %v150 = vld [vmem:[%s1 + $0x1ac] sm:$0xf]
  %v167 = vunpack.c.l.b16 %v27
  %v168 = vunpack.c.h.b16 %v27
  %v169 = vunpack.c.l.b16 %v28
  %v170 = vunpack.c.h.b16 %v28
  %v171 = vunpack.c.l.b16 %v29
  %v172 = vunpack.c.h.b16 %v29
  %v173 = vunpack.c.l.b16 %v30
  %v174 = vunpack.c.l.b16 %v31
  %v175 = vunpack.c.h.b16 %v31
  %v176 = vunpack.c.l.b16 %v32
  %v177 = vunpack.c.h.b16 %v32
  %v178 = vunpack.c.l.b16 %v33
  %v179 = vunpack.c.h.b16 %v33
  %v180 = vunpack.c.l.b16 %v34
  %v181 = vunpack.c.l.b16 %v35
  %v182 = vunpack.c.h.b16 %v35
  %v183 = vunpack.c.l.b16 %v36
  %v184 = vunpack.c.h.b16 %v36
  %v185 = vunpack.c.l.b16 %v37
  %v186 = vunpack.c.h.b16 %v37
  %v187 = vunpack.c.l.b16 %v38
  %v188 = vunpack.c.l.b16 %v39
  %v189 = vunpack.c.h.b16 %v39
  %v190 = vunpack.c.l.b16 %v40
  %v191 = vunpack.c.h.b16 %v40
  %v192 = vunpack.c.l.b16 %v41
  %v193 = vunpack.c.h.b16 %v41
  %v194 = vunpack.c.l.b16 %v42
  %v195 = vpack.c.b16 %v174, %v167
  %v196 = vpack.c.b16 %v175, %v168
  %v197 = vpack.c.b16 %v176, %v169
  %v198 = vpack.c.b16 %v177, %v170
  %v199 = vpack.c.b16 %v178, %v171
  %v200 = vpack.c.b16 %v179, %v172
  %v201 = vpack.c.b16 %v180, %v173
  %v202 = vpack.c.b16 %v188, %v181
  %v203 = vpack.c.b16 %v189, %v182
  %v204 = vpack.c.b16 %v190, %v183
  %v205 = vpack.c.b16 %v191, %v184
  %v206 = vpack.c.b16 %v192, %v185
  %v207 = vpack.c.b16 %v193, %v186
  %v208 = vpack.c.b16 %v194, %v187
  %v329 = vunpack.c.l.b16 %v43
  %v330 = vunpack.c.l.b16 %v44
  %v331 = vunpack.c.l.b16 %v45
  %v332 = vunpack.c.l.b16 %v46
  %v333 = vunpack.c.l.b16 %v47
  %v334 = vunpack.c.l.b16 %v48
  %v335 = vunpack.c.l.b16 %v49
  %v336 = vunpack.c.l.b16 %v50
  %v337 = vunpack.c.l.b16 %v51
  %v338 = vunpack.c.l.b16 %v52
  %v339 = vunpack.c.l.b16 %v53
  %v340 = vunpack.c.l.b16 %v54
  %v341 = vunpack.c.l.b16 %v55
  %v342 = vunpack.c.l.b16 %v56
  %v343 = vunpack.c.l.b16 %v57
  %v344 = vunpack.c.l.b16 %v58
  %v345 = vunpack.c.l.b16 %v59
  %v346 = vunpack.c.l.b16 %v60
  %v347 = vunpack.c.l.b16 %v61
  %v348 = vunpack.c.l.b16 %v62
  %v349 = vunpack.c.l.b16 %v63
  %v350 = vunpack.c.l.b16 %v64
  %v351 = vunpack.c.l.b16 %v65
  %v352 = vunpack.c.l.b16 %v66
  %v353 = vunpack.c.l.b16 %v67
  %v354 = vunpack.c.l.b16 %v68
  %v355 = vunpack.c.l.b16 %v69
  %v356 = vunpack.c.l.b16 %v70
  %v357 = vunpack.c.l.b16 %v71
  %v358 = vunpack.c.l.b16 %v72
  %v359 = vunpack.c.l.b16 %v73
  %v360 = vunpack.c.l.b16 %v74
  %v361 = vunpack.c.l.b16 %v75
  %v362 = vunpack.c.l.b16 %v76
  %v363 = vunpack.c.l.b16 %v77
  %v364 = vunpack.c.l.b16 %v78
  %v365 = vunpack.c.l.b16 %v79
  %v366 = vunpack.c.l.b16 %v80
  %v367 = vunpack.c.l.b16 %v81
  %v368 = vunpack.c.l.b16 %v82
  %v369 = vunpack.c.l.b16 %v83
  %v370 = vunpack.c.l.b16 %v84
  %v371 = vunpack.c.l.b16 %v85
  %v372 = vunpack.c.l.b16 %v86
  %v373 = vunpack.c.l.b16 %v87
  %v374 = vunpack.c.l.b16 %v88
  %v375 = vunpack.c.l.b16 %v89
  %v376 = vunpack.c.l.b16 %v90
  %v377 = vunpack.c.l.b16 %v91
  %v378 = vunpack.c.l.b16 %v92
  %v379 = vunpack.c.l.b16 %v93
  %v380 = vunpack.c.l.b16 %v94
  %v381 = vunpack.c.l.b16 %v95
  %v382 = vunpack.c.l.b16 %v96
  %v383 = vunpack.c.l.b16 %v97
  %v384 = vunpack.c.l.b16 %v98
  %v385 = vunpack.c.l.b16 %v99
  %v386 = vunpack.c.l.b16 %v100
  %v387 = vunpack.c.l.b16 %v101
  %v388 = vunpack.c.l.b16 %v102
  %v389 = vunpack.c.l.b16 %v103
  %v390 = vunpack.c.l.b16 %v104
  %v391 = vunpack.c.l.b16 %v105
  %v392 = vunpack.c.l.b16 %v106
  %v393 = vunpack.c.l.b16 %v107
  %v394 = vunpack.c.l.b16 %v108
  %v395 = vunpack.c.l.b16 %v109
  %v396 = vunpack.c.l.b16 %v110
  %v397 = vunpack.c.l.b16 %v111
  %v398 = vunpack.c.l.b16 %v112
  %v399 = vunpack.c.l.b16 %v113
  %v400 = vunpack.c.l.b16 %v114
  %v401 = vunpack.c.l.b16 %v115
  %v402 = vunpack.c.l.b16 %v116
  %v403 = vunpack.c.l.b16 %v117
  %v404 = vunpack.c.l.b16 %v118
  %v405 = vunpack.c.l.b16 %v119
  %v406 = vunpack.c.l.b16 %v120
  %v407 = vunpack.c.l.b16 %v121
  %v408 = vunpack.c.l.b16 %v122
  %v409 = vunpack.c.l.b16 %v123
  %v410 = vunpack.c.l.b16 %v124
  %v411 = vunpack.c.l.b16 %v125
  %v412 = vunpack.c.l.b16 %v126
  %v413 = vunpack.c.l.b16 %v127
  %v414 = vunpack.c.l.b16 %v128
  %v415 = vunpack.c.l.b16 %v129
  %v416 = vunpack.c.l.b16 %v130
  %v417 = vunpack.c.l.b16 %v131
  %v418 = vunpack.c.l.b16 %v132
  %v419 = vunpack.c.l.b16 %v133
  %v420 = vunpack.c.l.b16 %v134
  %v421 = vunpack.c.l.b16 %v135
  %v422 = vunpack.c.l.b16 %v136
  %v423 = vunpack.c.l.b16 %v137
  %v424 = vunpack.c.l.b16 %v138
  %v425 = vunpack.c.l.b16 %v139
  %v426 = vunpack.c.l.b16 %v140
  %v427 = vunpack.c.l.b16 %v141
  %v428 = vunpack.c.l.b16 %v142
  %v429 = vunpack.c.l.b16 %v143
  %v430 = vunpack.c.l.b16 %v144
  %v431 = vunpack.c.l.b16 %v145
  %v432 = vunpack.c.l.b16 %v146
  %v433 = vunpack.c.l.b16 %v147
  %v434 = vunpack.c.l.b16 %v148
  %v435 = vunpack.c.l.b16 %v149
  %v436 = vunpack.c.l.b16 %v150
  %v437 = vpack.c.b16 %v330, %v329
  %v438 = vpack.c.b16 %v332, %v331
  %v439 = vpack.c.b16 %v334, %v333
  %v440 = vpack.c.b16 %v336, %v335
  %v441 = vpack.c.b16 %v338, %v337
  %v442 = vpack.c.b16 %v340, %v339
  %v443 = vpack.c.b16 %v342, %v341
  %v444 = vpack.c.b16 %v344, %v343
  %v445 = vpack.c.b16 %v346, %v345
  %v446 = vpack.c.b16 %v348, %v347
  %v447 = vpack.c.b16 %v350, %v349
  %v448 = vpack.c.b16 %v352, %v351
  %v449 = vpack.c.b16 %v354, %v353
  %v450 = vpack.c.b16 %v356, %v355
  %v451 = vpack.c.b16 %v358, %v357
  %v452 = vpack.c.b16 %v360, %v359
  %v453 = vpack.c.b16 %v362, %v361
  %v454 = vpack.c.b16 %v364, %v363
  %v455 = vpack.c.b16 %v366, %v365
  %v456 = vpack.c.b16 %v368, %v367
  %v457 = vpack.c.b16 %v370, %v369
  %v458 = vpack.c.b16 %v372, %v371
  %v459 = vpack.c.b16 %v374, %v373
  %v460 = vpack.c.b16 %v376, %v375
  %v461 = vpack.c.b16 %v378, %v377
  %v462 = vpack.c.b16 %v380, %v379
  %v463 = vpack.c.b16 %v382, %v381
  %v464 = vpack.c.b16 %v384, %v383
  %v465 = vpack.c.b16 %v386, %v385
  %v466 = vpack.c.b16 %v388, %v387
  %v467 = vpack.c.b16 %v390, %v389
  %v468 = vpack.c.b16 %v392, %v391
  %v469 = vpack.c.b16 %v394, %v393
  %v470 = vpack.c.b16 %v396, %v395
  %v471 = vpack.c.b16 %v398, %v397
  %v472 = vpack.c.b16 %v400, %v399
  %v473 = vpack.c.b16 %v402, %v401
  %v474 = vpack.c.b16 %v404, %v403
  %v475 = vpack.c.b16 %v406, %v405
  %v476 = vpack.c.b16 %v408, %v407
  %v477 = vpack.c.b16 %v410, %v409
  %v478 = vpack.c.b16 %v412, %v411
  %v479 = vpack.c.b16 %v414, %v413
  %v480 = vpack.c.b16 %v416, %v415
  %v481 = vpack.c.b16 %v418, %v417
  %v482 = vpack.c.b16 %v420, %v419
  %v483 = vpack.c.b16 %v422, %v421
  %v484 = vpack.c.b16 %v424, %v423
  %v485 = vpack.c.b16 %v426, %v425
  %v486 = vpack.c.b16 %v428, %v427
  %v487 = vpack.c.b16 %v430, %v429
  %v488 = vpack.c.b16 %v432, %v431
  %v489 = vpack.c.b16 %v434, %v433
  %v490 = vpack.c.b16 %v436, %v435
  %vm545 = vcmask 785408
  %v547 = vsel %vm545, %v201, 0
  %v550 = vsel %vm545, %v208, 0
  %552 = vmatprep.subr.bf16.mxu0 0
  %553 = vmatpush1.bf16.msra.mxu0 %v437
  %554 = vmatprep.subr.bf16.mxu0 0
  %555 = vmatpush1.bf16.msra.mxu0 %v438
  %556 = vmatprep.subr.bf16.mxu0 0
  %557 = vmatpush1.bf16.msra.mxu0 %v439
  %558 = vmatprep.subr.bf16.mxu0 0
  %559 = vmatpush1.bf16.msra.mxu0 %v440
  %560 = vmatprep.subr.bf16.mxu0 0
  %561 = vmatpush1.bf16.msra.mxu0 %v441
  %562 = vmatprep.subr.bf16.mxu0 0
  %563 = vmatpush1.bf16.msra.mxu0 %v442
  %564 = vmatprep.subr.bf16.mxu0 0
  %565 = vmatpush1.bf16.msra.mxu0 %v443
  %566 = vmatprep.subr.bf16.mxu0 0
  %567 = vmatpush1.bf16.msra.mxu0 %v444
  %568 = vmatprep.subr.bf16.mxu0 0
  %569 = vmatpush1.bf16.msra.mxu0 %v445
  %570 = vmatprep.subr.bf16.mxu0 0
  %571 = vmatpush1.bf16.msra.mxu0 %v446
  %572 = vmatprep.subr.bf16.mxu0 0
  %573 = vmatpush1.bf16.msra.mxu0 %v447
  %574 = vmatprep.subr.bf16.mxu0 0
  %575 = vmatpush1.bf16.msra.mxu0 %v448
  %576 = vmatprep.subr.bf16.mxu0 0
  %577 = vmatpush1.bf16.msra.mxu0 %v449
  %578 = vmatprep.subr.bf16.mxu0 0
  %579 = vmatpush1.bf16.msra.mxu0 %v450
  %580 = vmatprep.subr.bf16.mxu0 0
  %581 = vmatpush1.bf16.msra.mxu0 %v451
  %582 = vmatprep.subr.bf16.mxu0 0
  %583 = vmatpush1.bf16.msra.mxu0 %v452
  %584 = vmatprep.mubr.bf16.mxu0 %v196
  %585 = vmatmul.mubr.bf16.gmra.mrb[0].mxu0 %v195
  %v586 = vpop.f32.mrb[0].mxu0
  %v587 = vadd.f32 0.0, %v586
  %v588 = vpop.f32.mrb[0].mxu0
  %v589 = vpop.f32.mrb[0].mxu0
  %v590 = vadd.f32 0.0, %v589
  %v591 = vpop.f32.mrb[0].mxu0
  %592 = vmatprep.mubr.bf16.mxu0 %v203
  %593 = vmatmul.mubr.bf16.gmra.mrb[0].mxu0 %v202
  %v594 = vpop.f32.mrb[0].mxu0
  %v595 = vadd.f32 0.0, %v594
  %v596 = vpop.f32.mrb[0].mxu0
  %v597 = vpop.f32.mrb[0].mxu0
  %v598 = vadd.f32 0.0, %v597
  %v599 = vpop.f32.mrb[0].mxu0
  %600 = vdwg.mxu0
  %601 = vmatprep.subr.bf16.mxu0 0
  %602 = vmatpush1.bf16.msra.mxu0 %v453
  %603 = vmatprep.subr.bf16.mxu0 0
  %604 = vmatpush1.bf16.msra.mxu0 %v454
  %605 = vmatprep.subr.bf16.mxu0 0
  %606 = vmatpush1.bf16.msra.mxu0 %v455
  %607 = vmatprep.subr.bf16.mxu0 0
  %608 = vmatpush1.bf16.msra.mxu0 %v456
  %609 = vmatprep.subr.bf16.mxu0 0
  %610 = vmatpush1.bf16.msra.mxu0 %v457
  %611 = vmatprep.subr.bf16.mxu0 0
  %612 = vmatpush1.bf16.msra.mxu0 %v458
  %613 = vmatprep.subr.bf16.mxu0 0
  %614 = vmatpush1.bf16.msra.mxu0 %v459
  %615 = vmatprep.subr.bf16.mxu0 0
  %616 = vmatpush1.bf16.msra.mxu0 %v460
  %617 = vmatprep.subr.bf16.mxu0 0
  %618 = vmatpush1.bf16.msra.mxu0 %v461
  %619 = vmatprep.subr.bf16.mxu0 0
  %620 = vmatpush1.bf16.msra.mxu0 %v462
  %621 = vmatprep.subr.bf16.mxu0 0
  %622 = vmatpush1.bf16.msra.mxu0 %v463
  %623 = vmatprep.subr.bf16.mxu0 0
  %624 = vmatpush1.bf16.msra.mxu0 %v464
  %625 = vmatprep.subr.bf16.mxu0 0
  %626 = vmatpush1.bf16.msra.mxu0 %v465
  %627 = vmatprep.subr.bf16.mxu0 0
  %628 = vmatpush1.bf16.msra.mxu0 %v466
  %629 = vmatprep.subr.bf16.mxu0 0
  %630 = vmatpush1.bf16.msra.mxu0 %v467
  %631 = vmatprep.subr.bf16.mxu0 0
  %632 = vmatpush1.bf16.msra.mxu0 %v468
  %633 = vmatprep.mubr.bf16.mxu0 %v198
  %634 = vmatmul.mubr.bf16.gmra.mrb[0].mxu0 %v197
  %v635 = vpop.f32.mrb[0].mxu0
  %v636 = vadd.f32 %v587, %v635
  %v637 = vpop.f32.mrb[0].mxu0
  %v638 = vpop.f32.mrb[0].mxu0
  %v639 = vadd.f32 %v590, %v638
  %v640 = vpop.f32.mrb[0].mxu0
  %641 = vmatprep.mubr.bf16.mxu0 %v205
  %642 = vmatmul.mubr.bf16.gmra.mrb[0].mxu0 %v204
  %v643 = vpop.f32.mrb[0].mxu0
  %v644 = vadd.f32 %v595, %v643
  %v645 = vpop.f32.mrb[0].mxu0
  %v646 = vpop.f32.mrb[0].mxu0
  %v647 = vadd.f32 %v598, %v646
  %v648 = vpop.f32.mrb[0].mxu0
  %649 = vdwg.mxu0
  %650 = vmatprep.subr.bf16.mxu0 0
  %651 = vmatpush1.bf16.msra.mxu0 %v469
  %652 = vmatprep.subr.bf16.mxu0 0
  %653 = vmatpush1.bf16.msra.mxu0 %v470
  %654 = vmatprep.subr.bf16.mxu0 0
  %655 = vmatpush1.bf16.msra.mxu0 %v471
  %656 = vmatprep.subr.bf16.mxu0 0
  %657 = vmatpush1.bf16.msra.mxu0 %v472
  %658 = vmatprep.subr.bf16.mxu0 0
  %659 = vmatpush1.bf16.msra.mxu0 %v473
  %660 = vmatprep.subr.bf16.mxu0 0
  %661 = vmatpush1.bf16.msra.mxu0 %v474
  %662 = vmatprep.subr.bf16.mxu0 0
  %663 = vmatpush1.bf16.msra.mxu0 %v475
  %664 = vmatprep.subr.bf16.mxu0 0
  %665 = vmatpush1.bf16.msra.mxu0 %v476
  %666 = vmatprep.subr.bf16.mxu0 0
  %667 = vmatpush1.bf16.msra.mxu0 %v477
  %668 = vmatprep.subr.bf16.mxu0 0
  %669 = vmatpush1.bf16.msra.mxu0 %v478
  %670 = vmatprep.subr.bf16.mxu0 0
  %671 = vmatpush1.bf16.msra.mxu0 %v479
  %672 = vmatprep.subr.bf16.mxu0 0
  %673 = vmatpush1.bf16.msra.mxu0 %v480
  %674 = vmatprep.subr.bf16.mxu0 0
  %675 = vmatpush1.bf16.msra.mxu0 %v481
  %676 = vmatprep.subr.bf16.mxu0 0
  %677 = vmatpush1.bf16.msra.mxu0 %v482
  %678 = vmatprep.subr.bf16.mxu0 0
  %679 = vmatpush1.bf16.msra.mxu0 %v483
  %680 = vmatprep.subr.bf16.mxu0 0
  %681 = vmatpush1.bf16.msra.mxu0 %v484
  %682 = vmatprep.mubr.bf16.mxu0 %v200
  %683 = vmatmul.mubr.bf16.gmra.mrb[0].mxu0 %v199
  %v684 = vpop.f32.mrb[0].mxu0
  %v685 = vadd.f32 %v636, %v684
  %v686 = vpop.f32.mrb[0].mxu0
  %v687 = vpop.f32.mrb[0].mxu0
  %v688 = vadd.f32 %v639, %v687
  %v689 = vpop.f32.mrb[0].mxu0
  %690 = vmatprep.mubr.bf16.mxu0 %v207
  %691 = vmatmul.mubr.bf16.gmra.mrb[0].mxu0 %v206
  %v692 = vpop.f32.mrb[0].mxu0
  %v693 = vadd.f32 %v644, %v692
  %v694 = vpop.f32.mrb[0].mxu0
  %v695 = vpop.f32.mrb[0].mxu0
  %v696 = vadd.f32 %v647, %v695
  %v697 = vpop.f32.mrb[0].mxu0
  %698 = vdwg.mxu0
  %699 = vmatprep.subr.bf16.mxu0 0
  %700 = vmatpush1.bf16.msra.mxu0 %v485
  %701 = vmatprep.subr.bf16.mxu0 0
  %702 = vmatpush1.bf16.msra.mxu0 %v486
  %703 = vmatprep.subr.bf16.mxu0 0
  %704 = vmatpush1.bf16.msra.mxu0 %v487
  %705 = vmatprep.subr.bf16.mxu0 0
  %706 = vmatpush1.bf16.msra.mxu0 %v488
  %707 = vmatprep.subr.bf16.mxu0 0
  %708 = vmatpush1.bf16.msra.mxu0 %v489
  %709 = vmatprep.subr.bf16.mxu0 0
  %710 = vmatpush1.bf16.msra.mxu0 %v490
  %711 = vmatprep.subr.bf16.mxu0 0
  %712 = vmatpush1.bf16.msra.mxu0 0
  %713 = vmatprep.subr.bf16.mxu0 0
  %714 = vmatpush1.bf16.msra.mxu0 0
  %715 = vmatprep.subr.bf16.mxu0 0
  %716 = vmatpush1.bf16.msra.mxu0 0
  %717 = vmatprep.subr.bf16.mxu0 0
  %718 = vmatpush1.bf16.msra.mxu0 0
  %719 = vmatprep.subr.bf16.mxu0 0
  %720 = vmatpush1.bf16.msra.mxu0 0
  %721 = vmatprep.subr.bf16.mxu0 0
  %722 = vmatpush1.bf16.msra.mxu0 0
  %723 = vmatprep.subr.bf16.mxu0 0
  %724 = vmatpush1.bf16.msra.mxu0 0
  %725 = vmatprep.subr.bf16.mxu0 0
  %726 = vmatpush1.bf16.msra.mxu0 0
  %727 = vmatprep.subr.bf16.mxu0 0
  %728 = vmatpush1.bf16.msra.mxu0 0
  %729 = vmatprep.subr.bf16.mxu0 0
  %730 = vmatpush1.bf16.msra.mxu0 0
  %731 = vmatprep.mubr.bf16.mxu0 0
  %732 = vmatmul.mubr.bf16.gmra.mrb[0].mxu0 %v547
  %v733 = vpop.f32.mrb[0].mxu0
  %v734 = vadd.f32 %v685, %v733
  %v735 = vpop.f32.mrb[0].mxu0
  %v736 = vpop.f32.mrb[0].mxu0
  %v737 = vadd.f32 %v688, %v736
  %v738 = vpop.f32.mrb[0].mxu0
  %739 = vmatprep.mubr.bf16.mxu0 0
  %740 = vmatmul.mubr.bf16.gmra.mrb[0].mxu0 %v550
  %v741 = vpop.f32.mrb[0].mxu0
  %v742 = vadd.f32 %v693, %v741
  %v743 = vpop.f32.mrb[0].mxu0
  %v744 = vpop.f32.mrb[0].mxu0
  %v745 = vadd.f32 %v696, %v744
  %v746 = vpop.f32.mrb[0].mxu0
  %747 = vdwg.mxu0
  %v748 = vadd.f32 %v23, %v734
  %v749 = vadd.f32 %v24, %v737
  %v750 = vadd.f32 %v25, %v742
  %v751 = vadd.f32 %v26, %v745
  %752 = vst [vmem:[#allocation2] sm:$0xff] %v748
  %753 = vst [vmem:[#allocation2 + $0x8] sm:$0xff] %v749
  %754 = vst [vmem:[#allocation2 + $0x10] sm:$0xff] %v750
  %755 = vst [vmem:[#allocation2 + $0x18] sm:$0xff] %v751
  // Predicated region
  $region18: #{resunet_forward.39} parent=0 // pred_check
    %p756 = pneg %p15
  $region19: #{resunet_forward.39} parent=0 // pred_check_branch
    %758 = sbr.rel (%p756) target = $region21
  $region20: #{resunet_forward.39} parent=0 // pred_region
    %v759 = vld [vmem:[#allocation2] sm:$0xff]
    %v760 = vld [vmem:[#allocation2 + $0x8] sm:$0xff]
    %v761 = vld [vmem:[#allocation2 + $0x10] sm:$0xff]
    %v762 = vld [vmem:[#allocation2 + $0x18] sm:$0xff]
    %v763 = vld [vmem:[%s2] sm:$0x1]
    %v765 = vlaneseq
    %v766 = vshrl.u32 %v765, 7
    %v767 = vsub.s32 0, %v766
    %v768 = vrot.slane %v763, %v767
    %v770 = vadd.f32 %v759, %v768
    %v771 = vadd.f32 %v760, %v768
    %v772 = vadd.f32 %v761, %v768
    %v773 = vadd.f32 %v762, %v768
    %v774 = vpack.c.bf16 %v771, %v770
    %v775 = vpack.c.bf16 %v773, %v772
    %v778 = vunpack.c.l.b16 %v774
    %v779 = vunpack.c.h.b16 %v774
    %v780 = vunpack.c.l.b16 %v775
    %v781 = vunpack.c.h.b16 %v775
    %v782 = vpack.c.b16 %v778, %v778
    %v783 = vpack.c.b16 %v779, %v779
    %v784 = vpack.c.b16 %v780, %v780
    %v785 = vpack.c.b16 %v781, %v781
    %790 = vst [vmem:[%s3] sm:$0xf] %v782
    %791 = vst [vmem:[%s3 + $0x4] sm:$0xf] %v783
    %792 = vst [vmem:[%s3 + $0x8] sm:$0xf] %v784
    %793 = vst [vmem:[%s3 + $0xc] sm:$0xf] %v785
  $region21: #{resunet_forward.39} parent=0 // pred_fallthru
    _
  // Predicated region
  $region22: #{resunet_forward.39} parent=0 // pred_check
    _
  $region23: #{resunet_forward.39} parent=0 // pred_check_branch
    %795 = sbr.rel (0) target = $region25
  $region24: #{resunet_forward.39} parent=0 // pred_region
    _
  $region25: #{resunet_forward.39} parent=0 // pred_fallthru
    _
  // Predicated region
  $region26: #{resunet_forward.39} parent=0 // pred_check
    _
  $region27: #{resunet_forward.39} parent=0 // pred_check_branch
    %797 = sbr.rel (0) target = $region29
  $region28: #{resunet_forward.39} parent=0 // pred_region
    _
  $region29: #{resunet_forward.39} parent=0 // pred_fallthru
    _

// kernel: resunet_forward.41
$region0: #{resunet_forward.41}
  #allocation0 [shape = 'u32[]', space=smem, size = 0x4, offset = 0x4, fixed_abs, tag = 'smem constant byte address 0x4 - core index']
  #allocation1 [shape = 'u32[144,128]{1,0:T(1,128)}', space=vmem, size = 0x12000, scoped, tag = 'internal scratch']
  %s0 = inlined_call_operand.vmem [shape: bf16[8,4,32], index: 0, kind: input, shape index: {}]
  %s1 = inlined_call_operand.vmem [shape: bf16[2,32,128], index: 1, kind: input, shape index: {}]
  %s2 = inlined_call_operand.vmem [shape: f32[1,128], index: 2, kind: input, shape index: {}]
  %s3 = inlined_call_operand.vmem [shape: bf16[8,2,4,128], index: 3, kind: output, shape index: {}]
  %s4 = sld [smem:[#allocation0]]
  $region22: #{resunet_forward.41} parent=0
    _
  %s6 = ssub.s32 1, %s4
  %s7 = scalar_select 0, %s6, %s4
  // Predicated region
  $region2: #{resunet_forward.41} parent=0 // pred_check
    _
  $region3: #{resunet_forward.41} parent=0 // pred_check_branch
    %9 = sbr.rel (0) target = $region5
  $region4: #{resunet_forward.41} parent=0 // pred_region
    _
  $region5: #{resunet_forward.41} parent=0 // pred_fallthru
    _
  // Predicated region
  $region6: #{resunet_forward.41} parent=0 // pred_check
    _
  $region7: #{resunet_forward.41} parent=0 // pred_check_branch
    %11 = sbr.rel (0) target = $region9
  $region8: #{resunet_forward.41} parent=0 // pred_region
    _
  $region9: #{resunet_forward.41} parent=0 // pred_fallthru
    _
  // Predicated region
  $region10: #{resunet_forward.41} parent=0 // pred_check
    _
  $region11: #{resunet_forward.41} parent=0 // pred_check_branch
    %13 = sbr.rel (0) target = $region13
  $region12: #{resunet_forward.41} parent=0 // pred_region
    _
  $region13: #{resunet_forward.41} parent=0 // pred_fallthru
    _
  %v15 = vld [vmem:[%s0] sm:$0x3]
  %v16 = vld [vmem:[%s0 + $0x2] sm:$0x3]
  %v17 = vld [vmem:[%s0 + $0x4] sm:$0x3]
  %v18 = vld [vmem:[%s0 + $0x6] sm:$0x3]
  %v19 = vld [vmem:[%s0 + $0x8] sm:$0x3]
  %v20 = vld [vmem:[%s0 + $0xa] sm:$0x3]
  %v21 = vld [vmem:[%s0 + $0xc] sm:$0x3]
  %v22 = vld [vmem:[%s0 + $0xe] sm:$0x3]
  %v23 = vld [vmem:[%s1] sm:$0xf]
  %v24 = vld [vmem:[%s1 + $0x4] sm:$0xf]
  %v25 = vld [vmem:[%s1 + $0x8] sm:$0xf]
  %v26 = vld [vmem:[%s1 + $0xc] sm:$0xf]
  %v27 = vld [vmem:[%s2] sm:$0x1]
  %v29 = vlaneseq
  %v30 = vshrl.u32 %v29, 7
  %v31 = vsub.s32 0, %v30
  %v32 = vrot.slane %v27, %v31
  %v42 = vcombine.low %v15, %v16
  %v43 = vcombine.low %v17, %v18
  %v45 = vunpack.c.l.s4 1983009808
  %v46 = vunpack.c.0.s8 %v45
  %v47 = vlaneseq
  %v48 = vshrl.u32 %v47, 7
  %v49 = vsub.s32 %v46, %v48
  %v50 = vrot.slane %v42, %v49
  %v52 = vunpack.c.l.s4 1983009808
  %v53 = vunpack.c.0.s8 %v52
  %v54 = vlaneseq
  %v55 = vshrl.u32 %v54, 7
  %v56 = vsub.s32 %v53, %v55
  %v57 = vrot.slane %v43, %v56
  %v58 = vcombine.low %v50, %v57
  %v59 = vcombine.low %v19, %v20
  %v60 = vcombine.low %v21, %v22
  %v62 = vunpack.c.l.s4 1983009808
  %v63 = vunpack.c.0.s8 %v62
  %v64 = vlaneseq
  %v65 = vshrl.u32 %v64, 7
  %v66 = vsub.s32 %v63, %v65
  %v67 = vrot.slane %v59, %v66
  %v69 = vunpack.c.l.s4 1983009808
  %v70 = vunpack.c.0.s8 %v69
  %v71 = vlaneseq
  %v72 = vshrl.u32 %v71, 7
  %v73 = vsub.s32 %v70, %v72
  %v74 = vrot.slane %v60, %v73
  %v75 = vcombine.low %v67, %v74
  %v80 = vunpack.c.l.b16 %v23
  %v81 = vunpack.c.l.b16 %v24
  %v82 = vunpack.c.l.b16 %v25
  %v83 = vunpack.c.l.b16 %v26
  %v84 = vpack.c.b16 %v81, %v80
  %v85 = vpack.c.b16 %v83, %v82
  %vm88 = vcmask 261120
  %v90 = vsel %vm88, %v58, 0
  %v93 = vsel %vm88, %v75, 0
  %95 = vmatprep.subr.bf16.mxu0 0
  %96 = vmatpush1.bf16.msra.mxu0 %v84
  %97 = vmatprep.subr.bf16.mxu0 0
  %98 = vmatpush1.bf16.msra.mxu0 %v85
  %99 = vmatprep.subr.bf16.mxu0 0
  %100 = vmatpush1.bf16.msra.mxu0 0
  %101 = vmatprep.subr.bf16.mxu0 0
  %102 = vmatpush1.bf16.msra.mxu0 0
  %103 = vmatprep.subr.bf16.mxu0 0
  %104 = vmatpush1.bf16.msra.mxu0 0
  %105 = vmatprep.subr.bf16.mxu0 0
  %106 = vmatpush1.bf16.msra.mxu0 0
  %107 = vmatprep.subr.bf16.mxu0 0
  %108 = vmatpush1.bf16.msra.mxu0 0
  %109 = vmatprep.subr.bf16.mxu0 0
  %110 = vmatpush1.bf16.msra.mxu0 0
  %111 = vmatprep.subr.bf16.mxu0 0
  %112 = vmatpush1.bf16.msra.mxu0 0
  %113 = vmatprep.subr.bf16.mxu0 0
  %114 = vmatpush1.bf16.msra.mxu0 0
  %115 = vmatprep.subr.bf16.mxu0 0
  %116 = vmatpush1.bf16.msra.mxu0 0
  %117 = vmatprep.subr.bf16.mxu0 0
  %118 = vmatpush1.bf16.msra.mxu0 0
  %119 = vmatprep.subr.bf16.mxu0 0
  %120 = vmatpush1.bf16.msra.mxu0 0
  %121 = vmatprep.subr.bf16.mxu0 0
  %122 = vmatpush1.bf16.msra.mxu0 0
  %123 = vmatprep.subr.bf16.mxu0 0
  %124 = vmatpush1.bf16.msra.mxu0 0
  %125 = vmatprep.subr.bf16.mxu0 0
  %126 = vmatpush1.bf16.msra.mxu0 0
  %127 = vmatprep.mubr.bf16.mxu0 0
  %128 = vmatmul.mubr.bf16.gmra.mrb[0].mxu0 %v90
  %v129 = vpop.f32.mrb[0].mxu0
  %v130 = vadd.f32 %v32, %v129
  %v131 = vpop.f32.mrb[0].mxu0
  %v132 = vpop.f32.mrb[0].mxu0
  %v133 = vadd.f32 %v32, %v132
  %v134 = vpop.f32.mrb[0].mxu0
  %135 = vmatprep.mubr.bf16.mxu0 0
  %136 = vmatmul.mubr.bf16.gmra.mrb[0].mxu0 %v93
  %v137 = vpop.f32.mrb[0].mxu0
  %v138 = vadd.f32 %v32, %v137
  %v139 = vpop.f32.mrb[0].mxu0
  %v140 = vpop.f32.mrb[0].mxu0
  %v141 = vadd.f32 %v32, %v140
  %v142 = vpop.f32.mrb[0].mxu0
  %143 = vdwg.mxu0
  %v148 = vcombine.high %v130, %v130
  %v149 = vcombine.high %v133, %v133
  %v150 = vcombine.high %v138, %v138
  %v151 = vcombine.high %v141, %v141
  %v156 = vpack.c.bf16 %v130, %v130
  %v157 = vpack.c.bf16 %v148, %v148
  %v158 = vpack.c.bf16 %v133, %v133
  %v159 = vpack.c.bf16 %v149, %v149
  %v160 = vpack.c.bf16 %v138, %v138
  %v161 = vpack.c.bf16 %v150, %v150
  %v162 = vpack.c.bf16 %v141, %v141
  %v163 = vpack.c.bf16 %v151, %v151
  %164 = vst [vmem:[%s3] sm:$0x3] %v156
  %165 = vst [vmem:[%s3 + $0x4] sm:$0x3] %v157
  %166 = vst [vmem:[%s3 + $0x8] sm:$0x3] %v158
  %167 = vst [vmem:[%s3 + $0xc] sm:$0x3] %v159
  %168 = vst [vmem:[%s3 + $0x10] sm:$0x3] %v160
  %169 = vst [vmem:[%s3 + $0x14] sm:$0x3] %v161
  %170 = vst [vmem:[%s3 + $0x18] sm:$0x3] %v162
  %171 = vst [vmem:[%s3 + $0x1c] sm:$0x3] %v163
  %s172 = scalar_lea.vmem %s1, 16
  %v173 = vld [vmem:[%s172] sm:$0xf]
  %v174 = vld [vmem:[%s172 + $0x4] sm:$0xf]
  %v175 = vld [vmem:[%s172 + $0x8] sm:$0xf]
  %v176 = vld [vmem:[%s172 + $0xc] sm:$0xf]
  %v177 = vld [vmem:[%s2] sm:$0x1]
  %v179 = vlaneseq
  %v180 = vshrl.u32 %v179, 7
  %v181 = vsub.s32 0, %v180
  %v182 = vrot.slane %v177, %v181
  %v188 = vunpack.c.l.b16 %v173
  %v189 = vunpack.c.l.b16 %v174
  %v190 = vunpack.c.l.b16 %v175
  %v191 = vunpack.c.l.b16 %v176
  %v192 = vpack.c.b16 %v189, %v188
  %v193 = vpack.c.b16 %v191, %v190
  %196 = vmatprep.subr.bf16.mxu0 0
  %197 = vmatpush1.bf16.msra.mxu0 %v192
  %198 = vmatprep.subr.bf16.mxu0 0
  %199 = vmatpush1.bf16.msra.mxu0 %v193
  %200 = vmatprep.subr.bf16.mxu0 0
  %201 = vmatpush1.bf16.msra.mxu0 0
  %202 = vmatprep.subr.bf16.mxu0 0
  %203 = vmatpush1.bf16.msra.mxu0 0
  %204 = vmatprep.subr.bf16.mxu0 0
  %205 = vmatpush1.bf16.msra.mxu0 0
  %206 = vmatprep.subr.bf16.mxu0 0
  %207 = vmatpush1.bf16.msra.mxu0 0
  %208 = vmatprep.subr.bf16.mxu0 0
  %209 = vmatpush1.bf16.msra.mxu0 0
  %210 = vmatprep.subr.bf16.mxu0 0
  %211 = vmatpush1.bf16.msra.mxu0 0
  %212 = vmatprep.subr.bf16.mxu0 0
  %213 = vmatpush1.bf16.msra.mxu0 0
  %214 = vmatprep.subr.bf16.mxu0 0
  %215 = vmatpush1.bf16.msra.mxu0 0
  %216 = vmatprep.subr.bf16.mxu0 0
  %217 = vmatpush1.bf16.msra.mxu0 0
  %218 = vmatprep.subr.bf16.mxu0 0
  %219 = vmatpush1.bf16.msra.mxu0 0
  %220 = vmatprep.subr.bf16.mxu0 0
  %221 = vmatpush1.bf16.msra.mxu0 0
  %222 = vmatprep.subr.bf16.mxu0 0
  %223 = vmatpush1.bf16.msra.mxu0 0
  %224 = vmatprep.subr.bf16.mxu0 0
  %225 = vmatpush1.bf16.msra.mxu0 0
  %226 = vmatprep.subr.bf16.mxu0 0
  %227 = vmatpush1.bf16.msra.mxu0 0
  %228 = vmatprep.mubr.bf16.mxu0 0
  %229 = vmatmul.mubr.bf16.gmra.mrb[0].mxu0 %v90
  %v230 = vpop.f32.mrb[0].mxu0
  %v231 = vadd.f32 %v182, %v230
  %v232 = vpop.f32.mrb[0].mxu0
  %v233 = vpop.f32.mrb[0].mxu0
  %v234 = vadd.f32 %v182, %v233
  %v235 = vpop.f32.mrb[0].mxu0
  %236 = vmatprep.mubr.bf16.mxu0 0
  %237 = vmatmul.mubr.bf16.gmra.mrb[0].mxu0 %v93
  %v238 = vpop.f32.mrb[0].mxu0
  %v239 = vadd.f32 %v182, %v238
  %v240 = vpop.f32.mrb[0].mxu0
  %v241 = vpop.f32.mrb[0].mxu0
  %v242 = vadd.f32 %v182, %v241
  %v243 = vpop.f32.mrb[0].mxu0
  %244 = vdwg.mxu0
  %v249 = vcombine.high %v231, %v231
  %v250 = vcombine.high %v234, %v234
  %v251 = vcombine.high %v239, %v239
  %v252 = vcombine.high %v242, %v242
  %v257 = vpack.c.bf16 %v231, %v231
  %v258 = vpack.c.bf16 %v249, %v249
  %v259 = vpack.c.bf16 %v234, %v234
  %v260 = vpack.c.bf16 %v250, %v250
  %v261 = vpack.c.bf16 %v239, %v239
  %v262 = vpack.c.bf16 %v251, %v251
  %v263 = vpack.c.bf16 %v242, %v242
  %v264 = vpack.c.bf16 %v252, %v252
  %s265 = scalar_lea.vmem %s3, 2
  %266 = vst [vmem:[%s265] sm:$0x3] %v257
  %267 = vst [vmem:[%s265 + $0x4] sm:$0x3] %v258
  %268 = vst [vmem:[%s265 + $0x8] sm:$0x3] %v259
  %269 = vst [vmem:[%s265 + $0xc] sm:$0x3] %v260
  %270 = vst [vmem:[%s265 + $0x10] sm:$0x3] %v261
  %271 = vst [vmem:[%s265 + $0x14] sm:$0x3] %v262
  %272 = vst [vmem:[%s265 + $0x18] sm:$0x3] %v263
  %273 = vst [vmem:[%s265 + $0x1c] sm:$0x3] %v264
  // Predicated region
  $region14: #{resunet_forward.41} parent=0 // pred_check
    _
  $region15: #{resunet_forward.41} parent=0 // pred_check_branch
    %275 = sbr.rel (0) target = $region17
  $region16: #{resunet_forward.41} parent=0 // pred_region
    _
  $region17: #{resunet_forward.41} parent=0 // pred_fallthru
    _
  // Predicated region
  $region18: #{resunet_forward.41} parent=0 // pred_check
    _
  $region19: #{resunet_forward.41} parent=0 // pred_check_branch
    %277 = sbr.rel (0) target = $region21
  $region20: #{resunet_forward.41} parent=0 // pred_region
    _
  $region21: #{resunet_forward.41} parent=0 // pred_fallthru
    _

// kernel: resunet_forward.43
$region0: #{resunet_forward.43}
  #allocation0 [shape = 'u32[]', space=smem, size = 0x4, offset = 0x4, fixed_abs, tag = 'smem constant byte address 0x4 - core index']
  #allocation1 [shape = 'u32[144,128]{1,0:T(1,128)}', space=vmem, size = 0x12000, scoped, tag = 'internal scratch']
  #allocation2 [shape = 'f32[128,128]{1,0:T(8,128)}', space=vmem, size = 0x10000, scoped, tag = 'scratch operand']
  %s0 = inlined_call_operand.vmem [shape: bf16[128,432], index: 0, kind: input, shape index: {}]
  %s1 = inlined_call_operand.vmem [shape: bf16[432,128], index: 1, kind: input, shape index: {}]
  %s2 = inlined_call_operand.vmem [shape: f32[1,128], index: 2, kind: input, shape index: {}]
  %s3 = inlined_call_operand.vmem [shape: bf16[128,128], index: 3, kind: output, shape index: {}]
  %s4 = sld [smem:[#allocation0]]
  $region30: #{resunet_forward.43} parent=0
    _
  %s6 = ssub.s32 1, %s4
  %s7 = scalar_select 0, %s6, %s4
  // Predicated region
  $region2: #{resunet_forward.43} parent=0 // pred_check
    _
  $region3: #{resunet_forward.43} parent=0 // pred_check_branch
    %9 = sbr.rel (0) target = $region5
  $region4: #{resunet_forward.43} parent=0 // pred_region
    _
  $region5: #{resunet_forward.43} parent=0 // pred_fallthru
    _
  // Predicated region
  $region6: #{resunet_forward.43} parent=0 // pred_check
    _
  $region7: #{resunet_forward.43} parent=0 // pred_check_branch
    %11 = sbr.rel (0) target = $region9
  $region8: #{resunet_forward.43} parent=0 // pred_region
    _
  $region9: #{resunet_forward.43} parent=0 // pred_fallthru
    _
  // Predicated region
  $region10: #{resunet_forward.43} parent=0 // pred_check
    _
  $region11: #{resunet_forward.43} parent=0 // pred_check_branch
    %13 = sbr.rel (0) target = $region13
  $region12: #{resunet_forward.43} parent=0 // pred_region
    _
  $region13: #{resunet_forward.43} parent=0 // pred_fallthru
    _
  %p15 = scmp.eq.s32.totalorder 0, 0
  // Predicated region
  $region14: #{resunet_forward.43} parent=0 // pred_check
    %p16 = pneg %p15
  $region15: #{resunet_forward.43} parent=0 // pred_check_branch
    %18 = sbr.rel (%p16) target = $region17
  $region16: #{resunet_forward.43} parent=0 // pred_region
    %19 = vst [vmem:[#allocation2] sm:$0xff] 0.0
    %20 = vst [vmem:[#allocation2 + $0x8] sm:$0xff] 0.0
    %21 = vst [vmem:[#allocation2 + $0x10] sm:$0xff] 0.0
    %22 = vst [vmem:[#allocation2 + $0x18] sm:$0xff] 0.0
    %23 = vst [vmem:[#allocation2 + $0x20] sm:$0xff] 0.0
    %24 = vst [vmem:[#allocation2 + $0x28] sm:$0xff] 0.0
    %25 = vst [vmem:[#allocation2 + $0x30] sm:$0xff] 0.0
    %26 = vst [vmem:[#allocation2 + $0x38] sm:$0xff] 0.0
    %27 = vst [vmem:[#allocation2 + $0x40] sm:$0xff] 0.0
    %28 = vst [vmem:[#allocation2 + $0x48] sm:$0xff] 0.0
    %29 = vst [vmem:[#allocation2 + $0x50] sm:$0xff] 0.0
    %30 = vst [vmem:[#allocation2 + $0x58] sm:$0xff] 0.0
    %31 = vst [vmem:[#allocation2 + $0x60] sm:$0xff] 0.0
    %32 = vst [vmem:[#allocation2 + $0x68] sm:$0xff] 0.0
    %33 = vst [vmem:[#allocation2 + $0x70] sm:$0xff] 0.0
    %34 = vst [vmem:[#allocation2 + $0x78] sm:$0xff] 0.0
  $region17: #{resunet_forward.43} parent=0 // pred_fallthru
    _
  %v35 = vld [vmem:[#allocation2] sm:$0xff]
  %v36 = vld [vmem:[#allocation2 + $0x8] sm:$0xff]
  %v37 = vld [vmem:[#allocation2 + $0x10] sm:$0xff]
  %v38 = vld [vmem:[#allocation2 + $0x18] sm:$0xff]
  %v39 = vld [vmem:[#allocation2 + $0x20] sm:$0xff]
  %v40 = vld [vmem:[#allocation2 + $0x28] sm:$0xff]
  %v41 = vld [vmem:[#allocation2 + $0x30] sm:$0xff]
  %v42 = vld [vmem:[#allocation2 + $0x38] sm:$0xff]
  %v43 = vld [vmem:[#allocation2 + $0x40] sm:$0xff]
  %v44 = vld [vmem:[#allocation2 + $0x48] sm:$0xff]
  %v45 = vld [vmem:[#allocation2 + $0x50] sm:$0xff]
  %v46 = vld [vmem:[#allocation2 + $0x58] sm:$0xff]
  %v47 = vld [vmem:[#allocation2 + $0x60] sm:$0xff]
  %v48 = vld [vmem:[#allocation2 + $0x68] sm:$0xff]
  %v49 = vld [vmem:[#allocation2 + $0x70] sm:$0xff]
  %v50 = vld [vmem:[#allocation2 + $0x78] sm:$0xff]
  %v51 = vld [vmem:[%s0] sm:$0xff]
  %v52 = vld [vmem:[%s0 + $0x8] sm:$0xff]
  %v53 = vld [vmem:[%s0 + $0x10] sm:$0xff]
  %v54 = vld [vmem:[%s0 + $0x18] sm:$0xff]
  %v55 = vld [vmem:[%s0 + $0x20] sm:$0xff]
  %v56 = vld [vmem:[%s0 + $0x28] sm:$0xff]
  %v57 = vld [vmem:[%s0 + $0x30] sm:$0xff]
  %v58 = vld [vmem:[%s0 + $0x38] sm:$0xff]
  %v59 = vld [vmem:[%s0 + $0x40] sm:$0xff]
  %v60 = vld [vmem:[%s0 + $0x48] sm:$0xff]
  %v61 = vld [vmem:[%s0 + $0x50] sm:$0xff]
  %v62 = vld [vmem:[%s0 + $0x58] sm:$0xff]
  %v63 = vld [vmem:[%s0 + $0x60] sm:$0xff]
  %v64 = vld [vmem:[%s0 + $0x68] sm:$0xff]
  %v65 = vld [vmem:[%s0 + $0x70] sm:$0xff]
  %v66 = vld [vmem:[%s0 + $0x78] sm:$0xff]
  %v67 = vld [vmem:[%s0 + $0x80] sm:$0xff]
  %v68 = vld [vmem:[%s0 + $0x88] sm:$0xff]
  %v69 = vld [vmem:[%s0 + $0x90] sm:$0xff]
  %v70 = vld [vmem:[%s0 + $0x98] sm:$0xff]
  %v71 = vld [vmem:[%s0 + $0xa0] sm:$0xff]
  %v72 = vld [vmem:[%s0 + $0xa8] sm:$0xff]
  %v73 = vld [vmem:[%s0 + $0xb0] sm:$0xff]
  %v74 = vld [vmem:[%s0 + $0xb8] sm:$0xff]
  %v75 = vld [vmem:[%s0 + $0xc0] sm:$0xff]
  %v76 = vld [vmem:[%s0 + $0xc8] sm:$0xff]
  %v77 = vld [vmem:[%s0 + $0xd0] sm:$0xff]
  %v78 = vld [vmem:[%s0 + $0xd8] sm:$0xff]
  %v79 = vld [vmem:[%s0 + $0xe0] sm:$0xff]
  %v80 = vld [vmem:[%s0 + $0xe8] sm:$0xff]
  %v81 = vld [vmem:[%s0 + $0xf0] sm:$0xff]
  %v82 = vld [vmem:[%s0 + $0xf8] sm:$0xff]
  %v83 = vld [vmem:[%s1] sm:$0xf]
  %v84 = vld [vmem:[%s1 + $0x4] sm:$0xf]
  %v85 = vld [vmem:[%s1 + $0x8] sm:$0xf]
  %v86 = vld [vmem:[%s1 + $0xc] sm:$0xf]
  %v87 = vld [vmem:[%s1 + $0x10] sm:$0xf]
  %v88 = vld [vmem:[%s1 + $0x14] sm:$0xf]
  %v89 = vld [vmem:[%s1 + $0x18] sm:$0xf]
  %v90 = vld [vmem:[%s1 + $0x1c] sm:$0xf]
  %v91 = vld [vmem:[%s1 + $0x20] sm:$0xf]
  %v92 = vld [vmem:[%s1 + $0x24] sm:$0xf]
  %v93 = vld [vmem:[%s1 + $0x28] sm:$0xf]
  %v94 = vld [vmem:[%s1 + $0x2c] sm:$0xf]
  %v95 = vld [vmem:[%s1 + $0x30] sm:$0xf]
  %v96 = vld [vmem:[%s1 + $0x34] sm:$0xf]
  %v97 = vld [vmem:[%s1 + $0x38] sm:$0xf]
  %v98 = vld [vmem:[%s1 + $0x3c] sm:$0xf]
  %v99 = vld [vmem:[%s1 + $0x40] sm:$0xf]
  %v100 = vld [vmem:[%s1 + $0x44] sm:$0xf]
  %v101 = vld [vmem:[%s1 + $0x48] sm:$0xf]
  %v102 = vld [vmem:[%s1 + $0x4c] sm:$0xf]
  %v103 = vld [vmem:[%s1 + $0x50] sm:$0xf]
  %v104 = vld [vmem:[%s1 + $0x54] sm:$0xf]
  %v105 = vld [vmem:[%s1 + $0x58] sm:$0xf]
  %v106 = vld [vmem:[%s1 + $0x5c] sm:$0xf]
  %v107 = vld [vmem:[%s1 + $0x60] sm:$0xf]
  %v108 = vld [vmem:[%s1 + $0x64] sm:$0xf]
  %v109 = vld [vmem:[%s1 + $0x68] sm:$0xf]
  %v110 = vld [vmem:[%s1 + $0x6c] sm:$0xf]
  %v111 = vld [vmem:[%s1 + $0x70] sm:$0xf]
  %v112 = vld [vmem:[%s1 + $0x74] sm:$0xf]
  %v113 = vld [vmem:[%s1 + $0x78] sm:$0xf]
  %v114 = vld [vmem:[%s1 + $0x7c] sm:$0xf]
  %v115 = vld [vmem:[%s1 + $0x80] sm:$0xf]
  %v116 = vld [vmem:[%s1 + $0x84] sm:$0xf]
  %v117 = vld [vmem:[%s1 + $0x88] sm:$0xf]
  %v118 = vld [vmem:[%s1 + $0x8c] sm:$0xf]
  %v119 = vld [vmem:[%s1 + $0x90] sm:$0xf]
  %v120 = vld [vmem:[%s1 + $0x94] sm:$0xf]
  %v121 = vld [vmem:[%s1 + $0x98] sm:$0xf]
  %v122 = vld [vmem:[%s1 + $0x9c] sm:$0xf]
  %v123 = vld [vmem:[%s1 + $0xa0] sm:$0xf]
  %v124 = vld [vmem:[%s1 + $0xa4] sm:$0xf]
  %v125 = vld [vmem:[%s1 + $0xa8] sm:$0xf]
  %v126 = vld [vmem:[%s1 + $0xac] sm:$0xf]
  %v127 = vld [vmem:[%s1 + $0xb0] sm:$0xf]
  %v128 = vld [vmem:[%s1 + $0xb4] sm:$0xf]
  %v129 = vld [vmem:[%s1 + $0xb8] sm:$0xf]
  %v130 = vld [vmem:[%s1 + $0xbc] sm:$0xf]
  %v131 = vld [vmem:[%s1 + $0xc0] sm:$0xf]
  %v132 = vld [vmem:[%s1 + $0xc4] sm:$0xf]
  %v133 = vld [vmem:[%s1 + $0xc8] sm:$0xf]
  %v134 = vld [vmem:[%s1 + $0xcc] sm:$0xf]
  %v135 = vld [vmem:[%s1 + $0xd0] sm:$0xf]
  %v136 = vld [vmem:[%s1 + $0xd4] sm:$0xf]
  %v169 = vunpack.c.l.b16 %v51
  %v170 = vunpack.c.h.b16 %v51
  %v171 = vunpack.c.l.b16 %v52
  %v172 = vunpack.c.h.b16 %v52
  %v173 = vunpack.c.l.b16 %v53
  %v174 = vunpack.c.h.b16 %v53
  %v175 = vunpack.c.l.b16 %v54
  %v176 = vunpack.c.h.b16 %v54
  %v177 = vunpack.c.l.b16 %v55
  %v178 = vunpack.c.h.b16 %v55
  %v179 = vunpack.c.l.b16 %v56
  %v180 = vunpack.c.h.b16 %v56
  %v181 = vunpack.c.l.b16 %v57
  %v182 = vunpack.c.h.b16 %v57
  %v183 = vunpack.c.l.b16 %v58
  %v184 = vunpack.c.h.b16 %v58
  %v185 = vunpack.c.l.b16 %v59
  %v186 = vunpack.c.h.b16 %v59
  %v187 = vunpack.c.l.b16 %v60
  %v188 = vunpack.c.h.b16 %v60
  %v189 = vunpack.c.l.b16 %v61
  %v190 = vunpack.c.h.b16 %v61
  %v191 = vunpack.c.l.b16 %v62
  %v192 = vunpack.c.h.b16 %v62
  %v193 = vunpack.c.l.b16 %v63
  %v194 = vunpack.c.h.b16 %v63
  %v195 = vunpack.c.l.b16 %v64
  %v196 = vunpack.c.h.b16 %v64
  %v197 = vunpack.c.l.b16 %v65
  %v198 = vunpack.c.h.b16 %v65
  %v199 = vunpack.c.l.b16 %v66
  %v200 = vunpack.c.h.b16 %v66
  %v201 = vunpack.c.l.b16 %v67
  %v202 = vunpack.c.h.b16 %v67
  %v203 = vunpack.c.l.b16 %v68
  %v204 = vunpack.c.h.b16 %v68
  %v205 = vunpack.c.l.b16 %v69
  %v206 = vunpack.c.h.b16 %v69
  %v207 = vunpack.c.l.b16 %v70
  %v208 = vunpack.c.h.b16 %v70
  %v209 = vunpack.c.l.b16 %v71
  %v210 = vunpack.c.h.b16 %v71
  %v211 = vunpack.c.l.b16 %v72
  %v212 = vunpack.c.h.b16 %v72
  %v213 = vunpack.c.l.b16 %v73
  %v214 = vunpack.c.h.b16 %v73
  %v215 = vunpack.c.l.b16 %v74
  %v216 = vunpack.c.h.b16 %v74
  %v217 = vunpack.c.l.b16 %v75
  %v218 = vunpack.c.h.b16 %v75
  %v219 = vunpack.c.l.b16 %v76
  %v220 = vunpack.c.h.b16 %v76
  %v221 = vunpack.c.l.b16 %v77
  %v222 = vunpack.c.h.b16 %v77
  %v223 = vunpack.c.l.b16 %v78
  %v224 = vunpack.c.h.b16 %v78
  %v225 = vunpack.c.l.b16 %v79
  %v226 = vunpack.c.h.b16 %v79
  %v227 = vunpack.c.l.b16 %v80
  %v228 = vunpack.c.h.b16 %v80
  %v229 = vunpack.c.l.b16 %v81
  %v230 = vunpack.c.h.b16 %v81
  %v231 = vunpack.c.l.b16 %v82
  %v232 = vunpack.c.h.b16 %v82
  %v233 = vpack.c.b16 %v173, %v169
  %v234 = vpack.c.b16 %v174, %v170
  %v235 = vpack.c.b16 %v175, %v171
  %v236 = vpack.c.b16 %v176, %v172
  %v237 = vpack.c.b16 %v181, %v177
  %v238 = vpack.c.b16 %v182, %v178
  %v239 = vpack.c.b16 %v183, %v179
  %v240 = vpack.c.b16 %v184, %v180
  %v241 = vpack.c.b16 %v189, %v185
  %v242 = vpack.c.b16 %v190, %v186
  %v243 = vpack.c.b16 %v191, %v187
  %v244 = vpack.c.b16 %v192, %v188
  %v245 = vpack.c.b16 %v197, %v193
  %v246 = vpack.c.b16 %v198, %v194
  %v247 = vpack.c.b16 %v199, %v195
  %v248 = vpack.c.b16 %v200, %v196
  %v249 = vpack.c.b16 %v205, %v201
  %v250 = vpack.c.b16 %v206, %v202
  %v251 = vpack.c.b16 %v207, %v203
  %v252 = vpack.c.b16 %v208, %v204
  %v253 = vpack.c.b16 %v213, %v209
  %v254 = vpack.c.b16 %v214, %v210
  %v255 = vpack.c.b16 %v215, %v211
  %v256 = vpack.c.b16 %v216, %v212
  %v257 = vpack.c.b16 %v221, %v217
  %v258 = vpack.c.b16 %v222, %v218
  %v259 = vpack.c.b16 %v223, %v219
  %v260 = vpack.c.b16 %v224, %v220
  %v261 = vpack.c.b16 %v229, %v225
  %v262 = vpack.c.b16 %v230, %v226
  %v263 = vpack.c.b16 %v231, %v227
  %v264 = vpack.c.b16 %v232, %v228
  %v343 = vunpack.c.l.b16 %v83
  %v344 = vunpack.c.l.b16 %v84
  %v345 = vunpack.c.l.b16 %v85
  %v346 = vunpack.c.l.b16 %v86
  %v347 = vunpack.c.l.b16 %v87
  %v348 = vunpack.c.l.b16 %v88
  %v349 = vunpack.c.l.b16 %v89
  %v350 = vunpack.c.l.b16 %v90
  %v351 = vunpack.c.l.b16 %v91
  %v352 = vunpack.c.l.b16 %v92
  %v353 = vunpack.c.l.b16 %v93
  %v354 = vunpack.c.l.b16 %v94
  %v355 = vunpack.c.l.b16 %v95
  %v356 = vunpack.c.l.b16 %v96
  %v357 = vunpack.c.l.b16 %v97
  %v358 = vunpack.c.l.b16 %v98
  %v359 = vunpack.c.l.b16 %v99
  %v360 = vunpack.c.l.b16 %v100
  %v361 = vunpack.c.l.b16 %v101
  %v362 = vunpack.c.l.b16 %v102
  %v363 = vunpack.c.l.b16 %v103
  %v364 = vunpack.c.l.b16 %v104
  %v365 = vunpack.c.l.b16 %v105
  %v366 = vunpack.c.l.b16 %v106
  %v367 = vunpack.c.l.b16 %v107
  %v368 = vunpack.c.l.b16 %v108
  %v369 = vunpack.c.l.b16 %v109
  %v370 = vunpack.c.l.b16 %v110
  %v371 = vunpack.c.l.b16 %v111
  %v372 = vunpack.c.l.b16 %v112
  %v373 = vunpack.c.l.b16 %v113
  %v374 = vunpack.c.l.b16 %v114
  %v375 = vunpack.c.l.b16 %v115
  %v376 = vunpack.c.l.b16 %v116
  %v377 = vunpack.c.l.b16 %v117
  %v378 = vunpack.c.l.b16 %v118
  %v379 = vunpack.c.l.b16 %v119
  %v380 = vunpack.c.l.b16 %v120
  %v381 = vunpack.c.l.b16 %v121
  %v382 = vunpack.c.l.b16 %v122
  %v383 = vunpack.c.l.b16 %v123
  %v384 = vunpack.c.l.b16 %v124
  %v385 = vunpack.c.l.b16 %v125
  %v386 = vunpack.c.l.b16 %v126
  %v387 = vunpack.c.l.b16 %v127
  %v388 = vunpack.c.l.b16 %v128
  %v389 = vunpack.c.l.b16 %v129
  %v390 = vunpack.c.l.b16 %v130
  %v391 = vunpack.c.l.b16 %v131
  %v392 = vunpack.c.l.b16 %v132
  %v393 = vunpack.c.l.b16 %v133
  %v394 = vunpack.c.l.b16 %v134
  %v395 = vunpack.c.l.b16 %v135
  %v396 = vunpack.c.l.b16 %v136
  %v397 = vpack.c.b16 %v344, %v343
  %v398 = vpack.c.b16 %v346, %v345
  %v399 = vpack.c.b16 %v348, %v347
  %v400 = vpack.c.b16 %v350, %v349
  %v401 = vpack.c.b16 %v352, %v351
  %v402 = vpack.c.b16 %v354, %v353
  %v403 = vpack.c.b16 %v356, %v355
  %v404 = vpack.c.b16 %v358, %v357
  %v405 = vpack.c.b16 %v360, %v359
  %v406 = vpack.c.b16 %v362, %v361
  %v407 = vpack.c.b16 %v364, %v363
  %v408 = vpack.c.b16 %v366, %v365
  %v409 = vpack.c.b16 %v368, %v367
  %v410 = vpack.c.b16 %v370, %v369
  %v411 = vpack.c.b16 %v372, %v371
  %v412 = vpack.c.b16 %v374, %v373
  %v413 = vpack.c.b16 %v376, %v375
  %v414 = vpack.c.b16 %v378, %v377
  %v415 = vpack.c.b16 %v380, %v379
  %v416 = vpack.c.b16 %v382, %v381
  %v417 = vpack.c.b16 %v384, %v383
  %v418 = vpack.c.b16 %v386, %v385
  %v419 = vpack.c.b16 %v388, %v387
  %v420 = vpack.c.b16 %v390, %v389
  %v421 = vpack.c.b16 %v392, %v391
  %v422 = vpack.c.b16 %v394, %v393
  %v423 = vpack.c.b16 %v396, %v395
  %vm451 = vcmask 392192
  %v453 = vsel %vm451, %v236, 0
  %v456 = vsel %vm451, %v240, 0
  %v459 = vsel %vm451, %v244, 0
  %v462 = vsel %vm451, %v248, 0
  %v465 = vsel %vm451, %v252, 0
  %v468 = vsel %vm451, %v256, 0
  %v471 = vsel %vm451, %v260, 0
  %v474 = vsel %vm451, %v264, 0
  %476 = vmatprep.subr.bf16.mxu0 0
  %477 = vmatpush1.bf16.msra.mxu0 %v397
  %478 = vmatprep.subr.bf16.mxu0 0
  %479 = vmatpush1.bf16.msra.mxu0 %v398
  %480 = vmatprep.subr.bf16.mxu0 0
  %481 = vmatpush1.bf16.msra.mxu0 %v399
  %482 = vmatprep.subr.bf16.mxu0 0
  %483 = vmatpush1.bf16.msra.mxu0 %v400
  %484 = vmatprep.subr.bf16.mxu0 0
  %485 = vmatpush1.bf16.msra.mxu0 %v401
  %486 = vmatprep.subr.bf16.mxu0 0
  %487 = vmatpush1.bf16.msra.mxu0 %v402
  %488 = vmatprep.subr.bf16.mxu0 0
  %489 = vmatpush1.bf16.msra.mxu0 %v403
  %490 = vmatprep.subr.bf16.mxu0 0
  %491 = vmatpush1.bf16.msra.mxu0 %v404
  %492 = vmatprep.subr.bf16.mxu0 0
  %493 = vmatpush1.bf16.msra.mxu0 %v405
  %494 = vmatprep.subr.bf16.mxu0 0
  %495 = vmatpush1.bf16.msra.mxu0 %v406
  %496 = vmatprep.subr.bf16.mxu0 0
  %497 = vmatpush1.bf16.msra.mxu0 %v407
  %498 = vmatprep.subr.bf16.mxu0 0
  %499 = vmatpush1.bf16.msra.mxu0 %v408
  %500 = vmatprep.subr.bf16.mxu0 0
  %501 = vmatpush1.bf16.msra.mxu0 %v409
  %502 = vmatprep.subr.bf16.mxu0 0
  %503 = vmatpush1.bf16.msra.mxu0 %v410
  %504 = vmatprep.subr.bf16.mxu0 0
  %505 = vmatpush1.bf16.msra.mxu0 %v411
  %506 = vmatprep.subr.bf16.mxu0 0
  %507 = vmatpush1.bf16.msra.mxu0 %v412
  %508 = vmatprep.mubr.bf16.mxu0 %v234
  %509 = vmatmul.mubr.bf16.gmra.mrb[0].mxu0 %v233
  %v510 = vpop.f32.mrb[0].mxu0
  %v511 = vadd.f32 0.0, %v510
  %v512 = vpop.f32.mrb[0].mxu0
  %v513 = vpop.f32.mrb[0].mxu0
  %v514 = vadd.f32 0.0, %v513
  %v515 = vpop.f32.mrb[0].mxu0
  %516 = vmatprep.mubr.bf16.mxu0 %v238
  %517 = vmatmul.mubr.bf16.gmra.mrb[0].mxu0 %v237
  %v518 = vpop.f32.mrb[0].mxu0
  %v519 = vadd.f32 0.0, %v518
  %v520 = vpop.f32.mrb[0].mxu0
  %v521 = vpop.f32.mrb[0].mxu0
  %v522 = vadd.f32 0.0, %v521
  %v523 = vpop.f32.mrb[0].mxu0
  %524 = vmatprep.mubr.bf16.mxu0 %v242
  %525 = vmatmul.mubr.bf16.gmra.mrb[0].mxu0 %v241
  %v526 = vpop.f32.mrb[0].mxu0
  %v527 = vadd.f32 0.0, %v526
  %v528 = vpop.f32.mrb[0].mxu0
  %v529 = vpop.f32.mrb[0].mxu0
  %v530 = vadd.f32 0.0, %v529
  %v531 = vpop.f32.mrb[0].mxu0
  %532 = vmatprep.mubr.bf16.mxu0 %v246
  %533 = vmatmul.mubr.bf16.gmra.mrb[0].mxu0 %v245
  %v534 = vpop.f32.mrb[0].mxu0
  %v535 = vadd.f32 0.0, %v534
  %v536 = vpop.f32.mrb[0].mxu0
  %v537 = vpop.f32.mrb[0].mxu0
  %v538 = vadd.f32 0.0, %v537
  %v539 = vpop.f32.mrb[0].mxu0
  %540 = vmatprep.mubr.bf16.mxu0 %v250
  %541 = vmatmul.mubr.bf16.gmra.mrb[0].mxu0 %v249
  %v542 = vpop.f32.mrb[0].mxu0
  %v543 = vadd.f32 0.0, %v542
  %v544 = vpop.f32.mrb[0].mxu0
  %v545 = vpop.f32.mrb[0].mxu0
  %v546 = vadd.f32 0.0, %v545
  %v547 = vpop.f32.mrb[0].mxu0
  %548 = vmatprep.mubr.bf16.mxu0 %v254
  %549 = vmatmul.mubr.bf16.gmra.mrb[0].mxu0 %v253
  %v550 = vpop.f32.mrb[0].mxu0
  %v551 = vadd.f32 0.0, %v550
  %v552 = vpop.f32.mrb[0].mxu0
  %v553 = vpop.f32.mrb[0].mxu0
  %v554 = vadd.f32 0.0, %v553
  %v555 = vpop.f32.mrb[0].mxu0
  %556 = vmatprep.mubr.bf16.mxu0 %v258
  %557 = vmatmul.mubr.bf16.gmra.mrb[0].mxu0 %v257
  %v558 = vpop.f32.mrb[0].mxu0
  %v559 = vadd.f32 0.0, %v558
  %v560 = vpop.f32.mrb[0].mxu0
  %v561 = vpop.f32.mrb[0].mxu0
  %v562 = vadd.f32 0.0, %v561
  %v563 = vpop.f32.mrb[0].mxu0
  %564 = vmatprep.mubr.bf16.mxu0 %v262
  %565 = vmatmul.mubr.bf16.gmra.mrb[0].mxu0 %v261
  %v566 = vpop.f32.mrb[0].mxu0
  %v567 = vadd.f32 0.0, %v566
  %v568 = vpop.f32.mrb[0].mxu0
  %v569 = vpop.f32.mrb[0].mxu0
  %v570 = vadd.f32 0.0, %v569
  %v571 = vpop.f32.mrb[0].mxu0
  %572 = vdwg.mxu0
  %573 = vmatprep.subr.bf16.mxu0 0
  %574 = vmatpush1.bf16.msra.mxu0 %v413
  %575 = vmatprep.subr.bf16.mxu0 0
  %576 = vmatpush1.bf16.msra.mxu0 %v414
  %577 = vmatprep.subr.bf16.mxu0 0
  %578 = vmatpush1.bf16.msra.mxu0 %v415
  %579 = vmatprep.subr.bf16.mxu0 0
  %580 = vmatpush1.bf16.msra.mxu0 %v416
  %581 = vmatprep.subr.bf16.mxu0 0
  %582 = vmatpush1.bf16.msra.mxu0 %v417
  %583 = vmatprep.subr.bf16.mxu0 0
  %584 = vmatpush1.bf16.msra.mxu0 %v418
  %585 = vmatprep.subr.bf16.mxu0 0
  %586 = vmatpush1.bf16.msra.mxu0 %v419
  %587 = vmatprep.subr.bf16.mxu0 0
  %588 = vmatpush1.bf16.msra.mxu0 %v420
  %589 = vmatprep.subr.bf16.mxu0 0
  %590 = vmatpush1.bf16.msra.mxu0 %v421
  %591 = vmatprep.subr.bf16.mxu0 0
  %592 = vmatpush1.bf16.msra.mxu0 %v422
  %593 = vmatprep.subr.bf16.mxu0 0
  %594 = vmatpush1.bf16.msra.mxu0 %v423
  %595 = vmatprep.subr.bf16.mxu0 0
  %596 = vmatpush1.bf16.msra.mxu0 0
  %597 = vmatprep.subr.bf16.mxu0 0
  %598 = vmatpush1.bf16.msra.mxu0 0
  %599 = vmatprep.subr.bf16.mxu0 0
  %600 = vmatpush1.bf16.msra.mxu0 0
  %601 = vmatprep.subr.bf16.mxu0 0
  %602 = vmatpush1.bf16.msra.mxu0 0
  %603 = vmatprep.subr.bf16.mxu0 0
  %604 = vmatpush1.bf16.msra.mxu0 0
  %605 = vmatprep.mubr.bf16.mxu0 %v453
  %606 = vmatmul.mubr.bf16.gmra.mrb[0].mxu0 %v235
  %v607 = vpop.f32.mrb[0].mxu0
  %v608 = vadd.f32 %v511, %v607
  %v609 = vpop.f32.mrb[0].mxu0
  %v610 = vpop.f32.mrb[0].mxu0
  %v611 = vadd.f32 %v514, %v610
  %v612 = vpop.f32.mrb[0].mxu0
  %613 = vmatprep.mubr.bf16.mxu0 %v456
  %614 = vmatmul.mubr.bf16.gmra.mrb[0].mxu0 %v239
  %v615 = vpop.f32.mrb[0].mxu0
  %v616 = vadd.f32 %v519, %v615
  %v617 = vpop.f32.mrb[0].mxu0
  %v618 = vpop.f32.mrb[0].mxu0
  %v619 = vadd.f32 %v522, %v618
  %v620 = vpop.f32.mrb[0].mxu0
  %621 = vmatprep.mubr.bf16.mxu0 %v459
  %622 = vmatmul.mubr.bf16.gmra.mrb[0].mxu0 %v243
  %v623 = vpop.f32.mrb[0].mxu0
  %v624 = vadd.f32 %v527, %v623
  %v625 = vpop.f32.mrb[0].mxu0
  %v626 = vpop.f32.mrb[0].mxu0
  %v627 = vadd.f32 %v530, %v626
  %v628 = vpop.f32.mrb[0].mxu0
  %629 = vmatprep.mubr.bf16.mxu0 %v462
  %630 = vmatmul.mubr.bf16.gmra.mrb[0].mxu0 %v247
  %v631 = vpop.f32.mrb[0].mxu0
  %v632 = vadd.f32 %v535, %v631
  %v633 = vpop.f32.mrb[0].mxu0
  %v634 = vpop.f32.mrb[0].mxu0
  %v635 = vadd.f32 %v538, %v634
  %v636 = vpop.f32.mrb[0].mxu0
  %637 = vmatprep.mubr.bf16.mxu0 %v465
  %638 = vmatmul.mubr.bf16.gmra.mrb[0].mxu0 %v251
  %v639 = vpop.f32.mrb[0].mxu0
  %v640 = vadd.f32 %v543, %v639
  %v641 = vpop.f32.mrb[0].mxu0
  %v642 = vpop.f32.mrb[0].mxu0
  %v643 = vadd.f32 %v546, %v642
  %v644 = vpop.f32.mrb[0].mxu0
  %645 = vmatprep.mubr.bf16.mxu0 %v468
  %646 = vmatmul.mubr.bf16.gmra.mrb[0].mxu0 %v255
  %v647 = vpop.f32.mrb[0].mxu0
  %v648 = vadd.f32 %v551, %v647
  %v649 = vpop.f32.mrb[0].mxu0
  %v650 = vpop.f32.mrb[0].mxu0
  %v651 = vadd.f32 %v554, %v650
  %v652 = vpop.f32.mrb[0].mxu0
  %653 = vmatprep.mubr.bf16.mxu0 %v471
  %654 = vmatmul.mubr.bf16.gmra.mrb[0].mxu0 %v259
  %v655 = vpop.f32.mrb[0].mxu0
  %v656 = vadd.f32 %v559, %v655
  %v657 = vpop.f32.mrb[0].mxu0
  %v658 = vpop.f32.mrb[0].mxu0
  %v659 = vadd.f32 %v562, %v658
  %v660 = vpop.f32.mrb[0].mxu0
  %661 = vmatprep.mubr.bf16.mxu0 %v474
  %662 = vmatmul.mubr.bf16.gmra.mrb[0].mxu0 %v263
  %v663 = vpop.f32.mrb[0].mxu0
  %v664 = vadd.f32 %v567, %v663
  %v665 = vpop.f32.mrb[0].mxu0
  %v666 = vpop.f32.mrb[0].mxu0
  %v667 = vadd.f32 %v570, %v666
  %v668 = vpop.f32.mrb[0].mxu0
  %669 = vdwg.mxu0
  %v670 = vadd.f32 %v35, %v608
  %v671 = vadd.f32 %v36, %v611
  %v672 = vadd.f32 %v37, %v616
  %v673 = vadd.f32 %v38, %v619
  %v674 = vadd.f32 %v39, %v624
  %v675 = vadd.f32 %v40, %v627
  %v676 = vadd.f32 %v41, %v632
  %v677 = vadd.f32 %v42, %v635
  %v678 = vadd.f32 %v43, %v640
  %v679 = vadd.f32 %v44, %v643
  %v680 = vadd.f32 %v45, %v648
  %v681 = vadd.f32 %v46, %v651
  %v682 = vadd.f32 %v47, %v656
  %v683 = vadd.f32 %v48, %v659
  %v684 = vadd.f32 %v49, %v664
  %v685 = vadd.f32 %v50, %v667
  %686 = vst [vmem:[#allocation2] sm:$0xff] %v670
  %687 = vst [vmem:[#allocation2 + $0x8] sm:$0xff] %v671
  %688 = vst [vmem:[#allocation2 + $0x10] sm:$0xff] %v672
  %689 = vst [vmem:[#allocation2 + $0x18] sm:$0xff] %v673
  %690 = vst [vmem:[#allocation2 + $0x20] sm:$0xff] %v674
  %691 = vst [vmem:[#allocation2 + $0x28] sm:$0xff] %v675
  %692 = vst [vmem:[#allocation2 + $0x30] sm:$0xff] %v676
  %693 = vst [vmem:[#allocation2 + $0x38] sm:$0xff] %v677
  %694 = vst [vmem:[#allocation2 + $0x40] sm:$0xff] %v678
  %695 = vst [vmem:[#allocation2 + $0x48] sm:$0xff] %v679
  %696 = vst [vmem:[#allocation2 + $0x50] sm:$0xff] %v680
  %697 = vst [vmem:[#allocation2 + $0x58] sm:$0xff] %v681
  %698 = vst [vmem:[#allocation2 + $0x60] sm:$0xff] %v682
  %699 = vst [vmem:[#allocation2 + $0x68] sm:$0xff] %v683
  %700 = vst [vmem:[#allocation2 + $0x70] sm:$0xff] %v684
  %701 = vst [vmem:[#allocation2 + $0x78] sm:$0xff] %v685
  // Predicated region
  $region18: #{resunet_forward.43} parent=0 // pred_check
    %p702 = pneg %p15
  $region19: #{resunet_forward.43} parent=0 // pred_check_branch
    %704 = sbr.rel (%p702) target = $region21
  $region20: #{resunet_forward.43} parent=0 // pred_region
    %v705 = vld [vmem:[#allocation2] sm:$0xff]
    %v706 = vld [vmem:[#allocation2 + $0x8] sm:$0xff]
    %v707 = vld [vmem:[#allocation2 + $0x10] sm:$0xff]
    %v708 = vld [vmem:[#allocation2 + $0x18] sm:$0xff]
    %v709 = vld [vmem:[#allocation2 + $0x20] sm:$0xff]
    %v710 = vld [vmem:[#allocation2 + $0x28] sm:$0xff]
    %v711 = vld [vmem:[#allocation2 + $0x30] sm:$0xff]
    %v712 = vld [vmem:[#allocation2 + $0x38] sm:$0xff]
    %v713 = vld [vmem:[#allocation2 + $0x40] sm:$0xff]
    %v714 = vld [vmem:[#allocation2 + $0x48] sm:$0xff]
    %v715 = vld [vmem:[#allocation2 + $0x50] sm:$0xff]
    %v716 = vld [vmem:[#allocation2 + $0x58] sm:$0xff]
    %v717 = vld [vmem:[#allocation2 + $0x60] sm:$0xff]
    %v718 = vld [vmem:[#allocation2 + $0x68] sm:$0xff]
    %v719 = vld [vmem:[#allocation2 + $0x70] sm:$0xff]
    %v720 = vld [vmem:[#allocation2 + $0x78] sm:$0xff]
    %v721 = vld [vmem:[%s2] sm:$0x1]
    %v723 = vlaneseq
    %v724 = vshrl.u32 %v723, 7
    %v725 = vsub.s32 0, %v724
    %v726 = vrot.slane %v721, %v725
    %v728 = vadd.f32 %v705, %v726
    %v729 = vadd.f32 %v706, %v726
    %v730 = vadd.f32 %v707, %v726
    %v731 = vadd.f32 %v708, %v726
    %v732 = vadd.f32 %v709, %v726
    %v733 = vadd.f32 %v710, %v726
    %v734 = vadd.f32 %v711, %v726
    %v735 = vadd.f32 %v712, %v726
    %v736 = vadd.f32 %v713, %v726
    %v737 = vadd.f32 %v714, %v726
    %v738 = vadd.f32 %v715, %v726
    %v739 = vadd.f32 %v716, %v726
    %v740 = vadd.f32 %v717, %v726
    %v741 = vadd.f32 %v718, %v726
    %v742 = vadd.f32 %v719, %v726
    %v743 = vadd.f32 %v720, %v726
    %v744 = vpack.c.bf16 %v729, %v728
    %v745 = vpack.c.bf16 %v731, %v730
    %v746 = vpack.c.bf16 %v733, %v732
    %v747 = vpack.c.bf16 %v735, %v734
    %v748 = vpack.c.bf16 %v737, %v736
    %v749 = vpack.c.bf16 %v739, %v738
    %v750 = vpack.c.bf16 %v741, %v740
    %v751 = vpack.c.bf16 %v743, %v742
    %v760 = vunpack.c.l.b16 %v744
    %v761 = vunpack.c.h.b16 %v744
    %v762 = vunpack.c.l.b16 %v745
    %v763 = vunpack.c.h.b16 %v745
    %v764 = vunpack.c.l.b16 %v746
    %v765 = vunpack.c.h.b16 %v746
    %v766 = vunpack.c.l.b16 %v747
    %v767 = vunpack.c.h.b16 %v747
    %v768 = vunpack.c.l.b16 %v748
    %v769 = vunpack.c.h.b16 %v748
    %v770 = vunpack.c.l.b16 %v749
    %v771 = vunpack.c.h.b16 %v749
    %v772 = vunpack.c.l.b16 %v750
    %v773 = vunpack.c.h.b16 %v750
    %v774 = vunpack.c.l.b16 %v751
    %v775 = vunpack.c.h.b16 %v751
    %v776 = vpack.c.b16 %v760, %v760
    %v777 = vpack.c.b16 %v761, %v761
    %v778 = vpack.c.b16 %v762, %v762
    %v779 = vpack.c.b16 %v763, %v763
    %v780 = vpack.c.b16 %v764, %v764
    %v781 = vpack.c.b16 %v765, %v765
    %v782 = vpack.c.b16 %v766, %v766
    %v783 = vpack.c.b16 %v767, %v767
    %v784 = vpack.c.b16 %v768, %v768
    %v785 = vpack.c.b16 %v769, %v769
    %v786 = vpack.c.b16 %v770, %v770
    %v787 = vpack.c.b16 %v771, %v771
    %v788 = vpack.c.b16 %v772, %v772
    %v789 = vpack.c.b16 %v773, %v773
    %v790 = vpack.c.b16 %v774, %v774
    %v791 = vpack.c.b16 %v775, %v775
    %808 = vst [vmem:[%s3] sm:$0xf] %v776
    %809 = vst [vmem:[%s3 + $0x4] sm:$0xf] %v777
    %810 = vst [vmem:[%s3 + $0x8] sm:$0xf] %v778
    %811 = vst [vmem:[%s3 + $0xc] sm:$0xf] %v779
    %812 = vst [vmem:[%s3 + $0x10] sm:$0xf] %v780
    %813 = vst [vmem:[%s3 + $0x14] sm:$0xf] %v781
    %814 = vst [vmem:[%s3 + $0x18] sm:$0xf] %v782
    %815 = vst [vmem:[%s3 + $0x1c] sm:$0xf] %v783
    %816 = vst [vmem:[%s3 + $0x20] sm:$0xf] %v784
    %817 = vst [vmem:[%s3 + $0x24] sm:$0xf] %v785
    %818 = vst [vmem:[%s3 + $0x28] sm:$0xf] %v786
    %819 = vst [vmem:[%s3 + $0x2c] sm:$0xf] %v787
    %820 = vst [vmem:[%s3 + $0x30] sm:$0xf] %v788
    %821 = vst [vmem:[%s3 + $0x34] sm:$0xf] %v789
    %822 = vst [vmem:[%s3 + $0x38] sm:$0xf] %v790
    %823 = vst [vmem:[%s3 + $0x3c] sm:$0xf] %v791
  $region21: #{resunet_forward.43} parent=0 // pred_fallthru
    _
  // Predicated region
  $region22: #{resunet_forward.43} parent=0 // pred_check
    _
  $region23: #{resunet_forward.43} parent=0 // pred_check_branch
    %825 = sbr.rel (0) target = $region25
  $region24: #{resunet_forward.43} parent=0 // pred_region
    _
  $region25: #{resunet_forward.43} parent=0 // pred_fallthru
    _
  // Predicated region
  $region26: #{resunet_forward.43} parent=0 // pred_check
    _
  $region27: #{resunet_forward.43} parent=0 // pred_check_branch
    %827 = sbr.rel (0) target = $region29
  $region28: #{resunet_forward.43} parent=0 // pred_region
    _
  $region29: #{resunet_forward.43} parent=0 // pred_fallthru
    _

// kernel: resunet_forward.45
$region0: #{resunet_forward.45}
  #allocation0 [shape = 'u32[]', space=smem, size = 0x4, offset = 0x4, fixed_abs, tag = 'smem constant byte address 0x4 - core index']
  #allocation1 [shape = 'u32[144,128]{1,0:T(1,128)}', space=vmem, size = 0x12000, scoped, tag = 'internal scratch']
  %s0 = inlined_call_operand.vmem [shape: bf16[16,8,16], index: 0, kind: input, shape index: {}]
  %s1 = inlined_call_operand.vmem [shape: bf16[2,16,128], index: 1, kind: input, shape index: {}]
  %s2 = inlined_call_operand.vmem [shape: f32[1,128], index: 2, kind: input, shape index: {}]
  %s3 = inlined_call_operand.vmem [shape: bf16[16,2,8,128], index: 3, kind: output, shape index: {}]
  %s4 = sld [smem:[#allocation0]]
  $region22: #{resunet_forward.45} parent=0
    _
  %s6 = ssub.s32 1, %s4
  %s7 = scalar_select 0, %s6, %s4
  // Predicated region
  $region2: #{resunet_forward.45} parent=0 // pred_check
    _
  $region3: #{resunet_forward.45} parent=0 // pred_check_branch
    %9 = sbr.rel (0) target = $region5
  $region4: #{resunet_forward.45} parent=0 // pred_region
    _
  $region5: #{resunet_forward.45} parent=0 // pred_fallthru
    _
  // Predicated region
  $region6: #{resunet_forward.45} parent=0 // pred_check
    _
  $region7: #{resunet_forward.45} parent=0 // pred_check_branch
    %11 = sbr.rel (0) target = $region9
  $region8: #{resunet_forward.45} parent=0 // pred_region
    _
  $region9: #{resunet_forward.45} parent=0 // pred_fallthru
    _
  // Predicated region
  $region10: #{resunet_forward.45} parent=0 // pred_check
    _
  $region11: #{resunet_forward.45} parent=0 // pred_check_branch
    %13 = sbr.rel (0) target = $region13
  $region12: #{resunet_forward.45} parent=0 // pred_region
    _
  $region13: #{resunet_forward.45} parent=0 // pred_fallthru
    _
  %v15 = vld [vmem:[%s0] sm:$0xf]
  %v16 = vld [vmem:[%s0 + $0x4] sm:$0xf]
  %v17 = vld [vmem:[%s0 + $0x8] sm:$0xf]
  %v18 = vld [vmem:[%s0 + $0xc] sm:$0xf]
  %v19 = vld [vmem:[%s0 + $0x10] sm:$0xf]
  %v20 = vld [vmem:[%s0 + $0x14] sm:$0xf]
  %v21 = vld [vmem:[%s0 + $0x18] sm:$0xf]
  %v22 = vld [vmem:[%s0 + $0x1c] sm:$0xf]
  %v23 = vld [vmem:[%s0 + $0x20] sm:$0xf]
  %v24 = vld [vmem:[%s0 + $0x24] sm:$0xf]
  %v25 = vld [vmem:[%s0 + $0x28] sm:$0xf]
  %v26 = vld [vmem:[%s0 + $0x2c] sm:$0xf]
  %v27 = vld [vmem:[%s0 + $0x30] sm:$0xf]
  %v28 = vld [vmem:[%s0 + $0x34] sm:$0xf]
  %v29 = vld [vmem:[%s0 + $0x38] sm:$0xf]
  %v30 = vld [vmem:[%s0 + $0x3c] sm:$0xf]
  %v31 = vld [vmem:[%s1] sm:$0xf]
  %v32 = vld [vmem:[%s1 + $0x4] sm:$0xf]
  %v33 = vld [vmem:[%s2] sm:$0x1]
  %v35 = vlaneseq
  %v36 = vshrl.u32 %v35, 7
  %v37 = vsub.s32 0, %v36
  %v38 = vrot.slane %v33, %v37
  %v56 = vunpack.c.l.b16 %v15
  %v57 = vunpack.c.l.b16 %v16
  %v58 = vunpack.c.l.b16 %v17
  %v59 = vunpack.c.l.b16 %v18
  %v60 = vunpack.c.l.b16 %v19
  %v61 = vunpack.c.l.b16 %v20
  %v62 = vunpack.c.l.b16 %v21
  %v63 = vunpack.c.l.b16 %v22
  %v64 = vunpack.c.l.b16 %v23
  %v65 = vunpack.c.l.b16 %v24
  %v66 = vunpack.c.l.b16 %v25
  %v67 = vunpack.c.l.b16 %v26
  %v68 = vunpack.c.l.b16 %v27
  %v69 = vunpack.c.l.b16 %v28
  %v70 = vunpack.c.l.b16 %v29
  %v71 = vunpack.c.l.b16 %v30
  %v72 = vpack.c.b16 %v57, %v56
  %v73 = vpack.c.b16 %v59, %v58
  %v74 = vpack.c.b16 %v61, %v60
  %v75 = vpack.c.b16 %v63, %v62
  %v76 = vpack.c.b16 %v65, %v64
  %v77 = vpack.c.b16 %v67, %v66
  %v78 = vpack.c.b16 %v69, %v68
  %v79 = vpack.c.b16 %v71, %v70
  %v82 = vunpack.c.l.b16 %v31
  %v83 = vunpack.c.l.b16 %v32
  %v84 = vpack.c.b16 %v83, %v82
  %vm86 = vcmask 130048
  %v88 = vsel %vm86, %v72, 0
  %v91 = vsel %vm86, %v73, 0
  %v94 = vsel %vm86, %v74, 0
  %v97 = vsel %vm86, %v75, 0
  %v100 = vsel %vm86, %v76, 0
  %v103 = vsel %vm86, %v77, 0
  %v106 = vsel %vm86, %v78, 0
  %v109 = vsel %vm86, %v79, 0
  %111 = vmatprep.subr.bf16.mxu0 0
  %112 = vmatpush1.bf16.msra.mxu0 %v84
  %113 = vmatprep.subr.bf16.mxu0 0
  %114 = vmatpush1.bf16.msra.mxu0 0
  %115 = vmatprep.subr.bf16.mxu0 0
  %116 = vmatpush1.bf16.msra.mxu0 0
  %117 = vmatprep.subr.bf16.mxu0 0
  %118 = vmatpush1.bf16.msra.mxu0 0
  %119 = vmatprep.subr.bf16.mxu0 0
  %120 = vmatpush1.bf16.msra.mxu0 0
  %121 = vmatprep.subr.bf16.mxu0 0
  %122 = vmatpush1.bf16.msra.mxu0 0
  %123 = vmatprep.subr.bf16.mxu0 0
  %124 = vmatpush1.bf16.msra.mxu0 0
  %125 = vmatprep.subr.bf16.mxu0 0
  %126 = vmatpush1.bf16.msra.mxu0 0
  %127 = vmatprep.subr.bf16.mxu0 0
  %128 = vmatpush1.bf16.msra.mxu0 0
  %129 = vmatprep.subr.bf16.mxu0 0
  %130 = vmatpush1.bf16.msra.mxu0 0
  %131 = vmatprep.subr.bf16.mxu0 0
  %132 = vmatpush1.bf16.msra.mxu0 0
  %133 = vmatprep.subr.bf16.mxu0 0
  %134 = vmatpush1.bf16.msra.mxu0 0
  %135 = vmatprep.subr.bf16.mxu0 0
  %136 = vmatpush1.bf16.msra.mxu0 0
  %137 = vmatprep.subr.bf16.mxu0 0
  %138 = vmatpush1.bf16.msra.mxu0 0
  %139 = vmatprep.subr.bf16.mxu0 0
  %140 = vmatpush1.bf16.msra.mxu0 0
  %141 = vmatprep.subr.bf16.mxu0 0
  %142 = vmatpush1.bf16.msra.mxu0 0
  %143 = vmatprep.mubr.bf16.mxu0 0
  %144 = vmatmul.mubr.bf16.gmra.mrb[0].mxu0 %v88
  %v145 = vpop.f32.mrb[0].mxu0
  %v146 = vadd.f32 %v38, %v145
  %v147 = vpop.f32.mrb[0].mxu0
  %v148 = vpop.f32.mrb[0].mxu0
  %v149 = vadd.f32 %v38, %v148
  %v150 = vpop.f32.mrb[0].mxu0
  %151 = vmatprep.mubr.bf16.mxu0 0
  %152 = vmatmul.mubr.bf16.gmra.mrb[0].mxu0 %v91
  %v153 = vpop.f32.mrb[0].mxu0
  %v154 = vadd.f32 %v38, %v153
  %v155 = vpop.f32.mrb[0].mxu0
  %v156 = vpop.f32.mrb[0].mxu0
  %v157 = vadd.f32 %v38, %v156
  %v158 = vpop.f32.mrb[0].mxu0
  %159 = vmatprep.mubr.bf16.mxu0 0
  %160 = vmatmul.mubr.bf16.gmra.mrb[0].mxu0 %v94
  %v161 = vpop.f32.mrb[0].mxu0
  %v162 = vadd.f32 %v38, %v161
  %v163 = vpop.f32.mrb[0].mxu0
  %v164 = vpop.f32.mrb[0].mxu0
  %v165 = vadd.f32 %v38, %v164
  %v166 = vpop.f32.mrb[0].mxu0
  %167 = vmatprep.mubr.bf16.mxu0 0
  %168 = vmatmul.mubr.bf16.gmra.mrb[0].mxu0 %v97
  %v169 = vpop.f32.mrb[0].mxu0
  %v170 = vadd.f32 %v38, %v169
  %v171 = vpop.f32.mrb[0].mxu0
  %v172 = vpop.f32.mrb[0].mxu0
  %v173 = vadd.f32 %v38, %v172
  %v174 = vpop.f32.mrb[0].mxu0
  %175 = vmatprep.mubr.bf16.mxu0 0
  %176 = vmatmul.mubr.bf16.gmra.mrb[0].mxu0 %v100
  %v177 = vpop.f32.mrb[0].mxu0
  %v178 = vadd.f32 %v38, %v177
  %v179 = vpop.f32.mrb[0].mxu0
  %v180 = vpop.f32.mrb[0].mxu0
  %v181 = vadd.f32 %v38, %v180
  %v182 = vpop.f32.mrb[0].mxu0
  %183 = vmatprep.mubr.bf16.mxu0 0
  %184 = vmatmul.mubr.bf16.gmra.mrb[0].mxu0 %v103
  %v185 = vpop.f32.mrb[0].mxu0
  %v186 = vadd.f32 %v38, %v185
  %v187 = vpop.f32.mrb[0].mxu0
  %v188 = vpop.f32.mrb[0].mxu0
  %v189 = vadd.f32 %v38, %v188
  %v190 = vpop.f32.mrb[0].mxu0
  %191 = vmatprep.mubr.bf16.mxu0 0
  %192 = vmatmul.mubr.bf16.gmra.mrb[0].mxu0 %v106
  %v193 = vpop.f32.mrb[0].mxu0
  %v194 = vadd.f32 %v38, %v193
  %v195 = vpop.f32.mrb[0].mxu0
  %v196 = vpop.f32.mrb[0].mxu0
  %v197 = vadd.f32 %v38, %v196
  %v198 = vpop.f32.mrb[0].mxu0
  %199 = vmatprep.mubr.bf16.mxu0 0
  %200 = vmatmul.mubr.bf16.gmra.mrb[0].mxu0 %v109
  %v201 = vpop.f32.mrb[0].mxu0
  %v202 = vadd.f32 %v38, %v201
  %v203 = vpop.f32.mrb[0].mxu0
  %v204 = vpop.f32.mrb[0].mxu0
  %v205 = vadd.f32 %v38, %v204
  %v206 = vpop.f32.mrb[0].mxu0
  %207 = vdwg.mxu0
  %v208 = vpack.c.bf16 %v146, %v146
  %v209 = vpack.c.bf16 %v149, %v149
  %v210 = vpack.c.bf16 %v154, %v154
  %v211 = vpack.c.bf16 %v157, %v157
  %v212 = vpack.c.bf16 %v162, %v162
  %v213 = vpack.c.bf16 %v165, %v165
  %v214 = vpack.c.bf16 %v170, %v170
  %v215 = vpack.c.bf16 %v173, %v173
  %v216 = vpack.c.bf16 %v178, %v178
  %v217 = vpack.c.bf16 %v181, %v181
  %v218 = vpack.c.bf16 %v186, %v186
  %v219 = vpack.c.bf16 %v189, %v189
  %v220 = vpack.c.bf16 %v194, %v194
  %v221 = vpack.c.bf16 %v197, %v197
  %v222 = vpack.c.bf16 %v202, %v202
  %v223 = vpack.c.bf16 %v205, %v205
  %224 = vst [vmem:[%s3] sm:$0xf] %v208
  %225 = vst [vmem:[%s3 + $0x8] sm:$0xf] %v209
  %226 = vst [vmem:[%s3 + $0x10] sm:$0xf] %v210
  %227 = vst [vmem:[%s3 + $0x18] sm:$0xf] %v211
  %228 = vst [vmem:[%s3 + $0x20] sm:$0xf] %v212
  %229 = vst [vmem:[%s3 + $0x28] sm:$0xf] %v213
  %230 = vst [vmem:[%s3 + $0x30] sm:$0xf] %v214
  %231 = vst [vmem:[%s3 + $0x38] sm:$0xf] %v215
  %232 = vst [vmem:[%s3 + $0x40] sm:$0xf] %v216
  %233 = vst [vmem:[%s3 + $0x48] sm:$0xf] %v217
  %234 = vst [vmem:[%s3 + $0x50] sm:$0xf] %v218
  %235 = vst [vmem:[%s3 + $0x58] sm:$0xf] %v219
  %236 = vst [vmem:[%s3 + $0x60] sm:$0xf] %v220
  %237 = vst [vmem:[%s3 + $0x68] sm:$0xf] %v221
  %238 = vst [vmem:[%s3 + $0x70] sm:$0xf] %v222
  %239 = vst [vmem:[%s3 + $0x78] sm:$0xf] %v223
  %s240 = scalar_lea.vmem %s1, 8
  %v241 = vld [vmem:[%s240] sm:$0xf]
  %v242 = vld [vmem:[%s240 + $0x4] sm:$0xf]
  %v243 = vld [vmem:[%s2] sm:$0x1]
  %v245 = vlaneseq
  %v246 = vshrl.u32 %v245, 7
  %v247 = vsub.s32 0, %v246
  %v248 = vrot.slane %v243, %v247
  %v252 = vunpack.c.l.b16 %v241
  %v253 = vunpack.c.l.b16 %v242
  %v254 = vpack.c.b16 %v253, %v252
  %256 = vmatprep.subr.bf16.mxu0 0
  %257 = vmatpush1.bf16.msra.mxu0 %v254
  %258 = vmatprep.subr.bf16.mxu0 0
  %259 = vmatpush1.bf16.msra.mxu0 0
  %260 = vmatprep.subr.bf16.mxu0 0
  %261 = vmatpush1.bf16.msra.mxu0 0
  %262 = vmatprep.subr.bf16.mxu0 0
  %263 = vmatpush1.bf16.msra.mxu0 0
  %264 = vmatprep.subr.bf16.mxu0 0
  %265 = vmatpush1.bf16.msra.mxu0 0
  %266 = vmatprep.subr.bf16.mxu0 0
  %267 = vmatpush1.bf16.msra.mxu0 0
  %268 = vmatprep.subr.bf16.mxu0 0
  %269 = vmatpush1.bf16.msra.mxu0 0
  %270 = vmatprep.subr.bf16.mxu0 0
  %271 = vmatpush1.bf16.msra.mxu0 0
  %272 = vmatprep.subr.bf16.mxu0 0
  %273 = vmatpush1.bf16.msra.mxu0 0
  %274 = vmatprep.subr.bf16.mxu0 0
  %275 = vmatpush1.bf16.msra.mxu0 0
  %276 = vmatprep.subr.bf16.mxu0 0
  %277 = vmatpush1.bf16.msra.mxu0 0
  %278 = vmatprep.subr.bf16.mxu0 0
  %279 = vmatpush1.bf16.msra.mxu0 0
  %280 = vmatprep.subr.bf16.mxu0 0
  %281 = vmatpush1.bf16.msra.mxu0 0
  %282 = vmatprep.subr.bf16.mxu0 0
  %283 = vmatpush1.bf16.msra.mxu0 0
  %284 = vmatprep.subr.bf16.mxu0 0
  %285 = vmatpush1.bf16.msra.mxu0 0
  %286 = vmatprep.subr.bf16.mxu0 0
  %287 = vmatpush1.bf16.msra.mxu0 0
  %288 = vmatprep.mubr.bf16.mxu0 0
  %289 = vmatmul.mubr.bf16.gmra.mrb[0].mxu0 %v88
  %v290 = vpop.f32.mrb[0].mxu0
  %v291 = vadd.f32 %v248, %v290
  %v292 = vpop.f32.mrb[0].mxu0
  %v293 = vpop.f32.mrb[0].mxu0
  %v294 = vadd.f32 %v248, %v293
  %v295 = vpop.f32.mrb[0].mxu0
  %296 = vmatprep.mubr.bf16.mxu0 0
  %297 = vmatmul.mubr.bf16.gmra.mrb[0].mxu0 %v91
  %v298 = vpop.f32.mrb[0].mxu0
  %v299 = vadd.f32 %v248, %v298
  %v300 = vpop.f32.mrb[0].mxu0
  %v301 = vpop.f32.mrb[0].mxu0
  %v302 = vadd.f32 %v248, %v301
  %v303 = vpop.f32.mrb[0].mxu0
  %304 = vmatprep.mubr.bf16.mxu0 0
  %305 = vmatmul.mubr.bf16.gmra.mrb[0].mxu0 %v94
  %v306 = vpop.f32.mrb[0].mxu0
  %v307 = vadd.f32 %v248, %v306
  %v308 = vpop.f32.mrb[0].mxu0
  %v309 = vpop.f32.mrb[0].mxu0
  %v310 = vadd.f32 %v248, %v309
  %v311 = vpop.f32.mrb[0].mxu0
  %312 = vmatprep.mubr.bf16.mxu0 0
  %313 = vmatmul.mubr.bf16.gmra.mrb[0].mxu0 %v97
  %v314 = vpop.f32.mrb[0].mxu0
  %v315 = vadd.f32 %v248, %v314
  %v316 = vpop.f32.mrb[0].mxu0
  %v317 = vpop.f32.mrb[0].mxu0
  %v318 = vadd.f32 %v248, %v317
  %v319 = vpop.f32.mrb[0].mxu0
  %320 = vmatprep.mubr.bf16.mxu0 0
  %321 = vmatmul.mubr.bf16.gmra.mrb[0].mxu0 %v100
  %v322 = vpop.f32.mrb[0].mxu0
  %v323 = vadd.f32 %v248, %v322
  %v324 = vpop.f32.mrb[0].mxu0
  %v325 = vpop.f32.mrb[0].mxu0
  %v326 = vadd.f32 %v248, %v325
  %v327 = vpop.f32.mrb[0].mxu0
  %328 = vmatprep.mubr.bf16.mxu0 0
  %329 = vmatmul.mubr.bf16.gmra.mrb[0].mxu0 %v103
  %v330 = vpop.f32.mrb[0].mxu0
  %v331 = vadd.f32 %v248, %v330
  %v332 = vpop.f32.mrb[0].mxu0
  %v333 = vpop.f32.mrb[0].mxu0
  %v334 = vadd.f32 %v248, %v333
  %v335 = vpop.f32.mrb[0].mxu0
  %336 = vmatprep.mubr.bf16.mxu0 0
  %337 = vmatmul.mubr.bf16.gmra.mrb[0].mxu0 %v106
  %v338 = vpop.f32.mrb[0].mxu0
  %v339 = vadd.f32 %v248, %v338
  %v340 = vpop.f32.mrb[0].mxu0
  %v341 = vpop.f32.mrb[0].mxu0
  %v342 = vadd.f32 %v248, %v341
  %v343 = vpop.f32.mrb[0].mxu0
  %344 = vmatprep.mubr.bf16.mxu0 0
  %345 = vmatmul.mubr.bf16.gmra.mrb[0].mxu0 %v109
  %v346 = vpop.f32.mrb[0].mxu0
  %v347 = vadd.f32 %v248, %v346
  %v348 = vpop.f32.mrb[0].mxu0
  %v349 = vpop.f32.mrb[0].mxu0
  %v350 = vadd.f32 %v248, %v349
  %v351 = vpop.f32.mrb[0].mxu0
  %352 = vdwg.mxu0
  %v353 = vpack.c.bf16 %v291, %v291
  %v354 = vpack.c.bf16 %v294, %v294
  %v355 = vpack.c.bf16 %v299, %v299
  %v356 = vpack.c.bf16 %v302, %v302
  %v357 = vpack.c.bf16 %v307, %v307
  %v358 = vpack.c.bf16 %v310, %v310
  %v359 = vpack.c.bf16 %v315, %v315
  %v360 = vpack.c.bf16 %v318, %v318
  %v361 = vpack.c.bf16 %v323, %v323
  %v362 = vpack.c.bf16 %v326, %v326
  %v363 = vpack.c.bf16 %v331, %v331
  %v364 = vpack.c.bf16 %v334, %v334
  %v365 = vpack.c.bf16 %v339, %v339
  %v366 = vpack.c.bf16 %v342, %v342
  %v367 = vpack.c.bf16 %v347, %v347
  %v368 = vpack.c.bf16 %v350, %v350
  %s369 = scalar_lea.vmem %s3, 4
  %370 = vst [vmem:[%s369] sm:$0xf] %v353
  %371 = vst [vmem:[%s369 + $0x8] sm:$0xf] %v354
  %372 = vst [vmem:[%s369 + $0x10] sm:$0xf] %v355
  %373 = vst [vmem:[%s369 + $0x18] sm:$0xf] %v356
  %374 = vst [vmem:[%s369 + $0x20] sm:$0xf] %v357
  %375 = vst [vmem:[%s369 + $0x28] sm:$0xf] %v358
  %376 = vst [vmem:[%s369 + $0x30] sm:$0xf] %v359
  %377 = vst [vmem:[%s369 + $0x38] sm:$0xf] %v360
  %378 = vst [vmem:[%s369 + $0x40] sm:$0xf] %v361
  %379 = vst [vmem:[%s369 + $0x48] sm:$0xf] %v362
  %380 = vst [vmem:[%s369 + $0x50] sm:$0xf] %v363
  %381 = vst [vmem:[%s369 + $0x58] sm:$0xf] %v364
  %382 = vst [vmem:[%s369 + $0x60] sm:$0xf] %v365
  %383 = vst [vmem:[%s369 + $0x68] sm:$0xf] %v366
  %384 = vst [vmem:[%s369 + $0x70] sm:$0xf] %v367
  %385 = vst [vmem:[%s369 + $0x78] sm:$0xf] %v368
  // Predicated region
  $region14: #{resunet_forward.45} parent=0 // pred_check
    _
  $region15: #{resunet_forward.45} parent=0 // pred_check_branch
    %387 = sbr.rel (0) target = $region17
  $region16: #{resunet_forward.45} parent=0 // pred_region
    _
  $region17: #{resunet_forward.45} parent=0 // pred_fallthru
    _
  // Predicated region
  $region18: #{resunet_forward.45} parent=0 // pred_check
    _
  $region19: #{resunet_forward.45} parent=0 // pred_check_branch
    %389 = sbr.rel (0) target = $region21
  $region20: #{resunet_forward.45} parent=0 // pred_region
    _
  $region21: #{resunet_forward.45} parent=0 // pred_fallthru
    _

// kernel: resunet_forward.47
$region0: #{resunet_forward.47}
  #allocation0 [shape = 'u32[]', space=smem, size = 0x4, offset = 0x4, fixed_abs, tag = 'smem constant byte address 0x4 - core index']
  #allocation1 [shape = 'u32[144,128]{1,0:T(1,128)}', space=vmem, size = 0x12000, scoped, tag = 'internal scratch']
  #allocation2 [shape = 'f32[256,128]{1,0:T(8,128)}', space=vmem, size = 0x20000, scoped, tag = 'scratch operand']
  %s0 = inlined_call_operand.vmem [shape: bf16[512,216], index: 0, kind: input, shape index: {}]
  %s1 = inlined_call_operand.vmem [shape: bf16[216,128], index: 1, kind: input, shape index: {}]
  %s2 = inlined_call_operand.vmem [shape: f32[1,128], index: 2, kind: input, shape index: {}]
  %s3 = inlined_call_operand.vmem [shape: bf16[512,128], index: 3, kind: output, shape index: {}]
  %s4 = sld [smem:[#allocation0]]
  $region53: #{resunet_forward.47} parent=0
    _
  %s6 = ssub.s32 1, %s4
  %s7 = scalar_select 0, %s6, %s4
  loop: start=0, step=1, limit=4
  $region2: #{resunet_forward.47} parent=0 // loop_pre_header
    _
  $region3: #{resunet_forward.47} parent=0 // loop_header
    %s9 = sphi 0, %s13
    %p10 = scmp.ge.s32.totalorder %s9, 4
    %s16 = sphi 0, %s35
    %s17 = sphi 0, %s31
    %s18 = sphi 0, %s27
    %s19 = sphi 0, %s16
    %s20 = sphi 0, %s17
    %s21 = sphi 0, %s18
    %s22 = sphi 0, %s19
    %s23 = sphi 0, %s20
    %s24 = sphi 0, %s21
    %s40 = sphi 0, %s42
    %s43 = sphi 0, %s40
    %s44 = sphi 0, %s43
    %s60 = sphi 0, %s44
    %s68 = sphi 0, %s70
    %s71 = sphi 0, %s68
    %s72 = sphi 0, %s71
    %s88 = sphi 0, %s72
    %s94 = sphi 0, %s96
    %s97 = sphi 0, %s94
    %s98 = sphi 0, %s97
    %s114 = sphi 0, %s98
    %s122 = sphi 0, %s124
    %s125 = sphi 0, %s122
    %s126 = sphi 0, %s125
    %s142 = sphi 0, %s126
  $region4: #{resunet_forward.47} parent=0 // loop_header_branch
    %12 = sbr.rel (%p10) target = $region8
  $region5: #{resunet_forward.47} parent=0 // loop_body
    %s14 = ssub.s32 %s9, 1
    %s15 = ssub.s32 %s9, 2
    %s25 = sadd.s32 1, %s18
    %p26 = scmp.ge.s32.totalorder %s25, 1
    %s27 = scalar_select %p26, 0, %s25
    %s28 = sadd.s32 1, %s17
    %s29 = scalar_select %p26, %s28, %s17
    %p30 = scmp.ge.s32.totalorder %s29, 1
    %s31 = scalar_select %p30, 0, %s29
    %s32 = sadd.s32 1, %s16
    %s33 = scalar_select %p30, %s32, %s16
    %p34 = scmp.ge.s32.totalorder %s33, 2
    %s35 = scalar_select %p34, 0, %s33
    %s36 = ssub.s32 %s16, %s35
    %s37 = ssub.s32 %s18, %s27
    %s38 = sor.u32 %s36, %s37
    %p39 = scmp.eq.s32.totalorder %s38, 0
    %s41 = sadd.s32 %s40, 1
    %s42 = scalar_select %p39, %s40, %s41
    %p45 = pneg %p39
    %p46 = scmp.eq.s32.totalorder %s9, 1
    %p47 = por %p45, %p46
    %p48 = scmp.ne.s32.totalorder %s40, %s43
    %p49 = scmp.eq.s32.totalorder %s9, 0
    %p50 = por %p48, %p49
    %p51 = scmp.ne.s32.totalorder %s40, %s43
    %p52 = scmp.eq.s32.totalorder %s14, 1
    %p53 = por %p51, %p52
    %p54 = scmp.ne.s32.totalorder %s43, %s44
    %p55 = scmp.eq.s32.totalorder %s14, 0
    %p56 = por %p54, %p55
    %p57 = scmp.ne.s32.totalorder %s43, %s44
    %p58 = scmp.eq.s32.totalorder %s15, 1
    %p59 = por %p57, %p58
    %p61 = scmp.ne.s32.totalorder %s44, %s60
    %p62 = scmp.eq.s32.totalorder %s15, 0
    %p63 = por %p61, %p62
    %s64 = ssub.s32 %s18, %s27
    %s65 = ssub.s32 %s17, %s31
    %s66 = sor.u32 %s64, %s65
    %p67 = scmp.eq.s32.totalorder %s66, 0
    %s69 = sadd.s32 %s68, 1
    %s70 = scalar_select %p67, %s68, %s69
    %p73 = pneg %p67
    %p74 = scmp.eq.s32.totalorder %s9, 1
    %p75 = por %p73, %p74
    %p76 = scmp.ne.s32.totalorder %s68, %s71
    %p77 = scmp.eq.s32.totalorder %s9, 0
    %p78 = por %p76, %p77
    %p79 = scmp.ne.s32.totalorder %s68, %s71
    %p80 = scmp.eq.s32.totalorder %s14, 1
    %p81 = por %p79, %p80
    %p82 = scmp.ne.s32.totalorder %s71, %s72
    %p83 = scmp.eq.s32.totalorder %s14, 0
    %p84 = por %p82, %p83
    %p85 = scmp.ne.s32.totalorder %s71, %s72
    %p86 = scmp.eq.s32.totalorder %s15, 1
    %p87 = por %p85, %p86
    %p89 = scmp.ne.s32.totalorder %s72, %s88
    %p90 = scmp.eq.s32.totalorder %s15, 0
    %p91 = por %p89, %p90
    %s92 = ssub.s32 %s17, %s31
    %p93 = scmp.eq.s32.totalorder %s92, 0
    %s95 = sadd.s32 %s94, 1
    %s96 = scalar_select %p93, %s94, %s95
    %p99 = pneg %p93
    %p100 = scmp.eq.s32.totalorder %s9, 1
    %p101 = por %p99, %p100
    %p102 = scmp.ne.s32.totalorder %s94, %s97
    %p103 = scmp.eq.s32.totalorder %s9, 0
    %p104 = por %p102, %p103
    %p105 = scmp.ne.s32.totalorder %s94, %s97
    %p106 = scmp.eq.s32.totalorder %s14, 1
    %p107 = por %p105, %p106
    %p108 = scmp.ne.s32.totalorder %s97, %s98
    %p109 = scmp.eq.s32.totalorder %s14, 0
    %p110 = por %p108, %p109
    %p111 = scmp.ne.s32.totalorder %s97, %s98
    %p112 = scmp.eq.s32.totalorder %s15, 1
    %p113 = por %p111, %p112
    %p115 = scmp.ne.s32.totalorder %s98, %s114
    %p116 = scmp.eq.s32.totalorder %s15, 0
    %p117 = por %p115, %p116
    %s118 = ssub.s32 %s16, %s35
    %s119 = ssub.s32 %s17, %s31
    %s120 = sor.u32 %s118, %s119
    %p121 = scmp.eq.s32.totalorder %s120, 0
    %s123 = sadd.s32 %s122, 1
    %s124 = scalar_select %p121, %s122, %s123
    %p127 = pneg %p121
    %p128 = scmp.eq.s32.totalorder %s9, 1
    %p129 = por %p127, %p128
    %p130 = scmp.ne.s32.totalorder %s122, %s125
    %p131 = scmp.eq.s32.totalorder %s9, 0
    %p132 = por %p130, %p131
    %p133 = scmp.ne.s32.totalorder %s122, %s125
    %p134 = scmp.eq.s32.totalorder %s14, 1
    %p135 = por %p133, %p134
    %p136 = scmp.ne.s32.totalorder %s125, %s126
    %p137 = scmp.eq.s32.totalorder %s14, 0
    %p138 = por %p136, %p137
    %p139 = scmp.ne.s32.totalorder %s125, %s126
    %p140 = scmp.eq.s32.totalorder %s15, 1
    %p141 = por %p139, %p140
    %p143 = scmp.ne.s32.totalorder %s126, %s142
    %p144 = scmp.eq.s32.totalorder %s15, 0
    %p145 = por %p143, %p144
    %p146 = scmp.le.s32.totalorder 1, %s9
    %p147 = scmp.lt.s32.totalorder %s9, 3
    %p148 = pnand %p146, %p147
    %p149 = pneg %p148
    // Predicated region
    $region9: #{resunet_forward.47} parent=5 // pred_check
      _
    $region10: #{resunet_forward.47} parent=5 // pred_check_branch
      %151 = sbr.rel (%p148) target = $region12
    $region11: #{resunet_forward.47} parent=5 // pred_region
      %s152 = ssub.s32 %s9, 1
      // Predicated region
      $region13: #{resunet_forward.47} parent=11 // pred_check
        %p153 = pneg %p84
      $region14: #{resunet_forward.47} parent=11 // pred_check_branch
        %155 = sbr.rel (%p153) target = $region16
      $region15: #{resunet_forward.47} parent=11 // pred_region
        %s156 = smul.u32 27, %s21
        %p157 = scmp.lt.s32.totalorder %s156, 26
        %s158 = scalar_select %p157, %s156, 26
        %p159 = scmp.lt.s32.totalorder %s20, 0
        %s160 = scalar_select %p159, %s20, 0
        %s161 = sadd.s32 %s160, %s158
        %s162 = smul.addr %s161, 4
        %s163 = scalar_lea.vmem %s1, %s162
        %s164 = smul.u32 27, %s21
      $region16: #{resunet_forward.47} parent=11 // pred_fallthru
        _
      // Predicated region
      $region17: #{resunet_forward.47} parent=11 // pred_check
        %p165 = pneg %p110
      $region18: #{resunet_forward.47} parent=11 // pred_check_branch
        %167 = sbr.rel (%p165) target = $region20
      $region19: #{resunet_forward.47} parent=11 // pred_region
        %p168 = scmp.lt.s32.totalorder %s20, 0
        %s169 = scalar_select %p168, %s20, 0
        %s170 = scalar_lea.vmem %s2, %s169
      $region20: #{resunet_forward.47} parent=11 // pred_fallthru
        _
    $region12: #{resunet_forward.47} parent=5 // pred_fallthru
      _
    %p171 = scmp.lt.s32.totalorder %s9, 2
    // Predicated region
    $region21: #{resunet_forward.47} parent=5 // pred_check
      %p172 = pneg %p171
    $region22: #{resunet_forward.47} parent=5 // pred_check_branch
      %174 = sbr.rel (%p172) target = $region24
    $region23: #{resunet_forward.47} parent=5 // pred_region
      // Predicated region
      $region25: #{resunet_forward.47} parent=23 // pred_check
        %p175 = pneg %p50
      $region26: #{resunet_forward.47} parent=23 // pred_check_branch
        %177 = sbr.rel (%p175) target = $region28
      $region27: #{resunet_forward.47} parent=23 // pred_region
        %s178 = smul.u32 32, %s16
        %s179 = smul.u32 2, %s18
        %p180 = scmp.lt.s32.totalorder %s178, 63
        %s181 = scalar_select %p180, %s178, 63
        %p182 = scmp.lt.s32.totalorder %s179, 1
        %s183 = scalar_select %p182, %s179, 1
        %s184 = smul.addr %s181, 2
        %s185 = sadd.s32 %s183, %s184
        %s186 = smul.addr %s185, 4
        %s187 = scalar_lea.vmem %s0, %s186
        %s188 = smul.u32 32, %s16
        %s189 = smul.u32 2, %s18
      $region28: #{resunet_forward.47} parent=23 // pred_fallthru
        _
    $region24: #{resunet_forward.47} parent=5 // pred_fallthru
      _
    %p190 = scmp.le.s32.totalorder 1, %s9
    %p191 = scmp.lt.s32.totalorder %s9, 3
    %p192 = pnand %p190, %p191
    %p193 = pneg %p192
    // Predicated region
    $region29: #{resunet_forward.47} parent=5 // pred_check
      _
    $region30: #{resunet_forward.47} parent=5 // pred_check_branch
      %195 = sbr.rel (%p192) target = $region32
    $region31: #{resunet_forward.47} parent=5 // pred_region
      %s196 = ssub.s32 %s9, 1
      %s197 = smul.u32 32, %s19
      %s198 = smul.u32 2, %s21
      %p199 = scmp.lt.s32.totalorder %s197, 63
      %s200 = scalar_select %p199, %s197, 63
      %p201 = scmp.lt.s32.totalorder %s198, 1
      %s202 = scalar_select %p201, %s198, 1
      %s203 = smul.addr %s200, 2
      %s204 = sadd.s32 %s202, %s203
      %s205 = smul.addr %s204, 4
      %s206 = scalar_lea.vmem %s0, %s205
      %p207 = pneg %p56
      %p208 = pneg %p53
      %s209 = smul.u32 27, %s21
      %p210 = scmp.lt.s32.totalorder %s209, 26
      %s211 = scalar_select %p210, %s209, 26
      %p212 = scmp.lt.s32.totalorder %s20, 0
      %s213 = scalar_select %p212, %s20, 0
      %s214 = sadd.s32 %s213, %s211
      %s215 = smul.addr %s214, 4
      %s216 = scalar_lea.vmem %s1, %s215
      %p217 = pneg %p84
      %p218 = pneg %p81
      %p219 = scmp.lt.s32.totalorder %s20, 0
      %s220 = scalar_select %p219, %s20, 0
      %s221 = scalar_lea.vmem %s2, %s220
      %p222 = pneg %p110
      %p223 = pneg %p107
      %p224 = pneg %p138
      %p225 = pneg %p135
      %s226 = smul.u32 32, %s19
      %p227 = scmp.lt.s32.totalorder %s226, 63
      %s228 = scalar_select %p227, %s226, 63
      %p229 = scmp.lt.s32.totalorder %s20, 0
      %s230 = scalar_select %p229, %s20, 0
      %s231 = sadd.s32 %s230, %s228
      %s232 = smul.addr %s231, 4
      %s233 = scalar_lea.vmem %s3, %s232
      %s234 = smul.u32 32, %s19
      %s235 = smul.u32 2, %s21
      %p236 = scmp.lt.s32.totalorder %s234, 63
      %s237 = scalar_select %p236, %s234, 63
      %p238 = scmp.lt.s32.totalorder %s235, 1
      %s239 = scalar_select %p238, %s235, 1
      %s240 = smul.addr %s237, 2
      %s241 = sadd.s32 %s239, %s240
      %s242 = smul.addr %s241, 4
      %s243 = scalar_lea.vmem %s0, %s242
      %s244 = smul.u32 32, %s19
      %s245 = smul.u32 2, %s21
      %s246 = smul.u32 27, %s21
      %p247 = scmp.lt.s32.totalorder %s246, 26
      %s248 = scalar_select %p247, %s246, 26
      %p249 = scmp.lt.s32.totalorder %s20, 0
      %s250 = scalar_select %p249, %s20, 0
      %s251 = sadd.s32 %s250, %s248
      %s252 = smul.addr %s251, 4
      %s253 = scalar_lea.vmem %s1, %s252
      %s254 = smul.u32 27, %s21
      %p255 = scmp.lt.s32.totalorder %s20, 0
      %s256 = scalar_select %p255, %s20, 0
      %s257 = scalar_lea.vmem %s2, %s256
      %s258 = smul.u32 32, %s19
      %p259 = scmp.lt.s32.totalorder %s258, 63
      %s260 = scalar_select %p259, %s258, 63
      %p261 = scmp.lt.s32.totalorder %s20, 0
      %s262 = scalar_select %p261, %s20, 0
      %s263 = sadd.s32 %s262, %s260
      %s264 = smul.addr %s263, 4
      %s265 = scalar_lea.vmem %s3, %s264
      %s266 = smul.u32 32, %s19
      %p268 = scmp.eq.s32.totalorder %s21, 0
      // Predicated region
      $region33: #{resunet_forward.47} parent=31 // pred_check
        %p269 = pneg %p268
      $region34: #{resunet_forward.47} parent=31 // pred_check_branch
        %271 = sbr.rel (%p269) target = $region36
      $region35: #{resunet_forward.47} parent=31 // pred_region
        %272 = vst [vmem:[#allocation2] sm:$0xff] 0.0
        %273 = vst [vmem:[#allocation2 + $0x8] sm:$0xff] 0.0
        %274 = vst [vmem:[#allocation2 + $0x10] sm:$0xff] 0.0
        %275 = vst [vmem:[#allocation2 + $0x18] sm:$0xff] 0.0
        %276 = vst [vmem:[#allocation2 + $0x20] sm:$0xff] 0.0
        %277 = vst [vmem:[#allocation2 + $0x28] sm:$0xff] 0.0
        %278 = vst [vmem:[#allocation2 + $0x30] sm:$0xff] 0.0
        %279 = vst [vmem:[#allocation2 + $0x38] sm:$0xff] 0.0
        %280 = vst [vmem:[#allocation2 + $0x40] sm:$0xff] 0.0
        %281 = vst [vmem:[#allocation2 + $0x48] sm:$0xff] 0.0
        %282 = vst [vmem:[#allocation2 + $0x50] sm:$0xff] 0.0
        %283 = vst [vmem:[#allocation2 + $0x58] sm:$0xff] 0.0
        %284 = vst [vmem:[#allocation2 + $0x60] sm:$0xff] 0.0
        %285 = vst [vmem:[#allocation2 + $0x68] sm:$0xff] 0.0
        %286 = vst [vmem:[#allocation2 + $0x70] sm:$0xff] 0.0
        %287 = vst [vmem:[#allocation2 + $0x78] sm:$0xff] 0.0
        %288 = vst [vmem:[#allocation2 + $0x80] sm:$0xff] 0.0
        %289 = vst [vmem:[#allocation2 + $0x88] sm:$0xff] 0.0
        %290 = vst [vmem:[#allocation2 + $0x90] sm:$0xff] 0.0
        %291 = vst [vmem:[#allocation2 + $0x98] sm:$0xff] 0.0
        %292 = vst [vmem:[#allocation2 + $0xa0] sm:$0xff] 0.0
        %293 = vst [vmem:[#allocation2 + $0xa8] sm:$0xff] 0.0
        %294 = vst [vmem:[#allocation2 + $0xb0] sm:$0xff] 0.0
        %295 = vst [vmem:[#allocation2 + $0xb8] sm:$0xff] 0.0
        %296 = vst [vmem:[#allocation2 + $0xc0] sm:$0xff] 0.0
        %297 = vst [vmem:[#allocation2 + $0xc8] sm:$0xff] 0.0
        %298 = vst [vmem:[#allocation2 + $0xd0] sm:$0xff] 0.0
        %299 = vst [vmem:[#allocation2 + $0xd8] sm:$0xff] 0.0
        %300 = vst [vmem:[#allocation2 + $0xe0] sm:$0xff] 0.0
        %301 = vst [vmem:[#allocation2 + $0xe8] sm:$0xff] 0.0
        %302 = vst [vmem:[#allocation2 + $0xf0] sm:$0xff] 0.0
        %303 = vst [vmem:[#allocation2 + $0xf8] sm:$0xff] 0.0
      $region36: #{resunet_forward.47} parent=31 // pred_fallthru
        _
      %v304 = vld [vmem:[#allocation2] sm:$0xff]
      %v305 = vld [vmem:[#allocation2 + $0x8] sm:$0xff]
      %v306 = vld [vmem:[#allocation2 + $0x10] sm:$0xff]
      %v307 = vld [vmem:[#allocation2 + $0x18] sm:$0xff]
      %v308 = vld [vmem:[#allocation2 + $0x20] sm:$0xff]
      %v309 = vld [vmem:[#allocation2 + $0x28] sm:$0xff]
      %v310 = vld [vmem:[#allocation2 + $0x30] sm:$0xff]
      %v311 = vld [vmem:[#allocation2 + $0x38] sm:$0xff]
      %v312 = vld [vmem:[#allocation2 + $0x40] sm:$0xff]
      %v313 = vld [vmem:[#allocation2 + $0x48] sm:$0xff]
      %v314 = vld [vmem:[#allocation2 + $0x50] sm:$0xff]
      %v315 = vld [vmem:[#allocation2 + $0x58] sm:$0xff]
      %v316 = vld [vmem:[#allocation2 + $0x60] sm:$0xff]
      %v317 = vld [vmem:[#allocation2 + $0x68] sm:$0xff]
      %v318 = vld [vmem:[#allocation2 + $0x70] sm:$0xff]
      %v319 = vld [vmem:[#allocation2 + $0x78] sm:$0xff]
      %v320 = vld [vmem:[#allocation2 + $0x80] sm:$0xff]
      %v321 = vld [vmem:[#allocation2 + $0x88] sm:$0xff]
      %v322 = vld [vmem:[#allocation2 + $0x90] sm:$0xff]
      %v323 = vld [vmem:[#allocation2 + $0x98] sm:$0xff]
      %v324 = vld [vmem:[#allocation2 + $0xa0] sm:$0xff]
      %v325 = vld [vmem:[#allocation2 + $0xa8] sm:$0xff]
      %v326 = vld [vmem:[#allocation2 + $0xb0] sm:$0xff]
      %v327 = vld [vmem:[#allocation2 + $0xb8] sm:$0xff]
      %v328 = vld [vmem:[#allocation2 + $0xc0] sm:$0xff]
      %v329 = vld [vmem:[#allocation2 + $0xc8] sm:$0xff]
      %v330 = vld [vmem:[#allocation2 + $0xd0] sm:$0xff]
      %v331 = vld [vmem:[#allocation2 + $0xd8] sm:$0xff]
      %v332 = vld [vmem:[#allocation2 + $0xe0] sm:$0xff]
      %v333 = vld [vmem:[#allocation2 + $0xe8] sm:$0xff]
      %v334 = vld [vmem:[#allocation2 + $0xf0] sm:$0xff]
      %v335 = vld [vmem:[#allocation2 + $0xf8] sm:$0xff]
      %v336 = vld [vmem:[%s243] sm:$0xff]
      %v337 = vld [vmem:[%s243 + $0x8] sm:$0xff]
      %v338 = vld [vmem:[%s243 + $0x10] sm:$0xff]
      %v339 = vld [vmem:[%s243 + $0x18] sm:$0xff]
      %v340 = vld [vmem:[%s243 + $0x20] sm:$0xff]
      %v341 = vld [vmem:[%s243 + $0x28] sm:$0xff]
      %v342 = vld [vmem:[%s243 + $0x30] sm:$0xff]
      %v343 = vld [vmem:[%s243 + $0x38] sm:$0xff]
      %v344 = vld [vmem:[%s243 + $0x40] sm:$0xff]
      %v345 = vld [vmem:[%s243 + $0x48] sm:$0xff]
      %v346 = vld [vmem:[%s243 + $0x50] sm:$0xff]
      %v347 = vld [vmem:[%s243 + $0x58] sm:$0xff]
      %v348 = vld [vmem:[%s243 + $0x60] sm:$0xff]
      %v349 = vld [vmem:[%s243 + $0x68] sm:$0xff]
      %v350 = vld [vmem:[%s243 + $0x70] sm:$0xff]
      %v351 = vld [vmem:[%s243 + $0x78] sm:$0xff]
      %v352 = vld [vmem:[%s243 + $0x80] sm:$0xff]
      %v353 = vld [vmem:[%s243 + $0x88] sm:$0xff]
      %v354 = vld [vmem:[%s243 + $0x90] sm:$0xff]
      %v355 = vld [vmem:[%s243 + $0x98] sm:$0xff]
      %v356 = vld [vmem:[%s243 + $0xa0] sm:$0xff]
      %v357 = vld [vmem:[%s243 + $0xa8] sm:$0xff]
      %v358 = vld [vmem:[%s243 + $0xb0] sm:$0xff]
      %v359 = vld [vmem:[%s243 + $0xb8] sm:$0xff]
      %v360 = vld [vmem:[%s243 + $0xc0] sm:$0xff]
      %v361 = vld [vmem:[%s243 + $0xc8] sm:$0xff]
      %v362 = vld [vmem:[%s243 + $0xd0] sm:$0xff]
      %v363 = vld [vmem:[%s243 + $0xd8] sm:$0xff]
      %v364 = vld [vmem:[%s243 + $0xe0] sm:$0xff]
      %v365 = vld [vmem:[%s243 + $0xe8] sm:$0xff]
      %v366 = vld [vmem:[%s243 + $0xf0] sm:$0xff]
      %v367 = vld [vmem:[%s243 + $0xf8] sm:$0xff]
      %v368 = vld [vmem:[%s253] sm:$0xf]
      %v369 = vld [vmem:[%s253 + $0x4] sm:$0xf]
      %v370 = vld [vmem:[%s253 + $0x8] sm:$0xf]
      %v371 = vld [vmem:[%s253 + $0xc] sm:$0xf]
      %v372 = vld [vmem:[%s253 + $0x10] sm:$0xf]
      %v373 = vld [vmem:[%s253 + $0x14] sm:$0xf]
      %v374 = vld [vmem:[%s253 + $0x18] sm:$0xf]
      %v375 = vld [vmem:[%s253 + $0x1c] sm:$0xf]
      %v376 = vld [vmem:[%s253 + $0x20] sm:$0xf]
      %v377 = vld [vmem:[%s253 + $0x24] sm:$0xf]
      %v378 = vld [vmem:[%s253 + $0x28] sm:$0xf]
      %v379 = vld [vmem:[%s253 + $0x2c] sm:$0xf]
      %v380 = vld [vmem:[%s253 + $0x30] sm:$0xf]
      %v381 = vld [vmem:[%s253 + $0x34] sm:$0xf]
      %v382 = vld [vmem:[%s253 + $0x38] sm:$0xf]
      %v383 = vld [vmem:[%s253 + $0x3c] sm:$0xf]
      %v384 = vld [vmem:[%s253 + $0x40] sm:$0xf]
      %v385 = vld [vmem:[%s253 + $0x44] sm:$0xf]
      %v386 = vld [vmem:[%s253 + $0x48] sm:$0xf]
      %v387 = vld [vmem:[%s253 + $0x4c] sm:$0xf]
      %v388 = vld [vmem:[%s253 + $0x50] sm:$0xf]
      %v389 = vld [vmem:[%s253 + $0x54] sm:$0xf]
      %v390 = vld [vmem:[%s253 + $0x58] sm:$0xf]
      %v391 = vld [vmem:[%s253 + $0x5c] sm:$0xf]
      %v392 = vld [vmem:[%s253 + $0x60] sm:$0xf]
      %v393 = vld [vmem:[%s253 + $0x64] sm:$0xf]
      %v394 = vld [vmem:[%s253 + $0x68] sm:$0xf]
      %v427 = vunpack.c.l.b16 %v336
      %v428 = vunpack.c.h.b16 %v336
      %v429 = vunpack.c.l.b16 %v337
      %v430 = vunpack.c.h.b16 %v337
      %v431 = vunpack.c.l.b16 %v338
      %v432 = vunpack.c.h.b16 %v338
      %v433 = vunpack.c.l.b16 %v339
      %v434 = vunpack.c.h.b16 %v339
      %v435 = vunpack.c.l.b16 %v340
      %v436 = vunpack.c.h.b16 %v340
      %v437 = vunpack.c.l.b16 %v341
      %v438 = vunpack.c.h.b16 %v341
      %v439 = vunpack.c.l.b16 %v342
      %v440 = vunpack.c.h.b16 %v342
      %v441 = vunpack.c.l.b16 %v343
      %v442 = vunpack.c.h.b16 %v343
      %v443 = vunpack.c.l.b16 %v344
      %v444 = vunpack.c.h.b16 %v344
      %v445 = vunpack.c.l.b16 %v345
      %v446 = vunpack.c.h.b16 %v345
      %v447 = vunpack.c.l.b16 %v346
      %v448 = vunpack.c.h.b16 %v346
      %v449 = vunpack.c.l.b16 %v347
      %v450 = vunpack.c.h.b16 %v347
      %v451 = vunpack.c.l.b16 %v348
      %v452 = vunpack.c.h.b16 %v348
      %v453 = vunpack.c.l.b16 %v349
      %v454 = vunpack.c.h.b16 %v349
      %v455 = vunpack.c.l.b16 %v350
      %v456 = vunpack.c.h.b16 %v350
      %v457 = vunpack.c.l.b16 %v351
      %v458 = vunpack.c.h.b16 %v351
      %v459 = vunpack.c.l.b16 %v352
      %v460 = vunpack.c.h.b16 %v352
      %v461 = vunpack.c.l.b16 %v353
      %v462 = vunpack.c.h.b16 %v353
      %v463 = vunpack.c.l.b16 %v354
      %v464 = vunpack.c.h.b16 %v354
      %v465 = vunpack.c.l.b16 %v355
      %v466 = vunpack.c.h.b16 %v355
      %v467 = vunpack.c.l.b16 %v356
      %v468 = vunpack.c.h.b16 %v356
      %v469 = vunpack.c.l.b16 %v357
      %v470 = vunpack.c.h.b16 %v357
      %v471 = vunpack.c.l.b16 %v358
      %v472 = vunpack.c.h.b16 %v358
      %v473 = vunpack.c.l.b16 %v359
      %v474 = vunpack.c.h.b16 %v359
      %v475 = vunpack.c.l.b16 %v360
      %v476 = vunpack.c.h.b16 %v360
      %v477 = vunpack.c.l.b16 %v361
      %v478 = vunpack.c.h.b16 %v361
      %v479 = vunpack.c.l.b16 %v362
      %v480 = vunpack.c.h.b16 %v362
      %v481 = vunpack.c.l.b16 %v363
      %v482 = vunpack.c.h.b16 %v363
      %v483 = vunpack.c.l.b16 %v364
      %v484 = vunpack.c.h.b16 %v364
      %v485 = vunpack.c.l.b16 %v365
      %v486 = vunpack.c.h.b16 %v365
      %v487 = vunpack.c.l.b16 %v366
      %v488 = vunpack.c.h.b16 %v366
      %v489 = vunpack.c.l.b16 %v367
      %v490 = vunpack.c.h.b16 %v367
      %v491 = vpack.c.b16 %v429, %v427
      %v492 = vpack.c.b16 %v430, %v428
      %v493 = vpack.c.b16 %v433, %v431
      %v494 = vpack.c.b16 %v434, %v432
      %v495 = vpack.c.b16 %v437, %v435
      %v496 = vpack.c.b16 %v438, %v436
      %v497 = vpack.c.b16 %v441, %v439
      %v498 = vpack.c.b16 %v442, %v440
      %v499 = vpack.c.b16 %v445, %v443
      %v500 = vpack.c.b16 %v446, %v444
      %v501 = vpack.c.b16 %v449, %v447
      %v502 = vpack.c.b16 %v450, %v448
      %v503 = vpack.c.b16 %v453, %v451
      %v504 = vpack.c.b16 %v454, %v452
      %v505 = vpack.c.b16 %v457, %v455
      %v506 = vpack.c.b16 %v458, %v456
      %v507 = vpack.c.b16 %v461, %v459
      %v508 = vpack.c.b16 %v462, %v460
      %v509 = vpack.c.b16 %v465, %v463
      %v510 = vpack.c.b16 %v466, %v464
      %v511 = vpack.c.b16 %v469, %v467
      %v512 = vpack.c.b16 %v470, %v468
      %v513 = vpack.c.b16 %v473, %v471
      %v514 = vpack.c.b16 %v474, %v472
      %v515 = vpack.c.b16 %v477, %v475
      %v516 = vpack.c.b16 %v478, %v476
      %v517 = vpack.c.b16 %v481, %v479
      %v518 = vpack.c.b16 %v482, %v480
      %v519 = vpack.c.b16 %v485, %v483
      %v520 = vpack.c.b16 %v486, %v484
      %v521 = vpack.c.b16 %v489, %v487
      %v522 = vpack.c.b16 %v490, %v488
      %v566 = vunpack.c.l.b16 %v368
      %v567 = vunpack.c.l.b16 %v369
      %v568 = vunpack.c.l.b16 %v370
      %v569 = vunpack.c.l.b16 %v371
      %v570 = vunpack.c.l.b16 %v372
      %v571 = vunpack.c.l.b16 %v373
      %v572 = vunpack.c.l.b16 %v374
      %v573 = vunpack.c.l.b16 %v375
      %v574 = vunpack.c.l.b16 %v376
      %v575 = vunpack.c.l.b16 %v377
      %v576 = vunpack.c.l.b16 %v378
      %v577 = vunpack.c.l.b16 %v379
      %v578 = vunpack.c.l.b16 %v380
      %v579 = vunpack.c.l.b16 %v381
      %v580 = vunpack.c.l.b16 %v382
      %v581 = vunpack.c.l.b16 %v383
      %v582 = vunpack.c.l.b16 %v384
      %v583 = vunpack.c.l.b16 %v385
      %v584 = vunpack.c.l.b16 %v386
      %v585 = vunpack.c.l.b16 %v387
      %v586 = vunpack.c.l.b16 %v388
      %v587 = vunpack.c.l.b16 %v389
      %v588 = vunpack.c.l.b16 %v390
      %v589 = vunpack.c.l.b16 %v391
      %v590 = vunpack.c.l.b16 %v392
      %v591 = vunpack.c.l.b16 %v393
      %v592 = vunpack.c.l.b16 %v394
      %v593 = vpack.c.b16 %v567, %v566
      %v594 = vpack.c.b16 %v569, %v568
      %v595 = vpack.c.b16 %v571, %v570
      %v596 = vpack.c.b16 %v573, %v572
      %v597 = vpack.c.b16 %v575, %v574
      %v598 = vpack.c.b16 %v577, %v576
      %v599 = vpack.c.b16 %v579, %v578
      %v600 = vpack.c.b16 %v581, %v580
      %v601 = vpack.c.b16 %v583, %v582
      %v602 = vpack.c.b16 %v585, %v584
      %v603 = vpack.c.b16 %v587, %v586
      %v604 = vpack.c.b16 %v589, %v588
      %v605 = vpack.c.b16 %v591, %v590
      %v606 = vpack.c.b16 %v592, %v592
      %vm620 = vcmask 719872
      %v622 = vsel %vm620, %v492, 0
      %v625 = vsel %vm620, %v494, 0
      %v628 = vsel %vm620, %v496, 0
      %v631 = vsel %vm620, %v498, 0
      %v634 = vsel %vm620, %v500, 0
      %v637 = vsel %vm620, %v502, 0
      %v640 = vsel %vm620, %v504, 0
      %v643 = vsel %vm620, %v506, 0
      %v646 = vsel %vm620, %v508, 0
      %v649 = vsel %vm620, %v510, 0
      %v652 = vsel %vm620, %v512, 0
      %v655 = vsel %vm620, %v514, 0
      %v658 = vsel %vm620, %v516, 0
      %v661 = vsel %vm620, %v518, 0
      %v664 = vsel %vm620, %v520, 0
      %v667 = vsel %vm620, %v522, 0
      %vm669 = vcmask 1043456
      %v671 = vsel %vm669, %v606, 0
      %673 = vmatprep.subr.bf16.mxu0 0
      %674 = vmatpush1.bf16.msra.mxu0 %v593
      %675 = vmatprep.subr.bf16.mxu0 0
      %676 = vmatpush1.bf16.msra.mxu0 %v594
      %677 = vmatprep.subr.bf16.mxu0 0
      %678 = vmatpush1.bf16.msra.mxu0 %v595
      %679 = vmatprep.subr.bf16.mxu0 0
      %680 = vmatpush1.bf16.msra.mxu0 %v596
      %681 = vmatprep.subr.bf16.mxu0 0
      %682 = vmatpush1.bf16.msra.mxu0 %v597
      %683 = vmatprep.subr.bf16.mxu0 0
      %684 = vmatpush1.bf16.msra.mxu0 %v598
      %685 = vmatprep.subr.bf16.mxu0 0
      %686 = vmatpush1.bf16.msra.mxu0 %v599
      %687 = vmatprep.subr.bf16.mxu0 0
      %688 = vmatpush1.bf16.msra.mxu0 %v600
      %689 = vmatprep.subr.bf16.mxu0 0
      %690 = vmatpush1.bf16.msra.mxu0 %v601
      %691 = vmatprep.subr.bf16.mxu0 0
      %692 = vmatpush1.bf16.msra.mxu0 %v602
      %693 = vmatprep.subr.bf16.mxu0 0
      %694 = vmatpush1.bf16.msra.mxu0 %v603
      %695 = vmatprep.subr.bf16.mxu0 0
      %696 = vmatpush1.bf16.msra.mxu0 %v604
      %697 = vmatprep.subr.bf16.mxu0 0
      %698 = vmatpush1.bf16.msra.mxu0 %v605
      %699 = vmatprep.subr.bf16.mxu0 0
      %700 = vmatpush1.bf16.msra.mxu0 %v671
      %701 = vmatprep.subr.bf16.mxu0 0
      %702 = vmatpush1.bf16.msra.mxu0 0
      %703 = vmatprep.subr.bf16.mxu0 0
      %704 = vmatpush1.bf16.msra.mxu0 0
      %705 = vmatprep.mubr.bf16.mxu0 %v622
      %706 = vmatmul.mubr.bf16.gmra.mrb[0].mxu0 %v491
      %v707 = vpop.f32.mrb[0].mxu0
      %v708 = vadd.f32 0.0, %v707
      %v709 = vpop.f32.mrb[0].mxu0
      %v710 = vpop.f32.mrb[0].mxu0
      %v711 = vadd.f32 0.0, %v710
      %v712 = vpop.f32.mrb[0].mxu0
      %713 = vmatprep.mubr.bf16.mxu0 %v625
      %714 = vmatmul.mubr.bf16.gmra.mrb[0].mxu0 %v493
      %v715 = vpop.f32.mrb[0].mxu0
      %v716 = vadd.f32 0.0, %v715
      %v717 = vpop.f32.mrb[0].mxu0
      %v718 = vpop.f32.mrb[0].mxu0
      %v719 = vadd.f32 0.0, %v718
      %v720 = vpop.f32.mrb[0].mxu0
      %721 = vmatprep.mubr.bf16.mxu0 %v628
      %722 = vmatmul.mubr.bf16.gmra.mrb[0].mxu0 %v495
      %v723 = vpop.f32.mrb[0].mxu0
      %v724 = vadd.f32 0.0, %v723
      %v725 = vpop.f32.mrb[0].mxu0
      %v726 = vpop.f32.mrb[0].mxu0
      %v727 = vadd.f32 0.0, %v726
      %v728 = vpop.f32.mrb[0].mxu0
      %729 = vmatprep.mubr.bf16.mxu0 %v631
      %730 = vmatmul.mubr.bf16.gmra.mrb[0].mxu0 %v497
      %v731 = vpop.f32.mrb[0].mxu0
      %v732 = vadd.f32 0.0, %v731
      %v733 = vpop.f32.mrb[0].mxu0
      %v734 = vpop.f32.mrb[0].mxu0
      %v735 = vadd.f32 0.0, %v734
      %v736 = vpop.f32.mrb[0].mxu0
      %737 = vmatprep.mubr.bf16.mxu0 %v634
      %738 = vmatmul.mubr.bf16.gmra.mrb[0].mxu0 %v499
      %v739 = vpop.f32.mrb[0].mxu0
      %v740 = vadd.f32 0.0, %v739
      %v741 = vpop.f32.mrb[0].mxu0
      %v742 = vpop.f32.mrb[0].mxu0
      %v743 = vadd.f32 0.0, %v742
      %v744 = vpop.f32.mrb[0].mxu0
      %745 = vmatprep.mubr.bf16.mxu0 %v637
      %746 = vmatmul.mubr.bf16.gmra.mrb[0].mxu0 %v501
      %v747 = vpop.f32.mrb[0].mxu0
      %v748 = vadd.f32 0.0, %v747
      %v749 = vpop.f32.mrb[0].mxu0
      %v750 = vpop.f32.mrb[0].mxu0
      %v751 = vadd.f32 0.0, %v750
      %v752 = vpop.f32.mrb[0].mxu0
      %753 = vmatprep.mubr.bf16.mxu0 %v640
      %754 = vmatmul.mubr.bf16.gmra.mrb[0].mxu0 %v503
      %v755 = vpop.f32.mrb[0].mxu0
      %v756 = vadd.f32 0.0, %v755
      %v757 = vpop.f32.mrb[0].mxu0
      %v758 = vpop.f32.mrb[0].mxu0
      %v759 = vadd.f32 0.0, %v758
      %v760 = vpop.f32.mrb[0].mxu0
      %761 = vmatprep.mubr.bf16.mxu0 %v643
      %762 = vmatmul.mubr.bf16.gmra.mrb[0].mxu0 %v505
      %v763 = vpop.f32.mrb[0].mxu0
      %v764 = vadd.f32 0.0, %v763
      %v765 = vpop.f32.mrb[0].mxu0
      %v766 = vpop.f32.mrb[0].mxu0
      %v767 = vadd.f32 0.0, %v766
      %v768 = vpop.f32.mrb[0].mxu0
      %769 = vmatprep.mubr.bf16.mxu0 %v646
      %770 = vmatmul.mubr.bf16.gmra.mrb[0].mxu0 %v507
      %v771 = vpop.f32.mrb[0].mxu0
      %v772 = vadd.f32 0.0, %v771
      %v773 = vpop.f32.mrb[0].mxu0
      %v774 = vpop.f32.mrb[0].mxu0
      %v775 = vadd.f32 0.0, %v774
      %v776 = vpop.f32.mrb[0].mxu0
      %777 = vmatprep.mubr.bf16.mxu0 %v649
      %778 = vmatmul.mubr.bf16.gmra.mrb[0].mxu0 %v509
      %v779 = vpop.f32.mrb[0].mxu0
      %v780 = vadd.f32 0.0, %v779
      %v781 = vpop.f32.mrb[0].mxu0
      %v782 = vpop.f32.mrb[0].mxu0
      %v783 = vadd.f32 0.0, %v782
      %v784 = vpop.f32.mrb[0].mxu0
      %785 = vmatprep.mubr.bf16.mxu0 %v652
      %786 = vmatmul.mubr.bf16.gmra.mrb[0].mxu0 %v511
      %v787 = vpop.f32.mrb[0].mxu0
      %v788 = vadd.f32 0.0, %v787
      %v789 = vpop.f32.mrb[0].mxu0
      %v790 = vpop.f32.mrb[0].mxu0
      %v791 = vadd.f32 0.0, %v790
      %v792 = vpop.f32.mrb[0].mxu0
      %793 = vmatprep.mubr.bf16.mxu0 %v655
      %794 = vmatmul.mubr.bf16.gmra.mrb[0].mxu0 %v513
      %v795 = vpop.f32.mrb[0].mxu0
      %v796 = vadd.f32 0.0, %v795
      %v797 = vpop.f32.mrb[0].mxu0
      %v798 = vpop.f32.mrb[0].mxu0
      %v799 = vadd.f32 0.0, %v798
      %v800 = vpop.f32.mrb[0].mxu0
      %801 = vmatprep.mubr.bf16.mxu0 %v658
      %802 = vmatmul.mubr.bf16.gmra.mrb[0].mxu0 %v515
      %v803 = vpop.f32.mrb[0].mxu0
      %v804 = vadd.f32 0.0, %v803
      %v805 = vpop.f32.mrb[0].mxu0
      %v806 = vpop.f32.mrb[0].mxu0
      %v807 = vadd.f32 0.0, %v806
      %v808 = vpop.f32.mrb[0].mxu0
      %809 = vmatprep.mubr.bf16.mxu0 %v661
      %810 = vmatmul.mubr.bf16.gmra.mrb[0].mxu0 %v517
      %v811 = vpop.f32.mrb[0].mxu0
      %v812 = vadd.f32 0.0, %v811
      %v813 = vpop.f32.mrb[0].mxu0
      %v814 = vpop.f32.mrb[0].mxu0
      %v815 = vadd.f32 0.0, %v814
      %v816 = vpop.f32.mrb[0].mxu0
      %817 = vmatprep.mubr.bf16.mxu0 %v664
      %818 = vmatmul.mubr.bf16.gmra.mrb[0].mxu0 %v519
      %v819 = vpop.f32.mrb[0].mxu0
      %v820 = vadd.f32 0.0, %v819
      %v821 = vpop.f32.mrb[0].mxu0
      %v822 = vpop.f32.mrb[0].mxu0
      %v823 = vadd.f32 0.0, %v822
      %v824 = vpop.f32.mrb[0].mxu0
      %825 = vmatprep.mubr.bf16.mxu0 %v667
      %826 = vmatmul.mubr.bf16.gmra.mrb[0].mxu0 %v521
      %v827 = vpop.f32.mrb[0].mxu0
      %v828 = vadd.f32 0.0, %v827
      %v829 = vpop.f32.mrb[0].mxu0
      %v830 = vpop.f32.mrb[0].mxu0
      %v831 = vadd.f32 0.0, %v830
      %v832 = vpop.f32.mrb[0].mxu0
      %833 = vdwg.mxu0
      %v834 = vadd.f32 %v304, %v708
      %v835 = vadd.f32 %v305, %v711
      %v836 = vadd.f32 %v306, %v716
      %v837 = vadd.f32 %v307, %v719
      %v838 = vadd.f32 %v308, %v724
      %v839 = vadd.f32 %v309, %v727
      %v840 = vadd.f32 %v310, %v732
      %v841 = vadd.f32 %v311, %v735
      %v842 = vadd.f32 %v312, %v740
      %v843 = vadd.f32 %v313, %v743
      %v844 = vadd.f32 %v314, %v748
      %v845 = vadd.f32 %v315, %v751
      %v846 = vadd.f32 %v316, %v756
      %v847 = vadd.f32 %v317, %v759
      %v848 = vadd.f32 %v318, %v764
      %v849 = vadd.f32 %v319, %v767
      %v850 = vadd.f32 %v320, %v772
      %v851 = vadd.f32 %v321, %v775
      %v852 = vadd.f32 %v322, %v780
      %v853 = vadd.f32 %v323, %v783
      %v854 = vadd.f32 %v324, %v788
      %v855 = vadd.f32 %v325, %v791
      %v856 = vadd.f32 %v326, %v796
      %v857 = vadd.f32 %v327, %v799
      %v858 = vadd.f32 %v328, %v804
      %v859 = vadd.f32 %v329, %v807
      %v860 = vadd.f32 %v330, %v812
      %v861 = vadd.f32 %v331, %v815
      %v862 = vadd.f32 %v332, %v820
      %v863 = vadd.f32 %v333, %v823
      %v864 = vadd.f32 %v334, %v828
      %v865 = vadd.f32 %v335, %v831
      %866 = vst [vmem:[#allocation2] sm:$0xff] %v834
      %867 = vst [vmem:[#allocation2 + $0x8] sm:$0xff] %v835
      %868 = vst [vmem:[#allocation2 + $0x10] sm:$0xff] %v836
      %869 = vst [vmem:[#allocation2 + $0x18] sm:$0xff] %v837
      %870 = vst [vmem:[#allocation2 + $0x20] sm:$0xff] %v838
      %871 = vst [vmem:[#allocation2 + $0x28] sm:$0xff] %v839
      %872 = vst [vmem:[#allocation2 + $0x30] sm:$0xff] %v840
      %873 = vst [vmem:[#allocation2 + $0x38] sm:$0xff] %v841
      %874 = vst [vmem:[#allocation2 + $0x40] sm:$0xff] %v842
      %875 = vst [vmem:[#allocation2 + $0x48] sm:$0xff] %v843
      %876 = vst [vmem:[#allocation2 + $0x50] sm:$0xff] %v844
      %877 = vst [vmem:[#allocation2 + $0x58] sm:$0xff] %v845
      %878 = vst [vmem:[#allocation2 + $0x60] sm:$0xff] %v846
      %879 = vst [vmem:[#allocation2 + $0x68] sm:$0xff] %v847
      %880 = vst [vmem:[#allocation2 + $0x70] sm:$0xff] %v848
      %881 = vst [vmem:[#allocation2 + $0x78] sm:$0xff] %v849
      %882 = vst [vmem:[#allocation2 + $0x80] sm:$0xff] %v850
      %883 = vst [vmem:[#allocation2 + $0x88] sm:$0xff] %v851
      %884 = vst [vmem:[#allocation2 + $0x90] sm:$0xff] %v852
      %885 = vst [vmem:[#allocation2 + $0x98] sm:$0xff] %v853
      %886 = vst [vmem:[#allocation2 + $0xa0] sm:$0xff] %v854
      %887 = vst [vmem:[#allocation2 + $0xa8] sm:$0xff] %v855
      %888 = vst [vmem:[#allocation2 + $0xb0] sm:$0xff] %v856
      %889 = vst [vmem:[#allocation2 + $0xb8] sm:$0xff] %v857
      %890 = vst [vmem:[#allocation2 + $0xc0] sm:$0xff] %v858
      %891 = vst [vmem:[#allocation2 + $0xc8] sm:$0xff] %v859
      %892 = vst [vmem:[#allocation2 + $0xd0] sm:$0xff] %v860
      %893 = vst [vmem:[#allocation2 + $0xd8] sm:$0xff] %v861
      %894 = vst [vmem:[#allocation2 + $0xe0] sm:$0xff] %v862
      %895 = vst [vmem:[#allocation2 + $0xe8] sm:$0xff] %v863
      %896 = vst [vmem:[#allocation2 + $0xf0] sm:$0xff] %v864
      %897 = vst [vmem:[#allocation2 + $0xf8] sm:$0xff] %v865
      // Predicated region
      $region37: #{resunet_forward.47} parent=31 // pred_check
        %p898 = pneg %p268
      $region38: #{resunet_forward.47} parent=31 // pred_check_branch
        %900 = sbr.rel (%p898) target = $region40
      $region39: #{resunet_forward.47} parent=31 // pred_region
        %v901 = vld [vmem:[#allocation2] sm:$0xff]
        %v902 = vld [vmem:[#allocation2 + $0x8] sm:$0xff]
        %v903 = vld [vmem:[#allocation2 + $0x10] sm:$0xff]
        %v904 = vld [vmem:[#allocation2 + $0x18] sm:$0xff]
        %v905 = vld [vmem:[#allocation2 + $0x20] sm:$0xff]
        %v906 = vld [vmem:[#allocation2 + $0x28] sm:$0xff]
        %v907 = vld [vmem:[#allocation2 + $0x30] sm:$0xff]
        %v908 = vld [vmem:[#allocation2 + $0x38] sm:$0xff]
        %v909 = vld [vmem:[#allocation2 + $0x40] sm:$0xff]
        %v910 = vld [vmem:[#allocation2 + $0x48] sm:$0xff]
        %v911 = vld [vmem:[#allocation2 + $0x50] sm:$0xff]
        %v912 = vld [vmem:[#allocation2 + $0x58] sm:$0xff]
        %v913 = vld [vmem:[#allocation2 + $0x60] sm:$0xff]
        %v914 = vld [vmem:[#allocation2 + $0x68] sm:$0xff]
        %v915 = vld [vmem:[#allocation2 + $0x70] sm:$0xff]
        %v916 = vld [vmem:[#allocation2 + $0x78] sm:$0xff]
        %v917 = vld [vmem:[#allocation2 + $0x80] sm:$0xff]
        %v918 = vld [vmem:[#allocation2 + $0x88] sm:$0xff]
        %v919 = vld [vmem:[#allocation2 + $0x90] sm:$0xff]
        %v920 = vld [vmem:[#allocation2 + $0x98] sm:$0xff]
        %v921 = vld [vmem:[#allocation2 + $0xa0] sm:$0xff]
        %v922 = vld [vmem:[#allocation2 + $0xa8] sm:$0xff]
        %v923 = vld [vmem:[#allocation2 + $0xb0] sm:$0xff]
        %v924 = vld [vmem:[#allocation2 + $0xb8] sm:$0xff]
        %v925 = vld [vmem:[#allocation2 + $0xc0] sm:$0xff]
        %v926 = vld [vmem:[#allocation2 + $0xc8] sm:$0xff]
        %v927 = vld [vmem:[#allocation2 + $0xd0] sm:$0xff]
        %v928 = vld [vmem:[#allocation2 + $0xd8] sm:$0xff]
        %v929 = vld [vmem:[#allocation2 + $0xe0] sm:$0xff]
        %v930 = vld [vmem:[#allocation2 + $0xe8] sm:$0xff]
        %v931 = vld [vmem:[#allocation2 + $0xf0] sm:$0xff]
        %v932 = vld [vmem:[#allocation2 + $0xf8] sm:$0xff]
        %v933 = vld [vmem:[%s257] sm:$0x1]
        %v935 = vlaneseq
        %v936 = vshrl.u32 %v935, 7
        %v937 = vsub.s32 0, %v936
        %v938 = vrot.slane %v933, %v937
        %v940 = vadd.f32 %v901, %v938
        %v941 = vadd.f32 %v902, %v938
        %v942 = vadd.f32 %v903, %v938
        %v943 = vadd.f32 %v904, %v938
        %v944 = vadd.f32 %v905, %v938
        %v945 = vadd.f32 %v906, %v938
        %v946 = vadd.f32 %v907, %v938
        %v947 = vadd.f32 %v908, %v938
        %v948 = vadd.f32 %v909, %v938
        %v949 = vadd.f32 %v910, %v938
        %v950 = vadd.f32 %v911, %v938
        %v951 = vadd.f32 %v912, %v938
        %v952 = vadd.f32 %v913, %v938
        %v953 = vadd.f32 %v914, %v938
        %v954 = vadd.f32 %v915, %v938
        %v955 = vadd.f32 %v916, %v938
        %v956 = vadd.f32 %v917, %v938
        %v957 = vadd.f32 %v918, %v938
        %v958 = vadd.f32 %v919, %v938
        %v959 = vadd.f32 %v920, %v938
        %v960 = vadd.f32 %v921, %v938
        %v961 = vadd.f32 %v922, %v938
        %v962 = vadd.f32 %v923, %v938
        %v963 = vadd.f32 %v924, %v938
        %v964 = vadd.f32 %v925, %v938
        %v965 = vadd.f32 %v926, %v938
        %v966 = vadd.f32 %v927, %v938
        %v967 = vadd.f32 %v928, %v938
        %v968 = vadd.f32 %v929, %v938
        %v969 = vadd.f32 %v930, %v938
        %v970 = vadd.f32 %v931, %v938
        %v971 = vadd.f32 %v932, %v938
        %v972 = vpack.c.bf16 %v941, %v940
        %v973 = vpack.c.bf16 %v943, %v942
        %v974 = vpack.c.bf16 %v945, %v944
        %v975 = vpack.c.bf16 %v947, %v946
        %v976 = vpack.c.bf16 %v949, %v948
        %v977 = vpack.c.bf16 %v951, %v950
        %v978 = vpack.c.bf16 %v953, %v952
        %v979 = vpack.c.bf16 %v955, %v954
        %v980 = vpack.c.bf16 %v957, %v956
        %v981 = vpack.c.bf16 %v959, %v958
        %v982 = vpack.c.bf16 %v961, %v960
        %v983 = vpack.c.bf16 %v963, %v962
        %v984 = vpack.c.bf16 %v965, %v964
        %v985 = vpack.c.bf16 %v967, %v966
        %v986 = vpack.c.bf16 %v969, %v968
        %v987 = vpack.c.bf16 %v971, %v970
        %v1004 = vunpack.c.l.b16 %v972
        %v1005 = vunpack.c.h.b16 %v972
        %v1006 = vunpack.c.l.b16 %v973
        %v1007 = vunpack.c.h.b16 %v973
        %v1008 = vunpack.c.l.b16 %v974
        %v1009 = vunpack.c.h.b16 %v974
        %v1010 = vunpack.c.l.b16 %v975
        %v1011 = vunpack.c.h.b16 %v975
        %v1012 = vunpack.c.l.b16 %v976
        %v1013 = vunpack.c.h.b16 %v976
        %v1014 = vunpack.c.l.b16 %v977
        %v1015 = vunpack.c.h.b16 %v977
        %v1016 = vunpack.c.l.b16 %v978
        %v1017 = vunpack.c.h.b16 %v978
        %v1018 = vunpack.c.l.b16 %v979
        %v1019 = vunpack.c.h.b16 %v979
        %v1020 = vunpack.c.l.b16 %v980
        %v1021 = vunpack.c.h.b16 %v980
        %v1022 = vunpack.c.l.b16 %v981
        %v1023 = vunpack.c.h.b16 %v981
        %v1024 = vunpack.c.l.b16 %v982
        %v1025 = vunpack.c.h.b16 %v982
        %v1026 = vunpack.c.l.b16 %v983
        %v1027 = vunpack.c.h.b16 %v983
        %v1028 = vunpack.c.l.b16 %v984
        %v1029 = vunpack.c.h.b16 %v984
        %v1030 = vunpack.c.l.b16 %v985
        %v1031 = vunpack.c.h.b16 %v985
        %v1032 = vunpack.c.l.b16 %v986
        %v1033 = vunpack.c.h.b16 %v986
        %v1034 = vunpack.c.l.b16 %v987
        %v1035 = vunpack.c.h.b16 %v987
        %v1036 = vpack.c.b16 %v1004, %v1004
        %v1037 = vpack.c.b16 %v1005, %v1005
        %v1038 = vpack.c.b16 %v1006, %v1006
        %v1039 = vpack.c.b16 %v1007, %v1007
        %v1040 = vpack.c.b16 %v1008, %v1008
        %v1041 = vpack.c.b16 %v1009, %v1009
        %v1042 = vpack.c.b16 %v1010, %v1010
        %v1043 = vpack.c.b16 %v1011, %v1011
        %v1044 = vpack.c.b16 %v1012, %v1012
        %v1045 = vpack.c.b16 %v1013, %v1013
        %v1046 = vpack.c.b16 %v1014, %v1014
        %v1047 = vpack.c.b16 %v1015, %v1015
        %v1048 = vpack.c.b16 %v1016, %v1016
        %v1049 = vpack.c.b16 %v1017, %v1017
        %v1050 = vpack.c.b16 %v1018, %v1018
        %v1051 = vpack.c.b16 %v1019, %v1019
        %v1052 = vpack.c.b16 %v1020, %v1020
        %v1053 = vpack.c.b16 %v1021, %v1021
        %v1054 = vpack.c.b16 %v1022, %v1022
        %v1055 = vpack.c.b16 %v1023, %v1023
        %v1056 = vpack.c.b16 %v1024, %v1024
        %v1057 = vpack.c.b16 %v1025, %v1025
        %v1058 = vpack.c.b16 %v1026, %v1026
        %v1059 = vpack.c.b16 %v1027, %v1027
        %v1060 = vpack.c.b16 %v1028, %v1028
        %v1061 = vpack.c.b16 %v1029, %v1029
        %v1062 = vpack.c.b16 %v1030, %v1030
        %v1063 = vpack.c.b16 %v1031, %v1031
        %v1064 = vpack.c.b16 %v1032, %v1032
        %v1065 = vpack.c.b16 %v1033, %v1033
        %v1066 = vpack.c.b16 %v1034, %v1034
        %v1067 = vpack.c.b16 %v1035, %v1035
        %1100 = vst [vmem:[%s265] sm:$0xf] %v1036
        %1101 = vst [vmem:[%s265 + $0x4] sm:$0xf] %v1037
        %1102 = vst [vmem:[%s265 + $0x8] sm:$0xf] %v1038
        %1103 = vst [vmem:[%s265 + $0xc] sm:$0xf] %v1039
        %1104 = vst [vmem:[%s265 + $0x10] sm:$0xf] %v1040
        %1105 = vst [vmem:[%s265 + $0x14] sm:$0xf] %v1041
        %1106 = vst [vmem:[%s265 + $0x18] sm:$0xf] %v1042
        %1107 = vst [vmem:[%s265 + $0x1c] sm:$0xf] %v1043
        %1108 = vst [vmem:[%s265 + $0x20] sm:$0xf] %v1044
        %1109 = vst [vmem:[%s265 + $0x24] sm:$0xf] %v1045
        %1110 = vst [vmem:[%s265 + $0x28] sm:$0xf] %v1046
        %1111 = vst [vmem:[%s265 + $0x2c] sm:$0xf] %v1047
        %1112 = vst [vmem:[%s265 + $0x30] sm:$0xf] %v1048
        %1113 = vst [vmem:[%s265 + $0x34] sm:$0xf] %v1049
        %1114 = vst [vmem:[%s265 + $0x38] sm:$0xf] %v1050
        %1115 = vst [vmem:[%s265 + $0x3c] sm:$0xf] %v1051
        %1116 = vst [vmem:[%s265 + $0x40] sm:$0xf] %v1052
        %1117 = vst [vmem:[%s265 + $0x44] sm:$0xf] %v1053
        %1118 = vst [vmem:[%s265 + $0x48] sm:$0xf] %v1054
        %1119 = vst [vmem:[%s265 + $0x4c] sm:$0xf] %v1055
        %1120 = vst [vmem:[%s265 + $0x50] sm:$0xf] %v1056
        %1121 = vst [vmem:[%s265 + $0x54] sm:$0xf] %v1057
        %1122 = vst [vmem:[%s265 + $0x58] sm:$0xf] %v1058
        %1123 = vst [vmem:[%s265 + $0x5c] sm:$0xf] %v1059
        %1124 = vst [vmem:[%s265 + $0x60] sm:$0xf] %v1060
        %1125 = vst [vmem:[%s265 + $0x64] sm:$0xf] %v1061
        %1126 = vst [vmem:[%s265 + $0x68] sm:$0xf] %v1062
        %1127 = vst [vmem:[%s265 + $0x6c] sm:$0xf] %v1063
        %1128 = vst [vmem:[%s265 + $0x70] sm:$0xf] %v1064
        %1129 = vst [vmem:[%s265 + $0x74] sm:$0xf] %v1065
        %1130 = vst [vmem:[%s265 + $0x78] sm:$0xf] %v1066
        %1131 = vst [vmem:[%s265 + $0x7c] sm:$0xf] %v1067
      $region40: #{resunet_forward.47} parent=31 // pred_fallthru
        _
      %s1132 = smul.u32 32, %s19
      %p1133 = scmp.lt.s32.totalorder %s1132, 63
      %s1134 = scalar_select %p1133, %s1132, 63
      %p1135 = scmp.lt.s32.totalorder %s20, 0
      %s1136 = scalar_select %p1135, %s20, 0
      %s1137 = sadd.s32 %s1136, %s1134
      %s1138 = smul.addr %s1137, 4
      %s1139 = scalar_lea.vmem %s3, %s1138
      // Predicated region
      $region41: #{resunet_forward.47} parent=31 // pred_check
        %p1140 = pneg %p135
      $region42: #{resunet_forward.47} parent=31 // pred_check_branch
        %1142 = sbr.rel (%p1140) target = $region44
      $region43: #{resunet_forward.47} parent=31 // pred_region
        %s1143 = smul.u32 32, %s19
      $region44: #{resunet_forward.47} parent=31 // pred_fallthru
        _
    $region32: #{resunet_forward.47} parent=5 // pred_fallthru
      _
    %p1144 = scmp.le.s32.totalorder 2, %s9
    // Predicated region
    $region45: #{resunet_forward.47} parent=5 // pred_check
      %p1145 = pneg %p1144
    $region46: #{resunet_forward.47} parent=5 // pred_check_branch
      %1147 = sbr.rel (%p1145) target = $region48
    $region47: #{resunet_forward.47} parent=5 // pred_region
      %s1148 = ssub.s32 %s9, 2
      // Predicated region
      $region49: #{resunet_forward.47} parent=47 // pred_check
        %p1149 = pneg %p141
      $region50: #{resunet_forward.47} parent=47 // pred_check_branch
        %1151 = sbr.rel (%p1149) target = $region52
      $region51: #{resunet_forward.47} parent=47 // pred_region
        %s1152 = smul.u32 32, %s22
        %p1153 = scmp.lt.s32.totalorder %s1152, 63
        %s1154 = scalar_select %p1153, %s1152, 63
        %p1155 = scmp.lt.s32.totalorder %s23, 0
        %s1156 = scalar_select %p1155, %s23, 0
        %s1157 = sadd.s32 %s1156, %s1154
        %s1158 = smul.addr %s1157, 4
        %s1159 = scalar_lea.vmem %s3, %s1158
      $region52: #{resunet_forward.47} parent=47 // pred_fallthru
        _
    $region48: #{resunet_forward.47} parent=5 // pred_fallthru
      _
  $region6: #{resunet_forward.47} parent=0 // loop_footer
    %s13 = sadd.s32 1, %s9
  $region7: #{resunet_forward.47} parent=0 // loop_footer_branch
    %8 = sbr.rel target = $region3
  $region8: #{resunet_forward.47} parent=0 // loop_exit
    _

// kernel: resunet_forward.49
$region0: #{resunet_forward.49}
  #allocation0 [shape = 'u32[]', space=smem, size = 0x4, offset = 0x4, fixed_abs, tag = 'smem constant byte address 0x4 - core index']
  #allocation1 [shape = 'u32[144,128]{1,0:T(1,128)}', space=vmem, size = 0x12000, scoped, tag = 'internal scratch']
  #allocation2 [shape = 'f32[256,128]{1,0:T(8,128)}', space=vmem, size = 0x20000, scoped, tag = 'scratch operand']
  %s0 = inlined_call_operand.vmem [shape: bf16[512,8], index: 0, kind: input, shape index: {}]
  %s1 = inlined_call_operand.vmem [shape: bf16[8,128], index: 1, kind: input, shape index: {}]
  %s2 = inlined_call_operand.vmem [shape: f32[1,128], index: 2, kind: input, shape index: {}]
  %s3 = inlined_call_operand.vmem [shape: bf16[512,128], index: 3, kind: output, shape index: {}]
  %s4 = sld [smem:[#allocation0]]
  $region53: #{resunet_forward.49} parent=0
    _
  %s6 = ssub.s32 1, %s4
  %s7 = scalar_select 0, %s6, %s4
  loop: start=0, step=1, limit=4
  $region2: #{resunet_forward.49} parent=0 // loop_pre_header
    _
  $region3: #{resunet_forward.49} parent=0 // loop_header
    %s9 = sphi 0, %s13
    %p10 = scmp.ge.s32.totalorder %s9, 4
    %s16 = sphi 0, %s35
    %s17 = sphi 0, %s31
    %s18 = sphi 0, %s27
    %s19 = sphi 0, %s16
    %s20 = sphi 0, %s17
    %s21 = sphi 0, %s18
    %s22 = sphi 0, %s19
    %s23 = sphi 0, %s20
    %s24 = sphi 0, %s21
    %s40 = sphi 0, %s42
    %s43 = sphi 0, %s40
    %s44 = sphi 0, %s43
    %s60 = sphi 0, %s44
    %s68 = sphi 0, %s70
    %s71 = sphi 0, %s68
    %s72 = sphi 0, %s71
    %s88 = sphi 0, %s72
    %s94 = sphi 0, %s96
    %s97 = sphi 0, %s94
    %s98 = sphi 0, %s97
    %s114 = sphi 0, %s98
    %s122 = sphi 0, %s124
    %s125 = sphi 0, %s122
    %s126 = sphi 0, %s125
    %s142 = sphi 0, %s126
  $region4: #{resunet_forward.49} parent=0 // loop_header_branch
    %12 = sbr.rel (%p10) target = $region8
  $region5: #{resunet_forward.49} parent=0 // loop_body
    %s14 = ssub.s32 %s9, 1
    %s15 = ssub.s32 %s9, 2
    %s25 = sadd.s32 1, %s18
    %p26 = scmp.ge.s32.totalorder %s25, 1
    %s27 = scalar_select %p26, 0, %s25
    %s28 = sadd.s32 1, %s17
    %s29 = scalar_select %p26, %s28, %s17
    %p30 = scmp.ge.s32.totalorder %s29, 1
    %s31 = scalar_select %p30, 0, %s29
    %s32 = sadd.s32 1, %s16
    %s33 = scalar_select %p30, %s32, %s16
    %p34 = scmp.ge.s32.totalorder %s33, 2
    %s35 = scalar_select %p34, 0, %s33
    %s36 = ssub.s32 %s16, %s35
    %s37 = ssub.s32 %s18, %s27
    %s38 = sor.u32 %s36, %s37
    %p39 = scmp.eq.s32.totalorder %s38, 0
    %s41 = sadd.s32 %s40, 1
    %s42 = scalar_select %p39, %s40, %s41
    %p45 = pneg %p39
    %p46 = scmp.eq.s32.totalorder %s9, 1
    %p47 = por %p45, %p46
    %p48 = scmp.ne.s32.totalorder %s40, %s43
    %p49 = scmp.eq.s32.totalorder %s9, 0
    %p50 = por %p48, %p49
    %p51 = scmp.ne.s32.totalorder %s40, %s43
    %p52 = scmp.eq.s32.totalorder %s14, 1
    %p53 = por %p51, %p52
    %p54 = scmp.ne.s32.totalorder %s43, %s44
    %p55 = scmp.eq.s32.totalorder %s14, 0
    %p56 = por %p54, %p55
    %p57 = scmp.ne.s32.totalorder %s43, %s44
    %p58 = scmp.eq.s32.totalorder %s15, 1
    %p59 = por %p57, %p58
    %p61 = scmp.ne.s32.totalorder %s44, %s60
    %p62 = scmp.eq.s32.totalorder %s15, 0
    %p63 = por %p61, %p62
    %s64 = ssub.s32 %s18, %s27
    %s65 = ssub.s32 %s17, %s31
    %s66 = sor.u32 %s64, %s65
    %p67 = scmp.eq.s32.totalorder %s66, 0
    %s69 = sadd.s32 %s68, 1
    %s70 = scalar_select %p67, %s68, %s69
    %p73 = pneg %p67
    %p74 = scmp.eq.s32.totalorder %s9, 1
    %p75 = por %p73, %p74
    %p76 = scmp.ne.s32.totalorder %s68, %s71
    %p77 = scmp.eq.s32.totalorder %s9, 0
    %p78 = por %p76, %p77
    %p79 = scmp.ne.s32.totalorder %s68, %s71
    %p80 = scmp.eq.s32.totalorder %s14, 1
    %p81 = por %p79, %p80
    %p82 = scmp.ne.s32.totalorder %s71, %s72
    %p83 = scmp.eq.s32.totalorder %s14, 0
    %p84 = por %p82, %p83
    %p85 = scmp.ne.s32.totalorder %s71, %s72
    %p86 = scmp.eq.s32.totalorder %s15, 1
    %p87 = por %p85, %p86
    %p89 = scmp.ne.s32.totalorder %s72, %s88
    %p90 = scmp.eq.s32.totalorder %s15, 0
    %p91 = por %p89, %p90
    %s92 = ssub.s32 %s17, %s31
    %p93 = scmp.eq.s32.totalorder %s92, 0
    %s95 = sadd.s32 %s94, 1
    %s96 = scalar_select %p93, %s94, %s95
    %p99 = pneg %p93
    %p100 = scmp.eq.s32.totalorder %s9, 1
    %p101 = por %p99, %p100
    %p102 = scmp.ne.s32.totalorder %s94, %s97
    %p103 = scmp.eq.s32.totalorder %s9, 0
    %p104 = por %p102, %p103
    %p105 = scmp.ne.s32.totalorder %s94, %s97
    %p106 = scmp.eq.s32.totalorder %s14, 1
    %p107 = por %p105, %p106
    %p108 = scmp.ne.s32.totalorder %s97, %s98
    %p109 = scmp.eq.s32.totalorder %s14, 0
    %p110 = por %p108, %p109
    %p111 = scmp.ne.s32.totalorder %s97, %s98
    %p112 = scmp.eq.s32.totalorder %s15, 1
    %p113 = por %p111, %p112
    %p115 = scmp.ne.s32.totalorder %s98, %s114
    %p116 = scmp.eq.s32.totalorder %s15, 0
    %p117 = por %p115, %p116
    %s118 = ssub.s32 %s16, %s35
    %s119 = ssub.s32 %s17, %s31
    %s120 = sor.u32 %s118, %s119
    %p121 = scmp.eq.s32.totalorder %s120, 0
    %s123 = sadd.s32 %s122, 1
    %s124 = scalar_select %p121, %s122, %s123
    %p127 = pneg %p121
    %p128 = scmp.eq.s32.totalorder %s9, 1
    %p129 = por %p127, %p128
    %p130 = scmp.ne.s32.totalorder %s122, %s125
    %p131 = scmp.eq.s32.totalorder %s9, 0
    %p132 = por %p130, %p131
    %p133 = scmp.ne.s32.totalorder %s122, %s125
    %p134 = scmp.eq.s32.totalorder %s14, 1
    %p135 = por %p133, %p134
    %p136 = scmp.ne.s32.totalorder %s125, %s126
    %p137 = scmp.eq.s32.totalorder %s14, 0
    %p138 = por %p136, %p137
    %p139 = scmp.ne.s32.totalorder %s125, %s126
    %p140 = scmp.eq.s32.totalorder %s15, 1
    %p141 = por %p139, %p140
    %p143 = scmp.ne.s32.totalorder %s126, %s142
    %p144 = scmp.eq.s32.totalorder %s15, 0
    %p145 = por %p143, %p144
    %p146 = scmp.le.s32.totalorder 1, %s9
    %p147 = scmp.lt.s32.totalorder %s9, 3
    %p148 = pnand %p146, %p147
    %p149 = pneg %p148
    // Predicated region
    $region9: #{resunet_forward.49} parent=5 // pred_check
      _
    $region10: #{resunet_forward.49} parent=5 // pred_check_branch
      %151 = sbr.rel (%p148) target = $region12
    $region11: #{resunet_forward.49} parent=5 // pred_region
      %s152 = ssub.s32 %s9, 1
      // Predicated region
      $region13: #{resunet_forward.49} parent=11 // pred_check
        %p153 = pneg %p84
      $region14: #{resunet_forward.49} parent=11 // pred_check_branch
        %155 = sbr.rel (%p153) target = $region16
      $region15: #{resunet_forward.49} parent=11 // pred_region
        %p156 = scmp.lt.s32.totalorder %s21, 0
        %s157 = scalar_select %p156, %s21, 0
        %p158 = scmp.lt.s32.totalorder %s20, 0
        %s159 = scalar_select %p158, %s20, 0
        %s160 = sadd.s32 %s159, %s157
        %s161 = smul.addr %s160, 4
        %s162 = scalar_lea.vmem %s1, %s161
      $region16: #{resunet_forward.49} parent=11 // pred_fallthru
        _
      // Predicated region
      $region17: #{resunet_forward.49} parent=11 // pred_check
        %p163 = pneg %p110
      $region18: #{resunet_forward.49} parent=11 // pred_check_branch
        %165 = sbr.rel (%p163) target = $region20
      $region19: #{resunet_forward.49} parent=11 // pred_region
        %p166 = scmp.lt.s32.totalorder %s20, 0
        %s167 = scalar_select %p166, %s20, 0
        %s168 = scalar_lea.vmem %s2, %s167
      $region20: #{resunet_forward.49} parent=11 // pred_fallthru
        _
    $region12: #{resunet_forward.49} parent=5 // pred_fallthru
      _
    %p169 = scmp.lt.s32.totalorder %s9, 2
    // Predicated region
    $region21: #{resunet_forward.49} parent=5 // pred_check
      %p170 = pneg %p169
    $region22: #{resunet_forward.49} parent=5 // pred_check_branch
      %172 = sbr.rel (%p170) target = $region24
    $region23: #{resunet_forward.49} parent=5 // pred_region
      // Predicated region
      $region25: #{resunet_forward.49} parent=23 // pred_check
        %p173 = pneg %p50
      $region26: #{resunet_forward.49} parent=23 // pred_check_branch
        %175 = sbr.rel (%p173) target = $region28
      $region27: #{resunet_forward.49} parent=23 // pred_region
        %s176 = smul.u32 32, %s16
        %p177 = scmp.lt.s32.totalorder %s176, 63
        %s178 = scalar_select %p177, %s176, 63
        %p179 = scmp.lt.s32.totalorder %s18, 0
        %s180 = scalar_select %p179, %s18, 0
        %s181 = sadd.s32 %s180, %s178
        %s182 = smul.addr %s181, 4
        %s183 = scalar_lea.vmem %s0, %s182
        %s184 = smul.u32 32, %s16
      $region28: #{resunet_forward.49} parent=23 // pred_fallthru
        _
    $region24: #{resunet_forward.49} parent=5 // pred_fallthru
      _
    %p185 = scmp.le.s32.totalorder 1, %s9
    %p186 = scmp.lt.s32.totalorder %s9, 3
    %p187 = pnand %p185, %p186
    %p188 = pneg %p187
    // Predicated region
    $region29: #{resunet_forward.49} parent=5 // pred_check
      _
    $region30: #{resunet_forward.49} parent=5 // pred_check_branch
      %190 = sbr.rel (%p187) target = $region32
    $region31: #{resunet_forward.49} parent=5 // pred_region
      %s191 = ssub.s32 %s9, 1
      %s192 = smul.u32 32, %s19
      %p193 = scmp.lt.s32.totalorder %s192, 63
      %s194 = scalar_select %p193, %s192, 63
      %p195 = scmp.lt.s32.totalorder %s21, 0
      %s196 = scalar_select %p195, %s21, 0
      %s197 = sadd.s32 %s196, %s194
      %s198 = smul.addr %s197, 4
      %s199 = scalar_lea.vmem %s0, %s198
      %p200 = pneg %p56
      %p201 = pneg %p53
      %p202 = scmp.lt.s32.totalorder %s21, 0
      %s203 = scalar_select %p202, %s21, 0
      %p204 = scmp.lt.s32.totalorder %s20, 0
      %s205 = scalar_select %p204, %s20, 0
      %s206 = sadd.s32 %s205, %s203
      %s207 = smul.addr %s206, 4
      %s208 = scalar_lea.vmem %s1, %s207
      %p209 = pneg %p84
      %p210 = pneg %p81
      %p211 = scmp.lt.s32.totalorder %s20, 0
      %s212 = scalar_select %p211, %s20, 0
      %s213 = scalar_lea.vmem %s2, %s212
      %p214 = pneg %p110
      %p215 = pneg %p107
      %p216 = pneg %p138
      %p217 = pneg %p135
      %s218 = smul.u32 32, %s19
      %p219 = scmp.lt.s32.totalorder %s218, 63
      %s220 = scalar_select %p219, %s218, 63
      %p221 = scmp.lt.s32.totalorder %s20, 0
      %s222 = scalar_select %p221, %s20, 0
      %s223 = sadd.s32 %s222, %s220
      %s224 = smul.addr %s223, 4
      %s225 = scalar_lea.vmem %s3, %s224
      %s226 = smul.u32 32, %s19
      %p227 = scmp.lt.s32.totalorder %s226, 63
      %s228 = scalar_select %p227, %s226, 63
      %p229 = scmp.lt.s32.totalorder %s21, 0
      %s230 = scalar_select %p229, %s21, 0
      %s231 = sadd.s32 %s230, %s228
      %s232 = smul.addr %s231, 4
      %s233 = scalar_lea.vmem %s0, %s232
      %s234 = smul.u32 32, %s19
      %p235 = scmp.lt.s32.totalorder %s21, 0
      %s236 = scalar_select %p235, %s21, 0
      %p237 = scmp.lt.s32.totalorder %s20, 0
      %s238 = scalar_select %p237, %s20, 0
      %s239 = sadd.s32 %s238, %s236
      %s240 = smul.addr %s239, 4
      %s241 = scalar_lea.vmem %s1, %s240
      %p242 = scmp.lt.s32.totalorder %s20, 0
      %s243 = scalar_select %p242, %s20, 0
      %s244 = scalar_lea.vmem %s2, %s243
      %s245 = smul.u32 32, %s19
      %p246 = scmp.lt.s32.totalorder %s245, 63
      %s247 = scalar_select %p246, %s245, 63
      %p248 = scmp.lt.s32.totalorder %s20, 0
      %s249 = scalar_select %p248, %s20, 0
      %s250 = sadd.s32 %s249, %s247
      %s251 = smul.addr %s250, 4
      %s252 = scalar_lea.vmem %s3, %s251
      %s253 = smul.u32 32, %s19
      %p255 = scmp.eq.s32.totalorder %s21, 0
      // Predicated region
      $region33: #{resunet_forward.49} parent=31 // pred_check
        %p256 = pneg %p255
      $region34: #{resunet_forward.49} parent=31 // pred_check_branch
        %258 = sbr.rel (%p256) target = $region36
      $region35: #{resunet_forward.49} parent=31 // pred_region
        %259 = vst [vmem:[#allocation2] sm:$0xff] 0.0
        %260 = vst [vmem:[#allocation2 + $0x8] sm:$0xff] 0.0
        %261 = vst [vmem:[#allocation2 + $0x10] sm:$0xff] 0.0
        %262 = vst [vmem:[#allocation2 + $0x18] sm:$0xff] 0.0
        %263 = vst [vmem:[#allocation2 + $0x20] sm:$0xff] 0.0
        %264 = vst [vmem:[#allocation2 + $0x28] sm:$0xff] 0.0
        %265 = vst [vmem:[#allocation2 + $0x30] sm:$0xff] 0.0
        %266 = vst [vmem:[#allocation2 + $0x38] sm:$0xff] 0.0
        %267 = vst [vmem:[#allocation2 + $0x40] sm:$0xff] 0.0
        %268 = vst [vmem:[#allocation2 + $0x48] sm:$0xff] 0.0
        %269 = vst [vmem:[#allocation2 + $0x50] sm:$0xff] 0.0
        %270 = vst [vmem:[#allocation2 + $0x58] sm:$0xff] 0.0
        %271 = vst [vmem:[#allocation2 + $0x60] sm:$0xff] 0.0
        %272 = vst [vmem:[#allocation2 + $0x68] sm:$0xff] 0.0
        %273 = vst [vmem:[#allocation2 + $0x70] sm:$0xff] 0.0
        %274 = vst [vmem:[#allocation2 + $0x78] sm:$0xff] 0.0
        %275 = vst [vmem:[#allocation2 + $0x80] sm:$0xff] 0.0
        %276 = vst [vmem:[#allocation2 + $0x88] sm:$0xff] 0.0
        %277 = vst [vmem:[#allocation2 + $0x90] sm:$0xff] 0.0
        %278 = vst [vmem:[#allocation2 + $0x98] sm:$0xff] 0.0
        %279 = vst [vmem:[#allocation2 + $0xa0] sm:$0xff] 0.0
        %280 = vst [vmem:[#allocation2 + $0xa8] sm:$0xff] 0.0
        %281 = vst [vmem:[#allocation2 + $0xb0] sm:$0xff] 0.0
        %282 = vst [vmem:[#allocation2 + $0xb8] sm:$0xff] 0.0
        %283 = vst [vmem:[#allocation2 + $0xc0] sm:$0xff] 0.0
        %284 = vst [vmem:[#allocation2 + $0xc8] sm:$0xff] 0.0
        %285 = vst [vmem:[#allocation2 + $0xd0] sm:$0xff] 0.0
        %286 = vst [vmem:[#allocation2 + $0xd8] sm:$0xff] 0.0
        %287 = vst [vmem:[#allocation2 + $0xe0] sm:$0xff] 0.0
        %288 = vst [vmem:[#allocation2 + $0xe8] sm:$0xff] 0.0
        %289 = vst [vmem:[#allocation2 + $0xf0] sm:$0xff] 0.0
        %290 = vst [vmem:[#allocation2 + $0xf8] sm:$0xff] 0.0
      $region36: #{resunet_forward.49} parent=31 // pred_fallthru
        _
      %v291 = vld [vmem:[#allocation2] sm:$0xff]
      %v292 = vld [vmem:[#allocation2 + $0x8] sm:$0xff]
      %v293 = vld [vmem:[#allocation2 + $0x10] sm:$0xff]
      %v294 = vld [vmem:[#allocation2 + $0x18] sm:$0xff]
      %v295 = vld [vmem:[#allocation2 + $0x20] sm:$0xff]
      %v296 = vld [vmem:[#allocation2 + $0x28] sm:$0xff]
      %v297 = vld [vmem:[#allocation2 + $0x30] sm:$0xff]
      %v298 = vld [vmem:[#allocation2 + $0x38] sm:$0xff]
      %v299 = vld [vmem:[#allocation2 + $0x40] sm:$0xff]
      %v300 = vld [vmem:[#allocation2 + $0x48] sm:$0xff]
      %v301 = vld [vmem:[#allocation2 + $0x50] sm:$0xff]
      %v302 = vld [vmem:[#allocation2 + $0x58] sm:$0xff]
      %v303 = vld [vmem:[#allocation2 + $0x60] sm:$0xff]
      %v304 = vld [vmem:[#allocation2 + $0x68] sm:$0xff]
      %v305 = vld [vmem:[#allocation2 + $0x70] sm:$0xff]
      %v306 = vld [vmem:[#allocation2 + $0x78] sm:$0xff]
      %v307 = vld [vmem:[#allocation2 + $0x80] sm:$0xff]
      %v308 = vld [vmem:[#allocation2 + $0x88] sm:$0xff]
      %v309 = vld [vmem:[#allocation2 + $0x90] sm:$0xff]
      %v310 = vld [vmem:[#allocation2 + $0x98] sm:$0xff]
      %v311 = vld [vmem:[#allocation2 + $0xa0] sm:$0xff]
      %v312 = vld [vmem:[#allocation2 + $0xa8] sm:$0xff]
      %v313 = vld [vmem:[#allocation2 + $0xb0] sm:$0xff]
      %v314 = vld [vmem:[#allocation2 + $0xb8] sm:$0xff]
      %v315 = vld [vmem:[#allocation2 + $0xc0] sm:$0xff]
      %v316 = vld [vmem:[#allocation2 + $0xc8] sm:$0xff]
      %v317 = vld [vmem:[#allocation2 + $0xd0] sm:$0xff]
      %v318 = vld [vmem:[#allocation2 + $0xd8] sm:$0xff]
      %v319 = vld [vmem:[#allocation2 + $0xe0] sm:$0xff]
      %v320 = vld [vmem:[#allocation2 + $0xe8] sm:$0xff]
      %v321 = vld [vmem:[#allocation2 + $0xf0] sm:$0xff]
      %v322 = vld [vmem:[#allocation2 + $0xf8] sm:$0xff]
      %v323 = vld [vmem:[%s233] sm:$0xf]
      %v324 = vld [vmem:[%s233 + $0x4] sm:$0xf]
      %v325 = vld [vmem:[%s233 + $0x8] sm:$0xf]
      %v326 = vld [vmem:[%s233 + $0xc] sm:$0xf]
      %v327 = vld [vmem:[%s233 + $0x10] sm:$0xf]
      %v328 = vld [vmem:[%s233 + $0x14] sm:$0xf]
      %v329 = vld [vmem:[%s233 + $0x18] sm:$0xf]
      %v330 = vld [vmem:[%s233 + $0x1c] sm:$0xf]
      %v331 = vld [vmem:[%s233 + $0x20] sm:$0xf]
      %v332 = vld [vmem:[%s233 + $0x24] sm:$0xf]
      %v333 = vld [vmem:[%s233 + $0x28] sm:$0xf]
      %v334 = vld [vmem:[%s233 + $0x2c] sm:$0xf]
      %v335 = vld [vmem:[%s233 + $0x30] sm:$0xf]
      %v336 = vld [vmem:[%s233 + $0x34] sm:$0xf]
      %v337 = vld [vmem:[%s233 + $0x38] sm:$0xf]
      %v338 = vld [vmem:[%s233 + $0x3c] sm:$0xf]
      %v339 = vld [vmem:[%s233 + $0x40] sm:$0xf]
      %v340 = vld [vmem:[%s233 + $0x44] sm:$0xf]
      %v341 = vld [vmem:[%s233 + $0x48] sm:$0xf]
      %v342 = vld [vmem:[%s233 + $0x4c] sm:$0xf]
      %v343 = vld [vmem:[%s233 + $0x50] sm:$0xf]
      %v344 = vld [vmem:[%s233 + $0x54] sm:$0xf]
      %v345 = vld [vmem:[%s233 + $0x58] sm:$0xf]
      %v346 = vld [vmem:[%s233 + $0x5c] sm:$0xf]
      %v347 = vld [vmem:[%s233 + $0x60] sm:$0xf]
      %v348 = vld [vmem:[%s233 + $0x64] sm:$0xf]
      %v349 = vld [vmem:[%s233 + $0x68] sm:$0xf]
      %v350 = vld [vmem:[%s233 + $0x6c] sm:$0xf]
      %v351 = vld [vmem:[%s233 + $0x70] sm:$0xf]
      %v352 = vld [vmem:[%s233 + $0x74] sm:$0xf]
      %v353 = vld [vmem:[%s233 + $0x78] sm:$0xf]
      %v354 = vld [vmem:[%s233 + $0x7c] sm:$0xf]
      %v355 = vld [vmem:[%s241] sm:$0xf]
      %v388 = vunpack.c.l.b16 %v323
      %v389 = vunpack.c.l.b16 %v324
      %v390 = vunpack.c.l.b16 %v325
      %v391 = vunpack.c.l.b16 %v326
      %v392 = vunpack.c.l.b16 %v327
      %v393 = vunpack.c.l.b16 %v328
      %v394 = vunpack.c.l.b16 %v329
      %v395 = vunpack.c.l.b16 %v330
      %v396 = vunpack.c.l.b16 %v331
      %v397 = vunpack.c.l.b16 %v332
      %v398 = vunpack.c.l.b16 %v333
      %v399 = vunpack.c.l.b16 %v334
      %v400 = vunpack.c.l.b16 %v335
      %v401 = vunpack.c.l.b16 %v336
      %v402 = vunpack.c.l.b16 %v337
      %v403 = vunpack.c.l.b16 %v338
      %v404 = vunpack.c.l.b16 %v339
      %v405 = vunpack.c.l.b16 %v340
      %v406 = vunpack.c.l.b16 %v341
      %v407 = vunpack.c.l.b16 %v342
      %v408 = vunpack.c.l.b16 %v343
      %v409 = vunpack.c.l.b16 %v344
      %v410 = vunpack.c.l.b16 %v345
      %v411 = vunpack.c.l.b16 %v346
      %v412 = vunpack.c.l.b16 %v347
      %v413 = vunpack.c.l.b16 %v348
      %v414 = vunpack.c.l.b16 %v349
      %v415 = vunpack.c.l.b16 %v350
      %v416 = vunpack.c.l.b16 %v351
      %v417 = vunpack.c.l.b16 %v352
      %v418 = vunpack.c.l.b16 %v353
      %v419 = vunpack.c.l.b16 %v354
      %v420 = vpack.c.b16 %v389, %v388
      %v421 = vpack.c.b16 %v391, %v390
      %v422 = vpack.c.b16 %v393, %v392
      %v423 = vpack.c.b16 %v395, %v394
      %v424 = vpack.c.b16 %v397, %v396
      %v425 = vpack.c.b16 %v399, %v398
      %v426 = vpack.c.b16 %v401, %v400
      %v427 = vpack.c.b16 %v403, %v402
      %v428 = vpack.c.b16 %v405, %v404
      %v429 = vpack.c.b16 %v407, %v406
      %v430 = vpack.c.b16 %v409, %v408
      %v431 = vpack.c.b16 %v411, %v410
      %v432 = vpack.c.b16 %v413, %v412
      %v433 = vpack.c.b16 %v415, %v414
      %v434 = vpack.c.b16 %v417, %v416
      %v435 = vpack.c.b16 %v419, %v418
      %vm436 = vcmask 64512
      %v438 = vsel %vm436, %v420, 0
      %v441 = vsel %vm436, %v421, 0
      %v444 = vsel %vm436, %v422, 0
      %v447 = vsel %vm436, %v423, 0
      %v450 = vsel %vm436, %v424, 0
      %v453 = vsel %vm436, %v425, 0
      %v456 = vsel %vm436, %v426, 0
      %v459 = vsel %vm436, %v427, 0
      %v462 = vsel %vm436, %v428, 0
      %v465 = vsel %vm436, %v429, 0
      %v468 = vsel %vm436, %v430, 0
      %v471 = vsel %vm436, %v431, 0
      %v474 = vsel %vm436, %v432, 0
      %v477 = vsel %vm436, %v433, 0
      %v480 = vsel %vm436, %v434, 0
      %v483 = vsel %vm436, %v435, 0
      %vm485 = vcmask 1043456
      %v487 = vsel %vm485, %v355, 0
      %489 = vmatprep.subr.bf16.mxu0 0
      %490 = vmatpush1.bf16.msra.mxu0 %v487
      %491 = vmatprep.subr.bf16.mxu0 0
      %492 = vmatpush1.bf16.msra.mxu0 0
      %493 = vmatprep.subr.bf16.mxu0 0
      %494 = vmatpush1.bf16.msra.mxu0 0
      %495 = vmatprep.subr.bf16.mxu0 0
      %496 = vmatpush1.bf16.msra.mxu0 0
      %497 = vmatprep.subr.bf16.mxu0 0
      %498 = vmatpush1.bf16.msra.mxu0 0
      %499 = vmatprep.subr.bf16.mxu0 0
      %500 = vmatpush1.bf16.msra.mxu0 0
      %501 = vmatprep.subr.bf16.mxu0 0
      %502 = vmatpush1.bf16.msra.mxu0 0
      %503 = vmatprep.subr.bf16.mxu0 0
      %504 = vmatpush1.bf16.msra.mxu0 0
      %505 = vmatprep.subr.bf16.mxu0 0
      %506 = vmatpush1.bf16.msra.mxu0 0
      %507 = vmatprep.subr.bf16.mxu0 0
      %508 = vmatpush1.bf16.msra.mxu0 0
      %509 = vmatprep.subr.bf16.mxu0 0
      %510 = vmatpush1.bf16.msra.mxu0 0
      %511 = vmatprep.subr.bf16.mxu0 0
      %512 = vmatpush1.bf16.msra.mxu0 0
      %513 = vmatprep.subr.bf16.mxu0 0
      %514 = vmatpush1.bf16.msra.mxu0 0
      %515 = vmatprep.subr.bf16.mxu0 0
      %516 = vmatpush1.bf16.msra.mxu0 0
      %517 = vmatprep.subr.bf16.mxu0 0
      %518 = vmatpush1.bf16.msra.mxu0 0
      %519 = vmatprep.subr.bf16.mxu0 0
      %520 = vmatpush1.bf16.msra.mxu0 0
      %521 = vmatprep.mubr.bf16.mxu0 0
      %522 = vmatmul.mubr.bf16.gmra.mrb[0].mxu0 %v438
      %v523 = vpop.f32.mrb[0].mxu0
      %v524 = vadd.f32 0.0, %v523
      %v525 = vpop.f32.mrb[0].mxu0
      %v526 = vpop.f32.mrb[0].mxu0
      %v527 = vadd.f32 0.0, %v526
      %v528 = vpop.f32.mrb[0].mxu0
      %529 = vmatprep.mubr.bf16.mxu0 0
      %530 = vmatmul.mubr.bf16.gmra.mrb[0].mxu0 %v441
      %v531 = vpop.f32.mrb[0].mxu0
      %v532 = vadd.f32 0.0, %v531
      %v533 = vpop.f32.mrb[0].mxu0
      %v534 = vpop.f32.mrb[0].mxu0
      %v535 = vadd.f32 0.0, %v534
      %v536 = vpop.f32.mrb[0].mxu0
      %537 = vmatprep.mubr.bf16.mxu0 0
      %538 = vmatmul.mubr.bf16.gmra.mrb[0].mxu0 %v444
      %v539 = vpop.f32.mrb[0].mxu0
      %v540 = vadd.f32 0.0, %v539
      %v541 = vpop.f32.mrb[0].mxu0
      %v542 = vpop.f32.mrb[0].mxu0
      %v543 = vadd.f32 0.0, %v542
      %v544 = vpop.f32.mrb[0].mxu0
      %545 = vmatprep.mubr.bf16.mxu0 0
      %546 = vmatmul.mubr.bf16.gmra.mrb[0].mxu0 %v447
      %v547 = vpop.f32.mrb[0].mxu0
      %v548 = vadd.f32 0.0, %v547
      %v549 = vpop.f32.mrb[0].mxu0
      %v550 = vpop.f32.mrb[0].mxu0
      %v551 = vadd.f32 0.0, %v550
      %v552 = vpop.f32.mrb[0].mxu0
      %553 = vmatprep.mubr.bf16.mxu0 0
      %554 = vmatmul.mubr.bf16.gmra.mrb[0].mxu0 %v450
      %v555 = vpop.f32.mrb[0].mxu0
      %v556 = vadd.f32 0.0, %v555
      %v557 = vpop.f32.mrb[0].mxu0
      %v558 = vpop.f32.mrb[0].mxu0
      %v559 = vadd.f32 0.0, %v558
      %v560 = vpop.f32.mrb[0].mxu0
      %561 = vmatprep.mubr.bf16.mxu0 0
      %562 = vmatmul.mubr.bf16.gmra.mrb[0].mxu0 %v453
      %v563 = vpop.f32.mrb[0].mxu0
      %v564 = vadd.f32 0.0, %v563
      %v565 = vpop.f32.mrb[0].mxu0
      %v566 = vpop.f32.mrb[0].mxu0
      %v567 = vadd.f32 0.0, %v566
      %v568 = vpop.f32.mrb[0].mxu0
      %569 = vmatprep.mubr.bf16.mxu0 0
      %570 = vmatmul.mubr.bf16.gmra.mrb[0].mxu0 %v456
      %v571 = vpop.f32.mrb[0].mxu0
      %v572 = vadd.f32 0.0, %v571
      %v573 = vpop.f32.mrb[0].mxu0
      %v574 = vpop.f32.mrb[0].mxu0
      %v575 = vadd.f32 0.0, %v574
      %v576 = vpop.f32.mrb[0].mxu0
      %577 = vmatprep.mubr.bf16.mxu0 0
      %578 = vmatmul.mubr.bf16.gmra.mrb[0].mxu0 %v459
      %v579 = vpop.f32.mrb[0].mxu0
      %v580 = vadd.f32 0.0, %v579
      %v581 = vpop.f32.mrb[0].mxu0
      %v582 = vpop.f32.mrb[0].mxu0
      %v583 = vadd.f32 0.0, %v582
      %v584 = vpop.f32.mrb[0].mxu0
      %585 = vmatprep.mubr.bf16.mxu0 0
      %586 = vmatmul.mubr.bf16.gmra.mrb[0].mxu0 %v462
      %v587 = vpop.f32.mrb[0].mxu0
      %v588 = vadd.f32 0.0, %v587
      %v589 = vpop.f32.mrb[0].mxu0
      %v590 = vpop.f32.mrb[0].mxu0
      %v591 = vadd.f32 0.0, %v590
      %v592 = vpop.f32.mrb[0].mxu0
      %593 = vmatprep.mubr.bf16.mxu0 0
      %594 = vmatmul.mubr.bf16.gmra.mrb[0].mxu0 %v465
      %v595 = vpop.f32.mrb[0].mxu0
      %v596 = vadd.f32 0.0, %v595
      %v597 = vpop.f32.mrb[0].mxu0
      %v598 = vpop.f32.mrb[0].mxu0
      %v599 = vadd.f32 0.0, %v598
      %v600 = vpop.f32.mrb[0].mxu0
      %601 = vmatprep.mubr.bf16.mxu0 0
      %602 = vmatmul.mubr.bf16.gmra.mrb[0].mxu0 %v468
      %v603 = vpop.f32.mrb[0].mxu0
      %v604 = vadd.f32 0.0, %v603
      %v605 = vpop.f32.mrb[0].mxu0
      %v606 = vpop.f32.mrb[0].mxu0
      %v607 = vadd.f32 0.0, %v606
      %v608 = vpop.f32.mrb[0].mxu0
      %609 = vmatprep.mubr.bf16.mxu0 0
      %610 = vmatmul.mubr.bf16.gmra.mrb[0].mxu0 %v471
      %v611 = vpop.f32.mrb[0].mxu0
      %v612 = vadd.f32 0.0, %v611
      %v613 = vpop.f32.mrb[0].mxu0
      %v614 = vpop.f32.mrb[0].mxu0
      %v615 = vadd.f32 0.0, %v614
      %v616 = vpop.f32.mrb[0].mxu0
      %617 = vmatprep.mubr.bf16.mxu0 0
      %618 = vmatmul.mubr.bf16.gmra.mrb[0].mxu0 %v474
      %v619 = vpop.f32.mrb[0].mxu0
      %v620 = vadd.f32 0.0, %v619
      %v621 = vpop.f32.mrb[0].mxu0
      %v622 = vpop.f32.mrb[0].mxu0
      %v623 = vadd.f32 0.0, %v622
      %v624 = vpop.f32.mrb[0].mxu0
      %625 = vmatprep.mubr.bf16.mxu0 0
      %626 = vmatmul.mubr.bf16.gmra.mrb[0].mxu0 %v477
      %v627 = vpop.f32.mrb[0].mxu0
      %v628 = vadd.f32 0.0, %v627
      %v629 = vpop.f32.mrb[0].mxu0
      %v630 = vpop.f32.mrb[0].mxu0
      %v631 = vadd.f32 0.0, %v630
      %v632 = vpop.f32.mrb[0].mxu0
      %633 = vmatprep.mubr.bf16.mxu0 0
      %634 = vmatmul.mubr.bf16.gmra.mrb[0].mxu0 %v480
      %v635 = vpop.f32.mrb[0].mxu0
      %v636 = vadd.f32 0.0, %v635
      %v637 = vpop.f32.mrb[0].mxu0
      %v638 = vpop.f32.mrb[0].mxu0
      %v639 = vadd.f32 0.0, %v638
      %v640 = vpop.f32.mrb[0].mxu0
      %641 = vmatprep.mubr.bf16.mxu0 0
      %642 = vmatmul.mubr.bf16.gmra.mrb[0].mxu0 %v483
      %v643 = vpop.f32.mrb[0].mxu0
      %v644 = vadd.f32 0.0, %v643
      %v645 = vpop.f32.mrb[0].mxu0
      %v646 = vpop.f32.mrb[0].mxu0
      %v647 = vadd.f32 0.0, %v646
      %v648 = vpop.f32.mrb[0].mxu0
      %649 = vdwg.mxu0
      %v650 = vadd.f32 %v291, %v524
      %v651 = vadd.f32 %v292, %v527
      %v652 = vadd.f32 %v293, %v532
      %v653 = vadd.f32 %v294, %v535
      %v654 = vadd.f32 %v295, %v540
      %v655 = vadd.f32 %v296, %v543
      %v656 = vadd.f32 %v297, %v548
      %v657 = vadd.f32 %v298, %v551
      %v658 = vadd.f32 %v299, %v556
      %v659 = vadd.f32 %v300, %v559
      %v660 = vadd.f32 %v301, %v564
      %v661 = vadd.f32 %v302, %v567
      %v662 = vadd.f32 %v303, %v572
      %v663 = vadd.f32 %v304, %v575
      %v664 = vadd.f32 %v305, %v580
      %v665 = vadd.f32 %v306, %v583
      %v666 = vadd.f32 %v307, %v588
      %v667 = vadd.f32 %v308, %v591
      %v668 = vadd.f32 %v309, %v596
      %v669 = vadd.f32 %v310, %v599
      %v670 = vadd.f32 %v311, %v604
      %v671 = vadd.f32 %v312, %v607
      %v672 = vadd.f32 %v313, %v612
      %v673 = vadd.f32 %v314, %v615
      %v674 = vadd.f32 %v315, %v620
      %v675 = vadd.f32 %v316, %v623
      %v676 = vadd.f32 %v317, %v628
      %v677 = vadd.f32 %v318, %v631
      %v678 = vadd.f32 %v319, %v636
      %v679 = vadd.f32 %v320, %v639
      %v680 = vadd.f32 %v321, %v644
      %v681 = vadd.f32 %v322, %v647
      %682 = vst [vmem:[#allocation2] sm:$0xff] %v650
      %683 = vst [vmem:[#allocation2 + $0x8] sm:$0xff] %v651
      %684 = vst [vmem:[#allocation2 + $0x10] sm:$0xff] %v652
      %685 = vst [vmem:[#allocation2 + $0x18] sm:$0xff] %v653
      %686 = vst [vmem:[#allocation2 + $0x20] sm:$0xff] %v654
      %687 = vst [vmem:[#allocation2 + $0x28] sm:$0xff] %v655
      %688 = vst [vmem:[#allocation2 + $0x30] sm:$0xff] %v656
      %689 = vst [vmem:[#allocation2 + $0x38] sm:$0xff] %v657
      %690 = vst [vmem:[#allocation2 + $0x40] sm:$0xff] %v658
      %691 = vst [vmem:[#allocation2 + $0x48] sm:$0xff] %v659
      %692 = vst [vmem:[#allocation2 + $0x50] sm:$0xff] %v660
      %693 = vst [vmem:[#allocation2 + $0x58] sm:$0xff] %v661
      %694 = vst [vmem:[#allocation2 + $0x60] sm:$0xff] %v662
      %695 = vst [vmem:[#allocation2 + $0x68] sm:$0xff] %v663
      %696 = vst [vmem:[#allocation2 + $0x70] sm:$0xff] %v664
      %697 = vst [vmem:[#allocation2 + $0x78] sm:$0xff] %v665
      %698 = vst [vmem:[#allocation2 + $0x80] sm:$0xff] %v666
      %699 = vst [vmem:[#allocation2 + $0x88] sm:$0xff] %v667
      %700 = vst [vmem:[#allocation2 + $0x90] sm:$0xff] %v668
      %701 = vst [vmem:[#allocation2 + $0x98] sm:$0xff] %v669
      %702 = vst [vmem:[#allocation2 + $0xa0] sm:$0xff] %v670
      %703 = vst [vmem:[#allocation2 + $0xa8] sm:$0xff] %v671
      %704 = vst [vmem:[#allocation2 + $0xb0] sm:$0xff] %v672
      %705 = vst [vmem:[#allocation2 + $0xb8] sm:$0xff] %v673
      %706 = vst [vmem:[#allocation2 + $0xc0] sm:$0xff] %v674
      %707 = vst [vmem:[#allocation2 + $0xc8] sm:$0xff] %v675
      %708 = vst [vmem:[#allocation2 + $0xd0] sm:$0xff] %v676
      %709 = vst [vmem:[#allocation2 + $0xd8] sm:$0xff] %v677
      %710 = vst [vmem:[#allocation2 + $0xe0] sm:$0xff] %v678
      %711 = vst [vmem:[#allocation2 + $0xe8] sm:$0xff] %v679
      %712 = vst [vmem:[#allocation2 + $0xf0] sm:$0xff] %v680
      %713 = vst [vmem:[#allocation2 + $0xf8] sm:$0xff] %v681
      // Predicated region
      $region37: #{resunet_forward.49} parent=31 // pred_check
        %p714 = pneg %p255
      $region38: #{resunet_forward.49} parent=31 // pred_check_branch
        %716 = sbr.rel (%p714) target = $region40
      $region39: #{resunet_forward.49} parent=31 // pred_region
        %v717 = vld [vmem:[#allocation2] sm:$0xff]
        %v718 = vld [vmem:[#allocation2 + $0x8] sm:$0xff]
        %v719 = vld [vmem:[#allocation2 + $0x10] sm:$0xff]
        %v720 = vld [vmem:[#allocation2 + $0x18] sm:$0xff]
        %v721 = vld [vmem:[#allocation2 + $0x20] sm:$0xff]
        %v722 = vld [vmem:[#allocation2 + $0x28] sm:$0xff]
        %v723 = vld [vmem:[#allocation2 + $0x30] sm:$0xff]
        %v724 = vld [vmem:[#allocation2 + $0x38] sm:$0xff]
        %v725 = vld [vmem:[#allocation2 + $0x40] sm:$0xff]
        %v726 = vld [vmem:[#allocation2 + $0x48] sm:$0xff]
        %v727 = vld [vmem:[#allocation2 + $0x50] sm:$0xff]
        %v728 = vld [vmem:[#allocation2 + $0x58] sm:$0xff]
        %v729 = vld [vmem:[#allocation2 + $0x60] sm:$0xff]
        %v730 = vld [vmem:[#allocation2 + $0x68] sm:$0xff]
        %v731 = vld [vmem:[#allocation2 + $0x70] sm:$0xff]
        %v732 = vld [vmem:[#allocation2 + $0x78] sm:$0xff]
        %v733 = vld [vmem:[#allocation2 + $0x80] sm:$0xff]
        %v734 = vld [vmem:[#allocation2 + $0x88] sm:$0xff]
        %v735 = vld [vmem:[#allocation2 + $0x90] sm:$0xff]
        %v736 = vld [vmem:[#allocation2 + $0x98] sm:$0xff]
        %v737 = vld [vmem:[#allocation2 + $0xa0] sm:$0xff]
        %v738 = vld [vmem:[#allocation2 + $0xa8] sm:$0xff]
        %v739 = vld [vmem:[#allocation2 + $0xb0] sm:$0xff]
        %v740 = vld [vmem:[#allocation2 + $0xb8] sm:$0xff]
        %v741 = vld [vmem:[#allocation2 + $0xc0] sm:$0xff]
        %v742 = vld [vmem:[#allocation2 + $0xc8] sm:$0xff]
        %v743 = vld [vmem:[#allocation2 + $0xd0] sm:$0xff]
        %v744 = vld [vmem:[#allocation2 + $0xd8] sm:$0xff]
        %v745 = vld [vmem:[#allocation2 + $0xe0] sm:$0xff]
        %v746 = vld [vmem:[#allocation2 + $0xe8] sm:$0xff]
        %v747 = vld [vmem:[#allocation2 + $0xf0] sm:$0xff]
        %v748 = vld [vmem:[#allocation2 + $0xf8] sm:$0xff]
        %v749 = vld [vmem:[%s244] sm:$0x1]
        %v751 = vlaneseq
        %v752 = vshrl.u32 %v751, 7
        %v753 = vsub.s32 0, %v752
        %v754 = vrot.slane %v749, %v753
        %v756 = vadd.f32 %v717, %v754
        %v757 = vadd.f32 %v718, %v754
        %v758 = vadd.f32 %v719, %v754
        %v759 = vadd.f32 %v720, %v754
        %v760 = vadd.f32 %v721, %v754
        %v761 = vadd.f32 %v722, %v754
        %v762 = vadd.f32 %v723, %v754
        %v763 = vadd.f32 %v724, %v754
        %v764 = vadd.f32 %v725, %v754
        %v765 = vadd.f32 %v726, %v754
        %v766 = vadd.f32 %v727, %v754
        %v767 = vadd.f32 %v728, %v754
        %v768 = vadd.f32 %v729, %v754
        %v769 = vadd.f32 %v730, %v754
        %v770 = vadd.f32 %v731, %v754
        %v771 = vadd.f32 %v732, %v754
        %v772 = vadd.f32 %v733, %v754
        %v773 = vadd.f32 %v734, %v754
        %v774 = vadd.f32 %v735, %v754
        %v775 = vadd.f32 %v736, %v754
        %v776 = vadd.f32 %v737, %v754
        %v777 = vadd.f32 %v738, %v754
        %v778 = vadd.f32 %v739, %v754
        %v779 = vadd.f32 %v740, %v754
        %v780 = vadd.f32 %v741, %v754
        %v781 = vadd.f32 %v742, %v754
        %v782 = vadd.f32 %v743, %v754
        %v783 = vadd.f32 %v744, %v754
        %v784 = vadd.f32 %v745, %v754
        %v785 = vadd.f32 %v746, %v754
        %v786 = vadd.f32 %v747, %v754
        %v787 = vadd.f32 %v748, %v754
        %v788 = vpack.c.bf16 %v757, %v756
        %v789 = vpack.c.bf16 %v759, %v758
        %v790 = vpack.c.bf16 %v761, %v760
        %v791 = vpack.c.bf16 %v763, %v762
        %v792 = vpack.c.bf16 %v765, %v764
        %v793 = vpack.c.bf16 %v767, %v766
        %v794 = vpack.c.bf16 %v769, %v768
        %v795 = vpack.c.bf16 %v771, %v770
        %v796 = vpack.c.bf16 %v773, %v772
        %v797 = vpack.c.bf16 %v775, %v774
        %v798 = vpack.c.bf16 %v777, %v776
        %v799 = vpack.c.bf16 %v779, %v778
        %v800 = vpack.c.bf16 %v781, %v780
        %v801 = vpack.c.bf16 %v783, %v782
        %v802 = vpack.c.bf16 %v785, %v784
        %v803 = vpack.c.bf16 %v787, %v786
        %v820 = vunpack.c.l.b16 %v788
        %v821 = vunpack.c.h.b16 %v788
        %v822 = vunpack.c.l.b16 %v789
        %v823 = vunpack.c.h.b16 %v789
        %v824 = vunpack.c.l.b16 %v790
        %v825 = vunpack.c.h.b16 %v790
        %v826 = vunpack.c.l.b16 %v791
        %v827 = vunpack.c.h.b16 %v791
        %v828 = vunpack.c.l.b16 %v792
        %v829 = vunpack.c.h.b16 %v792
        %v830 = vunpack.c.l.b16 %v793
        %v831 = vunpack.c.h.b16 %v793
        %v832 = vunpack.c.l.b16 %v794
        %v833 = vunpack.c.h.b16 %v794
        %v834 = vunpack.c.l.b16 %v795
        %v835 = vunpack.c.h.b16 %v795
        %v836 = vunpack.c.l.b16 %v796
        %v837 = vunpack.c.h.b16 %v796
        %v838 = vunpack.c.l.b16 %v797
        %v839 = vunpack.c.h.b16 %v797
        %v840 = vunpack.c.l.b16 %v798
        %v841 = vunpack.c.h.b16 %v798
        %v842 = vunpack.c.l.b16 %v799
        %v843 = vunpack.c.h.b16 %v799
        %v844 = vunpack.c.l.b16 %v800
        %v845 = vunpack.c.h.b16 %v800
        %v846 = vunpack.c.l.b16 %v801
        %v847 = vunpack.c.h.b16 %v801
        %v848 = vunpack.c.l.b16 %v802
        %v849 = vunpack.c.h.b16 %v802
        %v850 = vunpack.c.l.b16 %v803
        %v851 = vunpack.c.h.b16 %v803
        %v852 = vpack.c.b16 %v820, %v820
        %v853 = vpack.c.b16 %v821, %v821
        %v854 = vpack.c.b16 %v822, %v822
        %v855 = vpack.c.b16 %v823, %v823
        %v856 = vpack.c.b16 %v824, %v824
        %v857 = vpack.c.b16 %v825, %v825
        %v858 = vpack.c.b16 %v826, %v826
        %v859 = vpack.c.b16 %v827, %v827
        %v860 = vpack.c.b16 %v828, %v828
        %v861 = vpack.c.b16 %v829, %v829
        %v862 = vpack.c.b16 %v830, %v830
        %v863 = vpack.c.b16 %v831, %v831
        %v864 = vpack.c.b16 %v832, %v832
        %v865 = vpack.c.b16 %v833, %v833
        %v866 = vpack.c.b16 %v834, %v834
        %v867 = vpack.c.b16 %v835, %v835
        %v868 = vpack.c.b16 %v836, %v836
        %v869 = vpack.c.b16 %v837, %v837
        %v870 = vpack.c.b16 %v838, %v838
        %v871 = vpack.c.b16 %v839, %v839
        %v872 = vpack.c.b16 %v840, %v840
        %v873 = vpack.c.b16 %v841, %v841
        %v874 = vpack.c.b16 %v842, %v842
        %v875 = vpack.c.b16 %v843, %v843
        %v876 = vpack.c.b16 %v844, %v844
        %v877 = vpack.c.b16 %v845, %v845
        %v878 = vpack.c.b16 %v846, %v846
        %v879 = vpack.c.b16 %v847, %v847
        %v880 = vpack.c.b16 %v848, %v848
        %v881 = vpack.c.b16 %v849, %v849
        %v882 = vpack.c.b16 %v850, %v850
        %v883 = vpack.c.b16 %v851, %v851
        %916 = vst [vmem:[%s252] sm:$0xf] %v852
        %917 = vst [vmem:[%s252 + $0x4] sm:$0xf] %v853
        %918 = vst [vmem:[%s252 + $0x8] sm:$0xf] %v854
        %919 = vst [vmem:[%s252 + $0xc] sm:$0xf] %v855
        %920 = vst [vmem:[%s252 + $0x10] sm:$0xf] %v856
        %921 = vst [vmem:[%s252 + $0x14] sm:$0xf] %v857
        %922 = vst [vmem:[%s252 + $0x18] sm:$0xf] %v858
        %923 = vst [vmem:[%s252 + $0x1c] sm:$0xf] %v859
        %924 = vst [vmem:[%s252 + $0x20] sm:$0xf] %v860
        %925 = vst [vmem:[%s252 + $0x24] sm:$0xf] %v861
        %926 = vst [vmem:[%s252 + $0x28] sm:$0xf] %v862
        %927 = vst [vmem:[%s252 + $0x2c] sm:$0xf] %v863
        %928 = vst [vmem:[%s252 + $0x30] sm:$0xf] %v864
        %929 = vst [vmem:[%s252 + $0x34] sm:$0xf] %v865
        %930 = vst [vmem:[%s252 + $0x38] sm:$0xf] %v866
        %931 = vst [vmem:[%s252 + $0x3c] sm:$0xf] %v867
        %932 = vst [vmem:[%s252 + $0x40] sm:$0xf] %v868
        %933 = vst [vmem:[%s252 + $0x44] sm:$0xf] %v869
        %934 = vst [vmem:[%s252 + $0x48] sm:$0xf] %v870
        %935 = vst [vmem:[%s252 + $0x4c] sm:$0xf] %v871
        %936 = vst [vmem:[%s252 + $0x50] sm:$0xf] %v872
        %937 = vst [vmem:[%s252 + $0x54] sm:$0xf] %v873
        %938 = vst [vmem:[%s252 + $0x58] sm:$0xf] %v874
        %939 = vst [vmem:[%s252 + $0x5c] sm:$0xf] %v875
        %940 = vst [vmem:[%s252 + $0x60] sm:$0xf] %v876
        %941 = vst [vmem:[%s252 + $0x64] sm:$0xf] %v877
        %942 = vst [vmem:[%s252 + $0x68] sm:$0xf] %v878
        %943 = vst [vmem:[%s252 + $0x6c] sm:$0xf] %v879
        %944 = vst [vmem:[%s252 + $0x70] sm:$0xf] %v880
        %945 = vst [vmem:[%s252 + $0x74] sm:$0xf] %v881
        %946 = vst [vmem:[%s252 + $0x78] sm:$0xf] %v882
        %947 = vst [vmem:[%s252 + $0x7c] sm:$0xf] %v883
      $region40: #{resunet_forward.49} parent=31 // pred_fallthru
        _
      %s948 = smul.u32 32, %s19
      %p949 = scmp.lt.s32.totalorder %s948, 63
      %s950 = scalar_select %p949, %s948, 63
      %p951 = scmp.lt.s32.totalorder %s20, 0
      %s952 = scalar_select %p951, %s20, 0
      %s953 = sadd.s32 %s952, %s950
      %s954 = smul.addr %s953, 4
      %s955 = scalar_lea.vmem %s3, %s954
      // Predicated region
      $region41: #{resunet_forward.49} parent=31 // pred_check
        %p956 = pneg %p135
      $region42: #{resunet_forward.49} parent=31 // pred_check_branch
        %958 = sbr.rel (%p956) target = $region44
      $region43: #{resunet_forward.49} parent=31 // pred_region
        %s959 = smul.u32 32, %s19
      $region44: #{resunet_forward.49} parent=31 // pred_fallthru
        _
    $region32: #{resunet_forward.49} parent=5 // pred_fallthru
      _
    %p960 = scmp.le.s32.totalorder 2, %s9
    // Predicated region
    $region45: #{resunet_forward.49} parent=5 // pred_check
      %p961 = pneg %p960
    $region46: #{resunet_forward.49} parent=5 // pred_check_branch
      %963 = sbr.rel (%p961) target = $region48
    $region47: #{resunet_forward.49} parent=5 // pred_region
      %s964 = ssub.s32 %s9, 2
      // Predicated region
      $region49: #{resunet_forward.49} parent=47 // pred_check
        %p965 = pneg %p141
      $region50: #{resunet_forward.49} parent=47 // pred_check_branch
        %967 = sbr.rel (%p965) target = $region52
      $region51: #{resunet_forward.49} parent=47 // pred_region
        %s968 = smul.u32 32, %s22
        %p969 = scmp.lt.s32.totalorder %s968, 63
        %s970 = scalar_select %p969, %s968, 63
        %p971 = scmp.lt.s32.totalorder %s23, 0
        %s972 = scalar_select %p971, %s23, 0
        %s973 = sadd.s32 %s972, %s970
        %s974 = smul.addr %s973, 4
        %s975 = scalar_lea.vmem %s3, %s974
      $region52: #{resunet_forward.49} parent=47 // pred_fallthru
        _
    $region48: #{resunet_forward.49} parent=5 // pred_fallthru
      _
  $region6: #{resunet_forward.49} parent=0 // loop_footer
    %s13 = sadd.s32 1, %s9
  $region7: #{resunet_forward.49} parent=0 // loop_footer_branch
    %8 = sbr.rel target = $region3
  $region8: #{resunet_forward.49} parent=0 // loop_exit
    _

</llo_original>
